<compile_context>
chip_gen: v5e
topology: v5e:2x2
jax: 0.10.0
libtpu: 0.0.40
codegen_flags: <defaults>
</compile_context>

<pallas_src>
import jax
import jax.numpy as jnp
import numpy as np
from jax.experimental import pallas as pl
from jax.experimental.pallas import tpu as pltpu

# ----------------------------- small config ---------------------------------
D_MODEL    = 64                      # backbone hidden size (stand-in)
D_PAD      = 128                     # lane-padded activation width
D_STATE    = 16
D_CONV     = 4
EXPAND     = 2
HEADDIM    = 64
NGROUPS    = 1
D_INNER    = EXPAND * D_MODEL        # 128
NHEADS     = D_INNER // HEADDIM      # 2
CONV_DIM   = D_INNER + 2 * NGROUPS * D_STATE   # 160
NUM_LABELS = 3
RMS_EPS    = 1e-6                    # module RMSNorm eps
GATED_EPS  = 1e-5                    # mamba_ssm RMSNormGated default eps
BATCH      = 512                     # >=256 rows per review (MXU M utilization)
TILE_B     = 256                     # row tile; grid parallel -> 2 TCs on v7x
SEQ        = 8
VOCAB      = 100
OUT_PAD    = 128                     # lane-dense classifier output width

# column offsets inside the merged (128, 1024) weight slab
_OFF_WF, _OFF_W1, _OFF_WC, _OFF_OUTW = 0, 512, 768, 896


# ------------------------------- kernel -------------------------------------
def _mamba_peft_kernel(
    cls_ref,   # (TILE_B, D_PAD)  f32   CLS rows, lanes 64:128 zero
    vec_ref,   # (8, 256)         f32   packed tiny vectors (see pack_params)
    wa_ref,    # (128, 1024)      bf16  [in_proj_fused | w1 | wc | out_proj]
    wb_ref,    # (256, 128)       bf16  w2 @ wc  (folded MLP->classifier tail)
    out_ref,   # (TILE_B, OUT_PAD) f32  lane-dense logits (first NUM_LABELS valid)
):
    f32, bf16 = jnp.float32, jnp.bfloat16
    x0 = cls_ref[...].astype(f32)                                   # (TB, 128)

    # ---- packed tiny-vector slab ------------------------------------------
    cwx    = vec_ref[0:1, 0:128]
    cbx    = vec_ref[0:1, 128:256]
    cw_bc  = vec_ref[1:2, 0:128]
    cb_bc  = vec_ref[1:2, 128:256]
    dtb_e  = vec_ref[2:3, 0:128]
    d_exp  = vec_ref[2:3, 128:256]
    gnw    = vec_ref[3:4, 0:128]
    bias_c = vec_ref[3:4, 128:256]          # b2 @ wc + bc, zero-padded
    n1w    = vec_ref[4:5, 0:128]            # zero-padded beyond 64 lanes
    n2w    = vec_ref[4:5, 128:256]          # zero-padded beyond 64 lanes
    b1     = vec_ref[5:6, 0:256]

    # ---- merged weight slab (bf16) ------------------------------------------
    w_fused = wa_ref[:, _OFF_WF:_OFF_W1]     # (128, 512)
    w1      = wa_ref[:, _OFF_W1:_OFF_WC]     # (128, 256)
    wc      = wa_ref[:, _OFF_WC:_OFF_OUTW]   # (128, 128)
    outw    = wa_ref[:, _OFF_OUTW:1024]      # (128, 128)

    # ---- RMSNorm #1 (module variant: NO mean over features) ----------------
    ss = jnp.sum(x0 * x0, axis=-1, keepdims=True)
    xn = n1w * x0 * jax.lax.rsqrt(ss + RMS_EPS)                      # pads stay 0

    # ---- Mamba2, seq_len == 1: single fused projection ---------------------
    proj = jnp.dot(xn.astype(bf16), w_fused, preferred_element_type=f32)  # (TB,512)
    z    = proj[:, 0 * D_INNER:1 * D_INNER]                          # (TB, 128)
    xs   = proj[:, 1 * D_INNER:2 * D_INNER]                          # (TB, 128)
    dt_e = proj[:, 2 * D_INNER:3 * D_INNER]                          # (TB, 128)
    bcs  = proj[:, 3 * D_INNER:4 * D_INNER]                          # (TB, 128) [B|C|0]

    # softplus(dt + dt_bias), already head-expanded (softplus commutes w/ repeat)
    dt_e = jax.nn.softplus(dt_e + dtb_e)

    # causal depthwise conv with zero history -> last tap only, then SiLU
    # (zero-padded lanes of the B|C slab stay exactly zero: silu(0*0+0) == 0)
    xs  = xs * cwx + cbx
    bcs = bcs * cw_bc + cb_bc
    xs  = xs * jax.nn.sigmoid(xs)
    bcs = bcs * jax.nn.sigmoid(bcs)

    # <B, C> without a matmul: lane-roll aligns C (lanes 16:32) onto B (0:16);
    # the zero padding makes every other lane product exactly zero.
    bc = jnp.sum(bcs * pltpu.roll(bcs, D_INNER - D_STATE, 1),
                 axis=-1, keepdims=True)                             # (TB, 1)

    # single SSM step from zero state: y = x * (dt * <B,C> + D)
    y = xs * (dt_e * bc + d_exp)                                     # (TB, 128)

    # gated RMSNorm (mamba_ssm RMSNormGated, norm_before_gate=False)
    t  = y * (z * jax.nn.sigmoid(z))
    ms = jnp.mean(t * t, axis=-1, keepdims=True)
    t  = t * jax.lax.rsqrt(ms + GATED_EPS) * gnw

    mamba_out = jnp.dot(t.astype(bf16), outw, preferred_element_type=f32)  # (TB,128)
    x1 = x0 + mamba_out                      # residual (dropout = id, eval)

    # ---- RMSNorm #2 + MLP up-projection -------------------------------------
    ss2 = jnp.sum(x1 * x1, axis=-1, keepdims=True)
    xn2 = n2w * x1 * jax.lax.rsqrt(ss2 + RMS_EPS)

    h = jnp.dot(xn2.astype(bf16), w1, preferred_element_type=f32) + b1
    h = jax.nn.gelu(h, approximate=True)     # tanh GELU (EUP) per review

    # ---- folded tail: logits = (x0+x1)@wc + h@(w2@wc) + (b2@wc + bc) --------
    head = (x0 + x1).astype(bf16)            # == (2*x0 + mamba_out)
    out_ref[...] = (jnp.dot(head, wc, preferred_element_type=f32)
                    + jnp.dot(h.astype(bf16), wb_ref[...], preferred_element_type=f32)
                    + bias_c)


# ------------------------------ wrapper --------------------------------------
def mamba_peft_forward(input_ids, attention_mask, packed):
    """Full MambaPEFT forward on packed params; attention_mask only feeds the
    (stand-in) backbone."""
    del attention_mask  # the stand-in backbone is a plain embedding lookup
    hidden_states = packed["embed"][input_ids]          # (B, S, D_PAD)
    cls = hidden_states[:, 0, :].astype(jnp.float32)    # (B, D_PAD), pads zero
    B = cls.shape[0]

    # pad batch to a multiple of the row tile
    Bp = pl.cdiv(B, TILE_B) * TILE_B
    if Bp != B:
        cls = jnp.pad(cls, ((0, Bp - B), (0, 0)))

    out = pl.pallas_call(
        _mamba_peft_kernel,
        out_shape=jax.ShapeDtypeStruct((Bp, OUT_PAD), jnp.float32),
        grid=(Bp // TILE_B,),
        in_specs=[
            pl.BlockSpec((TILE_B, D_PAD), lambda i: (i, 0)),         # CLS rows
            pl.BlockSpec((8, 2 * D_INNER), lambda i: (0, 0)),        # vec slab
            pl.BlockSpec((D_PAD, 1024), lambda i: (0, 0)),           # weight slab A
            pl.BlockSpec((4 * D_MODEL, OUT_PAD), lambda i: (0, 0)),  # weight slab B
        ],
        out_specs=pl.BlockSpec((TILE_B, OUT_PAD), lambda i: (i, 0)),
        compiler_params=pltpu.CompilerParams(
            dimension_semantics=("parallel",)),   # 2 row tiles -> 2 TCs on v7x
    )(cls, packed["vec"], packed["wa"], packed["wb"])
    return out[:B, :NUM_LABELS]


# --------------------------- pure-JAX reference -------------------------------
def mamba_peft_reference(input_ids, attention_mask, p):
    del attention_mask
    x0 = p["embed"][input_ids][:, 0, :].astype(jnp.float32)
    ss = jnp.sum(x0 * x0, -1, keepdims=True)
    xn = p["n1w"] * x0 / jnp.sqrt(ss + RMS_EPS)
    z, xs = xn @ p["zproj"], xn @ p["xproj"]
    Bs, Cs, dt = xn @ p["bproj"], xn @ p["cproj"], xn @ p["dtproj"]
    dt = jax.nn.softplus(dt + p["dt_bias"])
    xs = jax.nn.silu(xs * p["cwx"] + p["cbx"])
    Bs = jax.nn.silu(Bs * p["cwb"] + p["cbb"])
    Cs = jax.nn.silu(Cs * p["cwc"] + p["cbc"])
    bc = jnp.sum(Bs * Cs, -1, keepdims=True)
    y = (dt @ p["E"]) * xs * bc + p["d_exp"] * xs
    t = y * jax.nn.silu(z)
    t = t * jax.lax.rsqrt(jnp.mean(t * t, -1, keepdims=True) + GATED_EPS) * p["gnw"]
    x1 = x0 + t @ p["outw"]
    ss2 = jnp.sum(x1 * x1, -1, keepdims=True)
    xn2 = p["n2w"] * x1 / jnp.sqrt(ss2 + RMS_EPS)
    h = jax.nn.gelu(xn2 @ p["w1"] + p["b1"], approximate=False)
    x2 = x1 + h @ p["w2"] + p["b2"]
    return (x0 + x2) @ p["wc"] + p["bc"]


# ------------------------------ param init ------------------------------------
def init_params(key):
    ks = jax.random.split(key, 16)
    nrm = lambda k, s, sc=0.05: (sc * jax.random.normal(k, s)).astype(jnp.float32)

    # in_proj (d_in_proj, d_model) split by output rows -> store transposed pieces
    zproj  = nrm(ks[0], (D_MODEL, D_INNER))
    xproj  = nrm(ks[1], (D_MODEL, D_INNER))
    bproj  = nrm(ks[2], (D_MODEL, D_STATE))
    cproj  = nrm(ks[3], (D_MODEL, D_STATE))
    dtproj = nrm(ks[4], (D_MODEL, NHEADS))

    conv_w = nrm(ks[5], (CONV_DIM, D_CONV), 0.2)   # depthwise conv weight
    conv_b = nrm(ks[6], (CONV_DIM,), 0.02)
    w_last = conv_w[:, -1]                          # only tap that sees the token (L=1)
    cwx, cwb, cwc = (w_last[:D_INNER][None, :],
                     w_last[D_INNER:D_INNER + D_STATE][None, :],
                     w_last[D_INNER + D_STATE:][None, :])
    cbx, cbb, cbc = (conv_b[:D_INNER][None, :],
                     conv_b[D_INNER:D_INNER + D_STATE][None, :],
                     conv_b[D_INNER + D_STATE:][None, :])

    dt_bias = nrm(ks[7], (1, NHEADS), 0.1)
    D_param = jnp.ones((1, NHEADS), jnp.float32)                        # Mamba2 default
    E = jnp.repeat(jnp.eye(NHEADS, dtype=jnp.float32), HEADDIM, axis=1)  # (NHEADS, D_INNER)
    d_exp = D_param @ E                                                  # (1, D_INNER)

    return dict(
        embed=nrm(ks[8], (VOCAB, D_MODEL), 0.5),
        n1w=jnp.ones((1, D_MODEL), jnp.float32),
        zproj=zproj, xproj=xproj, bproj=bproj, cproj=cproj, dtproj=dtproj,
        cwx=cwx, cwb=cwb, cwc=cwc, cbx=cbx, cbb=cbb, cbc=cbc,
        dt_bias=dt_bias, d_exp=d_exp, E=E,
        gnw=jnp.ones((1, D_INNER), jnp.float32),
        outw=nrm(ks[9], (D_INNER, D_MODEL)),
        n2w=jnp.ones((1, D_MODEL), jnp.float32),
        w1=nrm(ks[10], (D_MODEL, 4 * D_MODEL)),
        b1=nrm(ks[11], (1, 4 * D_MODEL), 0.01),
        w2=nrm(ks[12], (4 * D_MODEL, D_MODEL)),
        b2=nrm(ks[13], (1, D_MODEL), 0.01),
        wc=nrm(ks[14], (D_MODEL, NUM_LABELS)),
        bc=nrm(ks[15], (1, NUM_LABELS), 0.01),
    )


def pack_params(p):
    """Repack logical params into the kernel's fused / lane-aligned layout."""
    f32, bf16 = jnp.float32, jnp.bfloat16
    E = p["E"]                                   # (NHEADS, D_INNER) 0/1 repeat-of-eye
    # softplus(dt + bias) commutes with the per-head repeat -> pre-expand both.
    dtproj_e = (p["dtproj"] @ E).astype(f32)     # (D_MODEL, D_INNER)
    dtb_e    = (p["dt_bias"] @ E).astype(f32)    # (1, D_INNER)

    # fused in_proj: [ z | x | dt_exp | B|C|zero-pad ]  -> (D_MODEL, 4*D_INNER)
    bc_cols = jnp.zeros((D_MODEL, D_INNER), f32)
    bc_cols = bc_cols.at[:, :D_STATE].set(p["bproj"])
    bc_cols = bc_cols.at[:, D_STATE:2 * D_STATE].set(p["cproj"])
    w_fused = jnp.concatenate([p["zproj"], p["xproj"], dtproj_e, bc_cols], axis=1)

    # packed conv scale/bias for the B|C slab (zero padding keeps silu(0)=0)
    cw_bc = jnp.zeros((1, D_INNER), f32)
    cw_bc = cw_bc.at[:, :D_STATE].set(p["cwb"]).at[:, D_STATE:2 * D_STATE].set(p["cwc"])
    cb_bc = jnp.zeros((1, D_INNER), f32)
    cb_bc = cb_bc.at[:, :D_STATE].set(p["cbb"]).at[:, D_STATE:2 * D_STATE].set(p["cbc"])

    # lane-padded classifier weight + folded tail (w2@wc, b2@wc + bc)
    wc_pad = jnp.zeros((D_MODEL, OUT_PAD), f32).at[:, :NUM_LABELS].set(p["wc"])
    w2c    = p["w2"] @ wc_pad                                          # (256, 128)
    bias_c = jnp.zeros((1, OUT_PAD), f32).at[:, :NUM_LABELS].set(
        p["b2"] @ p["wc"] + p["bc"])

    # pad the D_MODEL-row weights to 128 rows; pad out_proj cols to 128; merge.
    def pad_rows(w):
        return jnp.concatenate(
            [w, jnp.zeros((D_PAD - D_MODEL, w.shape[1]), f32)], axis=0)
    outw_pad = jnp.zeros((D_INNER, D_PAD), f32).at[:, :D_MODEL].set(p["outw"])
    wa = jnp.concatenate(
        [pad_rows(w_fused), pad_rows(p["w1"]), pad_rows(wc_pad), outw_pad],
        axis=1).astype(bf16)                                           # (128, 1024)
    wb = w2c.astype(bf16)                                              # (256, 128)

    # tiny-vector slab (8, 256), f32
    vec = jnp.zeros((8, 2 * D_INNER), f32)
    vec = vec.at[0, 0:128].set(p["cwx"][0]).at[0, 128:256].set(p["cbx"][0])
    vec = vec.at[1, 0:128].set(cw_bc[0]).at[1, 128:256].set(cb_bc[0])
    vec = vec.at[2, 0:128].set(dtb_e[0]).at[2, 128:256].set(p["d_exp"][0])
    vec = vec.at[3, 0:128].set(p["gnw"][0]).at[3, 128:256].set(bias_c[0])
    vec = vec.at[4, 0:D_MODEL].set(p["n1w"][0])
    vec = vec.at[4, 128:128 + D_MODEL].set(p["n2w"][0])
    vec = vec.at[5, 0:4 * D_MODEL].set(p["b1"][0])

    # lane-padded stand-in embedding table -> CLS rows come out already padded
    embed_pad = jnp.zeros((VOCAB, D_PAD), f32).at[:, :D_MODEL].set(p["embed"])

    return dict(embed=embed_pad, vec=vec, wa=wa, wb=wb)


# --------------------------------- main ----------------------------------------
if __name__ == "__main__":
    root = jax.random.PRNGKey(0)
    k_ids, k_params = jax.random.split(root)

    input_ids = jax.random.randint(k_ids, (BATCH, SEQ), 0, VOCAB, dtype=jnp.int32)
    attention_mask = jnp.ones((BATCH, SEQ), jnp.int32)
    params = init_params(k_params)
    packed = pack_params(params)

    logits = mamba_peft_forward(input_ids, attention_mask, packed)
    logits = jax.block_until_ready(logits)

    ref = jax.block_until_ready(mamba_peft_reference(input_ids, attention_mask, params))
    np.testing.assert_allclose(np.asarray(logits), np.asarray(ref), rtol=1e-2, atol=1e-2)

    assert logits.shape == (BATCH, NUM_LABELS)
    print("KERNEL_OK")
</pallas_src>

<mosaic_0001>
module attributes {stable_mosaic.version = 11 : i64} {
  func.func @_mamba_peft_kernel(%arg0: i32, %arg1: memref<256x128xf32, #tpu.memory_space<vmem>>, %arg2: memref<8x256xf32, #tpu.memory_space<vmem>>, %arg3: memref<128x1024xbf16, #tpu.memory_space<vmem>>, %arg4: memref<256x128xbf16, #tpu.memory_space<vmem>>, %arg5: memref<256x128xf32, #tpu.memory_space<vmem>>) attributes {dimension_semantics = [#tpu.dimension_semantics<parallel>], iteration_bounds = array<i64: 2>, scalar_prefetch = 0 : i64, scratch_operands = 0 : i64, tpu.core_type = #tpu.core_type<tc>, window_params = [{transform_indices = @transform_0, window_bounds = array<i64: 256, 128>}, {pipeline_mode = #tpu.pipeline_mode<synchronous>, transform_indices = @transform_1, window_bounds = array<i64: 8, 256>}, {pipeline_mode = #tpu.pipeline_mode<synchronous>, transform_indices = @transform_2, window_bounds = array<i64: 128, 1024>}, {pipeline_mode = #tpu.pipeline_mode<synchronous>, transform_indices = @transform_3, window_bounds = array<i64: 256, 128>}, {transform_indices = @transform_4, window_bounds = array<i64: 256, 128>}]} {
    %c0 = arith.constant 0 : index
    %c0_0 = arith.constant 0 : index
    %0 = vector.load %arg1[%c0, %c0_0] : memref<256x128xf32, #tpu.memory_space<vmem>>, vector<256x128xf32>
    %c0_1 = arith.constant 0 : index
    %c0_2 = arith.constant 0 : index
    %1 = vector.load %arg2[%c0_1, %c0_2] : memref<8x256xf32, #tpu.memory_space<vmem>>, vector<1x128xf32>
    %c0_3 = arith.constant 0 : index
    %c128 = arith.constant 128 : index
    %2 = vector.load %arg2[%c0_3, %c128] : memref<8x256xf32, #tpu.memory_space<vmem>>, vector<1x128xf32>
    %c1 = arith.constant 1 : index
    %c0_4 = arith.constant 0 : index
    %3 = vector.load %arg2[%c1, %c0_4] : memref<8x256xf32, #tpu.memory_space<vmem>>, vector<1x128xf32>
    %c1_5 = arith.constant 1 : index
    %c128_6 = arith.constant 128 : index
    %4 = vector.load %arg2[%c1_5, %c128_6] : memref<8x256xf32, #tpu.memory_space<vmem>>, vector<1x128xf32>
    %c2 = arith.constant 2 : index
    %c0_7 = arith.constant 0 : index
    %5 = vector.load %arg2[%c2, %c0_7] : memref<8x256xf32, #tpu.memory_space<vmem>>, vector<1x128xf32>
    %c2_8 = arith.constant 2 : index
    %c128_9 = arith.constant 128 : index
    %6 = vector.load %arg2[%c2_8, %c128_9] : memref<8x256xf32, #tpu.memory_space<vmem>>, vector<1x128xf32>
    %c3 = arith.constant 3 : index
    %c0_10 = arith.constant 0 : index
    %7 = vector.load %arg2[%c3, %c0_10] : memref<8x256xf32, #tpu.memory_space<vmem>>, vector<1x128xf32>
    %c3_11 = arith.constant 3 : index
    %c128_12 = arith.constant 128 : index
    %8 = vector.load %arg2[%c3_11, %c128_12] : memref<8x256xf32, #tpu.memory_space<vmem>>, vector<1x128xf32>
    %c4 = arith.constant 4 : index
    %c0_13 = arith.constant 0 : index
    %9 = vector.load %arg2[%c4, %c0_13] : memref<8x256xf32, #tpu.memory_space<vmem>>, vector<1x128xf32>
    %c4_14 = arith.constant 4 : index
    %c128_15 = arith.constant 128 : index
    %10 = vector.load %arg2[%c4_14, %c128_15] : memref<8x256xf32, #tpu.memory_space<vmem>>, vector<1x128xf32>
    %c5 = arith.constant 5 : index
    %c0_16 = arith.constant 0 : index
    %11 = vector.load %arg2[%c5, %c0_16] : memref<8x256xf32, #tpu.memory_space<vmem>>, vector<1x256xf32>
    %c0_17 = arith.constant 0 : index
    %c0_18 = arith.constant 0 : index
    %12 = vector.load %arg3[%c0_17, %c0_18] : memref<128x1024xbf16, #tpu.memory_space<vmem>>, vector<128x512xbf16>
    %c0_19 = arith.constant 0 : index
    %c512 = arith.constant 512 : index
    %13 = vector.load %arg3[%c0_19, %c512] : memref<128x1024xbf16, #tpu.memory_space<vmem>>, vector<128x256xbf16>
    %c0_20 = arith.constant 0 : index
    %c768 = arith.constant 768 : index
    %14 = vector.load %arg3[%c0_20, %c768] : memref<128x1024xbf16, #tpu.memory_space<vmem>>, vector<128x128xbf16>
    %c0_21 = arith.constant 0 : index
    %c896 = arith.constant 896 : index
    %15 = vector.load %arg3[%c0_21, %c896] : memref<128x1024xbf16, #tpu.memory_space<vmem>>, vector<128x128xbf16>
    %16 = arith.mulf %0, %0 : vector<256x128xf32>
    %cst = arith.constant dense<0.000000e+00> : vector<256xf32>
    %17 = vector.multi_reduction <add>, %16, %cst [1] : vector<256x128xf32> to vector<256xf32>
    %18 = vector.shape_cast %17 : vector<256xf32> to vector<256x1xf32>
    %19 = vector.broadcast %9 : vector<1x128xf32> to vector<256x128xf32>
    %20 = arith.mulf %19, %0 : vector<256x128xf32>
    %cst_22 = arith.constant 9.99999997E-7 : f32
    %21 = vector.broadcast %cst_22 : f32 to vector<256x1xf32>
    %22 = arith.addf %18, %21 : vector<256x1xf32>
    %23 = math.rsqrt %22 : vector<256x1xf32>
    %24 = vector.broadcast %23 : vector<256x1xf32> to vector<256x128xf32>
    %25 = arith.mulf %20, %24 : vector<256x128xf32>
    %26 = arith.truncf %25 : vector<256x128xf32> to vector<256x128xbf16>
    %cst_23 = arith.constant dense<0.000000e+00> : vector<256x512xf32>
    %27 = tpu.matmul %26, %12, %cst_23 {dimension_numbers = #tpu.dot_dimension_numbers<[1], [0], [0], [1], [0, 0, 1, 1], [], []>} : vector<256x128xbf16>, vector<128x512xbf16>, vector<256x512xf32> -> vector<256x512xf32>
    %28 = vector.extract_strided_slice %27 {offsets = [0, 0], sizes = [256, 128], strides = [1, 1]} : vector<256x512xf32> to vector<256x128xf32>
    %29 = vector.extract_strided_slice %27 {offsets = [0, 128], sizes = [256, 128], strides = [1, 1]} : vector<256x512xf32> to vector<256x128xf32>
    %30 = vector.extract_strided_slice %27 {offsets = [0, 256], sizes = [256, 128], strides = [1, 1]} : vector<256x512xf32> to vector<256x128xf32>
    %31 = vector.extract_strided_slice %27 {offsets = [0, 384], sizes = [256, 128], strides = [1, 1]} : vector<256x512xf32> to vector<256x128xf32>
    %32 = vector.broadcast %5 : vector<1x128xf32> to vector<256x128xf32>
    %33 = arith.addf %30, %32 : vector<256x128xf32>
    %cst_24 = arith.constant 0.000000e+00 : f32
    %34 = vector.broadcast %cst_24 : f32 to vector<256x128xf32>
    %35 = arith.maximumf %33, %34 : vector<256x128xf32>
    %36 = vector.broadcast %cst_24 : f32 to vector<256x128xf32>
    %37 = arith.subf %33, %36 : vector<256x128xf32>
    %38 = arith.cmpf one, %37, %37 : vector<256x128xf32>
    %39 = vector.broadcast %cst_24 : f32 to vector<256x128xf32>
    %40 = arith.addf %33, %39 : vector<256x128xf32>
    %41 = math.absf %37 : vector<256x128xf32>
    %cst_25 = arith.constant 0.000000e+00 : f32
    %42 = vector.broadcast %cst_25 : f32 to vector<256x128xf32>
    %43 = arith.subf %42, %41 : vector<256x128xf32>
    %44 = math.exp %43 : vector<256x128xf32>
    %45 = math.log1p %44 : vector<256x128xf32>
    %46 = arith.addf %35, %45 : vector<256x128xf32>
    %47 = arith.select %38, %40, %46 : vector<256x128xi1>, vector<256x128xf32>
    %48 = vector.broadcast %1 : vector<1x128xf32> to vector<256x128xf32>
    %49 = arith.mulf %29, %48 : vector<256x128xf32>
    %50 = vector.broadcast %2 : vector<1x128xf32> to vector<256x128xf32>
    %51 = arith.addf %49, %50 : vector<256x128xf32>
    %52 = vector.broadcast %3 : vector<1x128xf32> to vector<256x128xf32>
    %53 = arith.mulf %31, %52 : vector<256x128xf32>
    %54 = vector.broadcast %4 : vector<1x128xf32> to vector<256x128xf32>
    %55 = arith.addf %53, %54 : vector<256x128xf32>
    %56 = arith.negf %51 : vector<256x128xf32>
    %57 = math.exp %56 : vector<256x128xf32>
    %cst_26 = arith.constant 1.000000e+00 : f32
    %58 = vector.broadcast %cst_26 : f32 to vector<256x128xf32>
    %59 = arith.addf %58, %57 : vector<256x128xf32>
    %60 = arith.divf %58, %59 : vector<256x128xf32>
    %61 = arith.mulf %51, %60 : vector<256x128xf32>
    %62 = arith.negf %55 : vector<256x128xf32>
    %63 = math.exp %62 : vector<256x128xf32>
    %cst_27 = arith.constant 1.000000e+00 : f32
    %64 = vector.broadcast %cst_27 : f32 to vector<256x128xf32>
    %65 = arith.addf %64, %63 : vector<256x128xf32>
    %66 = arith.divf %64, %65 : vector<256x128xf32>
    %67 = arith.mulf %55, %66 : vector<256x128xf32>
    %c112_i32 = arith.constant 112 : i32
    %68 = tpu.dynamic_rotate %67 by %c112_i32 dim 1 : vector<256x128xf32>, i32 -> vector<256x128xf32>
    %69 = arith.mulf %67, %68 : vector<256x128xf32>
    %cst_28 = arith.constant dense<0.000000e+00> : vector<256xf32>
    %70 = vector.multi_reduction <add>, %69, %cst_28 [1] : vector<256x128xf32> to vector<256xf32>
    %71 = vector.shape_cast %70 : vector<256xf32> to vector<256x1xf32>
    %72 = vector.broadcast %71 : vector<256x1xf32> to vector<256x128xf32>
    %73 = arith.mulf %47, %72 : vector<256x128xf32>
    %74 = vector.broadcast %6 : vector<1x128xf32> to vector<256x128xf32>
    %75 = arith.addf %73, %74 : vector<256x128xf32>
    %76 = arith.mulf %61, %75 : vector<256x128xf32>
    %77 = arith.negf %28 : vector<256x128xf32>
    %78 = math.exp %77 : vector<256x128xf32>
    %cst_29 = arith.constant 1.000000e+00 : f32
    %79 = vector.broadcast %cst_29 : f32 to vector<256x128xf32>
    %80 = arith.addf %79, %78 : vector<256x128xf32>
    %81 = arith.divf %79, %80 : vector<256x128xf32>
    %82 = arith.mulf %28, %81 : vector<256x128xf32>
    %83 = arith.mulf %76, %82 : vector<256x128xf32>
    %84 = arith.mulf %83, %83 : vector<256x128xf32>
    %cst_30 = arith.constant dense<0.000000e+00> : vector<256xf32>
    %85 = vector.multi_reduction <add>, %84, %cst_30 [1] : vector<256x128xf32> to vector<256xf32>
    %86 = vector.shape_cast %85 : vector<256xf32> to vector<256x1xf32>
    %cst_31 = arith.constant 1.280000e+02 : f32
    %87 = vector.broadcast %cst_31 : f32 to vector<256x1xf32>
    %88 = arith.divf %86, %87 : vector<256x1xf32>
    %cst_32 = arith.constant 9.99999974E-6 : f32
    %89 = vector.broadcast %cst_32 : f32 to vector<256x1xf32>
    %90 = arith.addf %88, %89 : vector<256x1xf32>
    %91 = math.rsqrt %90 : vector<256x1xf32>
    %92 = vector.broadcast %91 : vector<256x1xf32> to vector<256x128xf32>
    %93 = arith.mulf %83, %92 : vector<256x128xf32>
    %94 = vector.broadcast %7 : vector<1x128xf32> to vector<256x128xf32>
    %95 = arith.mulf %93, %94 : vector<256x128xf32>
    %96 = arith.truncf %95 : vector<256x128xf32> to vector<256x128xbf16>
    %cst_33 = arith.constant dense<0.000000e+00> : vector<256x128xf32>
    %97 = tpu.matmul %96, %15, %cst_33 {dimension_numbers = #tpu.dot_dimension_numbers<[1], [0], [0], [1], [0, 0, 1, 1], [], []>} : vector<256x128xbf16>, vector<128x128xbf16>, vector<256x128xf32> -> vector<256x128xf32>
    %98 = arith.addf %0, %97 : vector<256x128xf32>
    %99 = arith.mulf %98, %98 : vector<256x128xf32>
    %cst_34 = arith.constant dense<0.000000e+00> : vector<256xf32>
    %100 = vector.multi_reduction <add>, %99, %cst_34 [1] : vector<256x128xf32> to vector<256xf32>
    %101 = vector.shape_cast %100 : vector<256xf32> to vector<256x1xf32>
    %102 = vector.broadcast %10 : vector<1x128xf32> to vector<256x128xf32>
    %103 = arith.mulf %102, %98 : vector<256x128xf32>
    %cst_35 = arith.constant 9.99999997E-7 : f32
    %104 = vector.broadcast %cst_35 : f32 to vector<256x1xf32>
    %105 = arith.addf %101, %104 : vector<256x1xf32>
    %106 = math.rsqrt %105 : vector<256x1xf32>
    %107 = vector.broadcast %106 : vector<256x1xf32> to vector<256x128xf32>
    %108 = arith.mulf %103, %107 : vector<256x128xf32>
    %109 = arith.truncf %108 : vector<256x128xf32> to vector<256x128xbf16>
    %cst_36 = arith.constant dense<0.000000e+00> : vector<256x256xf32>
    %110 = tpu.matmul %109, %13, %cst_36 {dimension_numbers = #tpu.dot_dimension_numbers<[1], [0], [0], [1], [0, 0, 1, 1], [], []>} : vector<256x128xbf16>, vector<128x256xbf16>, vector<256x256xf32> -> vector<256x256xf32>
    %111 = vector.broadcast %11 : vector<1x256xf32> to vector<256x256xf32>
    %112 = arith.addf %110, %111 : vector<256x256xf32>
    %113 = arith.mulf %112, %112 : vector<256x256xf32>
    %114 = arith.mulf %112, %113 : vector<256x256xf32>
    %cst_37 = arith.constant 4.471500e-02 : f32
    %115 = vector.broadcast %cst_37 : f32 to vector<256x256xf32>
    %116 = arith.mulf %115, %114 : vector<256x256xf32>
    %117 = arith.addf %112, %116 : vector<256x256xf32>
    %cst_38 = arith.constant 0.797884583 : f32
    %118 = vector.broadcast %cst_38 : f32 to vector<256x256xf32>
    %119 = arith.mulf %118, %117 : vector<256x256xf32>
    %120 = math.tanh %119 : vector<256x256xf32>
    %cst_39 = arith.constant 1.000000e+00 : f32
    %121 = vector.broadcast %cst_39 : f32 to vector<256x256xf32>
    %122 = arith.addf %121, %120 : vector<256x256xf32>
    %cst_40 = arith.constant 5.000000e-01 : f32
    %123 = vector.broadcast %cst_40 : f32 to vector<256x256xf32>
    %124 = arith.mulf %123, %122 : vector<256x256xf32>
    %125 = arith.mulf %112, %124 : vector<256x256xf32>
    %126 = arith.addf %0, %98 : vector<256x128xf32>
    %127 = arith.truncf %126 : vector<256x128xf32> to vector<256x128xbf16>
    %cst_41 = arith.constant dense<0.000000e+00> : vector<256x128xf32>
    %128 = tpu.matmul %127, %14, %cst_41 {dimension_numbers = #tpu.dot_dimension_numbers<[1], [0], [0], [1], [0, 0, 1, 1], [], []>} : vector<256x128xbf16>, vector<128x128xbf16>, vector<256x128xf32> -> vector<256x128xf32>
    %129 = arith.truncf %125 : vector<256x256xf32> to vector<256x256xbf16>
    %c0_42 = arith.constant 0 : index
    %c0_43 = arith.constant 0 : index
    %130 = vector.load %arg4[%c0_42, %c0_43] : memref<256x128xbf16, #tpu.memory_space<vmem>>, vector<256x128xbf16>
    %cst_44 = arith.constant dense<0.000000e+00> : vector<256x128xf32>
    %131 = tpu.matmul %129, %130, %cst_44 {dimension_numbers = #tpu.dot_dimension_numbers<[1], [0], [0], [1], [0, 0, 1, 1], [], []>} : vector<256x256xbf16>, vector<256x128xbf16>, vector<256x128xf32> -> vector<256x128xf32>
    %132 = arith.addf %128, %131 : vector<256x128xf32>
    %133 = vector.broadcast %8 : vector<1x128xf32> to vector<256x128xf32>
    %134 = arith.addf %132, %133 : vector<256x128xf32>
    %c0_45 = arith.constant 0 : index
    %c0_46 = arith.constant 0 : index
    %135 = vector.load %arg5[%c0_45, %c0_46] : memref<256x128xf32, #tpu.memory_space<vmem>>, vector<256x128xf32>
    tpu.vector_store %arg5[%c0_45, %c0_46], %134 {strides = array<i32>} : memref<256x128xf32, #tpu.memory_space<vmem>>, vector<256x128xf32>,
    return
  }
  func.func @transform_0(%arg0: i32) -> (i32, i32) {
    %c0_i32 = arith.constant 0 : i32
    %c0_i32_0 = arith.constant 0 : i32
    return %arg0, %c0_i32 : i32, i32
  }
  func.func @transform_1(%arg0: i32) -> (i32, i32) {
    %c0_i32 = arith.constant 0 : i32
    %c0_i32_0 = arith.constant 0 : i32
    %c0_i32_1 = arith.constant 0 : i32
    return %c0_i32, %c0_i32_0 : i32, i32
  }
  func.func @transform_2(%arg0: i32) -> (i32, i32) {
    %c0_i32 = arith.constant 0 : i32
    %c0_i32_0 = arith.constant 0 : i32
    %c0_i32_1 = arith.constant 0 : i32
    return %c0_i32, %c0_i32_0 : i32, i32
  }
  func.func @transform_3(%arg0: i32) -> (i32, i32) {
    %c0_i32 = arith.constant 0 : i32
    %c0_i32_0 = arith.constant 0 : i32
    %c0_i32_1 = arith.constant 0 : i32
    return %c0_i32, %c0_i32_0 : i32, i32
  }
  func.func @transform_4(%arg0: i32) -> (i32, i32) {
    %c0_i32 = arith.constant 0 : i32
    %c0_i32_0 = arith.constant 0 : i32
    return %arg0, %c0_i32 : i32, i32
  }
}

</mosaic_0001>

<llo_original>
// kernel: tpu_custom_call.1
$region0: #{tpu_custom_call.1}
  #allocation0 [shape = 'u32[]', space=smem, size = 0x4, offset = 0x4, fixed_abs, tag = 'smem constant byte address 0x4 - core index']
  #allocation1 [shape = 'u32[72,128]{1,0:T(1,128)}', space=vmem, size = 0x9000, scoped, tag = 'internal scratch']
  %s0 = inlined_call_operand.hbm [shape: f32[512,128], index: 0, kind: input, shape index: {}]
  %s1 = inlined_call_operand.hbm [shape: f32[8,256], index: 1, kind: input, shape index: {}]
  %s2 = inlined_call_operand.hbm [shape: bf16[128,1024], index: 2, kind: input, shape index: {}]
  %s3 = inlined_call_operand.hbm [shape: bf16[256,128], index: 3, kind: input, shape index: {}]
  %s4 = inlined_call_operand.hbm [shape: f32[512,128], index: 4, kind: output, shape index: {}]
  %s5 = sld [smem:[#allocation0]]
  $region65: #{tpu_custom_call.1} parent=0
    _
  %s7 = ssub.s32 1, %s5
  %s8 = scalar_select 0, %s7, %s5
  $region1: #{tpu_custom_call.1} parent=0
    #allocation2 [shape = 'u8[262144]{0}', space=vmem, size = 0x40000, scoped, tag = 'input window, operand 0']
    #allocation3 [shape = 's32[2]{0}', space=sflag, size = 0x8, scoped, tag = 'scoped memory for tpu_custom_call.1']
    #allocation4 [shape = 's32[2]{0}', space=sflag, size = 0x8, scoped, tag = 'scoped memory for tpu_custom_call.1']
    #allocation5 [shape = 'u8[8192]{0}', space=vmem, size = 0x2000, scoped, tag = 'input window, operand 1, single buffered']
    #allocation6 [shape = 's32[1]{0}', space=sflag, size = 0x4, scoped, tag = 'scoped memory for tpu_custom_call.1']
    #allocation7 [shape = 'u8[262144]{0}', space=vmem, size = 0x40000, scoped, tag = 'input window, operand 2, single buffered']
    #allocation8 [shape = 'u8[65536]{0}', space=vmem, size = 0x10000, scoped, tag = 'input window, operand 3, single buffered']
    #allocation9 [shape = 's32[1]{0}', space=sflag, size = 0x4, scoped, tag = 'scoped memory for tpu_custom_call.1']
    #allocation10 [shape = 'u8[262144]{0}', space=vmem, size = 0x40000, scoped, tag = 'output window, operand 0']
    %9 = vsyncpa [#allocation3], 0
    %s10 = scalar_lea.sflag [#allocation3], 1
    %11 = vsyncpa %s10, 0
    %12 = vsyncpa [#allocation6], 0
    %13 = vsyncpa [#allocation9], 0
    %14 = vsyncpa [#allocation4], 0
    %s15 = scalar_lea.sflag [#allocation4], 1
    %16 = vsyncpa %s15, 0
    loop: start=0, step=1, limit=4
    $region2: #{tpu_custom_call.1} parent=1 // loop_pre_header
      _
    $region3: #{tpu_custom_call.1} parent=1 // loop_header
      %s18 = sphi 0, %s22
      %p19 = scmp.ge.s32.totalorder %s18, 4
      %s28 = sphi 0, %s30
      %s31 = sphi 0, %s28
      %s32 = sphi 0, %s31
      %s48 = sphi 0, %s32
      %s52 = sphi 0, %s52
      %s54 = sphi 0, %s52
      %s55 = sphi 0, %s54
      %s69 = sphi 0, %s55
      %s73 = sphi 0, %s73
      %s75 = sphi 0, %s73
      %s76 = sphi 0, %s75
      %s90 = sphi 0, %s76
      %s94 = sphi 0, %s94
      %s96 = sphi 0, %s94
      %s97 = sphi 0, %s96
      %s111 = sphi 0, %s97
      %s117 = sphi 0, %s119
      %s120 = sphi 0, %s117
      %s121 = sphi 0, %s120
      %s137 = sphi 0, %s121
    $region4: #{tpu_custom_call.1} parent=1 // loop_header_branch
      %21 = sbr.rel (%p19) target = $region8
    $region5: #{tpu_custom_call.1} parent=1 // loop_body
      %s23 = ssub.s32 %s18, 1
      %s24 = ssub.s32 %s18, 2
      %s25 = sadd.s32 %s18, 1
      %s26 = ssub.s32 %s18, %s25
      %p27 = scmp.eq.s32.totalorder %s26, 0
      %s29 = sadd.s32 %s28, 1
      %s30 = scalar_select %p27, %s28, %s29
      %p33 = pneg %p27
      %p34 = scmp.eq.s32.totalorder %s18, 1
      %p35 = por %p33, %p34
      %p36 = scmp.ne.s32.totalorder %s28, %s31
      %p37 = scmp.eq.s32.totalorder %s18, 0
      %p38 = por %p36, %p37
      %p39 = scmp.ne.s32.totalorder %s28, %s31
      %p40 = scmp.eq.s32.totalorder %s23, 1
      %p41 = por %p39, %p40
      %p42 = scmp.ne.s32.totalorder %s31, %s32
      %p43 = scmp.eq.s32.totalorder %s23, 0
      %p44 = por %p42, %p43
      %p45 = scmp.ne.s32.totalorder %s31, %s32
      %p46 = scmp.eq.s32.totalorder %s24, 1
      %p47 = por %p45, %p46
      %p49 = scmp.ne.s32.totalorder %s32, %s48
      %p50 = scmp.eq.s32.totalorder %s24, 0
      %p51 = por %p49, %p50
      %s53 = sadd.s32 %s52, 1
      %p56 = scmp.eq.s32.totalorder %s18, 1
      %p57 = scmp.ne.s32.totalorder %s52, %s54
      %p58 = scmp.eq.s32.totalorder %s18, 0
      %p59 = por %p57, %p58
      %p60 = scmp.ne.s32.totalorder %s52, %s54
      %p61 = scmp.eq.s32.totalorder %s23, 1
      %p62 = por %p60, %p61
      %p63 = scmp.ne.s32.totalorder %s54, %s55
      %p64 = scmp.eq.s32.totalorder %s23, 0
      %p65 = por %p63, %p64
      %p66 = scmp.ne.s32.totalorder %s54, %s55
      %p67 = scmp.eq.s32.totalorder %s24, 1
      %p68 = por %p66, %p67
      %p70 = scmp.ne.s32.totalorder %s55, %s69
      %p71 = scmp.eq.s32.totalorder %s24, 0
      %p72 = por %p70, %p71
      %s74 = sadd.s32 %s73, 1
      %p77 = scmp.eq.s32.totalorder %s18, 1
      %p78 = scmp.ne.s32.totalorder %s73, %s75
      %p79 = scmp.eq.s32.totalorder %s18, 0
      %p80 = por %p78, %p79
      %p81 = scmp.ne.s32.totalorder %s73, %s75
      %p82 = scmp.eq.s32.totalorder %s23, 1
      %p83 = por %p81, %p82
      %p84 = scmp.ne.s32.totalorder %s75, %s76
      %p85 = scmp.eq.s32.totalorder %s23, 0
      %p86 = por %p84, %p85
      %p87 = scmp.ne.s32.totalorder %s75, %s76
      %p88 = scmp.eq.s32.totalorder %s24, 1
      %p89 = por %p87, %p88
      %p91 = scmp.ne.s32.totalorder %s76, %s90
      %p92 = scmp.eq.s32.totalorder %s24, 0
      %p93 = por %p91, %p92
      %s95 = sadd.s32 %s94, 1
      %p98 = scmp.eq.s32.totalorder %s18, 1
      %p99 = scmp.ne.s32.totalorder %s94, %s96
      %p100 = scmp.eq.s32.totalorder %s18, 0
      %p101 = por %p99, %p100
      %p102 = scmp.ne.s32.totalorder %s94, %s96
      %p103 = scmp.eq.s32.totalorder %s23, 1
      %p104 = por %p102, %p103
      %p105 = scmp.ne.s32.totalorder %s96, %s97
      %p106 = scmp.eq.s32.totalorder %s23, 0
      %p107 = por %p105, %p106
      %p108 = scmp.ne.s32.totalorder %s96, %s97
      %p109 = scmp.eq.s32.totalorder %s24, 1
      %p110 = por %p108, %p109
      %p112 = scmp.ne.s32.totalorder %s97, %s111
      %p113 = scmp.eq.s32.totalorder %s24, 0
      %p114 = por %p112, %p113
      %s115 = ssub.s32 %s18, %s25
      %p116 = scmp.eq.s32.totalorder %s115, 0
      %s118 = sadd.s32 %s117, 1
      %s119 = scalar_select %p116, %s117, %s118
      %p122 = pneg %p116
      %p123 = scmp.eq.s32.totalorder %s18, 1
      %p124 = por %p122, %p123
      %p125 = scmp.ne.s32.totalorder %s117, %s120
      %p126 = scmp.eq.s32.totalorder %s18, 0
      %p127 = por %p125, %p126
      %p128 = scmp.ne.s32.totalorder %s117, %s120
      %p129 = scmp.eq.s32.totalorder %s23, 1
      %p130 = por %p128, %p129
      %p131 = scmp.ne.s32.totalorder %s120, %s121
      %p132 = scmp.eq.s32.totalorder %s23, 0
      %p133 = por %p131, %p132
      %p134 = scmp.ne.s32.totalorder %s120, %s121
      %p135 = scmp.eq.s32.totalorder %s24, 1
      %p136 = por %p134, %p135
      %p138 = scmp.ne.s32.totalorder %s121, %s137
      %p139 = scmp.eq.s32.totalorder %s24, 0
      %p140 = por %p138, %p139
      %p141 = scmp.le.s32.totalorder 1, %s18
      %p142 = scmp.lt.s32.totalorder %s18, 3
      %p143 = pnand %p141, %p142
      %p144 = pneg %p143
      // Predicated region
      $region9: #{tpu_custom_call.1} parent=5 // pred_check
        _
      $region10: #{tpu_custom_call.1} parent=5 // pred_check_branch
        %146 = sbr.rel (%p143) target = $region12
      $region11: #{tpu_custom_call.1} parent=5 // pred_region
        %s147 = ssub.s32 %s18, 1
        // Predicated region
        $region13: #{tpu_custom_call.1} parent=11 // pred_check
          %p148 = pneg %p65
        $region14: #{tpu_custom_call.1} parent=11 // pred_check_branch
          %150 = sbr.rel (%p148) target = $region16
        $region15: #{tpu_custom_call.1} parent=11 // pred_region
          %152 = vsyncadd [#allocation6], 0
          %s154 = sshll.u32 %s1, 4
          %s155 = int_to_ptr.hbm [resolvable:$true] %s154
          %s156 = sshll.u32 [#allocation5], 4
          %s157 = int_to_ptr.vmem [resolvable:$true] %s156
          %159 = dma.hbm_to_vmem [thread:$0]  %s155, 256, %s157, [#allocation6]
        $region16: #{tpu_custom_call.1} parent=11 // pred_fallthru
          _
        // Predicated region
        $region17: #{tpu_custom_call.1} parent=11 // pred_check
          %p160 = pneg %p86
        $region18: #{tpu_custom_call.1} parent=11 // pred_check_branch
          %162 = sbr.rel (%p160) target = $region20
        $region19: #{tpu_custom_call.1} parent=11 // pred_region
          %164 = vsyncadd [#allocation6], 0
          %s165 = sshll.u32 %s2, 4
          %s166 = int_to_ptr.hbm [resolvable:$true] %s165
          %s167 = sshll.u32 [#allocation7], 4
          %s168 = int_to_ptr.vmem [resolvable:$true] %s167
          %173 = dma.hbm_to_vmem [thread:$0]  %s166, 8192, %s168, [#allocation6], 512, 512, 32
        $region20: #{tpu_custom_call.1} parent=11 // pred_fallthru
          _
        // Predicated region
        $region21: #{tpu_custom_call.1} parent=11 // pred_check
          %p174 = pneg %p107
        $region22: #{tpu_custom_call.1} parent=11 // pred_check_branch
          %176 = sbr.rel (%p174) target = $region24
        $region23: #{tpu_custom_call.1} parent=11 // pred_region
          %178 = vsyncadd [#allocation9], 0
          %s179 = sshll.u32 %s3, 4
          %s180 = int_to_ptr.hbm [resolvable:$true] %s179
          %s181 = sshll.u32 [#allocation8], 4
          %s182 = int_to_ptr.vmem [resolvable:$true] %s181
          %187 = dma.hbm_to_vmem [thread:$0]  %s180, 2048, %s182, [#allocation9], 64, 64, 4
        $region24: #{tpu_custom_call.1} parent=11 // pred_fallthru
          _
      $region12: #{tpu_custom_call.1} parent=5 // pred_fallthru
        _
      %p188 = scmp.lt.s32.totalorder %s18, 2
      // Predicated region
      $region25: #{tpu_custom_call.1} parent=5 // pred_check
        %p189 = pneg %p188
      $region26: #{tpu_custom_call.1} parent=5 // pred_check_branch
        %191 = sbr.rel (%p189) target = $region28
      $region27: #{tpu_custom_call.1} parent=5 // pred_region
        // Predicated region
        $region29: #{tpu_custom_call.1} parent=27 // pred_check
          %p192 = pneg %p38
        $region30: #{tpu_custom_call.1} parent=27 // pred_check_branch
          %194 = sbr.rel (%p192) target = $region32
        $region31: #{tpu_custom_call.1} parent=27 // pred_region
          %s195 = sand.u32 %s28, 1
          %s196 = scalar_lea.sflag [#allocation3], %s195
          %s197 = sand.u32 %s28, 1
          %s198 = smul.addr %s197, 256
          %s199 = scalar_lea.vmem [#allocation2], %s198
          %s200 = smul.u32 32, %s18
          %202 = vsyncadd %s196, 0
          %s203 = smul.addr %s200, 8
          %s204 = scalar_lea.hbm %s0, %s203
          %s205 = sshll.u32 %s204, 4
          %s206 = int_to_ptr.hbm [resolvable:$true] %s205
          %s207 = sshll.u32 %s199, 4
          %s208 = int_to_ptr.vmem [resolvable:$true] %s207
          %213 = dma.hbm_to_vmem [thread:$0]  %s206, 4096, %s208, %s196, 128, 128, 8
        $region32: #{tpu_custom_call.1} parent=27 // pred_fallthru
          _
      $region28: #{tpu_custom_call.1} parent=5 // pred_fallthru
        _
      %p214 = scmp.le.s32.totalorder 1, %s18
      %p215 = scmp.lt.s32.totalorder %s18, 3
      %p216 = pnand %p214, %p215
      %p217 = pneg %p216
      // Predicated region
      $region33: #{tpu_custom_call.1} parent=5 // pred_check
        _
      $region34: #{tpu_custom_call.1} parent=5 // pred_check_branch
        %219 = sbr.rel (%p216) target = $region36
      $region35: #{tpu_custom_call.1} parent=5 // pred_region
        %s220 = ssub.s32 %s18, 1
        %s221 = sand.u32 %s31, 1
        %s222 = scalar_lea.sflag [#allocation3], %s221
        %s223 = sand.u32 %s31, 1
        %s224 = smul.addr %s223, 256
        %s225 = scalar_lea.vmem [#allocation2], %s224
        // Predicated region
        $region37: #{tpu_custom_call.1} parent=35 // pred_check
          %p226 = pneg %p44
        $region38: #{tpu_custom_call.1} parent=35 // pred_check_branch
          %228 = sbr.rel (%p226) target = $region40
        $region39: #{tpu_custom_call.1} parent=35 // pred_region
          %230 = dma.done %s222, 4096
        $region40: #{tpu_custom_call.1} parent=35 // pred_fallthru
          _
        // Predicated region
        $region41: #{tpu_custom_call.1} parent=35 // pred_check
          %p231 = pneg %p65
        $region42: #{tpu_custom_call.1} parent=35 // pred_check_branch
          %233 = sbr.rel (%p231) target = $region44
        $region43: #{tpu_custom_call.1} parent=35 // pred_region
          %235 = dma.done [#allocation6], 256
        $region44: #{tpu_custom_call.1} parent=35 // pred_fallthru
          _
        // Predicated region
        $region45: #{tpu_custom_call.1} parent=35 // pred_check
          %p236 = pneg %p86
        $region46: #{tpu_custom_call.1} parent=35 // pred_check_branch
          %238 = sbr.rel (%p236) target = $region48
        $region47: #{tpu_custom_call.1} parent=35 // pred_region
          %240 = dma.done [#allocation6], 8192
        $region48: #{tpu_custom_call.1} parent=35 // pred_fallthru
          _
        // Predicated region
        $region49: #{tpu_custom_call.1} parent=35 // pred_check
          %p241 = pneg %p107
        $region50: #{tpu_custom_call.1} parent=35 // pred_check_branch
          %243 = sbr.rel (%p241) target = $region52
        $region51: #{tpu_custom_call.1} parent=35 // pred_region
          %245 = dma.done [#allocation9], 2048
        $region52: #{tpu_custom_call.1} parent=35 // pred_fallthru
          _
        %s246 = sand.u32 %s31, 1
        %s247 = scalar_lea.sflag [#allocation3], %s246
        %s248 = sand.u32 %s31, 1
        %s249 = smul.addr %s248, 256
        %s250 = scalar_lea.vmem [#allocation2], %s249
        %p251 = pneg %p44
        %p252 = pneg %p41
        %p253 = pneg %p65
        %p254 = pneg %p62
        %p255 = pneg %p86
        %p256 = pneg %p83
        %p257 = pneg %p107
        %p258 = pneg %p104
        %p259 = pneg %p133
        %p260 = pneg %p130
        %s261 = sand.u32 %s120, 1
        %s262 = scalar_lea.sflag [#allocation4], %s261
        %s263 = sand.u32 %s120, 1
        %s264 = smul.addr %s263, 256
        %s265 = scalar_lea.vmem [#allocation10], %s264
        %s266 = smul.u32 32, %s23
        %s267 = smul.u32 32, %s23
        %v268 = vld [vmem:[%s225] sm:$0xff]
        %v269 = vld [vmem:[%s225 + $0x8] sm:$0xff]
        %v270 = vld [vmem:[%s225 + $0x10] sm:$0xff]
        %v271 = vld [vmem:[%s225 + $0x18] sm:$0xff]
        %v272 = vld [vmem:[%s225 + $0x20] sm:$0xff]
        %v273 = vld [vmem:[%s225 + $0x28] sm:$0xff]
        %v274 = vld [vmem:[%s225 + $0x30] sm:$0xff]
        %v275 = vld [vmem:[%s225 + $0x38] sm:$0xff]
        %v276 = vld [vmem:[%s225 + $0x40] sm:$0xff]
        %v277 = vld [vmem:[%s225 + $0x48] sm:$0xff]
        %v278 = vld [vmem:[%s225 + $0x50] sm:$0xff]
        %v279 = vld [vmem:[%s225 + $0x58] sm:$0xff]
        %v280 = vld [vmem:[%s225 + $0x60] sm:$0xff]
        %v281 = vld [vmem:[%s225 + $0x68] sm:$0xff]
        %v282 = vld [vmem:[%s225 + $0x70] sm:$0xff]
        %v283 = vld [vmem:[%s225 + $0x78] sm:$0xff]
        %v284 = vld [vmem:[%s225 + $0x80] sm:$0xff]
        %v285 = vld [vmem:[%s225 + $0x88] sm:$0xff]
        %v286 = vld [vmem:[%s225 + $0x90] sm:$0xff]
        %v287 = vld [vmem:[%s225 + $0x98] sm:$0xff]
        %v288 = vld [vmem:[%s225 + $0xa0] sm:$0xff]
        %v289 = vld [vmem:[%s225 + $0xa8] sm:$0xff]
        %v290 = vld [vmem:[%s225 + $0xb0] sm:$0xff]
        %v291 = vld [vmem:[%s225 + $0xb8] sm:$0xff]
        %v292 = vld [vmem:[%s225 + $0xc0] sm:$0xff]
        %v293 = vld [vmem:[%s225 + $0xc8] sm:$0xff]
        %v294 = vld [vmem:[%s225 + $0xd0] sm:$0xff]
        %v295 = vld [vmem:[%s225 + $0xd8] sm:$0xff]
        %v296 = vld [vmem:[%s225 + $0xe0] sm:$0xff]
        %v297 = vld [vmem:[%s225 + $0xe8] sm:$0xff]
        %v298 = vld [vmem:[%s225 + $0xf0] sm:$0xff]
        %v299 = vld [vmem:[%s225 + $0xf8] sm:$0xff]
        %v300 = vld [vmem:[#allocation5] ss:$0 sm:$0xff]
        %v301 = vld [vmem:[#allocation5 + $0x8] ss:$0 sm:$0xff]
        %v302 = vld [vmem:[#allocation5 + $0x1] ss:$0 sm:$0xff]
        %v303 = vld [vmem:[#allocation5 + $0x9] ss:$0 sm:$0xff]
        %v304 = vld [vmem:[#allocation5 + $0x2] ss:$0 sm:$0xff]
        %v305 = vld [vmem:[#allocation5 + $0xa] ss:$0 sm:$0xff]
        %v306 = vld [vmem:[#allocation5 + $0x3] ss:$0 sm:$0xff]
        %v307 = vld [vmem:[#allocation5 + $0xb] ss:$0 sm:$0xff]
        %v308 = vld [vmem:[#allocation5 + $0x4] ss:$0 sm:$0xff]
        %v309 = vld [vmem:[#allocation5 + $0xc] ss:$0 sm:$0xff]
        %s310 = scalar_lea.vmem [#allocation5], 5
        %v311 = vld [vmem:[%s310] ss:$8 sm:$0x3]
        %v312 = vld [vmem:[#allocation7] sm:$0xff]
        %v313 = vld [vmem:[#allocation7 + $0x8] sm:$0xff]
        %v314 = vld [vmem:[#allocation7 + $0x20] sm:$0xff]
        %v315 = vld [vmem:[#allocation7 + $0x28] sm:$0xff]
        %v316 = vld [vmem:[#allocation7 + $0x40] sm:$0xff]
        %v317 = vld [vmem:[#allocation7 + $0x48] sm:$0xff]
        %v318 = vld [vmem:[#allocation7 + $0x60] sm:$0xff]
        %v319 = vld [vmem:[#allocation7 + $0x68] sm:$0xff]
        %v320 = vld [vmem:[#allocation7 + $0x80] sm:$0xff]
        %v321 = vld [vmem:[#allocation7 + $0x88] sm:$0xff]
        %v322 = vld [vmem:[#allocation7 + $0xa0] sm:$0xff]
        %v323 = vld [vmem:[#allocation7 + $0xa8] sm:$0xff]
        %v324 = vld [vmem:[#allocation7 + $0xc0] sm:$0xff]
        %v325 = vld [vmem:[#allocation7 + $0xc8] sm:$0xff]
        %v326 = vld [vmem:[#allocation7 + $0xe0] sm:$0xff]
        %v327 = vld [vmem:[#allocation7 + $0xe8] sm:$0xff]
        %v328 = vld [vmem:[#allocation7 + $0x100] sm:$0xff]
        %v329 = vld [vmem:[#allocation7 + $0x108] sm:$0xff]
        %v330 = vld [vmem:[#allocation7 + $0x120] sm:$0xff]
        %v331 = vld [vmem:[#allocation7 + $0x128] sm:$0xff]
        %v332 = vld [vmem:[#allocation7 + $0x140] sm:$0xff]
        %v333 = vld [vmem:[#allocation7 + $0x148] sm:$0xff]
        %v334 = vld [vmem:[#allocation7 + $0x160] sm:$0xff]
        %v335 = vld [vmem:[#allocation7 + $0x168] sm:$0xff]
        %v336 = vld [vmem:[#allocation7 + $0x180] sm:$0xff]
        %v337 = vld [vmem:[#allocation7 + $0x188] sm:$0xff]
        %v338 = vld [vmem:[#allocation7 + $0x1a0] sm:$0xff]
        %v339 = vld [vmem:[#allocation7 + $0x1a8] sm:$0xff]
        %v340 = vld [vmem:[#allocation7 + $0x1c0] sm:$0xff]
        %v341 = vld [vmem:[#allocation7 + $0x1c8] sm:$0xff]
        %v342 = vld [vmem:[#allocation7 + $0x1e0] sm:$0xff]
        %v343 = vld [vmem:[#allocation7 + $0x1e8] sm:$0xff]
        %v344 = vld [vmem:[#allocation7 + $0x10] sm:$0xff]
        %v345 = vld [vmem:[#allocation7 + $0x30] sm:$0xff]
        %v346 = vld [vmem:[#allocation7 + $0x50] sm:$0xff]
        %v347 = vld [vmem:[#allocation7 + $0x70] sm:$0xff]
        %v348 = vld [vmem:[#allocation7 + $0x90] sm:$0xff]
        %v349 = vld [vmem:[#allocation7 + $0xb0] sm:$0xff]
        %v350 = vld [vmem:[#allocation7 + $0xd0] sm:$0xff]
        %v351 = vld [vmem:[#allocation7 + $0xf0] sm:$0xff]
        %v352 = vld [vmem:[#allocation7 + $0x110] sm:$0xff]
        %v353 = vld [vmem:[#allocation7 + $0x130] sm:$0xff]
        %v354 = vld [vmem:[#allocation7 + $0x150] sm:$0xff]
        %v355 = vld [vmem:[#allocation7 + $0x170] sm:$0xff]
        %v356 = vld [vmem:[#allocation7 + $0x190] sm:$0xff]
        %v357 = vld [vmem:[#allocation7 + $0x1b0] sm:$0xff]
        %v358 = vld [vmem:[#allocation7 + $0x1d0] sm:$0xff]
        %v359 = vld [vmem:[#allocation7 + $0x1f0] sm:$0xff]
        %v360 = vld [vmem:[#allocation7 + $0x18] sm:$0xf]
        %v361 = vld [vmem:[#allocation7 + $0x38] sm:$0xf]
        %v362 = vld [vmem:[#allocation7 + $0x58] sm:$0xf]
        %v363 = vld [vmem:[#allocation7 + $0x78] sm:$0xf]
        %v364 = vld [vmem:[#allocation7 + $0x98] sm:$0xf]
        %v365 = vld [vmem:[#allocation7 + $0xb8] sm:$0xf]
        %v366 = vld [vmem:[#allocation7 + $0xd8] sm:$0xf]
        %v367 = vld [vmem:[#allocation7 + $0xf8] sm:$0xf]
        %v368 = vld [vmem:[#allocation7 + $0x118] sm:$0xf]
        %v369 = vld [vmem:[#allocation7 + $0x138] sm:$0xf]
        %v370 = vld [vmem:[#allocation7 + $0x158] sm:$0xf]
        %v371 = vld [vmem:[#allocation7 + $0x178] sm:$0xf]
        %v372 = vld [vmem:[#allocation7 + $0x198] sm:$0xf]
        %v373 = vld [vmem:[#allocation7 + $0x1b8] sm:$0xf]
        %v374 = vld [vmem:[#allocation7 + $0x1d8] sm:$0xf]
        %v375 = vld [vmem:[#allocation7 + $0x1f8] sm:$0xf]
        %v376 = vld [vmem:[#allocation7 + $0x1c] sm:$0xf]
        %v377 = vld [vmem:[#allocation7 + $0x3c] sm:$0xf]
        %v378 = vld [vmem:[#allocation7 + $0x5c] sm:$0xf]
        %v379 = vld [vmem:[#allocation7 + $0x7c] sm:$0xf]
        %v380 = vld [vmem:[#allocation7 + $0x9c] sm:$0xf]
        %v381 = vld [vmem:[#allocation7 + $0xbc] sm:$0xf]
        %v382 = vld [vmem:[#allocation7 + $0xdc] sm:$0xf]
        %v383 = vld [vmem:[#allocation7 + $0xfc] sm:$0xf]
        %v384 = vld [vmem:[#allocation7 + $0x11c] sm:$0xf]
        %v385 = vld [vmem:[#allocation7 + $0x13c] sm:$0xf]
        %v386 = vld [vmem:[#allocation7 + $0x15c] sm:$0xf]
        %v387 = vld [vmem:[#allocation7 + $0x17c] sm:$0xf]
        %v388 = vld [vmem:[#allocation7 + $0x19c] sm:$0xf]
        %v389 = vld [vmem:[#allocation7 + $0x1bc] sm:$0xf]
        %v390 = vld [vmem:[#allocation7 + $0x1dc] sm:$0xf]
        %v391 = vld [vmem:[#allocation7 + $0x1fc] sm:$0xf]
        %v392 = vmul.f32 %v268, %v268
        %v393 = vmul.f32 %v269, %v269
        %v394 = vmul.f32 %v270, %v270
        %v395 = vmul.f32 %v271, %v271
        %v396 = vmul.f32 %v272, %v272
        %v397 = vmul.f32 %v273, %v273
        %v398 = vmul.f32 %v274, %v274
        %v399 = vmul.f32 %v275, %v275
        %v400 = vmul.f32 %v276, %v276
        %v401 = vmul.f32 %v277, %v277
        %v402 = vmul.f32 %v278, %v278
        %v403 = vmul.f32 %v279, %v279
        %v404 = vmul.f32 %v280, %v280
        %v405 = vmul.f32 %v281, %v281
        %v406 = vmul.f32 %v282, %v282
        %v407 = vmul.f32 %v283, %v283
        %v408 = vmul.f32 %v284, %v284
        %v409 = vmul.f32 %v285, %v285
        %v410 = vmul.f32 %v286, %v286
        %v411 = vmul.f32 %v287, %v287
        %v412 = vmul.f32 %v288, %v288
        %v413 = vmul.f32 %v289, %v289
        %v414 = vmul.f32 %v290, %v290
        %v415 = vmul.f32 %v291, %v291
        %v416 = vmul.f32 %v292, %v292
        %v417 = vmul.f32 %v293, %v293
        %v418 = vmul.f32 %v294, %v294
        %v419 = vmul.f32 %v295, %v295
        %v420 = vmul.f32 %v296, %v296
        %v421 = vmul.f32 %v297, %v297
        %v422 = vmul.f32 %v298, %v298
        %v423 = vmul.f32 %v299, %v299
        %424 = vadd.xlane.f32.xlu0 %v392
        %v425 = vpop.xlane.xlu0 %424
        %426 = vadd.xlane.f32.xlu0 %v393
        %v427 = vpop.xlane.xlu0 %426
        %428 = vadd.xlane.f32.xlu0 %v394
        %v429 = vpop.xlane.xlu0 %428
        %430 = vadd.xlane.f32.xlu0 %v395
        %v431 = vpop.xlane.xlu0 %430
        %432 = vadd.xlane.f32.xlu0 %v396
        %v433 = vpop.xlane.xlu0 %432
        %434 = vadd.xlane.f32.xlu0 %v397
        %v435 = vpop.xlane.xlu0 %434
        %436 = vadd.xlane.f32.xlu0 %v398
        %v437 = vpop.xlane.xlu0 %436
        %438 = vadd.xlane.f32.xlu0 %v399
        %v439 = vpop.xlane.xlu0 %438
        %440 = vadd.xlane.f32.xlu0 %v400
        %v441 = vpop.xlane.xlu0 %440
        %442 = vadd.xlane.f32.xlu0 %v401
        %v443 = vpop.xlane.xlu0 %442
        %444 = vadd.xlane.f32.xlu0 %v402
        %v445 = vpop.xlane.xlu0 %444
        %446 = vadd.xlane.f32.xlu0 %v403
        %v447 = vpop.xlane.xlu0 %446
        %448 = vadd.xlane.f32.xlu0 %v404
        %v449 = vpop.xlane.xlu0 %448
        %450 = vadd.xlane.f32.xlu0 %v405
        %v451 = vpop.xlane.xlu0 %450
        %452 = vadd.xlane.f32.xlu0 %v406
        %v453 = vpop.xlane.xlu0 %452
        %454 = vadd.xlane.f32.xlu0 %v407
        %v455 = vpop.xlane.xlu0 %454
        %456 = vadd.xlane.f32.xlu0 %v408
        %v457 = vpop.xlane.xlu0 %456
        %458 = vadd.xlane.f32.xlu0 %v409
        %v459 = vpop.xlane.xlu0 %458
        %460 = vadd.xlane.f32.xlu0 %v410
        %v461 = vpop.xlane.xlu0 %460
        %462 = vadd.xlane.f32.xlu0 %v411
        %v463 = vpop.xlane.xlu0 %462
        %464 = vadd.xlane.f32.xlu0 %v412
        %v465 = vpop.xlane.xlu0 %464
        %466 = vadd.xlane.f32.xlu0 %v413
        %v467 = vpop.xlane.xlu0 %466
        %468 = vadd.xlane.f32.xlu0 %v414
        %v469 = vpop.xlane.xlu0 %468
        %470 = vadd.xlane.f32.xlu0 %v415
        %v471 = vpop.xlane.xlu0 %470
        %472 = vadd.xlane.f32.xlu0 %v416
        %v473 = vpop.xlane.xlu0 %472
        %474 = vadd.xlane.f32.xlu0 %v417
        %v475 = vpop.xlane.xlu0 %474
        %476 = vadd.xlane.f32.xlu0 %v418
        %v477 = vpop.xlane.xlu0 %476
        %478 = vadd.xlane.f32.xlu0 %v419
        %v479 = vpop.xlane.xlu0 %478
        %480 = vadd.xlane.f32.xlu0 %v420
        %v481 = vpop.xlane.xlu0 %480
        %482 = vadd.xlane.f32.xlu0 %v421
        %v483 = vpop.xlane.xlu0 %482
        %484 = vadd.xlane.f32.xlu0 %v422
        %v485 = vpop.xlane.xlu0 %484
        %486 = vadd.xlane.f32.xlu0 %v423
        %v487 = vpop.xlane.xlu0 %486
        %v488 = vmul.f32 %v308, %v268
        %v489 = vmul.f32 %v308, %v269
        %v490 = vmul.f32 %v308, %v270
        %v491 = vmul.f32 %v308, %v271
        %v492 = vmul.f32 %v308, %v272
        %v493 = vmul.f32 %v308, %v273
        %v494 = vmul.f32 %v308, %v274
        %v495 = vmul.f32 %v308, %v275
        %v496 = vmul.f32 %v308, %v276
        %v497 = vmul.f32 %v308, %v277
        %v498 = vmul.f32 %v308, %v278
        %v499 = vmul.f32 %v308, %v279
        %v500 = vmul.f32 %v308, %v280
        %v501 = vmul.f32 %v308, %v281
        %v502 = vmul.f32 %v308, %v282
        %v503 = vmul.f32 %v308, %v283
        %v504 = vmul.f32 %v308, %v284
        %v505 = vmul.f32 %v308, %v285
        %v506 = vmul.f32 %v308, %v286
        %v507 = vmul.f32 %v308, %v287
        %v508 = vmul.f32 %v308, %v288
        %v509 = vmul.f32 %v308, %v289
        %v510 = vmul.f32 %v308, %v290
        %v511 = vmul.f32 %v308, %v291
        %v512 = vmul.f32 %v308, %v292
        %v513 = vmul.f32 %v308, %v293
        %v514 = vmul.f32 %v308, %v294
        %v515 = vmul.f32 %v308, %v295
        %v516 = vmul.f32 %v308, %v296
        %v517 = vmul.f32 %v308, %v297
        %v518 = vmul.f32 %v308, %v298
        %v519 = vmul.f32 %v308, %v299
        %v520 = vadd.f32 %v425, 1e-06
        %v521 = vadd.f32 %v427, 1e-06
        %v522 = vadd.f32 %v429, 1e-06
        %v523 = vadd.f32 %v431, 1e-06
        %v524 = vadd.f32 %v433, 1e-06
        %v525 = vadd.f32 %v435, 1e-06
        %v526 = vadd.f32 %v437, 1e-06
        %v527 = vadd.f32 %v439, 1e-06
        %v528 = vadd.f32 %v441, 1e-06
        %v529 = vadd.f32 %v443, 1e-06
        %v530 = vadd.f32 %v445, 1e-06
        %v531 = vadd.f32 %v447, 1e-06
        %v532 = vadd.f32 %v449, 1e-06
        %v533 = vadd.f32 %v451, 1e-06
        %v534 = vadd.f32 %v453, 1e-06
        %v535 = vadd.f32 %v455, 1e-06
        %v536 = vadd.f32 %v457, 1e-06
        %v537 = vadd.f32 %v459, 1e-06
        %v538 = vadd.f32 %v461, 1e-06
        %v539 = vadd.f32 %v463, 1e-06
        %v540 = vadd.f32 %v465, 1e-06
        %v541 = vadd.f32 %v467, 1e-06
        %v542 = vadd.f32 %v469, 1e-06
        %v543 = vadd.f32 %v471, 1e-06
        %v544 = vadd.f32 %v473, 1e-06
        %v545 = vadd.f32 %v475, 1e-06
        %v546 = vadd.f32 %v477, 1e-06
        %v547 = vadd.f32 %v479, 1e-06
        %v548 = vadd.f32 %v481, 1e-06
        %v549 = vadd.f32 %v483, 1e-06
        %v550 = vadd.f32 %v485, 1e-06
        %v551 = vadd.f32 %v487, 1e-06
        %v552 = vrsqrt.pop %v520
        %v553 = vmul.f32 %v552, %v520
        %v554 = vmul.f32 %v553, %v552
        %v555 = vmul.f32 0.5, %v554
        %v556 = vsub.f32 1.5, %v555
        %v557 = vmul.f32 %v552, %v556
        %vm558 = vweird.f32 %v520
        %vm559 = vweird.f32 %v552
        %vm560 = vmor %vm558, %vm559
        %v561 = vsel %vm560, %v552, %v557
        %v562 = vrsqrt.pop %v521
        %v563 = vmul.f32 %v562, %v521
        %v564 = vmul.f32 %v563, %v562
        %v565 = vmul.f32 0.5, %v564
        %v566 = vsub.f32 1.5, %v565
        %v567 = vmul.f32 %v562, %v566
        %vm568 = vweird.f32 %v521
        %vm569 = vweird.f32 %v562
        %vm570 = vmor %vm568, %vm569
        %v571 = vsel %vm570, %v562, %v567
        %v572 = vrsqrt.pop %v522
        %v573 = vmul.f32 %v572, %v522
        %v574 = vmul.f32 %v573, %v572
        %v575 = vmul.f32 0.5, %v574
        %v576 = vsub.f32 1.5, %v575
        %v577 = vmul.f32 %v572, %v576
        %vm578 = vweird.f32 %v522
        %vm579 = vweird.f32 %v572
        %vm580 = vmor %vm578, %vm579
        %v581 = vsel %vm580, %v572, %v577
        %v582 = vrsqrt.pop %v523
        %v583 = vmul.f32 %v582, %v523
        %v584 = vmul.f32 %v583, %v582
        %v585 = vmul.f32 0.5, %v584
        %v586 = vsub.f32 1.5, %v585
        %v587 = vmul.f32 %v582, %v586
        %vm588 = vweird.f32 %v523
        %vm589 = vweird.f32 %v582
        %vm590 = vmor %vm588, %vm589
        %v591 = vsel %vm590, %v582, %v587
        %v592 = vrsqrt.pop %v524
        %v593 = vmul.f32 %v592, %v524
        %v594 = vmul.f32 %v593, %v592
        %v595 = vmul.f32 0.5, %v594
        %v596 = vsub.f32 1.5, %v595
        %v597 = vmul.f32 %v592, %v596
        %vm598 = vweird.f32 %v524
        %vm599 = vweird.f32 %v592
        %vm600 = vmor %vm598, %vm599
        %v601 = vsel %vm600, %v592, %v597
        %v602 = vrsqrt.pop %v525
        %v603 = vmul.f32 %v602, %v525
        %v604 = vmul.f32 %v603, %v602
        %v605 = vmul.f32 0.5, %v604
        %v606 = vsub.f32 1.5, %v605
        %v607 = vmul.f32 %v602, %v606
        %vm608 = vweird.f32 %v525
        %vm609 = vweird.f32 %v602
        %vm610 = vmor %vm608, %vm609
        %v611 = vsel %vm610, %v602, %v607
        %v612 = vrsqrt.pop %v526
        %v613 = vmul.f32 %v612, %v526
        %v614 = vmul.f32 %v613, %v612
        %v615 = vmul.f32 0.5, %v614
        %v616 = vsub.f32 1.5, %v615
        %v617 = vmul.f32 %v612, %v616
        %vm618 = vweird.f32 %v526
        %vm619 = vweird.f32 %v612
        %vm620 = vmor %vm618, %vm619
        %v621 = vsel %vm620, %v612, %v617
        %v622 = vrsqrt.pop %v527
        %v623 = vmul.f32 %v622, %v527
        %v624 = vmul.f32 %v623, %v622
        %v625 = vmul.f32 0.5, %v624
        %v626 = vsub.f32 1.5, %v625
        %v627 = vmul.f32 %v622, %v626
        %vm628 = vweird.f32 %v527
        %vm629 = vweird.f32 %v622
        %vm630 = vmor %vm628, %vm629
        %v631 = vsel %vm630, %v622, %v627
        %v632 = vrsqrt.pop %v528
        %v633 = vmul.f32 %v632, %v528
        %v634 = vmul.f32 %v633, %v632
        %v635 = vmul.f32 0.5, %v634
        %v636 = vsub.f32 1.5, %v635
        %v637 = vmul.f32 %v632, %v636
        %vm638 = vweird.f32 %v528
        %vm639 = vweird.f32 %v632
        %vm640 = vmor %vm638, %vm639
        %v641 = vsel %vm640, %v632, %v637
        %v642 = vrsqrt.pop %v529
        %v643 = vmul.f32 %v642, %v529
        %v644 = vmul.f32 %v643, %v642
        %v645 = vmul.f32 0.5, %v644
        %v646 = vsub.f32 1.5, %v645
        %v647 = vmul.f32 %v642, %v646
        %vm648 = vweird.f32 %v529
        %vm649 = vweird.f32 %v642
        %vm650 = vmor %vm648, %vm649
        %v651 = vsel %vm650, %v642, %v647
        %v652 = vrsqrt.pop %v530
        %v653 = vmul.f32 %v652, %v530
        %v654 = vmul.f32 %v653, %v652
        %v655 = vmul.f32 0.5, %v654
        %v656 = vsub.f32 1.5, %v655
        %v657 = vmul.f32 %v652, %v656
        %vm658 = vweird.f32 %v530
        %vm659 = vweird.f32 %v652
        %vm660 = vmor %vm658, %vm659
        %v661 = vsel %vm660, %v652, %v657
        %v662 = vrsqrt.pop %v531
        %v663 = vmul.f32 %v662, %v531
        %v664 = vmul.f32 %v663, %v662
        %v665 = vmul.f32 0.5, %v664
        %v666 = vsub.f32 1.5, %v665
        %v667 = vmul.f32 %v662, %v666
        %vm668 = vweird.f32 %v531
        %vm669 = vweird.f32 %v662
        %vm670 = vmor %vm668, %vm669
        %v671 = vsel %vm670, %v662, %v667
        %v672 = vrsqrt.pop %v532
        %v673 = vmul.f32 %v672, %v532
        %v674 = vmul.f32 %v673, %v672
        %v675 = vmul.f32 0.5, %v674
        %v676 = vsub.f32 1.5, %v675
        %v677 = vmul.f32 %v672, %v676
        %vm678 = vweird.f32 %v532
        %vm679 = vweird.f32 %v672
        %vm680 = vmor %vm678, %vm679
        %v681 = vsel %vm680, %v672, %v677
        %v682 = vrsqrt.pop %v533
        %v683 = vmul.f32 %v682, %v533
        %v684 = vmul.f32 %v683, %v682
        %v685 = vmul.f32 0.5, %v684
        %v686 = vsub.f32 1.5, %v685
        %v687 = vmul.f32 %v682, %v686
        %vm688 = vweird.f32 %v533
        %vm689 = vweird.f32 %v682
        %vm690 = vmor %vm688, %vm689
        %v691 = vsel %vm690, %v682, %v687
        %v692 = vrsqrt.pop %v534
        %v693 = vmul.f32 %v692, %v534
        %v694 = vmul.f32 %v693, %v692
        %v695 = vmul.f32 0.5, %v694
        %v696 = vsub.f32 1.5, %v695
        %v697 = vmul.f32 %v692, %v696
        %vm698 = vweird.f32 %v534
        %vm699 = vweird.f32 %v692
        %vm700 = vmor %vm698, %vm699
        %v701 = vsel %vm700, %v692, %v697
        %v702 = vrsqrt.pop %v535
        %v703 = vmul.f32 %v702, %v535
        %v704 = vmul.f32 %v703, %v702
        %v705 = vmul.f32 0.5, %v704
        %v706 = vsub.f32 1.5, %v705
        %v707 = vmul.f32 %v702, %v706
        %vm708 = vweird.f32 %v535
        %vm709 = vweird.f32 %v702
        %vm710 = vmor %vm708, %vm709
        %v711 = vsel %vm710, %v702, %v707
        %v712 = vrsqrt.pop %v536
        %v713 = vmul.f32 %v712, %v536
        %v714 = vmul.f32 %v713, %v712
        %v715 = vmul.f32 0.5, %v714
        %v716 = vsub.f32 1.5, %v715
        %v717 = vmul.f32 %v712, %v716
        %vm718 = vweird.f32 %v536
        %vm719 = vweird.f32 %v712
        %vm720 = vmor %vm718, %vm719
        %v721 = vsel %vm720, %v712, %v717
        %v722 = vrsqrt.pop %v537
        %v723 = vmul.f32 %v722, %v537
        %v724 = vmul.f32 %v723, %v722
        %v725 = vmul.f32 0.5, %v724
        %v726 = vsub.f32 1.5, %v725
        %v727 = vmul.f32 %v722, %v726
        %vm728 = vweird.f32 %v537
        %vm729 = vweird.f32 %v722
        %vm730 = vmor %vm728, %vm729
        %v731 = vsel %vm730, %v722, %v727
        %v732 = vrsqrt.pop %v538
        %v733 = vmul.f32 %v732, %v538
        %v734 = vmul.f32 %v733, %v732
        %v735 = vmul.f32 0.5, %v734
        %v736 = vsub.f32 1.5, %v735
        %v737 = vmul.f32 %v732, %v736
        %vm738 = vweird.f32 %v538
        %vm739 = vweird.f32 %v732
        %vm740 = vmor %vm738, %vm739
        %v741 = vsel %vm740, %v732, %v737
        %v742 = vrsqrt.pop %v539
        %v743 = vmul.f32 %v742, %v539
        %v744 = vmul.f32 %v743, %v742
        %v745 = vmul.f32 0.5, %v744
        %v746 = vsub.f32 1.5, %v745
        %v747 = vmul.f32 %v742, %v746
        %vm748 = vweird.f32 %v539
        %vm749 = vweird.f32 %v742
        %vm750 = vmor %vm748, %vm749
        %v751 = vsel %vm750, %v742, %v747
        %v752 = vrsqrt.pop %v540
        %v753 = vmul.f32 %v752, %v540
        %v754 = vmul.f32 %v753, %v752
        %v755 = vmul.f32 0.5, %v754
        %v756 = vsub.f32 1.5, %v755
        %v757 = vmul.f32 %v752, %v756
        %vm758 = vweird.f32 %v540
        %vm759 = vweird.f32 %v752
        %vm760 = vmor %vm758, %vm759
        %v761 = vsel %vm760, %v752, %v757
        %v762 = vrsqrt.pop %v541
        %v763 = vmul.f32 %v762, %v541
        %v764 = vmul.f32 %v763, %v762
        %v765 = vmul.f32 0.5, %v764
        %v766 = vsub.f32 1.5, %v765
        %v767 = vmul.f32 %v762, %v766
        %vm768 = vweird.f32 %v541
        %vm769 = vweird.f32 %v762
        %vm770 = vmor %vm768, %vm769
        %v771 = vsel %vm770, %v762, %v767
        %v772 = vrsqrt.pop %v542
        %v773 = vmul.f32 %v772, %v542
        %v774 = vmul.f32 %v773, %v772
        %v775 = vmul.f32 0.5, %v774
        %v776 = vsub.f32 1.5, %v775
        %v777 = vmul.f32 %v772, %v776
        %vm778 = vweird.f32 %v542
        %vm779 = vweird.f32 %v772
        %vm780 = vmor %vm778, %vm779
        %v781 = vsel %vm780, %v772, %v777
        %v782 = vrsqrt.pop %v543
        %v783 = vmul.f32 %v782, %v543
        %v784 = vmul.f32 %v783, %v782
        %v785 = vmul.f32 0.5, %v784
        %v786 = vsub.f32 1.5, %v785
        %v787 = vmul.f32 %v782, %v786
        %vm788 = vweird.f32 %v543
        %vm789 = vweird.f32 %v782
        %vm790 = vmor %vm788, %vm789
        %v791 = vsel %vm790, %v782, %v787
        %v792 = vrsqrt.pop %v544
        %v793 = vmul.f32 %v792, %v544
        %v794 = vmul.f32 %v793, %v792
        %v795 = vmul.f32 0.5, %v794
        %v796 = vsub.f32 1.5, %v795
        %v797 = vmul.f32 %v792, %v796
        %vm798 = vweird.f32 %v544
        %vm799 = vweird.f32 %v792
        %vm800 = vmor %vm798, %vm799
        %v801 = vsel %vm800, %v792, %v797
        %v802 = vrsqrt.pop %v545
        %v803 = vmul.f32 %v802, %v545
        %v804 = vmul.f32 %v803, %v802
        %v805 = vmul.f32 0.5, %v804
        %v806 = vsub.f32 1.5, %v805
        %v807 = vmul.f32 %v802, %v806
        %vm808 = vweird.f32 %v545
        %vm809 = vweird.f32 %v802
        %vm810 = vmor %vm808, %vm809
        %v811 = vsel %vm810, %v802, %v807
        %v812 = vrsqrt.pop %v546
        %v813 = vmul.f32 %v812, %v546
        %v814 = vmul.f32 %v813, %v812
        %v815 = vmul.f32 0.5, %v814
        %v816 = vsub.f32 1.5, %v815
        %v817 = vmul.f32 %v812, %v816
        %vm818 = vweird.f32 %v546
        %vm819 = vweird.f32 %v812
        %vm820 = vmor %vm818, %vm819
        %v821 = vsel %vm820, %v812, %v817
        %v822 = vrsqrt.pop %v547
        %v823 = vmul.f32 %v822, %v547
        %v824 = vmul.f32 %v823, %v822
        %v825 = vmul.f32 0.5, %v824
        %v826 = vsub.f32 1.5, %v825
        %v827 = vmul.f32 %v822, %v826
        %vm828 = vweird.f32 %v547
        %vm829 = vweird.f32 %v822
        %vm830 = vmor %vm828, %vm829
        %v831 = vsel %vm830, %v822, %v827
        %v832 = vrsqrt.pop %v548
        %v833 = vmul.f32 %v832, %v548
        %v834 = vmul.f32 %v833, %v832
        %v835 = vmul.f32 0.5, %v834
        %v836 = vsub.f32 1.5, %v835
        %v837 = vmul.f32 %v832, %v836
        %vm838 = vweird.f32 %v548
        %vm839 = vweird.f32 %v832
        %vm840 = vmor %vm838, %vm839
        %v841 = vsel %vm840, %v832, %v837
        %v842 = vrsqrt.pop %v549
        %v843 = vmul.f32 %v842, %v549
        %v844 = vmul.f32 %v843, %v842
        %v845 = vmul.f32 0.5, %v844
        %v846 = vsub.f32 1.5, %v845
        %v847 = vmul.f32 %v842, %v846
        %vm848 = vweird.f32 %v549
        %vm849 = vweird.f32 %v842
        %vm850 = vmor %vm848, %vm849
        %v851 = vsel %vm850, %v842, %v847
        %v852 = vrsqrt.pop %v550
        %v853 = vmul.f32 %v852, %v550
        %v854 = vmul.f32 %v853, %v852
        %v855 = vmul.f32 0.5, %v854
        %v856 = vsub.f32 1.5, %v855
        %v857 = vmul.f32 %v852, %v856
        %vm858 = vweird.f32 %v550
        %vm859 = vweird.f32 %v852
        %vm860 = vmor %vm858, %vm859
        %v861 = vsel %vm860, %v852, %v857
        %v862 = vrsqrt.pop %v551
        %v863 = vmul.f32 %v862, %v551
        %v864 = vmul.f32 %v863, %v862
        %v865 = vmul.f32 0.5, %v864
        %v866 = vsub.f32 1.5, %v865
        %v867 = vmul.f32 %v862, %v866
        %vm868 = vweird.f32 %v551
        %vm869 = vweird.f32 %v862
        %vm870 = vmor %vm868, %vm869
        %v871 = vsel %vm870, %v862, %v867
        %v872 = vmul.f32 %v488, %v561
        %v873 = vmul.f32 %v489, %v571
        %v874 = vmul.f32 %v490, %v581
        %v875 = vmul.f32 %v491, %v591
        %v876 = vmul.f32 %v492, %v601
        %v877 = vmul.f32 %v493, %v611
        %v878 = vmul.f32 %v494, %v621
        %v879 = vmul.f32 %v495, %v631
        %v880 = vmul.f32 %v496, %v641
        %v881 = vmul.f32 %v497, %v651
        %v882 = vmul.f32 %v498, %v661
        %v883 = vmul.f32 %v499, %v671
        %v884 = vmul.f32 %v500, %v681
        %v885 = vmul.f32 %v501, %v691
        %v886 = vmul.f32 %v502, %v701
        %v887 = vmul.f32 %v503, %v711
        %v888 = vmul.f32 %v504, %v721
        %v889 = vmul.f32 %v505, %v731
        %v890 = vmul.f32 %v506, %v741
        %v891 = vmul.f32 %v507, %v751
        %v892 = vmul.f32 %v508, %v761
        %v893 = vmul.f32 %v509, %v771
        %v894 = vmul.f32 %v510, %v781
        %v895 = vmul.f32 %v511, %v791
        %v896 = vmul.f32 %v512, %v801
        %v897 = vmul.f32 %v513, %v811
        %v898 = vmul.f32 %v514, %v821
        %v899 = vmul.f32 %v515, %v831
        %v900 = vmul.f32 %v516, %v841
        %v901 = vmul.f32 %v517, %v851
        %v902 = vmul.f32 %v518, %v861
        %v903 = vmul.f32 %v519, %v871
        %v904 = vpack.c.bf16 %v873, %v872
        %v905 = vpack.c.bf16 %v875, %v874
        %v906 = vpack.c.bf16 %v877, %v876
        %v907 = vpack.c.bf16 %v879, %v878
        %v908 = vpack.c.bf16 %v881, %v880
        %v909 = vpack.c.bf16 %v883, %v882
        %v910 = vpack.c.bf16 %v885, %v884
        %v911 = vpack.c.bf16 %v887, %v886
        %v912 = vpack.c.bf16 %v889, %v888
        %v913 = vpack.c.bf16 %v891, %v890
        %v914 = vpack.c.bf16 %v893, %v892
        %v915 = vpack.c.bf16 %v895, %v894
        %v916 = vpack.c.bf16 %v897, %v896
        %v917 = vpack.c.bf16 %v899, %v898
        %v918 = vpack.c.bf16 %v901, %v900
        %v919 = vpack.c.bf16 %v903, %v902
        %v952 = vunpack.c.l.b16 %v312
        %v953 = vunpack.c.h.b16 %v312
        %v954 = vunpack.c.l.b16 %v313
        %v955 = vunpack.c.h.b16 %v313
        %v956 = vunpack.c.l.b16 %v314
        %v957 = vunpack.c.h.b16 %v314
        %v958 = vunpack.c.l.b16 %v315
        %v959 = vunpack.c.h.b16 %v315
        %v960 = vunpack.c.l.b16 %v316
        %v961 = vunpack.c.h.b16 %v316
        %v962 = vunpack.c.l.b16 %v317
        %v963 = vunpack.c.h.b16 %v317
        %v964 = vunpack.c.l.b16 %v318
        %v965 = vunpack.c.h.b16 %v318
        %v966 = vunpack.c.l.b16 %v319
        %v967 = vunpack.c.h.b16 %v319
        %v968 = vunpack.c.l.b16 %v320
        %v969 = vunpack.c.h.b16 %v320
        %v970 = vunpack.c.l.b16 %v321
        %v971 = vunpack.c.h.b16 %v321
        %v972 = vunpack.c.l.b16 %v322
        %v973 = vunpack.c.h.b16 %v322
        %v974 = vunpack.c.l.b16 %v323
        %v975 = vunpack.c.h.b16 %v323
        %v976 = vunpack.c.l.b16 %v324
        %v977 = vunpack.c.h.b16 %v324
        %v978 = vunpack.c.l.b16 %v325
        %v979 = vunpack.c.h.b16 %v325
        %v980 = vunpack.c.l.b16 %v326
        %v981 = vunpack.c.h.b16 %v326
        %v982 = vunpack.c.l.b16 %v327
        %v983 = vunpack.c.h.b16 %v327
        %v984 = vunpack.c.l.b16 %v328
        %v985 = vunpack.c.h.b16 %v328
        %v986 = vunpack.c.l.b16 %v329
        %v987 = vunpack.c.h.b16 %v329
        %v988 = vunpack.c.l.b16 %v330
        %v989 = vunpack.c.h.b16 %v330
        %v990 = vunpack.c.l.b16 %v331
        %v991 = vunpack.c.h.b16 %v331
        %v992 = vunpack.c.l.b16 %v332
        %v993 = vunpack.c.h.b16 %v332
        %v994 = vunpack.c.l.b16 %v333
        %v995 = vunpack.c.h.b16 %v333
        %v996 = vunpack.c.l.b16 %v334
        %v997 = vunpack.c.h.b16 %v334
        %v998 = vunpack.c.l.b16 %v335
        %v999 = vunpack.c.h.b16 %v335
        %v1000 = vunpack.c.l.b16 %v336
        %v1001 = vunpack.c.h.b16 %v336
        %v1002 = vunpack.c.l.b16 %v337
        %v1003 = vunpack.c.h.b16 %v337
        %v1004 = vunpack.c.l.b16 %v338
        %v1005 = vunpack.c.h.b16 %v338
        %v1006 = vunpack.c.l.b16 %v339
        %v1007 = vunpack.c.h.b16 %v339
        %v1008 = vunpack.c.l.b16 %v340
        %v1009 = vunpack.c.h.b16 %v340
        %v1010 = vunpack.c.l.b16 %v341
        %v1011 = vunpack.c.h.b16 %v341
        %v1012 = vunpack.c.l.b16 %v342
        %v1013 = vunpack.c.h.b16 %v342
        %v1014 = vunpack.c.l.b16 %v343
        %v1015 = vunpack.c.h.b16 %v343
        %v1016 = vpack.c.b16 %v956, %v952
        %v1017 = vpack.c.b16 %v957, %v953
        %v1018 = vpack.c.b16 %v958, %v954
        %v1019 = vpack.c.b16 %v959, %v955
        %v1020 = vpack.c.b16 %v964, %v960
        %v1021 = vpack.c.b16 %v965, %v961
        %v1022 = vpack.c.b16 %v966, %v962
        %v1023 = vpack.c.b16 %v967, %v963
        %v1024 = vpack.c.b16 %v972, %v968
        %v1025 = vpack.c.b16 %v973, %v969
        %v1026 = vpack.c.b16 %v974, %v970
        %v1027 = vpack.c.b16 %v975, %v971
        %v1028 = vpack.c.b16 %v980, %v976
        %v1029 = vpack.c.b16 %v981, %v977
        %v1030 = vpack.c.b16 %v982, %v978
        %v1031 = vpack.c.b16 %v983, %v979
        %v1032 = vpack.c.b16 %v988, %v984
        %v1033 = vpack.c.b16 %v989, %v985
        %v1034 = vpack.c.b16 %v990, %v986
        %v1035 = vpack.c.b16 %v991, %v987
        %v1036 = vpack.c.b16 %v996, %v992
        %v1037 = vpack.c.b16 %v997, %v993
        %v1038 = vpack.c.b16 %v998, %v994
        %v1039 = vpack.c.b16 %v999, %v995
        %v1040 = vpack.c.b16 %v1004, %v1000
        %v1041 = vpack.c.b16 %v1005, %v1001
        %v1042 = vpack.c.b16 %v1006, %v1002
        %v1043 = vpack.c.b16 %v1007, %v1003
        %v1044 = vpack.c.b16 %v1012, %v1008
        %v1045 = vpack.c.b16 %v1013, %v1009
        %v1046 = vpack.c.b16 %v1014, %v1010
        %v1047 = vpack.c.b16 %v1015, %v1011
        %1080 = vmatpush.bf16.msra.mxu0 %v1044
        %1081 = vmatpush.bf16.msra.mxu0 %v1040
        %1082 = vmatpush.bf16.msra.mxu0 %v1036
        %1083 = vmatpush.bf16.msra.mxu0 %v1032
        %1084 = vmatpush.bf16.msra.mxu0 %v1028
        %1085 = vmatpush.bf16.msra.mxu0 %v1024
        %1086 = vmatpush.bf16.msra.mxu0 %v1020
        %1087 = vmatpush.bf16.msra.mxu0 %v1016
        %1088 = vmatmul.bf16.gmra.mxu0 %v904
        %v1089 = vpop.f32.mrf.mxu0
        %v1090 = vadd.f32 0.0, %v1089
        %v1091 = vpop.f32.mrf.mxu0
        %v1092 = vadd.f32 0.0, %v1091
        %1093 = vmatmul.bf16.gmra.mxu0 %v905
        %v1094 = vpop.f32.mrf.mxu0
        %v1095 = vadd.f32 0.0, %v1094
        %v1096 = vpop.f32.mrf.mxu0
        %v1097 = vadd.f32 0.0, %v1096
        %1098 = vmatmul.bf16.gmra.mxu0 %v906
        %v1099 = vpop.f32.mrf.mxu0
        %v1100 = vadd.f32 0.0, %v1099
        %v1101 = vpop.f32.mrf.mxu0
        %v1102 = vadd.f32 0.0, %v1101
        %1103 = vmatmul.bf16.gmra.mxu0 %v907
        %v1104 = vpop.f32.mrf.mxu0
        %v1105 = vadd.f32 0.0, %v1104
        %v1106 = vpop.f32.mrf.mxu0
        %v1107 = vadd.f32 0.0, %v1106
        %1108 = vmatmul.bf16.gmra.mxu0 %v908
        %v1109 = vpop.f32.mrf.mxu0
        %v1110 = vadd.f32 0.0, %v1109
        %v1111 = vpop.f32.mrf.mxu0
        %v1112 = vadd.f32 0.0, %v1111
        %1113 = vmatmul.bf16.gmra.mxu0 %v909
        %v1114 = vpop.f32.mrf.mxu0
        %v1115 = vadd.f32 0.0, %v1114
        %v1116 = vpop.f32.mrf.mxu0
        %v1117 = vadd.f32 0.0, %v1116
        %1118 = vmatmul.bf16.gmra.mxu0 %v910
        %v1119 = vpop.f32.mrf.mxu0
        %v1120 = vadd.f32 0.0, %v1119
        %v1121 = vpop.f32.mrf.mxu0
        %v1122 = vadd.f32 0.0, %v1121
        %1123 = vmatmul.bf16.gmra.mxu0 %v911
        %v1124 = vpop.f32.mrf.mxu0
        %v1125 = vadd.f32 0.0, %v1124
        %v1126 = vpop.f32.mrf.mxu0
        %v1127 = vadd.f32 0.0, %v1126
        %1128 = vmatmul.bf16.gmra.mxu0 %v912
        %v1129 = vpop.f32.mrf.mxu0
        %v1130 = vadd.f32 0.0, %v1129
        %v1131 = vpop.f32.mrf.mxu0
        %v1132 = vadd.f32 0.0, %v1131
        %1133 = vmatmul.bf16.gmra.mxu0 %v913
        %v1134 = vpop.f32.mrf.mxu0
        %v1135 = vadd.f32 0.0, %v1134
        %v1136 = vpop.f32.mrf.mxu0
        %v1137 = vadd.f32 0.0, %v1136
        %1138 = vmatmul.bf16.gmra.mxu0 %v914
        %v1139 = vpop.f32.mrf.mxu0
        %v1140 = vadd.f32 0.0, %v1139
        %v1141 = vpop.f32.mrf.mxu0
        %v1142 = vadd.f32 0.0, %v1141
        %1143 = vmatmul.bf16.gmra.mxu0 %v915
        %v1144 = vpop.f32.mrf.mxu0
        %v1145 = vadd.f32 0.0, %v1144
        %v1146 = vpop.f32.mrf.mxu0
        %v1147 = vadd.f32 0.0, %v1146
        %1148 = vmatmul.bf16.gmra.mxu0 %v916
        %v1149 = vpop.f32.mrf.mxu0
        %v1150 = vadd.f32 0.0, %v1149
        %v1151 = vpop.f32.mrf.mxu0
        %v1152 = vadd.f32 0.0, %v1151
        %1153 = vmatmul.bf16.gmra.mxu0 %v917
        %v1154 = vpop.f32.mrf.mxu0
        %v1155 = vadd.f32 0.0, %v1154
        %v1156 = vpop.f32.mrf.mxu0
        %v1157 = vadd.f32 0.0, %v1156
        %1158 = vmatmul.bf16.gmra.mxu0 %v918
        %v1159 = vpop.f32.mrf.mxu0
        %v1160 = vadd.f32 0.0, %v1159
        %v1161 = vpop.f32.mrf.mxu0
        %v1162 = vadd.f32 0.0, %v1161
        %1163 = vmatmul.bf16.gmra.mxu0 %v919
        %v1164 = vpop.f32.mrf.mxu0
        %v1165 = vadd.f32 0.0, %v1164
        %v1166 = vpop.f32.mrf.mxu0
        %v1167 = vadd.f32 0.0, %v1166
        %1168 = vdwg.mxu0
        %1169 = vmatpush.bf16.msra.mxu0 %v1045
        %1170 = vmatpush.bf16.msra.mxu0 %v1041
        %1171 = vmatpush.bf16.msra.mxu0 %v1037
        %1172 = vmatpush.bf16.msra.mxu0 %v1033
        %1173 = vmatpush.bf16.msra.mxu0 %v1029
        %1174 = vmatpush.bf16.msra.mxu0 %v1025
        %1175 = vmatpush.bf16.msra.mxu0 %v1021
        %1176 = vmatpush.bf16.msra.mxu0 %v1017
        %1177 = vmatmul.bf16.gmra.mxu0 %v904
        %v1178 = vpop.f32.mrf.mxu0
        %v1179 = vadd.f32 0.0, %v1178
        %v1180 = vpop.f32.mrf.mxu0
        %v1181 = vadd.f32 0.0, %v1180
        %1182 = vmatmul.bf16.gmra.mxu0 %v905
        %v1183 = vpop.f32.mrf.mxu0
        %v1184 = vadd.f32 0.0, %v1183
        %v1185 = vpop.f32.mrf.mxu0
        %v1186 = vadd.f32 0.0, %v1185
        %1187 = vmatmul.bf16.gmra.mxu0 %v906
        %v1188 = vpop.f32.mrf.mxu0
        %v1189 = vadd.f32 0.0, %v1188
        %v1190 = vpop.f32.mrf.mxu0
        %v1191 = vadd.f32 0.0, %v1190
        %1192 = vmatmul.bf16.gmra.mxu0 %v907
        %v1193 = vpop.f32.mrf.mxu0
        %v1194 = vadd.f32 0.0, %v1193
        %v1195 = vpop.f32.mrf.mxu0
        %v1196 = vadd.f32 0.0, %v1195
        %1197 = vmatmul.bf16.gmra.mxu0 %v908
        %v1198 = vpop.f32.mrf.mxu0
        %v1199 = vadd.f32 0.0, %v1198
        %v1200 = vpop.f32.mrf.mxu0
        %v1201 = vadd.f32 0.0, %v1200
        %1202 = vmatmul.bf16.gmra.mxu0 %v909
        %v1203 = vpop.f32.mrf.mxu0
        %v1204 = vadd.f32 0.0, %v1203
        %v1205 = vpop.f32.mrf.mxu0
        %v1206 = vadd.f32 0.0, %v1205
        %1207 = vmatmul.bf16.gmra.mxu0 %v910
        %v1208 = vpop.f32.mrf.mxu0
        %v1209 = vadd.f32 0.0, %v1208
        %v1210 = vpop.f32.mrf.mxu0
        %v1211 = vadd.f32 0.0, %v1210
        %1212 = vmatmul.bf16.gmra.mxu0 %v911
        %v1213 = vpop.f32.mrf.mxu0
        %v1214 = vadd.f32 0.0, %v1213
        %v1215 = vpop.f32.mrf.mxu0
        %v1216 = vadd.f32 0.0, %v1215
        %1217 = vmatmul.bf16.gmra.mxu0 %v912
        %v1218 = vpop.f32.mrf.mxu0
        %v1219 = vadd.f32 0.0, %v1218
        %v1220 = vpop.f32.mrf.mxu0
        %v1221 = vadd.f32 0.0, %v1220
        %1222 = vmatmul.bf16.gmra.mxu0 %v913
        %v1223 = vpop.f32.mrf.mxu0
        %v1224 = vadd.f32 0.0, %v1223
        %v1225 = vpop.f32.mrf.mxu0
        %v1226 = vadd.f32 0.0, %v1225
        %1227 = vmatmul.bf16.gmra.mxu0 %v914
        %v1228 = vpop.f32.mrf.mxu0
        %v1229 = vadd.f32 0.0, %v1228
        %v1230 = vpop.f32.mrf.mxu0
        %v1231 = vadd.f32 0.0, %v1230
        %1232 = vmatmul.bf16.gmra.mxu0 %v915
        %v1233 = vpop.f32.mrf.mxu0
        %v1234 = vadd.f32 0.0, %v1233
        %v1235 = vpop.f32.mrf.mxu0
        %v1236 = vadd.f32 0.0, %v1235
        %1237 = vmatmul.bf16.gmra.mxu0 %v916
        %v1238 = vpop.f32.mrf.mxu0
        %v1239 = vadd.f32 0.0, %v1238
        %v1240 = vpop.f32.mrf.mxu0
        %v1241 = vadd.f32 0.0, %v1240
        %1242 = vmatmul.bf16.gmra.mxu0 %v917
        %v1243 = vpop.f32.mrf.mxu0
        %v1244 = vadd.f32 0.0, %v1243
        %v1245 = vpop.f32.mrf.mxu0
        %v1246 = vadd.f32 0.0, %v1245
        %1247 = vmatmul.bf16.gmra.mxu0 %v918
        %v1248 = vpop.f32.mrf.mxu0
        %v1249 = vadd.f32 0.0, %v1248
        %v1250 = vpop.f32.mrf.mxu0
        %v1251 = vadd.f32 0.0, %v1250
        %1252 = vmatmul.bf16.gmra.mxu0 %v919
        %v1253 = vpop.f32.mrf.mxu0
        %v1254 = vadd.f32 0.0, %v1253
        %v1255 = vpop.f32.mrf.mxu0
        %v1256 = vadd.f32 0.0, %v1255
        %1257 = vdwg.mxu0
        %1258 = vmatpush.bf16.msra.mxu0 %v1046
        %1259 = vmatpush.bf16.msra.mxu0 %v1042
        %1260 = vmatpush.bf16.msra.mxu0 %v1038
        %1261 = vmatpush.bf16.msra.mxu0 %v1034
        %1262 = vmatpush.bf16.msra.mxu0 %v1030
        %1263 = vmatpush.bf16.msra.mxu0 %v1026
        %1264 = vmatpush.bf16.msra.mxu0 %v1022
        %1265 = vmatpush.bf16.msra.mxu0 %v1018
        %1266 = vmatmul.bf16.gmra.mxu0 %v904
        %v1267 = vpop.f32.mrf.mxu0
        %v1268 = vadd.f32 0.0, %v1267
        %v1269 = vpop.f32.mrf.mxu0
        %v1270 = vadd.f32 0.0, %v1269
        %1271 = vmatmul.bf16.gmra.mxu0 %v905
        %v1272 = vpop.f32.mrf.mxu0
        %v1273 = vadd.f32 0.0, %v1272
        %v1274 = vpop.f32.mrf.mxu0
        %v1275 = vadd.f32 0.0, %v1274
        %1276 = vmatmul.bf16.gmra.mxu0 %v906
        %v1277 = vpop.f32.mrf.mxu0
        %v1278 = vadd.f32 0.0, %v1277
        %v1279 = vpop.f32.mrf.mxu0
        %v1280 = vadd.f32 0.0, %v1279
        %1281 = vmatmul.bf16.gmra.mxu0 %v907
        %v1282 = vpop.f32.mrf.mxu0
        %v1283 = vadd.f32 0.0, %v1282
        %v1284 = vpop.f32.mrf.mxu0
        %v1285 = vadd.f32 0.0, %v1284
        %1286 = vmatmul.bf16.gmra.mxu0 %v908
        %v1287 = vpop.f32.mrf.mxu0
        %v1288 = vadd.f32 0.0, %v1287
        %v1289 = vpop.f32.mrf.mxu0
        %v1290 = vadd.f32 0.0, %v1289
        %1291 = vmatmul.bf16.gmra.mxu0 %v909
        %v1292 = vpop.f32.mrf.mxu0
        %v1293 = vadd.f32 0.0, %v1292
        %v1294 = vpop.f32.mrf.mxu0
        %v1295 = vadd.f32 0.0, %v1294
        %1296 = vmatmul.bf16.gmra.mxu0 %v910
        %v1297 = vpop.f32.mrf.mxu0
        %v1298 = vadd.f32 0.0, %v1297
        %v1299 = vpop.f32.mrf.mxu0
        %v1300 = vadd.f32 0.0, %v1299
        %1301 = vmatmul.bf16.gmra.mxu0 %v911
        %v1302 = vpop.f32.mrf.mxu0
        %v1303 = vadd.f32 0.0, %v1302
        %v1304 = vpop.f32.mrf.mxu0
        %v1305 = vadd.f32 0.0, %v1304
        %1306 = vmatmul.bf16.gmra.mxu0 %v912
        %v1307 = vpop.f32.mrf.mxu0
        %v1308 = vadd.f32 0.0, %v1307
        %v1309 = vpop.f32.mrf.mxu0
        %v1310 = vadd.f32 0.0, %v1309
        %1311 = vmatmul.bf16.gmra.mxu0 %v913
        %v1312 = vpop.f32.mrf.mxu0
        %v1313 = vadd.f32 0.0, %v1312
        %v1314 = vpop.f32.mrf.mxu0
        %v1315 = vadd.f32 0.0, %v1314
        %1316 = vmatmul.bf16.gmra.mxu0 %v914
        %v1317 = vpop.f32.mrf.mxu0
        %v1318 = vadd.f32 0.0, %v1317
        %v1319 = vpop.f32.mrf.mxu0
        %v1320 = vadd.f32 0.0, %v1319
        %1321 = vmatmul.bf16.gmra.mxu0 %v915
        %v1322 = vpop.f32.mrf.mxu0
        %v1323 = vadd.f32 0.0, %v1322
        %v1324 = vpop.f32.mrf.mxu0
        %v1325 = vadd.f32 0.0, %v1324
        %1326 = vmatmul.bf16.gmra.mxu0 %v916
        %v1327 = vpop.f32.mrf.mxu0
        %v1328 = vadd.f32 0.0, %v1327
        %v1329 = vpop.f32.mrf.mxu0
        %v1330 = vadd.f32 0.0, %v1329
        %1331 = vmatmul.bf16.gmra.mxu0 %v917
        %v1332 = vpop.f32.mrf.mxu0
        %v1333 = vadd.f32 0.0, %v1332
        %v1334 = vpop.f32.mrf.mxu0
        %v1335 = vadd.f32 0.0, %v1334
        %1336 = vmatmul.bf16.gmra.mxu0 %v918
        %v1337 = vpop.f32.mrf.mxu0
        %v1338 = vadd.f32 0.0, %v1337
        %v1339 = vpop.f32.mrf.mxu0
        %v1340 = vadd.f32 0.0, %v1339
        %1341 = vmatmul.bf16.gmra.mxu0 %v919
        %v1342 = vpop.f32.mrf.mxu0
        %v1343 = vadd.f32 0.0, %v1342
        %v1344 = vpop.f32.mrf.mxu0
        %v1345 = vadd.f32 0.0, %v1344
        %1346 = vdwg.mxu0
        %1347 = vmatpush.bf16.msra.mxu0 %v1047
        %1348 = vmatpush.bf16.msra.mxu0 %v1043
        %1349 = vmatpush.bf16.msra.mxu0 %v1039
        %1350 = vmatpush.bf16.msra.mxu0 %v1035
        %1351 = vmatpush.bf16.msra.mxu0 %v1031
        %1352 = vmatpush.bf16.msra.mxu0 %v1027
        %1353 = vmatpush.bf16.msra.mxu0 %v1023
        %1354 = vmatpush.bf16.msra.mxu0 %v1019
        %1355 = vmatmul.bf16.gmra.mxu0 %v904
        %v1356 = vpop.f32.mrf.mxu0
        %v1357 = vadd.f32 0.0, %v1356
        %v1358 = vpop.f32.mrf.mxu0
        %v1359 = vadd.f32 0.0, %v1358
        %1360 = vmatmul.bf16.gmra.mxu0 %v905
        %v1361 = vpop.f32.mrf.mxu0
        %v1362 = vadd.f32 0.0, %v1361
        %v1363 = vpop.f32.mrf.mxu0
        %v1364 = vadd.f32 0.0, %v1363
        %1365 = vmatmul.bf16.gmra.mxu0 %v906
        %v1366 = vpop.f32.mrf.mxu0
        %v1367 = vadd.f32 0.0, %v1366
        %v1368 = vpop.f32.mrf.mxu0
        %v1369 = vadd.f32 0.0, %v1368
        %1370 = vmatmul.bf16.gmra.mxu0 %v907
        %v1371 = vpop.f32.mrf.mxu0
        %v1372 = vadd.f32 0.0, %v1371
        %v1373 = vpop.f32.mrf.mxu0
        %v1374 = vadd.f32 0.0, %v1373
        %1375 = vmatmul.bf16.gmra.mxu0 %v908
        %v1376 = vpop.f32.mrf.mxu0
        %v1377 = vadd.f32 0.0, %v1376
        %v1378 = vpop.f32.mrf.mxu0
        %v1379 = vadd.f32 0.0, %v1378
        %1380 = vmatmul.bf16.gmra.mxu0 %v909
        %v1381 = vpop.f32.mrf.mxu0
        %v1382 = vadd.f32 0.0, %v1381
        %v1383 = vpop.f32.mrf.mxu0
        %v1384 = vadd.f32 0.0, %v1383
        %1385 = vmatmul.bf16.gmra.mxu0 %v910
        %v1386 = vpop.f32.mrf.mxu0
        %v1387 = vadd.f32 0.0, %v1386
        %v1388 = vpop.f32.mrf.mxu0
        %v1389 = vadd.f32 0.0, %v1388
        %1390 = vmatmul.bf16.gmra.mxu0 %v911
        %v1391 = vpop.f32.mrf.mxu0
        %v1392 = vadd.f32 0.0, %v1391
        %v1393 = vpop.f32.mrf.mxu0
        %v1394 = vadd.f32 0.0, %v1393
        %1395 = vmatmul.bf16.gmra.mxu0 %v912
        %v1396 = vpop.f32.mrf.mxu0
        %v1397 = vadd.f32 0.0, %v1396
        %v1398 = vpop.f32.mrf.mxu0
        %v1399 = vadd.f32 0.0, %v1398
        %1400 = vmatmul.bf16.gmra.mxu0 %v913
        %v1401 = vpop.f32.mrf.mxu0
        %v1402 = vadd.f32 0.0, %v1401
        %v1403 = vpop.f32.mrf.mxu0
        %v1404 = vadd.f32 0.0, %v1403
        %1405 = vmatmul.bf16.gmra.mxu0 %v914
        %v1406 = vpop.f32.mrf.mxu0
        %v1407 = vadd.f32 0.0, %v1406
        %v1408 = vpop.f32.mrf.mxu0
        %v1409 = vadd.f32 0.0, %v1408
        %1410 = vmatmul.bf16.gmra.mxu0 %v915
        %v1411 = vpop.f32.mrf.mxu0
        %v1412 = vadd.f32 0.0, %v1411
        %v1413 = vpop.f32.mrf.mxu0
        %v1414 = vadd.f32 0.0, %v1413
        %1415 = vmatmul.bf16.gmra.mxu0 %v916
        %v1416 = vpop.f32.mrf.mxu0
        %v1417 = vadd.f32 0.0, %v1416
        %v1418 = vpop.f32.mrf.mxu0
        %v1419 = vadd.f32 0.0, %v1418
        %1420 = vmatmul.bf16.gmra.mxu0 %v917
        %v1421 = vpop.f32.mrf.mxu0
        %v1422 = vadd.f32 0.0, %v1421
        %v1423 = vpop.f32.mrf.mxu0
        %v1424 = vadd.f32 0.0, %v1423
        %1425 = vmatmul.bf16.gmra.mxu0 %v918
        %v1426 = vpop.f32.mrf.mxu0
        %v1427 = vadd.f32 0.0, %v1426
        %v1428 = vpop.f32.mrf.mxu0
        %v1429 = vadd.f32 0.0, %v1428
        %1430 = vmatmul.bf16.gmra.mxu0 %v919
        %v1431 = vpop.f32.mrf.mxu0
        %v1432 = vadd.f32 0.0, %v1431
        %v1433 = vpop.f32.mrf.mxu0
        %v1434 = vadd.f32 0.0, %v1433
        %1435 = vdwg.mxu0
        %v1436 = vadd.f32 %v1268, %v304
        %v1437 = vadd.f32 %v1270, %v304
        %v1438 = vadd.f32 %v1273, %v304
        %v1439 = vadd.f32 %v1275, %v304
        %v1440 = vadd.f32 %v1278, %v304
        %v1441 = vadd.f32 %v1280, %v304
        %v1442 = vadd.f32 %v1283, %v304
        %v1443 = vadd.f32 %v1285, %v304
        %v1444 = vadd.f32 %v1288, %v304
        %v1445 = vadd.f32 %v1290, %v304
        %v1446 = vadd.f32 %v1293, %v304
        %v1447 = vadd.f32 %v1295, %v304
        %v1448 = vadd.f32 %v1298, %v304
        %v1449 = vadd.f32 %v1300, %v304
        %v1450 = vadd.f32 %v1303, %v304
        %v1451 = vadd.f32 %v1305, %v304
        %v1452 = vadd.f32 %v1308, %v304
        %v1453 = vadd.f32 %v1310, %v304
        %v1454 = vadd.f32 %v1313, %v304
        %v1455 = vadd.f32 %v1315, %v304
        %v1456 = vadd.f32 %v1318, %v304
        %v1457 = vadd.f32 %v1320, %v304
        %v1458 = vadd.f32 %v1323, %v304
        %v1459 = vadd.f32 %v1325, %v304
        %v1460 = vadd.f32 %v1328, %v304
        %v1461 = vadd.f32 %v1330, %v304
        %v1462 = vadd.f32 %v1333, %v304
        %v1463 = vadd.f32 %v1335, %v304
        %v1464 = vadd.f32 %v1338, %v304
        %v1465 = vadd.f32 %v1340, %v304
        %v1466 = vadd.f32 %v1343, %v304
        %v1467 = vadd.f32 %v1345, %v304
        %v1468 = vmax.f32 %v1436, 0.0
        %v1469 = vmax.f32 %v1437, 0.0
        %v1470 = vmax.f32 %v1438, 0.0
        %v1471 = vmax.f32 %v1439, 0.0
        %v1472 = vmax.f32 %v1440, 0.0
        %v1473 = vmax.f32 %v1441, 0.0
        %v1474 = vmax.f32 %v1442, 0.0
        %v1475 = vmax.f32 %v1443, 0.0
        %v1476 = vmax.f32 %v1444, 0.0
        %v1477 = vmax.f32 %v1445, 0.0
        %v1478 = vmax.f32 %v1446, 0.0
        %v1479 = vmax.f32 %v1447, 0.0
        %v1480 = vmax.f32 %v1448, 0.0
        %v1481 = vmax.f32 %v1449, 0.0
        %v1482 = vmax.f32 %v1450, 0.0
        %v1483 = vmax.f32 %v1451, 0.0
        %v1484 = vmax.f32 %v1452, 0.0
        %v1485 = vmax.f32 %v1453, 0.0
        %v1486 = vmax.f32 %v1454, 0.0
        %v1487 = vmax.f32 %v1455, 0.0
        %v1488 = vmax.f32 %v1456, 0.0
        %v1489 = vmax.f32 %v1457, 0.0
        %v1490 = vmax.f32 %v1458, 0.0
        %v1491 = vmax.f32 %v1459, 0.0
        %v1492 = vmax.f32 %v1460, 0.0
        %v1493 = vmax.f32 %v1461, 0.0
        %v1494 = vmax.f32 %v1462, 0.0
        %v1495 = vmax.f32 %v1463, 0.0
        %v1496 = vmax.f32 %v1464, 0.0
        %v1497 = vmax.f32 %v1465, 0.0
        %v1498 = vmax.f32 %v1466, 0.0
        %v1499 = vmax.f32 %v1467, 0.0
        %vm1500 = vcmp.ne.f32.partialorder %v1436, %v1436
        %vm1501 = vcmp.ne.f32.partialorder %v1437, %v1437
        %vm1502 = vcmp.ne.f32.partialorder %v1438, %v1438
        %vm1503 = vcmp.ne.f32.partialorder %v1439, %v1439
        %vm1504 = vcmp.ne.f32.partialorder %v1440, %v1440
        %vm1505 = vcmp.ne.f32.partialorder %v1441, %v1441
        %vm1506 = vcmp.ne.f32.partialorder %v1442, %v1442
        %vm1507 = vcmp.ne.f32.partialorder %v1443, %v1443
        %vm1508 = vcmp.ne.f32.partialorder %v1444, %v1444
        %vm1509 = vcmp.ne.f32.partialorder %v1445, %v1445
        %vm1510 = vcmp.ne.f32.partialorder %v1446, %v1446
        %vm1511 = vcmp.ne.f32.partialorder %v1447, %v1447
        %vm1512 = vcmp.ne.f32.partialorder %v1448, %v1448
        %vm1513 = vcmp.ne.f32.partialorder %v1449, %v1449
        %vm1514 = vcmp.ne.f32.partialorder %v1450, %v1450
        %vm1515 = vcmp.ne.f32.partialorder %v1451, %v1451
        %vm1516 = vcmp.ne.f32.partialorder %v1452, %v1452
        %vm1517 = vcmp.ne.f32.partialorder %v1453, %v1453
        %vm1518 = vcmp.ne.f32.partialorder %v1454, %v1454
        %vm1519 = vcmp.ne.f32.partialorder %v1455, %v1455
        %vm1520 = vcmp.ne.f32.partialorder %v1456, %v1456
        %vm1521 = vcmp.ne.f32.partialorder %v1457, %v1457
        %vm1522 = vcmp.ne.f32.partialorder %v1458, %v1458
        %vm1523 = vcmp.ne.f32.partialorder %v1459, %v1459
        %vm1524 = vcmp.ne.f32.partialorder %v1460, %v1460
        %vm1525 = vcmp.ne.f32.partialorder %v1461, %v1461
        %vm1526 = vcmp.ne.f32.partialorder %v1462, %v1462
        %vm1527 = vcmp.ne.f32.partialorder %v1463, %v1463
        %vm1528 = vcmp.ne.f32.partialorder %v1464, %v1464
        %vm1529 = vcmp.ne.f32.partialorder %v1465, %v1465
        %vm1530 = vcmp.ne.f32.partialorder %v1466, %v1466
        %vm1531 = vcmp.ne.f32.partialorder %v1467, %v1467
        %v1532 = vadd.f32 %v1436, 0.0
        %v1533 = vadd.f32 %v1437, 0.0
        %v1534 = vadd.f32 %v1438, 0.0
        %v1535 = vadd.f32 %v1439, 0.0
        %v1536 = vadd.f32 %v1440, 0.0
        %v1537 = vadd.f32 %v1441, 0.0
        %v1538 = vadd.f32 %v1442, 0.0
        %v1539 = vadd.f32 %v1443, 0.0
        %v1540 = vadd.f32 %v1444, 0.0
        %v1541 = vadd.f32 %v1445, 0.0
        %v1542 = vadd.f32 %v1446, 0.0
        %v1543 = vadd.f32 %v1447, 0.0
        %v1544 = vadd.f32 %v1448, 0.0
        %v1545 = vadd.f32 %v1449, 0.0
        %v1546 = vadd.f32 %v1450, 0.0
        %v1547 = vadd.f32 %v1451, 0.0
        %v1548 = vadd.f32 %v1452, 0.0
        %v1549 = vadd.f32 %v1453, 0.0
        %v1550 = vadd.f32 %v1454, 0.0
        %v1551 = vadd.f32 %v1455, 0.0
        %v1552 = vadd.f32 %v1456, 0.0
        %v1553 = vadd.f32 %v1457, 0.0
        %v1554 = vadd.f32 %v1458, 0.0
        %v1555 = vadd.f32 %v1459, 0.0
        %v1556 = vadd.f32 %v1460, 0.0
        %v1557 = vadd.f32 %v1461, 0.0
        %v1558 = vadd.f32 %v1462, 0.0
        %v1559 = vadd.f32 %v1463, 0.0
        %v1560 = vadd.f32 %v1464, 0.0
        %v1561 = vadd.f32 %v1465, 0.0
        %v1562 = vadd.f32 %v1466, 0.0
        %v1563 = vadd.f32 %v1467, 0.0
        %v1564 = vand.u32 2147483647, %v1436
        %v1565 = vand.u32 2147483647, %v1437
        %v1566 = vand.u32 2147483647, %v1438
        %v1567 = vand.u32 2147483647, %v1439
        %v1568 = vand.u32 2147483647, %v1440
        %v1569 = vand.u32 2147483647, %v1441
        %v1570 = vand.u32 2147483647, %v1442
        %v1571 = vand.u32 2147483647, %v1443
        %v1572 = vand.u32 2147483647, %v1444
        %v1573 = vand.u32 2147483647, %v1445
        %v1574 = vand.u32 2147483647, %v1446
        %v1575 = vand.u32 2147483647, %v1447
        %v1576 = vand.u32 2147483647, %v1448
        %v1577 = vand.u32 2147483647, %v1449
        %v1578 = vand.u32 2147483647, %v1450
        %v1579 = vand.u32 2147483647, %v1451
        %v1580 = vand.u32 2147483647, %v1452
        %v1581 = vand.u32 2147483647, %v1453
        %v1582 = vand.u32 2147483647, %v1454
        %v1583 = vand.u32 2147483647, %v1455
        %v1584 = vand.u32 2147483647, %v1456
        %v1585 = vand.u32 2147483647, %v1457
        %v1586 = vand.u32 2147483647, %v1458
        %v1587 = vand.u32 2147483647, %v1459
        %v1588 = vand.u32 2147483647, %v1460
        %v1589 = vand.u32 2147483647, %v1461
        %v1590 = vand.u32 2147483647, %v1462
        %v1591 = vand.u32 2147483647, %v1463
        %v1592 = vand.u32 2147483647, %v1464
        %v1593 = vand.u32 2147483647, %v1465
        %v1594 = vand.u32 2147483647, %v1466
        %v1595 = vand.u32 2147483647, %v1467
        %v1596 = vsub.f32 0.0, %v1564
        %v1597 = vsub.f32 0.0, %v1565
        %v1598 = vsub.f32 0.0, %v1566
        %v1599 = vsub.f32 0.0, %v1567
        %v1600 = vsub.f32 0.0, %v1568
        %v1601 = vsub.f32 0.0, %v1569
        %v1602 = vsub.f32 0.0, %v1570
        %v1603 = vsub.f32 0.0, %v1571
        %v1604 = vsub.f32 0.0, %v1572
        %v1605 = vsub.f32 0.0, %v1573
        %v1606 = vsub.f32 0.0, %v1574
        %v1607 = vsub.f32 0.0, %v1575
        %v1608 = vsub.f32 0.0, %v1576
        %v1609 = vsub.f32 0.0, %v1577
        %v1610 = vsub.f32 0.0, %v1578
        %v1611 = vsub.f32 0.0, %v1579
        %v1612 = vsub.f32 0.0, %v1580
        %v1613 = vsub.f32 0.0, %v1581
        %v1614 = vsub.f32 0.0, %v1582
        %v1615 = vsub.f32 0.0, %v1583
        %v1616 = vsub.f32 0.0, %v1584
        %v1617 = vsub.f32 0.0, %v1585
        %v1618 = vsub.f32 0.0, %v1586
        %v1619 = vsub.f32 0.0, %v1587
        %v1620 = vsub.f32 0.0, %v1588
        %v1621 = vsub.f32 0.0, %v1589
        %v1622 = vsub.f32 0.0, %v1590
        %v1623 = vsub.f32 0.0, %v1591
        %v1624 = vsub.f32 0.0, %v1592
        %v1625 = vsub.f32 0.0, %v1593
        %v1626 = vsub.f32 0.0, %v1594
        %v1627 = vsub.f32 0.0, %v1595
        %v1628 = vmul.f32 %v1596, 1.442695
        %v1629 = vpow.pop %v1628
        %v1630 = vmul.f32 %v1597, 1.442695
        %v1631 = vpow.pop %v1630
        %v1632 = vmul.f32 %v1598, 1.442695
        %v1633 = vpow.pop %v1632
        %v1634 = vmul.f32 %v1599, 1.442695
        %v1635 = vpow.pop %v1634
        %v1636 = vmul.f32 %v1600, 1.442695
        %v1637 = vpow.pop %v1636
        %v1638 = vmul.f32 %v1601, 1.442695
        %v1639 = vpow.pop %v1638
        %v1640 = vmul.f32 %v1602, 1.442695
        %v1641 = vpow.pop %v1640
        %v1642 = vmul.f32 %v1603, 1.442695
        %v1643 = vpow.pop %v1642
        %v1644 = vmul.f32 %v1604, 1.442695
        %v1645 = vpow.pop %v1644
        %v1646 = vmul.f32 %v1605, 1.442695
        %v1647 = vpow.pop %v1646
        %v1648 = vmul.f32 %v1606, 1.442695
        %v1649 = vpow.pop %v1648
        %v1650 = vmul.f32 %v1607, 1.442695
        %v1651 = vpow.pop %v1650
        %v1652 = vmul.f32 %v1608, 1.442695
        %v1653 = vpow.pop %v1652
        %v1654 = vmul.f32 %v1609, 1.442695
        %v1655 = vpow.pop %v1654
        %v1656 = vmul.f32 %v1610, 1.442695
        %v1657 = vpow.pop %v1656
        %v1658 = vmul.f32 %v1611, 1.442695
        %v1659 = vpow.pop %v1658
        %v1660 = vmul.f32 %v1612, 1.442695
        %v1661 = vpow.pop %v1660
        %v1662 = vmul.f32 %v1613, 1.442695
        %v1663 = vpow.pop %v1662
        %v1664 = vmul.f32 %v1614, 1.442695
        %v1665 = vpow.pop %v1664
        %v1666 = vmul.f32 %v1615, 1.442695
        %v1667 = vpow.pop %v1666
        %v1668 = vmul.f32 %v1616, 1.442695
        %v1669 = vpow.pop %v1668
        %v1670 = vmul.f32 %v1617, 1.442695
        %v1671 = vpow.pop %v1670
        %v1672 = vmul.f32 %v1618, 1.442695
        %v1673 = vpow.pop %v1672
        %v1674 = vmul.f32 %v1619, 1.442695
        %v1675 = vpow.pop %v1674
        %v1676 = vmul.f32 %v1620, 1.442695
        %v1677 = vpow.pop %v1676
        %v1678 = vmul.f32 %v1621, 1.442695
        %v1679 = vpow.pop %v1678
        %v1680 = vmul.f32 %v1622, 1.442695
        %v1681 = vpow.pop %v1680
        %v1682 = vmul.f32 %v1623, 1.442695
        %v1683 = vpow.pop %v1682
        %v1684 = vmul.f32 %v1624, 1.442695
        %v1685 = vpow.pop %v1684
        %v1686 = vmul.f32 %v1625, 1.442695
        %v1687 = vpow.pop %v1686
        %v1688 = vmul.f32 %v1626, 1.442695
        %v1689 = vpow.pop %v1688
        %v1690 = vmul.f32 %v1627, 1.442695
        %v1691 = vpow.pop %v1690
        %v1692 = vadd.f32 %v1629, 1.0
        %v1693 = vlog2.pop %v1692
        %v1694 = vmul.f32 %v1693, 0.6931472
        %v1695 = vmul.f32 -0.5, %v1629
        %v1696 = vadd.f32 %v1695, 1.0
        %v1697 = vmul.f32 %v1696, %v1629
        %v1698 = vand.u32 2147483647, %v1629
        %vm1699 = vcmp.lt.f32.partialorder %v1698, 0.0004427343
        %v1700 = vsel %vm1699, %v1697, %v1694
        %v1701 = vadd.f32 %v1631, 1.0
        %v1702 = vlog2.pop %v1701
        %v1703 = vmul.f32 %v1702, 0.6931472
        %v1704 = vmul.f32 -0.5, %v1631
        %v1705 = vadd.f32 %v1704, 1.0
        %v1706 = vmul.f32 %v1705, %v1631
        %v1707 = vand.u32 2147483647, %v1631
        %vm1708 = vcmp.lt.f32.partialorder %v1707, 0.0004427343
        %v1709 = vsel %vm1708, %v1706, %v1703
        %v1710 = vadd.f32 %v1633, 1.0
        %v1711 = vlog2.pop %v1710
        %v1712 = vmul.f32 %v1711, 0.6931472
        %v1713 = vmul.f32 -0.5, %v1633
        %v1714 = vadd.f32 %v1713, 1.0
        %v1715 = vmul.f32 %v1714, %v1633
        %v1716 = vand.u32 2147483647, %v1633
        %vm1717 = vcmp.lt.f32.partialorder %v1716, 0.0004427343
        %v1718 = vsel %vm1717, %v1715, %v1712
        %v1719 = vadd.f32 %v1635, 1.0
        %v1720 = vlog2.pop %v1719
        %v1721 = vmul.f32 %v1720, 0.6931472
        %v1722 = vmul.f32 -0.5, %v1635
        %v1723 = vadd.f32 %v1722, 1.0
        %v1724 = vmul.f32 %v1723, %v1635
        %v1725 = vand.u32 2147483647, %v1635
        %vm1726 = vcmp.lt.f32.partialorder %v1725, 0.0004427343
        %v1727 = vsel %vm1726, %v1724, %v1721
        %v1728 = vadd.f32 %v1637, 1.0
        %v1729 = vlog2.pop %v1728
        %v1730 = vmul.f32 %v1729, 0.6931472
        %v1731 = vmul.f32 -0.5, %v1637
        %v1732 = vadd.f32 %v1731, 1.0
        %v1733 = vmul.f32 %v1732, %v1637
        %v1734 = vand.u32 2147483647, %v1637
        %vm1735 = vcmp.lt.f32.partialorder %v1734, 0.0004427343
        %v1736 = vsel %vm1735, %v1733, %v1730
        %v1737 = vadd.f32 %v1639, 1.0
        %v1738 = vlog2.pop %v1737
        %v1739 = vmul.f32 %v1738, 0.6931472
        %v1740 = vmul.f32 -0.5, %v1639
        %v1741 = vadd.f32 %v1740, 1.0
        %v1742 = vmul.f32 %v1741, %v1639
        %v1743 = vand.u32 2147483647, %v1639
        %vm1744 = vcmp.lt.f32.partialorder %v1743, 0.0004427343
        %v1745 = vsel %vm1744, %v1742, %v1739
        %v1746 = vadd.f32 %v1641, 1.0
        %v1747 = vlog2.pop %v1746
        %v1748 = vmul.f32 %v1747, 0.6931472
        %v1749 = vmul.f32 -0.5, %v1641
        %v1750 = vadd.f32 %v1749, 1.0
        %v1751 = vmul.f32 %v1750, %v1641
        %v1752 = vand.u32 2147483647, %v1641
        %vm1753 = vcmp.lt.f32.partialorder %v1752, 0.0004427343
        %v1754 = vsel %vm1753, %v1751, %v1748
        %v1755 = vadd.f32 %v1643, 1.0
        %v1756 = vlog2.pop %v1755
        %v1757 = vmul.f32 %v1756, 0.6931472
        %v1758 = vmul.f32 -0.5, %v1643
        %v1759 = vadd.f32 %v1758, 1.0
        %v1760 = vmul.f32 %v1759, %v1643
        %v1761 = vand.u32 2147483647, %v1643
        %vm1762 = vcmp.lt.f32.partialorder %v1761, 0.0004427343
        %v1763 = vsel %vm1762, %v1760, %v1757
        %v1764 = vadd.f32 %v1645, 1.0
        %v1765 = vlog2.pop %v1764
        %v1766 = vmul.f32 %v1765, 0.6931472
        %v1767 = vmul.f32 -0.5, %v1645
        %v1768 = vadd.f32 %v1767, 1.0
        %v1769 = vmul.f32 %v1768, %v1645
        %v1770 = vand.u32 2147483647, %v1645
        %vm1771 = vcmp.lt.f32.partialorder %v1770, 0.0004427343
        %v1772 = vsel %vm1771, %v1769, %v1766
        %v1773 = vadd.f32 %v1647, 1.0
        %v1774 = vlog2.pop %v1773
        %v1775 = vmul.f32 %v1774, 0.6931472
        %v1776 = vmul.f32 -0.5, %v1647
        %v1777 = vadd.f32 %v1776, 1.0
        %v1778 = vmul.f32 %v1777, %v1647
        %v1779 = vand.u32 2147483647, %v1647
        %vm1780 = vcmp.lt.f32.partialorder %v1779, 0.0004427343
        %v1781 = vsel %vm1780, %v1778, %v1775
        %v1782 = vadd.f32 %v1649, 1.0
        %v1783 = vlog2.pop %v1782
        %v1784 = vmul.f32 %v1783, 0.6931472
        %v1785 = vmul.f32 -0.5, %v1649
        %v1786 = vadd.f32 %v1785, 1.0
        %v1787 = vmul.f32 %v1786, %v1649
        %v1788 = vand.u32 2147483647, %v1649
        %vm1789 = vcmp.lt.f32.partialorder %v1788, 0.0004427343
        %v1790 = vsel %vm1789, %v1787, %v1784
        %v1791 = vadd.f32 %v1651, 1.0
        %v1792 = vlog2.pop %v1791
        %v1793 = vmul.f32 %v1792, 0.6931472
        %v1794 = vmul.f32 -0.5, %v1651
        %v1795 = vadd.f32 %v1794, 1.0
        %v1796 = vmul.f32 %v1795, %v1651
        %v1797 = vand.u32 2147483647, %v1651
        %vm1798 = vcmp.lt.f32.partialorder %v1797, 0.0004427343
        %v1799 = vsel %vm1798, %v1796, %v1793
        %v1800 = vadd.f32 %v1653, 1.0
        %v1801 = vlog2.pop %v1800
        %v1802 = vmul.f32 %v1801, 0.6931472
        %v1803 = vmul.f32 -0.5, %v1653
        %v1804 = vadd.f32 %v1803, 1.0
        %v1805 = vmul.f32 %v1804, %v1653
        %v1806 = vand.u32 2147483647, %v1653
        %vm1807 = vcmp.lt.f32.partialorder %v1806, 0.0004427343
        %v1808 = vsel %vm1807, %v1805, %v1802
        %v1809 = vadd.f32 %v1655, 1.0
        %v1810 = vlog2.pop %v1809
        %v1811 = vmul.f32 %v1810, 0.6931472
        %v1812 = vmul.f32 -0.5, %v1655
        %v1813 = vadd.f32 %v1812, 1.0
        %v1814 = vmul.f32 %v1813, %v1655
        %v1815 = vand.u32 2147483647, %v1655
        %vm1816 = vcmp.lt.f32.partialorder %v1815, 0.0004427343
        %v1817 = vsel %vm1816, %v1814, %v1811
        %v1818 = vadd.f32 %v1657, 1.0
        %v1819 = vlog2.pop %v1818
        %v1820 = vmul.f32 %v1819, 0.6931472
        %v1821 = vmul.f32 -0.5, %v1657
        %v1822 = vadd.f32 %v1821, 1.0
        %v1823 = vmul.f32 %v1822, %v1657
        %v1824 = vand.u32 2147483647, %v1657
        %vm1825 = vcmp.lt.f32.partialorder %v1824, 0.0004427343
        %v1826 = vsel %vm1825, %v1823, %v1820
        %v1827 = vadd.f32 %v1659, 1.0
        %v1828 = vlog2.pop %v1827
        %v1829 = vmul.f32 %v1828, 0.6931472
        %v1830 = vmul.f32 -0.5, %v1659
        %v1831 = vadd.f32 %v1830, 1.0
        %v1832 = vmul.f32 %v1831, %v1659
        %v1833 = vand.u32 2147483647, %v1659
        %vm1834 = vcmp.lt.f32.partialorder %v1833, 0.0004427343
        %v1835 = vsel %vm1834, %v1832, %v1829
        %v1836 = vadd.f32 %v1661, 1.0
        %v1837 = vlog2.pop %v1836
        %v1838 = vmul.f32 %v1837, 0.6931472
        %v1839 = vmul.f32 -0.5, %v1661
        %v1840 = vadd.f32 %v1839, 1.0
        %v1841 = vmul.f32 %v1840, %v1661
        %v1842 = vand.u32 2147483647, %v1661
        %vm1843 = vcmp.lt.f32.partialorder %v1842, 0.0004427343
        %v1844 = vsel %vm1843, %v1841, %v1838
        %v1845 = vadd.f32 %v1663, 1.0
        %v1846 = vlog2.pop %v1845
        %v1847 = vmul.f32 %v1846, 0.6931472
        %v1848 = vmul.f32 -0.5, %v1663
        %v1849 = vadd.f32 %v1848, 1.0
        %v1850 = vmul.f32 %v1849, %v1663
        %v1851 = vand.u32 2147483647, %v1663
        %vm1852 = vcmp.lt.f32.partialorder %v1851, 0.0004427343
        %v1853 = vsel %vm1852, %v1850, %v1847
        %v1854 = vadd.f32 %v1665, 1.0
        %v1855 = vlog2.pop %v1854
        %v1856 = vmul.f32 %v1855, 0.6931472
        %v1857 = vmul.f32 -0.5, %v1665
        %v1858 = vadd.f32 %v1857, 1.0
        %v1859 = vmul.f32 %v1858, %v1665
        %v1860 = vand.u32 2147483647, %v1665
        %vm1861 = vcmp.lt.f32.partialorder %v1860, 0.0004427343
        %v1862 = vsel %vm1861, %v1859, %v1856
        %v1863 = vadd.f32 %v1667, 1.0
        %v1864 = vlog2.pop %v1863
        %v1865 = vmul.f32 %v1864, 0.6931472
        %v1866 = vmul.f32 -0.5, %v1667
        %v1867 = vadd.f32 %v1866, 1.0
        %v1868 = vmul.f32 %v1867, %v1667
        %v1869 = vand.u32 2147483647, %v1667
        %vm1870 = vcmp.lt.f32.partialorder %v1869, 0.0004427343
        %v1871 = vsel %vm1870, %v1868, %v1865
        %v1872 = vadd.f32 %v1669, 1.0
        %v1873 = vlog2.pop %v1872
        %v1874 = vmul.f32 %v1873, 0.6931472
        %v1875 = vmul.f32 -0.5, %v1669
        %v1876 = vadd.f32 %v1875, 1.0
        %v1877 = vmul.f32 %v1876, %v1669
        %v1878 = vand.u32 2147483647, %v1669
        %vm1879 = vcmp.lt.f32.partialorder %v1878, 0.0004427343
        %v1880 = vsel %vm1879, %v1877, %v1874
        %v1881 = vadd.f32 %v1671, 1.0
        %v1882 = vlog2.pop %v1881
        %v1883 = vmul.f32 %v1882, 0.6931472
        %v1884 = vmul.f32 -0.5, %v1671
        %v1885 = vadd.f32 %v1884, 1.0
        %v1886 = vmul.f32 %v1885, %v1671
        %v1887 = vand.u32 2147483647, %v1671
        %vm1888 = vcmp.lt.f32.partialorder %v1887, 0.0004427343
        %v1889 = vsel %vm1888, %v1886, %v1883
        %v1890 = vadd.f32 %v1673, 1.0
        %v1891 = vlog2.pop %v1890
        %v1892 = vmul.f32 %v1891, 0.6931472
        %v1893 = vmul.f32 -0.5, %v1673
        %v1894 = vadd.f32 %v1893, 1.0
        %v1895 = vmul.f32 %v1894, %v1673
        %v1896 = vand.u32 2147483647, %v1673
        %vm1897 = vcmp.lt.f32.partialorder %v1896, 0.0004427343
        %v1898 = vsel %vm1897, %v1895, %v1892
        %v1899 = vadd.f32 %v1675, 1.0
        %v1900 = vlog2.pop %v1899
        %v1901 = vmul.f32 %v1900, 0.6931472
        %v1902 = vmul.f32 -0.5, %v1675
        %v1903 = vadd.f32 %v1902, 1.0
        %v1904 = vmul.f32 %v1903, %v1675
        %v1905 = vand.u32 2147483647, %v1675
        %vm1906 = vcmp.lt.f32.partialorder %v1905, 0.0004427343
        %v1907 = vsel %vm1906, %v1904, %v1901
        %v1908 = vadd.f32 %v1677, 1.0
        %v1909 = vlog2.pop %v1908
        %v1910 = vmul.f32 %v1909, 0.6931472
        %v1911 = vmul.f32 -0.5, %v1677
        %v1912 = vadd.f32 %v1911, 1.0
        %v1913 = vmul.f32 %v1912, %v1677
        %v1914 = vand.u32 2147483647, %v1677
        %vm1915 = vcmp.lt.f32.partialorder %v1914, 0.0004427343
        %v1916 = vsel %vm1915, %v1913, %v1910
        %v1917 = vadd.f32 %v1679, 1.0
        %v1918 = vlog2.pop %v1917
        %v1919 = vmul.f32 %v1918, 0.6931472
        %v1920 = vmul.f32 -0.5, %v1679
        %v1921 = vadd.f32 %v1920, 1.0
        %v1922 = vmul.f32 %v1921, %v1679
        %v1923 = vand.u32 2147483647, %v1679
        %vm1924 = vcmp.lt.f32.partialorder %v1923, 0.0004427343
        %v1925 = vsel %vm1924, %v1922, %v1919
        %v1926 = vadd.f32 %v1681, 1.0
        %v1927 = vlog2.pop %v1926
        %v1928 = vmul.f32 %v1927, 0.6931472
        %v1929 = vmul.f32 -0.5, %v1681
        %v1930 = vadd.f32 %v1929, 1.0
        %v1931 = vmul.f32 %v1930, %v1681
        %v1932 = vand.u32 2147483647, %v1681
        %vm1933 = vcmp.lt.f32.partialorder %v1932, 0.0004427343
        %v1934 = vsel %vm1933, %v1931, %v1928
        %v1935 = vadd.f32 %v1683, 1.0
        %v1936 = vlog2.pop %v1935
        %v1937 = vmul.f32 %v1936, 0.6931472
        %v1938 = vmul.f32 -0.5, %v1683
        %v1939 = vadd.f32 %v1938, 1.0
        %v1940 = vmul.f32 %v1939, %v1683
        %v1941 = vand.u32 2147483647, %v1683
        %vm1942 = vcmp.lt.f32.partialorder %v1941, 0.0004427343
        %v1943 = vsel %vm1942, %v1940, %v1937
        %v1944 = vadd.f32 %v1685, 1.0
        %v1945 = vlog2.pop %v1944
        %v1946 = vmul.f32 %v1945, 0.6931472
        %v1947 = vmul.f32 -0.5, %v1685
        %v1948 = vadd.f32 %v1947, 1.0
        %v1949 = vmul.f32 %v1948, %v1685
        %v1950 = vand.u32 2147483647, %v1685
        %vm1951 = vcmp.lt.f32.partialorder %v1950, 0.0004427343
        %v1952 = vsel %vm1951, %v1949, %v1946
        %v1953 = vadd.f32 %v1687, 1.0
        %v1954 = vlog2.pop %v1953
        %v1955 = vmul.f32 %v1954, 0.6931472
        %v1956 = vmul.f32 -0.5, %v1687
        %v1957 = vadd.f32 %v1956, 1.0
        %v1958 = vmul.f32 %v1957, %v1687
        %v1959 = vand.u32 2147483647, %v1687
        %vm1960 = vcmp.lt.f32.partialorder %v1959, 0.0004427343
        %v1961 = vsel %vm1960, %v1958, %v1955
        %v1962 = vadd.f32 %v1689, 1.0
        %v1963 = vlog2.pop %v1962
        %v1964 = vmul.f32 %v1963, 0.6931472
        %v1965 = vmul.f32 -0.5, %v1689
        %v1966 = vadd.f32 %v1965, 1.0
        %v1967 = vmul.f32 %v1966, %v1689
        %v1968 = vand.u32 2147483647, %v1689
        %vm1969 = vcmp.lt.f32.partialorder %v1968, 0.0004427343
        %v1970 = vsel %vm1969, %v1967, %v1964
        %v1971 = vadd.f32 %v1691, 1.0
        %v1972 = vlog2.pop %v1971
        %v1973 = vmul.f32 %v1972, 0.6931472
        %v1974 = vmul.f32 -0.5, %v1691
        %v1975 = vadd.f32 %v1974, 1.0
        %v1976 = vmul.f32 %v1975, %v1691
        %v1977 = vand.u32 2147483647, %v1691
        %vm1978 = vcmp.lt.f32.partialorder %v1977, 0.0004427343
        %v1979 = vsel %vm1978, %v1976, %v1973
        %v1980 = vadd.f32 %v1468, %v1700
        %v1981 = vadd.f32 %v1469, %v1709
        %v1982 = vadd.f32 %v1470, %v1718
        %v1983 = vadd.f32 %v1471, %v1727
        %v1984 = vadd.f32 %v1472, %v1736
        %v1985 = vadd.f32 %v1473, %v1745
        %v1986 = vadd.f32 %v1474, %v1754
        %v1987 = vadd.f32 %v1475, %v1763
        %v1988 = vadd.f32 %v1476, %v1772
        %v1989 = vadd.f32 %v1477, %v1781
        %v1990 = vadd.f32 %v1478, %v1790
        %v1991 = vadd.f32 %v1479, %v1799
        %v1992 = vadd.f32 %v1480, %v1808
        %v1993 = vadd.f32 %v1481, %v1817
        %v1994 = vadd.f32 %v1482, %v1826
        %v1995 = vadd.f32 %v1483, %v1835
        %v1996 = vadd.f32 %v1484, %v1844
        %v1997 = vadd.f32 %v1485, %v1853
        %v1998 = vadd.f32 %v1486, %v1862
        %v1999 = vadd.f32 %v1487, %v1871
        %v2000 = vadd.f32 %v1488, %v1880
        %v2001 = vadd.f32 %v1489, %v1889
        %v2002 = vadd.f32 %v1490, %v1898
        %v2003 = vadd.f32 %v1491, %v1907
        %v2004 = vadd.f32 %v1492, %v1916
        %v2005 = vadd.f32 %v1493, %v1925
        %v2006 = vadd.f32 %v1494, %v1934
        %v2007 = vadd.f32 %v1495, %v1943
        %v2008 = vadd.f32 %v1496, %v1952
        %v2009 = vadd.f32 %v1497, %v1961
        %v2010 = vadd.f32 %v1498, %v1970
        %v2011 = vadd.f32 %v1499, %v1979
        %v2012 = vsel %vm1500, %v1532, %v1980
        %v2013 = vsel %vm1501, %v1533, %v1981
        %v2014 = vsel %vm1502, %v1534, %v1982
        %v2015 = vsel %vm1503, %v1535, %v1983
        %v2016 = vsel %vm1504, %v1536, %v1984
        %v2017 = vsel %vm1505, %v1537, %v1985
        %v2018 = vsel %vm1506, %v1538, %v1986
        %v2019 = vsel %vm1507, %v1539, %v1987
        %v2020 = vsel %vm1508, %v1540, %v1988
        %v2021 = vsel %vm1509, %v1541, %v1989
        %v2022 = vsel %vm1510, %v1542, %v1990
        %v2023 = vsel %vm1511, %v1543, %v1991
        %v2024 = vsel %vm1512, %v1544, %v1992
        %v2025 = vsel %vm1513, %v1545, %v1993
        %v2026 = vsel %vm1514, %v1546, %v1994
        %v2027 = vsel %vm1515, %v1547, %v1995
        %v2028 = vsel %vm1516, %v1548, %v1996
        %v2029 = vsel %vm1517, %v1549, %v1997
        %v2030 = vsel %vm1518, %v1550, %v1998
        %v2031 = vsel %vm1519, %v1551, %v1999
        %v2032 = vsel %vm1520, %v1552, %v2000
        %v2033 = vsel %vm1521, %v1553, %v2001
        %v2034 = vsel %vm1522, %v1554, %v2002
        %v2035 = vsel %vm1523, %v1555, %v2003
        %v2036 = vsel %vm1524, %v1556, %v2004
        %v2037 = vsel %vm1525, %v1557, %v2005
        %v2038 = vsel %vm1526, %v1558, %v2006
        %v2039 = vsel %vm1527, %v1559, %v2007
        %v2040 = vsel %vm1528, %v1560, %v2008
        %v2041 = vsel %vm1529, %v1561, %v2009
        %v2042 = vsel %vm1530, %v1562, %v2010
        %v2043 = vsel %vm1531, %v1563, %v2011
        %v2044 = vmul.f32 %v1179, %v300
        %v2045 = vmul.f32 %v1181, %v300
        %v2046 = vmul.f32 %v1184, %v300
        %v2047 = vmul.f32 %v1186, %v300
        %v2048 = vmul.f32 %v1189, %v300
        %v2049 = vmul.f32 %v1191, %v300
        %v2050 = vmul.f32 %v1194, %v300
        %v2051 = vmul.f32 %v1196, %v300
        %v2052 = vmul.f32 %v1199, %v300
        %v2053 = vmul.f32 %v1201, %v300
        %v2054 = vmul.f32 %v1204, %v300
        %v2055 = vmul.f32 %v1206, %v300
        %v2056 = vmul.f32 %v1209, %v300
        %v2057 = vmul.f32 %v1211, %v300
        %v2058 = vmul.f32 %v1214, %v300
        %v2059 = vmul.f32 %v1216, %v300
        %v2060 = vmul.f32 %v1219, %v300
        %v2061 = vmul.f32 %v1221, %v300
        %v2062 = vmul.f32 %v1224, %v300
        %v2063 = vmul.f32 %v1226, %v300
        %v2064 = vmul.f32 %v1229, %v300
        %v2065 = vmul.f32 %v1231, %v300
        %v2066 = vmul.f32 %v1234, %v300
        %v2067 = vmul.f32 %v1236, %v300
        %v2068 = vmul.f32 %v1239, %v300
        %v2069 = vmul.f32 %v1241, %v300
        %v2070 = vmul.f32 %v1244, %v300
        %v2071 = vmul.f32 %v1246, %v300
        %v2072 = vmul.f32 %v1249, %v300
        %v2073 = vmul.f32 %v1251, %v300
        %v2074 = vmul.f32 %v1254, %v300
        %v2075 = vmul.f32 %v1256, %v300
        %v2076 = vadd.f32 %v2044, %v301
        %v2077 = vadd.f32 %v2045, %v301
        %v2078 = vadd.f32 %v2046, %v301
        %v2079 = vadd.f32 %v2047, %v301
        %v2080 = vadd.f32 %v2048, %v301
        %v2081 = vadd.f32 %v2049, %v301
        %v2082 = vadd.f32 %v2050, %v301
        %v2083 = vadd.f32 %v2051, %v301
        %v2084 = vadd.f32 %v2052, %v301
        %v2085 = vadd.f32 %v2053, %v301
        %v2086 = vadd.f32 %v2054, %v301
        %v2087 = vadd.f32 %v2055, %v301
        %v2088 = vadd.f32 %v2056, %v301
        %v2089 = vadd.f32 %v2057, %v301
        %v2090 = vadd.f32 %v2058, %v301
        %v2091 = vadd.f32 %v2059, %v301
        %v2092 = vadd.f32 %v2060, %v301
        %v2093 = vadd.f32 %v2061, %v301
        %v2094 = vadd.f32 %v2062, %v301
        %v2095 = vadd.f32 %v2063, %v301
        %v2096 = vadd.f32 %v2064, %v301
        %v2097 = vadd.f32 %v2065, %v301
        %v2098 = vadd.f32 %v2066, %v301
        %v2099 = vadd.f32 %v2067, %v301
        %v2100 = vadd.f32 %v2068, %v301
        %v2101 = vadd.f32 %v2069, %v301
        %v2102 = vadd.f32 %v2070, %v301
        %v2103 = vadd.f32 %v2071, %v301
        %v2104 = vadd.f32 %v2072, %v301
        %v2105 = vadd.f32 %v2073, %v301
        %v2106 = vadd.f32 %v2074, %v301
        %v2107 = vadd.f32 %v2075, %v301
        %v2108 = vmul.f32 %v1357, %v302
        %v2109 = vmul.f32 %v1359, %v302
        %v2110 = vmul.f32 %v1362, %v302
        %v2111 = vmul.f32 %v1364, %v302
        %v2112 = vmul.f32 %v1367, %v302
        %v2113 = vmul.f32 %v1369, %v302
        %v2114 = vmul.f32 %v1372, %v302
        %v2115 = vmul.f32 %v1374, %v302
        %v2116 = vmul.f32 %v1377, %v302
        %v2117 = vmul.f32 %v1379, %v302
        %v2118 = vmul.f32 %v1382, %v302
        %v2119 = vmul.f32 %v1384, %v302
        %v2120 = vmul.f32 %v1387, %v302
        %v2121 = vmul.f32 %v1389, %v302
        %v2122 = vmul.f32 %v1392, %v302
        %v2123 = vmul.f32 %v1394, %v302
        %v2124 = vmul.f32 %v1397, %v302
        %v2125 = vmul.f32 %v1399, %v302
        %v2126 = vmul.f32 %v1402, %v302
        %v2127 = vmul.f32 %v1404, %v302
        %v2128 = vmul.f32 %v1407, %v302
        %v2129 = vmul.f32 %v1409, %v302
        %v2130 = vmul.f32 %v1412, %v302
        %v2131 = vmul.f32 %v1414, %v302
        %v2132 = vmul.f32 %v1417, %v302
        %v2133 = vmul.f32 %v1419, %v302
        %v2134 = vmul.f32 %v1422, %v302
        %v2135 = vmul.f32 %v1424, %v302
        %v2136 = vmul.f32 %v1427, %v302
        %v2137 = vmul.f32 %v1429, %v302
        %v2138 = vmul.f32 %v1432, %v302
        %v2139 = vmul.f32 %v1434, %v302
        %v2140 = vadd.f32 %v2108, %v303
        %v2141 = vadd.f32 %v2109, %v303
        %v2142 = vadd.f32 %v2110, %v303
        %v2143 = vadd.f32 %v2111, %v303
        %v2144 = vadd.f32 %v2112, %v303
        %v2145 = vadd.f32 %v2113, %v303
        %v2146 = vadd.f32 %v2114, %v303
        %v2147 = vadd.f32 %v2115, %v303
        %v2148 = vadd.f32 %v2116, %v303
        %v2149 = vadd.f32 %v2117, %v303
        %v2150 = vadd.f32 %v2118, %v303
        %v2151 = vadd.f32 %v2119, %v303
        %v2152 = vadd.f32 %v2120, %v303
        %v2153 = vadd.f32 %v2121, %v303
        %v2154 = vadd.f32 %v2122, %v303
        %v2155 = vadd.f32 %v2123, %v303
        %v2156 = vadd.f32 %v2124, %v303
        %v2157 = vadd.f32 %v2125, %v303
        %v2158 = vadd.f32 %v2126, %v303
        %v2159 = vadd.f32 %v2127, %v303
        %v2160 = vadd.f32 %v2128, %v303
        %v2161 = vadd.f32 %v2129, %v303
        %v2162 = vadd.f32 %v2130, %v303
        %v2163 = vadd.f32 %v2131, %v303
        %v2164 = vadd.f32 %v2132, %v303
        %v2165 = vadd.f32 %v2133, %v303
        %v2166 = vadd.f32 %v2134, %v303
        %v2167 = vadd.f32 %v2135, %v303
        %v2168 = vadd.f32 %v2136, %v303
        %v2169 = vadd.f32 %v2137, %v303
        %v2170 = vadd.f32 %v2138, %v303
        %v2171 = vadd.f32 %v2139, %v303
        %v2172 = vxor.u32 %v2076, 2147483648
        %v2173 = vxor.u32 %v2077, 2147483648
        %v2174 = vxor.u32 %v2078, 2147483648
        %v2175 = vxor.u32 %v2079, 2147483648
        %v2176 = vxor.u32 %v2080, 2147483648
        %v2177 = vxor.u32 %v2081, 2147483648
        %v2178 = vxor.u32 %v2082, 2147483648
        %v2179 = vxor.u32 %v2083, 2147483648
        %v2180 = vxor.u32 %v2084, 2147483648
        %v2181 = vxor.u32 %v2085, 2147483648
        %v2182 = vxor.u32 %v2086, 2147483648
        %v2183 = vxor.u32 %v2087, 2147483648
        %v2184 = vxor.u32 %v2088, 2147483648
        %v2185 = vxor.u32 %v2089, 2147483648
        %v2186 = vxor.u32 %v2090, 2147483648
        %v2187 = vxor.u32 %v2091, 2147483648
        %v2188 = vxor.u32 %v2092, 2147483648
        %v2189 = vxor.u32 %v2093, 2147483648
        %v2190 = vxor.u32 %v2094, 2147483648
        %v2191 = vxor.u32 %v2095, 2147483648
        %v2192 = vxor.u32 %v2096, 2147483648
        %v2193 = vxor.u32 %v2097, 2147483648
        %v2194 = vxor.u32 %v2098, 2147483648
        %v2195 = vxor.u32 %v2099, 2147483648
        %v2196 = vxor.u32 %v2100, 2147483648
        %v2197 = vxor.u32 %v2101, 2147483648
        %v2198 = vxor.u32 %v2102, 2147483648
        %v2199 = vxor.u32 %v2103, 2147483648
        %v2200 = vxor.u32 %v2104, 2147483648
        %v2201 = vxor.u32 %v2105, 2147483648
        %v2202 = vxor.u32 %v2106, 2147483648
        %v2203 = vxor.u32 %v2107, 2147483648
        %v2204 = vmul.f32 %v2172, 1.442695
        %v2205 = vpow.pop %v2204
        %v2206 = vmul.f32 %v2173, 1.442695
        %v2207 = vpow.pop %v2206
        %v2208 = vmul.f32 %v2174, 1.442695
        %v2209 = vpow.pop %v2208
        %v2210 = vmul.f32 %v2175, 1.442695
        %v2211 = vpow.pop %v2210
        %v2212 = vmul.f32 %v2176, 1.442695
        %v2213 = vpow.pop %v2212
        %v2214 = vmul.f32 %v2177, 1.442695
        %v2215 = vpow.pop %v2214
        %v2216 = vmul.f32 %v2178, 1.442695
        %v2217 = vpow.pop %v2216
        %v2218 = vmul.f32 %v2179, 1.442695
        %v2219 = vpow.pop %v2218
        %v2220 = vmul.f32 %v2180, 1.442695
        %v2221 = vpow.pop %v2220
        %v2222 = vmul.f32 %v2181, 1.442695
        %v2223 = vpow.pop %v2222
        %v2224 = vmul.f32 %v2182, 1.442695
        %v2225 = vpow.pop %v2224
        %v2226 = vmul.f32 %v2183, 1.442695
        %v2227 = vpow.pop %v2226
        %v2228 = vmul.f32 %v2184, 1.442695
        %v2229 = vpow.pop %v2228
        %v2230 = vmul.f32 %v2185, 1.442695
        %v2231 = vpow.pop %v2230
        %v2232 = vmul.f32 %v2186, 1.442695
        %v2233 = vpow.pop %v2232
        %v2234 = vmul.f32 %v2187, 1.442695
        %v2235 = vpow.pop %v2234
        %v2236 = vmul.f32 %v2188, 1.442695
        %v2237 = vpow.pop %v2236
        %v2238 = vmul.f32 %v2189, 1.442695
        %v2239 = vpow.pop %v2238
        %v2240 = vmul.f32 %v2190, 1.442695
        %v2241 = vpow.pop %v2240
        %v2242 = vmul.f32 %v2191, 1.442695
        %v2243 = vpow.pop %v2242
        %v2244 = vmul.f32 %v2192, 1.442695
        %v2245 = vpow.pop %v2244
        %v2246 = vmul.f32 %v2193, 1.442695
        %v2247 = vpow.pop %v2246
        %v2248 = vmul.f32 %v2194, 1.442695
        %v2249 = vpow.pop %v2248
        %v2250 = vmul.f32 %v2195, 1.442695
        %v2251 = vpow.pop %v2250
        %v2252 = vmul.f32 %v2196, 1.442695
        %v2253 = vpow.pop %v2252
        %v2254 = vmul.f32 %v2197, 1.442695
        %v2255 = vpow.pop %v2254
        %v2256 = vmul.f32 %v2198, 1.442695
        %v2257 = vpow.pop %v2256
        %v2258 = vmul.f32 %v2199, 1.442695
        %v2259 = vpow.pop %v2258
        %v2260 = vmul.f32 %v2200, 1.442695
        %v2261 = vpow.pop %v2260
        %v2262 = vmul.f32 %v2201, 1.442695
        %v2263 = vpow.pop %v2262
        %v2264 = vmul.f32 %v2202, 1.442695
        %v2265 = vpow.pop %v2264
        %v2266 = vmul.f32 %v2203, 1.442695
        %v2267 = vpow.pop %v2266
        %v2268 = vadd.f32 %v2205, 1.0
        %v2269 = vadd.f32 %v2207, 1.0
        %v2270 = vadd.f32 %v2209, 1.0
        %v2271 = vadd.f32 %v2211, 1.0
        %v2272 = vadd.f32 %v2213, 1.0
        %v2273 = vadd.f32 %v2215, 1.0
        %v2274 = vadd.f32 %v2217, 1.0
        %v2275 = vadd.f32 %v2219, 1.0
        %v2276 = vadd.f32 %v2221, 1.0
        %v2277 = vadd.f32 %v2223, 1.0
        %v2278 = vadd.f32 %v2225, 1.0
        %v2279 = vadd.f32 %v2227, 1.0
        %v2280 = vadd.f32 %v2229, 1.0
        %v2281 = vadd.f32 %v2231, 1.0
        %v2282 = vadd.f32 %v2233, 1.0
        %v2283 = vadd.f32 %v2235, 1.0
        %v2284 = vadd.f32 %v2237, 1.0
        %v2285 = vadd.f32 %v2239, 1.0
        %v2286 = vadd.f32 %v2241, 1.0
        %v2287 = vadd.f32 %v2243, 1.0
        %v2288 = vadd.f32 %v2245, 1.0
        %v2289 = vadd.f32 %v2247, 1.0
        %v2290 = vadd.f32 %v2249, 1.0
        %v2291 = vadd.f32 %v2251, 1.0
        %v2292 = vadd.f32 %v2253, 1.0
        %v2293 = vadd.f32 %v2255, 1.0
        %v2294 = vadd.f32 %v2257, 1.0
        %v2295 = vadd.f32 %v2259, 1.0
        %v2296 = vadd.f32 %v2261, 1.0
        %v2297 = vadd.f32 %v2263, 1.0
        %v2298 = vadd.f32 %v2265, 1.0
        %v2299 = vadd.f32 %v2267, 1.0
        %v2300 = vrcp.pop %v2268
        %v2301 = vmul.f32 %v2268, %v2300
        %v2302 = vsub.f32 1.0, %v2301
        %v2303 = vmul.f32 %v2300, %v2302
        %v2304 = vadd.f32 %v2300, %v2303
        %vm2305 = vweird.f32 %v2268
        %vm2306 = vweird.f32 %v2300
        %vm2307 = vmor %vm2305, %vm2306
        %v2308 = vsel %vm2307, %v2300, %v2304
        %v2309 = vand.u32 2147483647, %v2268
        %vm2310 = vcmp.eq.f32.partialorder %v2309, 8.507059e+37
        %v2311 = vand.u32 %v2268, 2147483648
        %v2312 = vor.u32 1.1754944e-38, %v2311
        %v2313 = vsel %vm2310, %v2312, %v2308
        %v2314 = vmul.f32 1.0, %v2313
        %v2315 = vrcp.pop %v2269
        %v2316 = vmul.f32 %v2269, %v2315
        %v2317 = vsub.f32 1.0, %v2316
        %v2318 = vmul.f32 %v2315, %v2317
        %v2319 = vadd.f32 %v2315, %v2318
        %vm2320 = vweird.f32 %v2269
        %vm2321 = vweird.f32 %v2315
        %vm2322 = vmor %vm2320, %vm2321
        %v2323 = vsel %vm2322, %v2315, %v2319
        %v2324 = vand.u32 2147483647, %v2269
        %vm2325 = vcmp.eq.f32.partialorder %v2324, 8.507059e+37
        %v2326 = vand.u32 %v2269, 2147483648
        %v2327 = vor.u32 1.1754944e-38, %v2326
        %v2328 = vsel %vm2325, %v2327, %v2323
        %v2329 = vmul.f32 1.0, %v2328
        %v2330 = vrcp.pop %v2270
        %v2331 = vmul.f32 %v2270, %v2330
        %v2332 = vsub.f32 1.0, %v2331
        %v2333 = vmul.f32 %v2330, %v2332
        %v2334 = vadd.f32 %v2330, %v2333
        %vm2335 = vweird.f32 %v2270
        %vm2336 = vweird.f32 %v2330
        %vm2337 = vmor %vm2335, %vm2336
        %v2338 = vsel %vm2337, %v2330, %v2334
        %v2339 = vand.u32 2147483647, %v2270
        %vm2340 = vcmp.eq.f32.partialorder %v2339, 8.507059e+37
        %v2341 = vand.u32 %v2270, 2147483648
        %v2342 = vor.u32 1.1754944e-38, %v2341
        %v2343 = vsel %vm2340, %v2342, %v2338
        %v2344 = vmul.f32 1.0, %v2343
        %v2345 = vrcp.pop %v2271
        %v2346 = vmul.f32 %v2271, %v2345
        %v2347 = vsub.f32 1.0, %v2346
        %v2348 = vmul.f32 %v2345, %v2347
        %v2349 = vadd.f32 %v2345, %v2348
        %vm2350 = vweird.f32 %v2271
        %vm2351 = vweird.f32 %v2345
        %vm2352 = vmor %vm2350, %vm2351
        %v2353 = vsel %vm2352, %v2345, %v2349
        %v2354 = vand.u32 2147483647, %v2271
        %vm2355 = vcmp.eq.f32.partialorder %v2354, 8.507059e+37
        %v2356 = vand.u32 %v2271, 2147483648
        %v2357 = vor.u32 1.1754944e-38, %v2356
        %v2358 = vsel %vm2355, %v2357, %v2353
        %v2359 = vmul.f32 1.0, %v2358
        %v2360 = vrcp.pop %v2272
        %v2361 = vmul.f32 %v2272, %v2360
        %v2362 = vsub.f32 1.0, %v2361
        %v2363 = vmul.f32 %v2360, %v2362
        %v2364 = vadd.f32 %v2360, %v2363
        %vm2365 = vweird.f32 %v2272
        %vm2366 = vweird.f32 %v2360
        %vm2367 = vmor %vm2365, %vm2366
        %v2368 = vsel %vm2367, %v2360, %v2364
        %v2369 = vand.u32 2147483647, %v2272
        %vm2370 = vcmp.eq.f32.partialorder %v2369, 8.507059e+37
        %v2371 = vand.u32 %v2272, 2147483648
        %v2372 = vor.u32 1.1754944e-38, %v2371
        %v2373 = vsel %vm2370, %v2372, %v2368
        %v2374 = vmul.f32 1.0, %v2373
        %v2375 = vrcp.pop %v2273
        %v2376 = vmul.f32 %v2273, %v2375
        %v2377 = vsub.f32 1.0, %v2376
        %v2378 = vmul.f32 %v2375, %v2377
        %v2379 = vadd.f32 %v2375, %v2378
        %vm2380 = vweird.f32 %v2273
        %vm2381 = vweird.f32 %v2375
        %vm2382 = vmor %vm2380, %vm2381
        %v2383 = vsel %vm2382, %v2375, %v2379
        %v2384 = vand.u32 2147483647, %v2273
        %vm2385 = vcmp.eq.f32.partialorder %v2384, 8.507059e+37
        %v2386 = vand.u32 %v2273, 2147483648
        %v2387 = vor.u32 1.1754944e-38, %v2386
        %v2388 = vsel %vm2385, %v2387, %v2383
        %v2389 = vmul.f32 1.0, %v2388
        %v2390 = vrcp.pop %v2274
        %v2391 = vmul.f32 %v2274, %v2390
        %v2392 = vsub.f32 1.0, %v2391
        %v2393 = vmul.f32 %v2390, %v2392
        %v2394 = vadd.f32 %v2390, %v2393
        %vm2395 = vweird.f32 %v2274
        %vm2396 = vweird.f32 %v2390
        %vm2397 = vmor %vm2395, %vm2396
        %v2398 = vsel %vm2397, %v2390, %v2394
        %v2399 = vand.u32 2147483647, %v2274
        %vm2400 = vcmp.eq.f32.partialorder %v2399, 8.507059e+37
        %v2401 = vand.u32 %v2274, 2147483648
        %v2402 = vor.u32 1.1754944e-38, %v2401
        %v2403 = vsel %vm2400, %v2402, %v2398
        %v2404 = vmul.f32 1.0, %v2403
        %v2405 = vrcp.pop %v2275
        %v2406 = vmul.f32 %v2275, %v2405
        %v2407 = vsub.f32 1.0, %v2406
        %v2408 = vmul.f32 %v2405, %v2407
        %v2409 = vadd.f32 %v2405, %v2408
        %vm2410 = vweird.f32 %v2275
        %vm2411 = vweird.f32 %v2405
        %vm2412 = vmor %vm2410, %vm2411
        %v2413 = vsel %vm2412, %v2405, %v2409
        %v2414 = vand.u32 2147483647, %v2275
        %vm2415 = vcmp.eq.f32.partialorder %v2414, 8.507059e+37
        %v2416 = vand.u32 %v2275, 2147483648
        %v2417 = vor.u32 1.1754944e-38, %v2416
        %v2418 = vsel %vm2415, %v2417, %v2413
        %v2419 = vmul.f32 1.0, %v2418
        %v2420 = vrcp.pop %v2276
        %v2421 = vmul.f32 %v2276, %v2420
        %v2422 = vsub.f32 1.0, %v2421
        %v2423 = vmul.f32 %v2420, %v2422
        %v2424 = vadd.f32 %v2420, %v2423
        %vm2425 = vweird.f32 %v2276
        %vm2426 = vweird.f32 %v2420
        %vm2427 = vmor %vm2425, %vm2426
        %v2428 = vsel %vm2427, %v2420, %v2424
        %v2429 = vand.u32 2147483647, %v2276
        %vm2430 = vcmp.eq.f32.partialorder %v2429, 8.507059e+37
        %v2431 = vand.u32 %v2276, 2147483648
        %v2432 = vor.u32 1.1754944e-38, %v2431
        %v2433 = vsel %vm2430, %v2432, %v2428
        %v2434 = vmul.f32 1.0, %v2433
        %v2435 = vrcp.pop %v2277
        %v2436 = vmul.f32 %v2277, %v2435
        %v2437 = vsub.f32 1.0, %v2436
        %v2438 = vmul.f32 %v2435, %v2437
        %v2439 = vadd.f32 %v2435, %v2438
        %vm2440 = vweird.f32 %v2277
        %vm2441 = vweird.f32 %v2435
        %vm2442 = vmor %vm2440, %vm2441
        %v2443 = vsel %vm2442, %v2435, %v2439
        %v2444 = vand.u32 2147483647, %v2277
        %vm2445 = vcmp.eq.f32.partialorder %v2444, 8.507059e+37
        %v2446 = vand.u32 %v2277, 2147483648
        %v2447 = vor.u32 1.1754944e-38, %v2446
        %v2448 = vsel %vm2445, %v2447, %v2443
        %v2449 = vmul.f32 1.0, %v2448
        %v2450 = vrcp.pop %v2278
        %v2451 = vmul.f32 %v2278, %v2450
        %v2452 = vsub.f32 1.0, %v2451
        %v2453 = vmul.f32 %v2450, %v2452
        %v2454 = vadd.f32 %v2450, %v2453
        %vm2455 = vweird.f32 %v2278
        %vm2456 = vweird.f32 %v2450
        %vm2457 = vmor %vm2455, %vm2456
        %v2458 = vsel %vm2457, %v2450, %v2454
        %v2459 = vand.u32 2147483647, %v2278
        %vm2460 = vcmp.eq.f32.partialorder %v2459, 8.507059e+37
        %v2461 = vand.u32 %v2278, 2147483648
        %v2462 = vor.u32 1.1754944e-38, %v2461
        %v2463 = vsel %vm2460, %v2462, %v2458
        %v2464 = vmul.f32 1.0, %v2463
        %v2465 = vrcp.pop %v2279
        %v2466 = vmul.f32 %v2279, %v2465
        %v2467 = vsub.f32 1.0, %v2466
        %v2468 = vmul.f32 %v2465, %v2467
        %v2469 = vadd.f32 %v2465, %v2468
        %vm2470 = vweird.f32 %v2279
        %vm2471 = vweird.f32 %v2465
        %vm2472 = vmor %vm2470, %vm2471
        %v2473 = vsel %vm2472, %v2465, %v2469
        %v2474 = vand.u32 2147483647, %v2279
        %vm2475 = vcmp.eq.f32.partialorder %v2474, 8.507059e+37
        %v2476 = vand.u32 %v2279, 2147483648
        %v2477 = vor.u32 1.1754944e-38, %v2476
        %v2478 = vsel %vm2475, %v2477, %v2473
        %v2479 = vmul.f32 1.0, %v2478
        %v2480 = vrcp.pop %v2280
        %v2481 = vmul.f32 %v2280, %v2480
        %v2482 = vsub.f32 1.0, %v2481
        %v2483 = vmul.f32 %v2480, %v2482
        %v2484 = vadd.f32 %v2480, %v2483
        %vm2485 = vweird.f32 %v2280
        %vm2486 = vweird.f32 %v2480
        %vm2487 = vmor %vm2485, %vm2486
        %v2488 = vsel %vm2487, %v2480, %v2484
        %v2489 = vand.u32 2147483647, %v2280
        %vm2490 = vcmp.eq.f32.partialorder %v2489, 8.507059e+37
        %v2491 = vand.u32 %v2280, 2147483648
        %v2492 = vor.u32 1.1754944e-38, %v2491
        %v2493 = vsel %vm2490, %v2492, %v2488
        %v2494 = vmul.f32 1.0, %v2493
        %v2495 = vrcp.pop %v2281
        %v2496 = vmul.f32 %v2281, %v2495
        %v2497 = vsub.f32 1.0, %v2496
        %v2498 = vmul.f32 %v2495, %v2497
        %v2499 = vadd.f32 %v2495, %v2498
        %vm2500 = vweird.f32 %v2281
        %vm2501 = vweird.f32 %v2495
        %vm2502 = vmor %vm2500, %vm2501
        %v2503 = vsel %vm2502, %v2495, %v2499
        %v2504 = vand.u32 2147483647, %v2281
        %vm2505 = vcmp.eq.f32.partialorder %v2504, 8.507059e+37
        %v2506 = vand.u32 %v2281, 2147483648
        %v2507 = vor.u32 1.1754944e-38, %v2506
        %v2508 = vsel %vm2505, %v2507, %v2503
        %v2509 = vmul.f32 1.0, %v2508
        %v2510 = vrcp.pop %v2282
        %v2511 = vmul.f32 %v2282, %v2510
        %v2512 = vsub.f32 1.0, %v2511
        %v2513 = vmul.f32 %v2510, %v2512
        %v2514 = vadd.f32 %v2510, %v2513
        %vm2515 = vweird.f32 %v2282
        %vm2516 = vweird.f32 %v2510
        %vm2517 = vmor %vm2515, %vm2516
        %v2518 = vsel %vm2517, %v2510, %v2514
        %v2519 = vand.u32 2147483647, %v2282
        %vm2520 = vcmp.eq.f32.partialorder %v2519, 8.507059e+37
        %v2521 = vand.u32 %v2282, 2147483648
        %v2522 = vor.u32 1.1754944e-38, %v2521
        %v2523 = vsel %vm2520, %v2522, %v2518
        %v2524 = vmul.f32 1.0, %v2523
        %v2525 = vrcp.pop %v2283
        %v2526 = vmul.f32 %v2283, %v2525
        %v2527 = vsub.f32 1.0, %v2526
        %v2528 = vmul.f32 %v2525, %v2527
        %v2529 = vadd.f32 %v2525, %v2528
        %vm2530 = vweird.f32 %v2283
        %vm2531 = vweird.f32 %v2525
        %vm2532 = vmor %vm2530, %vm2531
        %v2533 = vsel %vm2532, %v2525, %v2529
        %v2534 = vand.u32 2147483647, %v2283
        %vm2535 = vcmp.eq.f32.partialorder %v2534, 8.507059e+37
        %v2536 = vand.u32 %v2283, 2147483648
        %v2537 = vor.u32 1.1754944e-38, %v2536
        %v2538 = vsel %vm2535, %v2537, %v2533
        %v2539 = vmul.f32 1.0, %v2538
        %v2540 = vrcp.pop %v2284
        %v2541 = vmul.f32 %v2284, %v2540
        %v2542 = vsub.f32 1.0, %v2541
        %v2543 = vmul.f32 %v2540, %v2542
        %v2544 = vadd.f32 %v2540, %v2543
        %vm2545 = vweird.f32 %v2284
        %vm2546 = vweird.f32 %v2540
        %vm2547 = vmor %vm2545, %vm2546
        %v2548 = vsel %vm2547, %v2540, %v2544
        %v2549 = vand.u32 2147483647, %v2284
        %vm2550 = vcmp.eq.f32.partialorder %v2549, 8.507059e+37
        %v2551 = vand.u32 %v2284, 2147483648
        %v2552 = vor.u32 1.1754944e-38, %v2551
        %v2553 = vsel %vm2550, %v2552, %v2548
        %v2554 = vmul.f32 1.0, %v2553
        %v2555 = vrcp.pop %v2285
        %v2556 = vmul.f32 %v2285, %v2555
        %v2557 = vsub.f32 1.0, %v2556
        %v2558 = vmul.f32 %v2555, %v2557
        %v2559 = vadd.f32 %v2555, %v2558
        %vm2560 = vweird.f32 %v2285
        %vm2561 = vweird.f32 %v2555
        %vm2562 = vmor %vm2560, %vm2561
        %v2563 = vsel %vm2562, %v2555, %v2559
        %v2564 = vand.u32 2147483647, %v2285
        %vm2565 = vcmp.eq.f32.partialorder %v2564, 8.507059e+37
        %v2566 = vand.u32 %v2285, 2147483648
        %v2567 = vor.u32 1.1754944e-38, %v2566
        %v2568 = vsel %vm2565, %v2567, %v2563
        %v2569 = vmul.f32 1.0, %v2568
        %v2570 = vrcp.pop %v2286
        %v2571 = vmul.f32 %v2286, %v2570
        %v2572 = vsub.f32 1.0, %v2571
        %v2573 = vmul.f32 %v2570, %v2572
        %v2574 = vadd.f32 %v2570, %v2573
        %vm2575 = vweird.f32 %v2286
        %vm2576 = vweird.f32 %v2570
        %vm2577 = vmor %vm2575, %vm2576
        %v2578 = vsel %vm2577, %v2570, %v2574
        %v2579 = vand.u32 2147483647, %v2286
        %vm2580 = vcmp.eq.f32.partialorder %v2579, 8.507059e+37
        %v2581 = vand.u32 %v2286, 2147483648
        %v2582 = vor.u32 1.1754944e-38, %v2581
        %v2583 = vsel %vm2580, %v2582, %v2578
        %v2584 = vmul.f32 1.0, %v2583
        %v2585 = vrcp.pop %v2287
        %v2586 = vmul.f32 %v2287, %v2585
        %v2587 = vsub.f32 1.0, %v2586
        %v2588 = vmul.f32 %v2585, %v2587
        %v2589 = vadd.f32 %v2585, %v2588
        %vm2590 = vweird.f32 %v2287
        %vm2591 = vweird.f32 %v2585
        %vm2592 = vmor %vm2590, %vm2591
        %v2593 = vsel %vm2592, %v2585, %v2589
        %v2594 = vand.u32 2147483647, %v2287
        %vm2595 = vcmp.eq.f32.partialorder %v2594, 8.507059e+37
        %v2596 = vand.u32 %v2287, 2147483648
        %v2597 = vor.u32 1.1754944e-38, %v2596
        %v2598 = vsel %vm2595, %v2597, %v2593
        %v2599 = vmul.f32 1.0, %v2598
        %v2600 = vrcp.pop %v2288
        %v2601 = vmul.f32 %v2288, %v2600
        %v2602 = vsub.f32 1.0, %v2601
        %v2603 = vmul.f32 %v2600, %v2602
        %v2604 = vadd.f32 %v2600, %v2603
        %vm2605 = vweird.f32 %v2288
        %vm2606 = vweird.f32 %v2600
        %vm2607 = vmor %vm2605, %vm2606
        %v2608 = vsel %vm2607, %v2600, %v2604
        %v2609 = vand.u32 2147483647, %v2288
        %vm2610 = vcmp.eq.f32.partialorder %v2609, 8.507059e+37
        %v2611 = vand.u32 %v2288, 2147483648
        %v2612 = vor.u32 1.1754944e-38, %v2611
        %v2613 = vsel %vm2610, %v2612, %v2608
        %v2614 = vmul.f32 1.0, %v2613
        %v2615 = vrcp.pop %v2289
        %v2616 = vmul.f32 %v2289, %v2615
        %v2617 = vsub.f32 1.0, %v2616
        %v2618 = vmul.f32 %v2615, %v2617
        %v2619 = vadd.f32 %v2615, %v2618
        %vm2620 = vweird.f32 %v2289
        %vm2621 = vweird.f32 %v2615
        %vm2622 = vmor %vm2620, %vm2621
        %v2623 = vsel %vm2622, %v2615, %v2619
        %v2624 = vand.u32 2147483647, %v2289
        %vm2625 = vcmp.eq.f32.partialorder %v2624, 8.507059e+37
        %v2626 = vand.u32 %v2289, 2147483648
        %v2627 = vor.u32 1.1754944e-38, %v2626
        %v2628 = vsel %vm2625, %v2627, %v2623
        %v2629 = vmul.f32 1.0, %v2628
        %v2630 = vrcp.pop %v2290
        %v2631 = vmul.f32 %v2290, %v2630
        %v2632 = vsub.f32 1.0, %v2631
        %v2633 = vmul.f32 %v2630, %v2632
        %v2634 = vadd.f32 %v2630, %v2633
        %vm2635 = vweird.f32 %v2290
        %vm2636 = vweird.f32 %v2630
        %vm2637 = vmor %vm2635, %vm2636
        %v2638 = vsel %vm2637, %v2630, %v2634
        %v2639 = vand.u32 2147483647, %v2290
        %vm2640 = vcmp.eq.f32.partialorder %v2639, 8.507059e+37
        %v2641 = vand.u32 %v2290, 2147483648
        %v2642 = vor.u32 1.1754944e-38, %v2641
        %v2643 = vsel %vm2640, %v2642, %v2638
        %v2644 = vmul.f32 1.0, %v2643
        %v2645 = vrcp.pop %v2291
        %v2646 = vmul.f32 %v2291, %v2645
        %v2647 = vsub.f32 1.0, %v2646
        %v2648 = vmul.f32 %v2645, %v2647
        %v2649 = vadd.f32 %v2645, %v2648
        %vm2650 = vweird.f32 %v2291
        %vm2651 = vweird.f32 %v2645
        %vm2652 = vmor %vm2650, %vm2651
        %v2653 = vsel %vm2652, %v2645, %v2649
        %v2654 = vand.u32 2147483647, %v2291
        %vm2655 = vcmp.eq.f32.partialorder %v2654, 8.507059e+37
        %v2656 = vand.u32 %v2291, 2147483648
        %v2657 = vor.u32 1.1754944e-38, %v2656
        %v2658 = vsel %vm2655, %v2657, %v2653
        %v2659 = vmul.f32 1.0, %v2658
        %v2660 = vrcp.pop %v2292
        %v2661 = vmul.f32 %v2292, %v2660
        %v2662 = vsub.f32 1.0, %v2661
        %v2663 = vmul.f32 %v2660, %v2662
        %v2664 = vadd.f32 %v2660, %v2663
        %vm2665 = vweird.f32 %v2292
        %vm2666 = vweird.f32 %v2660
        %vm2667 = vmor %vm2665, %vm2666
        %v2668 = vsel %vm2667, %v2660, %v2664
        %v2669 = vand.u32 2147483647, %v2292
        %vm2670 = vcmp.eq.f32.partialorder %v2669, 8.507059e+37
        %v2671 = vand.u32 %v2292, 2147483648
        %v2672 = vor.u32 1.1754944e-38, %v2671
        %v2673 = vsel %vm2670, %v2672, %v2668
        %v2674 = vmul.f32 1.0, %v2673
        %v2675 = vrcp.pop %v2293
        %v2676 = vmul.f32 %v2293, %v2675
        %v2677 = vsub.f32 1.0, %v2676
        %v2678 = vmul.f32 %v2675, %v2677
        %v2679 = vadd.f32 %v2675, %v2678
        %vm2680 = vweird.f32 %v2293
        %vm2681 = vweird.f32 %v2675
        %vm2682 = vmor %vm2680, %vm2681
        %v2683 = vsel %vm2682, %v2675, %v2679
        %v2684 = vand.u32 2147483647, %v2293
        %vm2685 = vcmp.eq.f32.partialorder %v2684, 8.507059e+37
        %v2686 = vand.u32 %v2293, 2147483648
        %v2687 = vor.u32 1.1754944e-38, %v2686
        %v2688 = vsel %vm2685, %v2687, %v2683
        %v2689 = vmul.f32 1.0, %v2688
        %v2690 = vrcp.pop %v2294
        %v2691 = vmul.f32 %v2294, %v2690
        %v2692 = vsub.f32 1.0, %v2691
        %v2693 = vmul.f32 %v2690, %v2692
        %v2694 = vadd.f32 %v2690, %v2693
        %vm2695 = vweird.f32 %v2294
        %vm2696 = vweird.f32 %v2690
        %vm2697 = vmor %vm2695, %vm2696
        %v2698 = vsel %vm2697, %v2690, %v2694
        %v2699 = vand.u32 2147483647, %v2294
        %vm2700 = vcmp.eq.f32.partialorder %v2699, 8.507059e+37
        %v2701 = vand.u32 %v2294, 2147483648
        %v2702 = vor.u32 1.1754944e-38, %v2701
        %v2703 = vsel %vm2700, %v2702, %v2698
        %v2704 = vmul.f32 1.0, %v2703
        %v2705 = vrcp.pop %v2295
        %v2706 = vmul.f32 %v2295, %v2705
        %v2707 = vsub.f32 1.0, %v2706
        %v2708 = vmul.f32 %v2705, %v2707
        %v2709 = vadd.f32 %v2705, %v2708
        %vm2710 = vweird.f32 %v2295
        %vm2711 = vweird.f32 %v2705
        %vm2712 = vmor %vm2710, %vm2711
        %v2713 = vsel %vm2712, %v2705, %v2709
        %v2714 = vand.u32 2147483647, %v2295
        %vm2715 = vcmp.eq.f32.partialorder %v2714, 8.507059e+37
        %v2716 = vand.u32 %v2295, 2147483648
        %v2717 = vor.u32 1.1754944e-38, %v2716
        %v2718 = vsel %vm2715, %v2717, %v2713
        %v2719 = vmul.f32 1.0, %v2718
        %v2720 = vrcp.pop %v2296
        %v2721 = vmul.f32 %v2296, %v2720
        %v2722 = vsub.f32 1.0, %v2721
        %v2723 = vmul.f32 %v2720, %v2722
        %v2724 = vadd.f32 %v2720, %v2723
        %vm2725 = vweird.f32 %v2296
        %vm2726 = vweird.f32 %v2720
        %vm2727 = vmor %vm2725, %vm2726
        %v2728 = vsel %vm2727, %v2720, %v2724
        %v2729 = vand.u32 2147483647, %v2296
        %vm2730 = vcmp.eq.f32.partialorder %v2729, 8.507059e+37
        %v2731 = vand.u32 %v2296, 2147483648
        %v2732 = vor.u32 1.1754944e-38, %v2731
        %v2733 = vsel %vm2730, %v2732, %v2728
        %v2734 = vmul.f32 1.0, %v2733
        %v2735 = vrcp.pop %v2297
        %v2736 = vmul.f32 %v2297, %v2735
        %v2737 = vsub.f32 1.0, %v2736
        %v2738 = vmul.f32 %v2735, %v2737
        %v2739 = vadd.f32 %v2735, %v2738
        %vm2740 = vweird.f32 %v2297
        %vm2741 = vweird.f32 %v2735
        %vm2742 = vmor %vm2740, %vm2741
        %v2743 = vsel %vm2742, %v2735, %v2739
        %v2744 = vand.u32 2147483647, %v2297
        %vm2745 = vcmp.eq.f32.partialorder %v2744, 8.507059e+37
        %v2746 = vand.u32 %v2297, 2147483648
        %v2747 = vor.u32 1.1754944e-38, %v2746
        %v2748 = vsel %vm2745, %v2747, %v2743
        %v2749 = vmul.f32 1.0, %v2748
        %v2750 = vrcp.pop %v2298
        %v2751 = vmul.f32 %v2298, %v2750
        %v2752 = vsub.f32 1.0, %v2751
        %v2753 = vmul.f32 %v2750, %v2752
        %v2754 = vadd.f32 %v2750, %v2753
        %vm2755 = vweird.f32 %v2298
        %vm2756 = vweird.f32 %v2750
        %vm2757 = vmor %vm2755, %vm2756
        %v2758 = vsel %vm2757, %v2750, %v2754
        %v2759 = vand.u32 2147483647, %v2298
        %vm2760 = vcmp.eq.f32.partialorder %v2759, 8.507059e+37
        %v2761 = vand.u32 %v2298, 2147483648
        %v2762 = vor.u32 1.1754944e-38, %v2761
        %v2763 = vsel %vm2760, %v2762, %v2758
        %v2764 = vmul.f32 1.0, %v2763
        %v2765 = vrcp.pop %v2299
        %v2766 = vmul.f32 %v2299, %v2765
        %v2767 = vsub.f32 1.0, %v2766
        %v2768 = vmul.f32 %v2765, %v2767
        %v2769 = vadd.f32 %v2765, %v2768
        %vm2770 = vweird.f32 %v2299
        %vm2771 = vweird.f32 %v2765
        %vm2772 = vmor %vm2770, %vm2771
        %v2773 = vsel %vm2772, %v2765, %v2769
        %v2774 = vand.u32 2147483647, %v2299
        %vm2775 = vcmp.eq.f32.partialorder %v2774, 8.507059e+37
        %v2776 = vand.u32 %v2299, 2147483648
        %v2777 = vor.u32 1.1754944e-38, %v2776
        %v2778 = vsel %vm2775, %v2777, %v2773
        %v2779 = vmul.f32 1.0, %v2778
        %v2780 = vmul.f32 %v2076, %v2314
        %v2781 = vmul.f32 %v2077, %v2329
        %v2782 = vmul.f32 %v2078, %v2344
        %v2783 = vmul.f32 %v2079, %v2359
        %v2784 = vmul.f32 %v2080, %v2374
        %v2785 = vmul.f32 %v2081, %v2389
        %v2786 = vmul.f32 %v2082, %v2404
        %v2787 = vmul.f32 %v2083, %v2419
        %v2788 = vmul.f32 %v2084, %v2434
        %v2789 = vmul.f32 %v2085, %v2449
        %v2790 = vmul.f32 %v2086, %v2464
        %v2791 = vmul.f32 %v2087, %v2479
        %v2792 = vmul.f32 %v2088, %v2494
        %v2793 = vmul.f32 %v2089, %v2509
        %v2794 = vmul.f32 %v2090, %v2524
        %v2795 = vmul.f32 %v2091, %v2539
        %v2796 = vmul.f32 %v2092, %v2554
        %v2797 = vmul.f32 %v2093, %v2569
        %v2798 = vmul.f32 %v2094, %v2584
        %v2799 = vmul.f32 %v2095, %v2599
        %v2800 = vmul.f32 %v2096, %v2614
        %v2801 = vmul.f32 %v2097, %v2629
        %v2802 = vmul.f32 %v2098, %v2644
        %v2803 = vmul.f32 %v2099, %v2659
        %v2804 = vmul.f32 %v2100, %v2674
        %v2805 = vmul.f32 %v2101, %v2689
        %v2806 = vmul.f32 %v2102, %v2704
        %v2807 = vmul.f32 %v2103, %v2719
        %v2808 = vmul.f32 %v2104, %v2734
        %v2809 = vmul.f32 %v2105, %v2749
        %v2810 = vmul.f32 %v2106, %v2764
        %v2811 = vmul.f32 %v2107, %v2779
        %v2812 = vxor.u32 %v2140, 2147483648
        %v2813 = vxor.u32 %v2141, 2147483648
        %v2814 = vxor.u32 %v2142, 2147483648
        %v2815 = vxor.u32 %v2143, 2147483648
        %v2816 = vxor.u32 %v2144, 2147483648
        %v2817 = vxor.u32 %v2145, 2147483648
        %v2818 = vxor.u32 %v2146, 2147483648
        %v2819 = vxor.u32 %v2147, 2147483648
        %v2820 = vxor.u32 %v2148, 2147483648
        %v2821 = vxor.u32 %v2149, 2147483648
        %v2822 = vxor.u32 %v2150, 2147483648
        %v2823 = vxor.u32 %v2151, 2147483648
        %v2824 = vxor.u32 %v2152, 2147483648
        %v2825 = vxor.u32 %v2153, 2147483648
        %v2826 = vxor.u32 %v2154, 2147483648
        %v2827 = vxor.u32 %v2155, 2147483648
        %v2828 = vxor.u32 %v2156, 2147483648
        %v2829 = vxor.u32 %v2157, 2147483648
        %v2830 = vxor.u32 %v2158, 2147483648
        %v2831 = vxor.u32 %v2159, 2147483648
        %v2832 = vxor.u32 %v2160, 2147483648
        %v2833 = vxor.u32 %v2161, 2147483648
        %v2834 = vxor.u32 %v2162, 2147483648
        %v2835 = vxor.u32 %v2163, 2147483648
        %v2836 = vxor.u32 %v2164, 2147483648
        %v2837 = vxor.u32 %v2165, 2147483648
        %v2838 = vxor.u32 %v2166, 2147483648
        %v2839 = vxor.u32 %v2167, 2147483648
        %v2840 = vxor.u32 %v2168, 2147483648
        %v2841 = vxor.u32 %v2169, 2147483648
        %v2842 = vxor.u32 %v2170, 2147483648
        %v2843 = vxor.u32 %v2171, 2147483648
        %v2844 = vmul.f32 %v2812, 1.442695
        %v2845 = vpow.pop %v2844
        %v2846 = vmul.f32 %v2813, 1.442695
        %v2847 = vpow.pop %v2846
        %v2848 = vmul.f32 %v2814, 1.442695
        %v2849 = vpow.pop %v2848
        %v2850 = vmul.f32 %v2815, 1.442695
        %v2851 = vpow.pop %v2850
        %v2852 = vmul.f32 %v2816, 1.442695
        %v2853 = vpow.pop %v2852
        %v2854 = vmul.f32 %v2817, 1.442695
        %v2855 = vpow.pop %v2854
        %v2856 = vmul.f32 %v2818, 1.442695
        %v2857 = vpow.pop %v2856
        %v2858 = vmul.f32 %v2819, 1.442695
        %v2859 = vpow.pop %v2858
        %v2860 = vmul.f32 %v2820, 1.442695
        %v2861 = vpow.pop %v2860
        %v2862 = vmul.f32 %v2821, 1.442695
        %v2863 = vpow.pop %v2862
        %v2864 = vmul.f32 %v2822, 1.442695
        %v2865 = vpow.pop %v2864
        %v2866 = vmul.f32 %v2823, 1.442695
        %v2867 = vpow.pop %v2866
        %v2868 = vmul.f32 %v2824, 1.442695
        %v2869 = vpow.pop %v2868
        %v2870 = vmul.f32 %v2825, 1.442695
        %v2871 = vpow.pop %v2870
        %v2872 = vmul.f32 %v2826, 1.442695
        %v2873 = vpow.pop %v2872
        %v2874 = vmul.f32 %v2827, 1.442695
        %v2875 = vpow.pop %v2874
        %v2876 = vmul.f32 %v2828, 1.442695
        %v2877 = vpow.pop %v2876
        %v2878 = vmul.f32 %v2829, 1.442695
        %v2879 = vpow.pop %v2878
        %v2880 = vmul.f32 %v2830, 1.442695
        %v2881 = vpow.pop %v2880
        %v2882 = vmul.f32 %v2831, 1.442695
        %v2883 = vpow.pop %v2882
        %v2884 = vmul.f32 %v2832, 1.442695
        %v2885 = vpow.pop %v2884
        %v2886 = vmul.f32 %v2833, 1.442695
        %v2887 = vpow.pop %v2886
        %v2888 = vmul.f32 %v2834, 1.442695
        %v2889 = vpow.pop %v2888
        %v2890 = vmul.f32 %v2835, 1.442695
        %v2891 = vpow.pop %v2890
        %v2892 = vmul.f32 %v2836, 1.442695
        %v2893 = vpow.pop %v2892
        %v2894 = vmul.f32 %v2837, 1.442695
        %v2895 = vpow.pop %v2894
        %v2896 = vmul.f32 %v2838, 1.442695
        %v2897 = vpow.pop %v2896
        %v2898 = vmul.f32 %v2839, 1.442695
        %v2899 = vpow.pop %v2898
        %v2900 = vmul.f32 %v2840, 1.442695
        %v2901 = vpow.pop %v2900
        %v2902 = vmul.f32 %v2841, 1.442695
        %v2903 = vpow.pop %v2902
        %v2904 = vmul.f32 %v2842, 1.442695
        %v2905 = vpow.pop %v2904
        %v2906 = vmul.f32 %v2843, 1.442695
        %v2907 = vpow.pop %v2906
        %v2908 = vadd.f32 %v2845, 1.0
        %v2909 = vadd.f32 %v2847, 1.0
        %v2910 = vadd.f32 %v2849, 1.0
        %v2911 = vadd.f32 %v2851, 1.0
        %v2912 = vadd.f32 %v2853, 1.0
        %v2913 = vadd.f32 %v2855, 1.0
        %v2914 = vadd.f32 %v2857, 1.0
        %v2915 = vadd.f32 %v2859, 1.0
        %v2916 = vadd.f32 %v2861, 1.0
        %v2917 = vadd.f32 %v2863, 1.0
        %v2918 = vadd.f32 %v2865, 1.0
        %v2919 = vadd.f32 %v2867, 1.0
        %v2920 = vadd.f32 %v2869, 1.0
        %v2921 = vadd.f32 %v2871, 1.0
        %v2922 = vadd.f32 %v2873, 1.0
        %v2923 = vadd.f32 %v2875, 1.0
        %v2924 = vadd.f32 %v2877, 1.0
        %v2925 = vadd.f32 %v2879, 1.0
        %v2926 = vadd.f32 %v2881, 1.0
        %v2927 = vadd.f32 %v2883, 1.0
        %v2928 = vadd.f32 %v2885, 1.0
        %v2929 = vadd.f32 %v2887, 1.0
        %v2930 = vadd.f32 %v2889, 1.0
        %v2931 = vadd.f32 %v2891, 1.0
        %v2932 = vadd.f32 %v2893, 1.0
        %v2933 = vadd.f32 %v2895, 1.0
        %v2934 = vadd.f32 %v2897, 1.0
        %v2935 = vadd.f32 %v2899, 1.0
        %v2936 = vadd.f32 %v2901, 1.0
        %v2937 = vadd.f32 %v2903, 1.0
        %v2938 = vadd.f32 %v2905, 1.0
        %v2939 = vadd.f32 %v2907, 1.0
        %v2940 = vrcp.pop %v2908
        %v2941 = vmul.f32 %v2908, %v2940
        %v2942 = vsub.f32 1.0, %v2941
        %v2943 = vmul.f32 %v2940, %v2942
        %v2944 = vadd.f32 %v2940, %v2943
        %vm2945 = vweird.f32 %v2908
        %vm2946 = vweird.f32 %v2940
        %vm2947 = vmor %vm2945, %vm2946
        %v2948 = vsel %vm2947, %v2940, %v2944
        %v2949 = vand.u32 2147483647, %v2908
        %vm2950 = vcmp.eq.f32.partialorder %v2949, 8.507059e+37
        %v2951 = vand.u32 %v2908, 2147483648
        %v2952 = vor.u32 1.1754944e-38, %v2951
        %v2953 = vsel %vm2950, %v2952, %v2948
        %v2954 = vmul.f32 1.0, %v2953
        %v2955 = vrcp.pop %v2909
        %v2956 = vmul.f32 %v2909, %v2955
        %v2957 = vsub.f32 1.0, %v2956
        %v2958 = vmul.f32 %v2955, %v2957
        %v2959 = vadd.f32 %v2955, %v2958
        %vm2960 = vweird.f32 %v2909
        %vm2961 = vweird.f32 %v2955
        %vm2962 = vmor %vm2960, %vm2961
        %v2963 = vsel %vm2962, %v2955, %v2959
        %v2964 = vand.u32 2147483647, %v2909
        %vm2965 = vcmp.eq.f32.partialorder %v2964, 8.507059e+37
        %v2966 = vand.u32 %v2909, 2147483648
        %v2967 = vor.u32 1.1754944e-38, %v2966
        %v2968 = vsel %vm2965, %v2967, %v2963
        %v2969 = vmul.f32 1.0, %v2968
        %v2970 = vrcp.pop %v2910
        %v2971 = vmul.f32 %v2910, %v2970
        %v2972 = vsub.f32 1.0, %v2971
        %v2973 = vmul.f32 %v2970, %v2972
        %v2974 = vadd.f32 %v2970, %v2973
        %vm2975 = vweird.f32 %v2910
        %vm2976 = vweird.f32 %v2970
        %vm2977 = vmor %vm2975, %vm2976
        %v2978 = vsel %vm2977, %v2970, %v2974
        %v2979 = vand.u32 2147483647, %v2910
        %vm2980 = vcmp.eq.f32.partialorder %v2979, 8.507059e+37
        %v2981 = vand.u32 %v2910, 2147483648
        %v2982 = vor.u32 1.1754944e-38, %v2981
        %v2983 = vsel %vm2980, %v2982, %v2978
        %v2984 = vmul.f32 1.0, %v2983
        %v2985 = vrcp.pop %v2911
        %v2986 = vmul.f32 %v2911, %v2985
        %v2987 = vsub.f32 1.0, %v2986
        %v2988 = vmul.f32 %v2985, %v2987
        %v2989 = vadd.f32 %v2985, %v2988
        %vm2990 = vweird.f32 %v2911
        %vm2991 = vweird.f32 %v2985
        %vm2992 = vmor %vm2990, %vm2991
        %v2993 = vsel %vm2992, %v2985, %v2989
        %v2994 = vand.u32 2147483647, %v2911
        %vm2995 = vcmp.eq.f32.partialorder %v2994, 8.507059e+37
        %v2996 = vand.u32 %v2911, 2147483648
        %v2997 = vor.u32 1.1754944e-38, %v2996
        %v2998 = vsel %vm2995, %v2997, %v2993
        %v2999 = vmul.f32 1.0, %v2998
        %v3000 = vrcp.pop %v2912
        %v3001 = vmul.f32 %v2912, %v3000
        %v3002 = vsub.f32 1.0, %v3001
        %v3003 = vmul.f32 %v3000, %v3002
        %v3004 = vadd.f32 %v3000, %v3003
        %vm3005 = vweird.f32 %v2912
        %vm3006 = vweird.f32 %v3000
        %vm3007 = vmor %vm3005, %vm3006
        %v3008 = vsel %vm3007, %v3000, %v3004
        %v3009 = vand.u32 2147483647, %v2912
        %vm3010 = vcmp.eq.f32.partialorder %v3009, 8.507059e+37
        %v3011 = vand.u32 %v2912, 2147483648
        %v3012 = vor.u32 1.1754944e-38, %v3011
        %v3013 = vsel %vm3010, %v3012, %v3008
        %v3014 = vmul.f32 1.0, %v3013
        %v3015 = vrcp.pop %v2913
        %v3016 = vmul.f32 %v2913, %v3015
        %v3017 = vsub.f32 1.0, %v3016
        %v3018 = vmul.f32 %v3015, %v3017
        %v3019 = vadd.f32 %v3015, %v3018
        %vm3020 = vweird.f32 %v2913
        %vm3021 = vweird.f32 %v3015
        %vm3022 = vmor %vm3020, %vm3021
        %v3023 = vsel %vm3022, %v3015, %v3019
        %v3024 = vand.u32 2147483647, %v2913
        %vm3025 = vcmp.eq.f32.partialorder %v3024, 8.507059e+37
        %v3026 = vand.u32 %v2913, 2147483648
        %v3027 = vor.u32 1.1754944e-38, %v3026
        %v3028 = vsel %vm3025, %v3027, %v3023
        %v3029 = vmul.f32 1.0, %v3028
        %v3030 = vrcp.pop %v2914
        %v3031 = vmul.f32 %v2914, %v3030
        %v3032 = vsub.f32 1.0, %v3031
        %v3033 = vmul.f32 %v3030, %v3032
        %v3034 = vadd.f32 %v3030, %v3033
        %vm3035 = vweird.f32 %v2914
        %vm3036 = vweird.f32 %v3030
        %vm3037 = vmor %vm3035, %vm3036
        %v3038 = vsel %vm3037, %v3030, %v3034
        %v3039 = vand.u32 2147483647, %v2914
        %vm3040 = vcmp.eq.f32.partialorder %v3039, 8.507059e+37
        %v3041 = vand.u32 %v2914, 2147483648
        %v3042 = vor.u32 1.1754944e-38, %v3041
        %v3043 = vsel %vm3040, %v3042, %v3038
        %v3044 = vmul.f32 1.0, %v3043
        %v3045 = vrcp.pop %v2915
        %v3046 = vmul.f32 %v2915, %v3045
        %v3047 = vsub.f32 1.0, %v3046
        %v3048 = vmul.f32 %v3045, %v3047
        %v3049 = vadd.f32 %v3045, %v3048
        %vm3050 = vweird.f32 %v2915
        %vm3051 = vweird.f32 %v3045
        %vm3052 = vmor %vm3050, %vm3051
        %v3053 = vsel %vm3052, %v3045, %v3049
        %v3054 = vand.u32 2147483647, %v2915
        %vm3055 = vcmp.eq.f32.partialorder %v3054, 8.507059e+37
        %v3056 = vand.u32 %v2915, 2147483648
        %v3057 = vor.u32 1.1754944e-38, %v3056
        %v3058 = vsel %vm3055, %v3057, %v3053
        %v3059 = vmul.f32 1.0, %v3058
        %v3060 = vrcp.pop %v2916
        %v3061 = vmul.f32 %v2916, %v3060
        %v3062 = vsub.f32 1.0, %v3061
        %v3063 = vmul.f32 %v3060, %v3062
        %v3064 = vadd.f32 %v3060, %v3063
        %vm3065 = vweird.f32 %v2916
        %vm3066 = vweird.f32 %v3060
        %vm3067 = vmor %vm3065, %vm3066
        %v3068 = vsel %vm3067, %v3060, %v3064
        %v3069 = vand.u32 2147483647, %v2916
        %vm3070 = vcmp.eq.f32.partialorder %v3069, 8.507059e+37
        %v3071 = vand.u32 %v2916, 2147483648
        %v3072 = vor.u32 1.1754944e-38, %v3071
        %v3073 = vsel %vm3070, %v3072, %v3068
        %v3074 = vmul.f32 1.0, %v3073
        %v3075 = vrcp.pop %v2917
        %v3076 = vmul.f32 %v2917, %v3075
        %v3077 = vsub.f32 1.0, %v3076
        %v3078 = vmul.f32 %v3075, %v3077
        %v3079 = vadd.f32 %v3075, %v3078
        %vm3080 = vweird.f32 %v2917
        %vm3081 = vweird.f32 %v3075
        %vm3082 = vmor %vm3080, %vm3081
        %v3083 = vsel %vm3082, %v3075, %v3079
        %v3084 = vand.u32 2147483647, %v2917
        %vm3085 = vcmp.eq.f32.partialorder %v3084, 8.507059e+37
        %v3086 = vand.u32 %v2917, 2147483648
        %v3087 = vor.u32 1.1754944e-38, %v3086
        %v3088 = vsel %vm3085, %v3087, %v3083
        %v3089 = vmul.f32 1.0, %v3088
        %v3090 = vrcp.pop %v2918
        %v3091 = vmul.f32 %v2918, %v3090
        %v3092 = vsub.f32 1.0, %v3091
        %v3093 = vmul.f32 %v3090, %v3092
        %v3094 = vadd.f32 %v3090, %v3093
        %vm3095 = vweird.f32 %v2918
        %vm3096 = vweird.f32 %v3090
        %vm3097 = vmor %vm3095, %vm3096
        %v3098 = vsel %vm3097, %v3090, %v3094
        %v3099 = vand.u32 2147483647, %v2918
        %vm3100 = vcmp.eq.f32.partialorder %v3099, 8.507059e+37
        %v3101 = vand.u32 %v2918, 2147483648
        %v3102 = vor.u32 1.1754944e-38, %v3101
        %v3103 = vsel %vm3100, %v3102, %v3098
        %v3104 = vmul.f32 1.0, %v3103
        %v3105 = vrcp.pop %v2919
        %v3106 = vmul.f32 %v2919, %v3105
        %v3107 = vsub.f32 1.0, %v3106
        %v3108 = vmul.f32 %v3105, %v3107
        %v3109 = vadd.f32 %v3105, %v3108
        %vm3110 = vweird.f32 %v2919
        %vm3111 = vweird.f32 %v3105
        %vm3112 = vmor %vm3110, %vm3111
        %v3113 = vsel %vm3112, %v3105, %v3109
        %v3114 = vand.u32 2147483647, %v2919
        %vm3115 = vcmp.eq.f32.partialorder %v3114, 8.507059e+37
        %v3116 = vand.u32 %v2919, 2147483648
        %v3117 = vor.u32 1.1754944e-38, %v3116
        %v3118 = vsel %vm3115, %v3117, %v3113
        %v3119 = vmul.f32 1.0, %v3118
        %v3120 = vrcp.pop %v2920
        %v3121 = vmul.f32 %v2920, %v3120
        %v3122 = vsub.f32 1.0, %v3121
        %v3123 = vmul.f32 %v3120, %v3122
        %v3124 = vadd.f32 %v3120, %v3123
        %vm3125 = vweird.f32 %v2920
        %vm3126 = vweird.f32 %v3120
        %vm3127 = vmor %vm3125, %vm3126
        %v3128 = vsel %vm3127, %v3120, %v3124
        %v3129 = vand.u32 2147483647, %v2920
        %vm3130 = vcmp.eq.f32.partialorder %v3129, 8.507059e+37
        %v3131 = vand.u32 %v2920, 2147483648
        %v3132 = vor.u32 1.1754944e-38, %v3131
        %v3133 = vsel %vm3130, %v3132, %v3128
        %v3134 = vmul.f32 1.0, %v3133
        %v3135 = vrcp.pop %v2921
        %v3136 = vmul.f32 %v2921, %v3135
        %v3137 = vsub.f32 1.0, %v3136
        %v3138 = vmul.f32 %v3135, %v3137
        %v3139 = vadd.f32 %v3135, %v3138
        %vm3140 = vweird.f32 %v2921
        %vm3141 = vweird.f32 %v3135
        %vm3142 = vmor %vm3140, %vm3141
        %v3143 = vsel %vm3142, %v3135, %v3139
        %v3144 = vand.u32 2147483647, %v2921
        %vm3145 = vcmp.eq.f32.partialorder %v3144, 8.507059e+37
        %v3146 = vand.u32 %v2921, 2147483648
        %v3147 = vor.u32 1.1754944e-38, %v3146
        %v3148 = vsel %vm3145, %v3147, %v3143
        %v3149 = vmul.f32 1.0, %v3148
        %v3150 = vrcp.pop %v2922
        %v3151 = vmul.f32 %v2922, %v3150
        %v3152 = vsub.f32 1.0, %v3151
        %v3153 = vmul.f32 %v3150, %v3152
        %v3154 = vadd.f32 %v3150, %v3153
        %vm3155 = vweird.f32 %v2922
        %vm3156 = vweird.f32 %v3150
        %vm3157 = vmor %vm3155, %vm3156
        %v3158 = vsel %vm3157, %v3150, %v3154
        %v3159 = vand.u32 2147483647, %v2922
        %vm3160 = vcmp.eq.f32.partialorder %v3159, 8.507059e+37
        %v3161 = vand.u32 %v2922, 2147483648
        %v3162 = vor.u32 1.1754944e-38, %v3161
        %v3163 = vsel %vm3160, %v3162, %v3158
        %v3164 = vmul.f32 1.0, %v3163
        %v3165 = vrcp.pop %v2923
        %v3166 = vmul.f32 %v2923, %v3165
        %v3167 = vsub.f32 1.0, %v3166
        %v3168 = vmul.f32 %v3165, %v3167
        %v3169 = vadd.f32 %v3165, %v3168
        %vm3170 = vweird.f32 %v2923
        %vm3171 = vweird.f32 %v3165
        %vm3172 = vmor %vm3170, %vm3171
        %v3173 = vsel %vm3172, %v3165, %v3169
        %v3174 = vand.u32 2147483647, %v2923
        %vm3175 = vcmp.eq.f32.partialorder %v3174, 8.507059e+37
        %v3176 = vand.u32 %v2923, 2147483648
        %v3177 = vor.u32 1.1754944e-38, %v3176
        %v3178 = vsel %vm3175, %v3177, %v3173
        %v3179 = vmul.f32 1.0, %v3178
        %v3180 = vrcp.pop %v2924
        %v3181 = vmul.f32 %v2924, %v3180
        %v3182 = vsub.f32 1.0, %v3181
        %v3183 = vmul.f32 %v3180, %v3182
        %v3184 = vadd.f32 %v3180, %v3183
        %vm3185 = vweird.f32 %v2924
        %vm3186 = vweird.f32 %v3180
        %vm3187 = vmor %vm3185, %vm3186
        %v3188 = vsel %vm3187, %v3180, %v3184
        %v3189 = vand.u32 2147483647, %v2924
        %vm3190 = vcmp.eq.f32.partialorder %v3189, 8.507059e+37
        %v3191 = vand.u32 %v2924, 2147483648
        %v3192 = vor.u32 1.1754944e-38, %v3191
        %v3193 = vsel %vm3190, %v3192, %v3188
        %v3194 = vmul.f32 1.0, %v3193
        %v3195 = vrcp.pop %v2925
        %v3196 = vmul.f32 %v2925, %v3195
        %v3197 = vsub.f32 1.0, %v3196
        %v3198 = vmul.f32 %v3195, %v3197
        %v3199 = vadd.f32 %v3195, %v3198
        %vm3200 = vweird.f32 %v2925
        %vm3201 = vweird.f32 %v3195
        %vm3202 = vmor %vm3200, %vm3201
        %v3203 = vsel %vm3202, %v3195, %v3199
        %v3204 = vand.u32 2147483647, %v2925
        %vm3205 = vcmp.eq.f32.partialorder %v3204, 8.507059e+37
        %v3206 = vand.u32 %v2925, 2147483648
        %v3207 = vor.u32 1.1754944e-38, %v3206
        %v3208 = vsel %vm3205, %v3207, %v3203
        %v3209 = vmul.f32 1.0, %v3208
        %v3210 = vrcp.pop %v2926
        %v3211 = vmul.f32 %v2926, %v3210
        %v3212 = vsub.f32 1.0, %v3211
        %v3213 = vmul.f32 %v3210, %v3212
        %v3214 = vadd.f32 %v3210, %v3213
        %vm3215 = vweird.f32 %v2926
        %vm3216 = vweird.f32 %v3210
        %vm3217 = vmor %vm3215, %vm3216
        %v3218 = vsel %vm3217, %v3210, %v3214
        %v3219 = vand.u32 2147483647, %v2926
        %vm3220 = vcmp.eq.f32.partialorder %v3219, 8.507059e+37
        %v3221 = vand.u32 %v2926, 2147483648
        %v3222 = vor.u32 1.1754944e-38, %v3221
        %v3223 = vsel %vm3220, %v3222, %v3218
        %v3224 = vmul.f32 1.0, %v3223
        %v3225 = vrcp.pop %v2927
        %v3226 = vmul.f32 %v2927, %v3225
        %v3227 = vsub.f32 1.0, %v3226
        %v3228 = vmul.f32 %v3225, %v3227
        %v3229 = vadd.f32 %v3225, %v3228
        %vm3230 = vweird.f32 %v2927
        %vm3231 = vweird.f32 %v3225
        %vm3232 = vmor %vm3230, %vm3231
        %v3233 = vsel %vm3232, %v3225, %v3229
        %v3234 = vand.u32 2147483647, %v2927
        %vm3235 = vcmp.eq.f32.partialorder %v3234, 8.507059e+37
        %v3236 = vand.u32 %v2927, 2147483648
        %v3237 = vor.u32 1.1754944e-38, %v3236
        %v3238 = vsel %vm3235, %v3237, %v3233
        %v3239 = vmul.f32 1.0, %v3238
        %v3240 = vrcp.pop %v2928
        %v3241 = vmul.f32 %v2928, %v3240
        %v3242 = vsub.f32 1.0, %v3241
        %v3243 = vmul.f32 %v3240, %v3242
        %v3244 = vadd.f32 %v3240, %v3243
        %vm3245 = vweird.f32 %v2928
        %vm3246 = vweird.f32 %v3240
        %vm3247 = vmor %vm3245, %vm3246
        %v3248 = vsel %vm3247, %v3240, %v3244
        %v3249 = vand.u32 2147483647, %v2928
        %vm3250 = vcmp.eq.f32.partialorder %v3249, 8.507059e+37
        %v3251 = vand.u32 %v2928, 2147483648
        %v3252 = vor.u32 1.1754944e-38, %v3251
        %v3253 = vsel %vm3250, %v3252, %v3248
        %v3254 = vmul.f32 1.0, %v3253
        %v3255 = vrcp.pop %v2929
        %v3256 = vmul.f32 %v2929, %v3255
        %v3257 = vsub.f32 1.0, %v3256
        %v3258 = vmul.f32 %v3255, %v3257
        %v3259 = vadd.f32 %v3255, %v3258
        %vm3260 = vweird.f32 %v2929
        %vm3261 = vweird.f32 %v3255
        %vm3262 = vmor %vm3260, %vm3261
        %v3263 = vsel %vm3262, %v3255, %v3259
        %v3264 = vand.u32 2147483647, %v2929
        %vm3265 = vcmp.eq.f32.partialorder %v3264, 8.507059e+37
        %v3266 = vand.u32 %v2929, 2147483648
        %v3267 = vor.u32 1.1754944e-38, %v3266
        %v3268 = vsel %vm3265, %v3267, %v3263
        %v3269 = vmul.f32 1.0, %v3268
        %v3270 = vrcp.pop %v2930
        %v3271 = vmul.f32 %v2930, %v3270
        %v3272 = vsub.f32 1.0, %v3271
        %v3273 = vmul.f32 %v3270, %v3272
        %v3274 = vadd.f32 %v3270, %v3273
        %vm3275 = vweird.f32 %v2930
        %vm3276 = vweird.f32 %v3270
        %vm3277 = vmor %vm3275, %vm3276
        %v3278 = vsel %vm3277, %v3270, %v3274
        %v3279 = vand.u32 2147483647, %v2930
        %vm3280 = vcmp.eq.f32.partialorder %v3279, 8.507059e+37
        %v3281 = vand.u32 %v2930, 2147483648
        %v3282 = vor.u32 1.1754944e-38, %v3281
        %v3283 = vsel %vm3280, %v3282, %v3278
        %v3284 = vmul.f32 1.0, %v3283
        %v3285 = vrcp.pop %v2931
        %v3286 = vmul.f32 %v2931, %v3285
        %v3287 = vsub.f32 1.0, %v3286
        %v3288 = vmul.f32 %v3285, %v3287
        %v3289 = vadd.f32 %v3285, %v3288
        %vm3290 = vweird.f32 %v2931
        %vm3291 = vweird.f32 %v3285
        %vm3292 = vmor %vm3290, %vm3291
        %v3293 = vsel %vm3292, %v3285, %v3289
        %v3294 = vand.u32 2147483647, %v2931
        %vm3295 = vcmp.eq.f32.partialorder %v3294, 8.507059e+37
        %v3296 = vand.u32 %v2931, 2147483648
        %v3297 = vor.u32 1.1754944e-38, %v3296
        %v3298 = vsel %vm3295, %v3297, %v3293
        %v3299 = vmul.f32 1.0, %v3298
        %v3300 = vrcp.pop %v2932
        %v3301 = vmul.f32 %v2932, %v3300
        %v3302 = vsub.f32 1.0, %v3301
        %v3303 = vmul.f32 %v3300, %v3302
        %v3304 = vadd.f32 %v3300, %v3303
        %vm3305 = vweird.f32 %v2932
        %vm3306 = vweird.f32 %v3300
        %vm3307 = vmor %vm3305, %vm3306
        %v3308 = vsel %vm3307, %v3300, %v3304
        %v3309 = vand.u32 2147483647, %v2932
        %vm3310 = vcmp.eq.f32.partialorder %v3309, 8.507059e+37
        %v3311 = vand.u32 %v2932, 2147483648
        %v3312 = vor.u32 1.1754944e-38, %v3311
        %v3313 = vsel %vm3310, %v3312, %v3308
        %v3314 = vmul.f32 1.0, %v3313
        %v3315 = vrcp.pop %v2933
        %v3316 = vmul.f32 %v2933, %v3315
        %v3317 = vsub.f32 1.0, %v3316
        %v3318 = vmul.f32 %v3315, %v3317
        %v3319 = vadd.f32 %v3315, %v3318
        %vm3320 = vweird.f32 %v2933
        %vm3321 = vweird.f32 %v3315
        %vm3322 = vmor %vm3320, %vm3321
        %v3323 = vsel %vm3322, %v3315, %v3319
        %v3324 = vand.u32 2147483647, %v2933
        %vm3325 = vcmp.eq.f32.partialorder %v3324, 8.507059e+37
        %v3326 = vand.u32 %v2933, 2147483648
        %v3327 = vor.u32 1.1754944e-38, %v3326
        %v3328 = vsel %vm3325, %v3327, %v3323
        %v3329 = vmul.f32 1.0, %v3328
        %v3330 = vrcp.pop %v2934
        %v3331 = vmul.f32 %v2934, %v3330
        %v3332 = vsub.f32 1.0, %v3331
        %v3333 = vmul.f32 %v3330, %v3332
        %v3334 = vadd.f32 %v3330, %v3333
        %vm3335 = vweird.f32 %v2934
        %vm3336 = vweird.f32 %v3330
        %vm3337 = vmor %vm3335, %vm3336
        %v3338 = vsel %vm3337, %v3330, %v3334
        %v3339 = vand.u32 2147483647, %v2934
        %vm3340 = vcmp.eq.f32.partialorder %v3339, 8.507059e+37
        %v3341 = vand.u32 %v2934, 2147483648
        %v3342 = vor.u32 1.1754944e-38, %v3341
        %v3343 = vsel %vm3340, %v3342, %v3338
        %v3344 = vmul.f32 1.0, %v3343
        %v3345 = vrcp.pop %v2935
        %v3346 = vmul.f32 %v2935, %v3345
        %v3347 = vsub.f32 1.0, %v3346
        %v3348 = vmul.f32 %v3345, %v3347
        %v3349 = vadd.f32 %v3345, %v3348
        %vm3350 = vweird.f32 %v2935
        %vm3351 = vweird.f32 %v3345
        %vm3352 = vmor %vm3350, %vm3351
        %v3353 = vsel %vm3352, %v3345, %v3349
        %v3354 = vand.u32 2147483647, %v2935
        %vm3355 = vcmp.eq.f32.partialorder %v3354, 8.507059e+37
        %v3356 = vand.u32 %v2935, 2147483648
        %v3357 = vor.u32 1.1754944e-38, %v3356
        %v3358 = vsel %vm3355, %v3357, %v3353
        %v3359 = vmul.f32 1.0, %v3358
        %v3360 = vrcp.pop %v2936
        %v3361 = vmul.f32 %v2936, %v3360
        %v3362 = vsub.f32 1.0, %v3361
        %v3363 = vmul.f32 %v3360, %v3362
        %v3364 = vadd.f32 %v3360, %v3363
        %vm3365 = vweird.f32 %v2936
        %vm3366 = vweird.f32 %v3360
        %vm3367 = vmor %vm3365, %vm3366
        %v3368 = vsel %vm3367, %v3360, %v3364
        %v3369 = vand.u32 2147483647, %v2936
        %vm3370 = vcmp.eq.f32.partialorder %v3369, 8.507059e+37
        %v3371 = vand.u32 %v2936, 2147483648
        %v3372 = vor.u32 1.1754944e-38, %v3371
        %v3373 = vsel %vm3370, %v3372, %v3368
        %v3374 = vmul.f32 1.0, %v3373
        %v3375 = vrcp.pop %v2937
        %v3376 = vmul.f32 %v2937, %v3375
        %v3377 = vsub.f32 1.0, %v3376
        %v3378 = vmul.f32 %v3375, %v3377
        %v3379 = vadd.f32 %v3375, %v3378
        %vm3380 = vweird.f32 %v2937
        %vm3381 = vweird.f32 %v3375
        %vm3382 = vmor %vm3380, %vm3381
        %v3383 = vsel %vm3382, %v3375, %v3379
        %v3384 = vand.u32 2147483647, %v2937
        %vm3385 = vcmp.eq.f32.partialorder %v3384, 8.507059e+37
        %v3386 = vand.u32 %v2937, 2147483648
        %v3387 = vor.u32 1.1754944e-38, %v3386
        %v3388 = vsel %vm3385, %v3387, %v3383
        %v3389 = vmul.f32 1.0, %v3388
        %v3390 = vrcp.pop %v2938
        %v3391 = vmul.f32 %v2938, %v3390
        %v3392 = vsub.f32 1.0, %v3391
        %v3393 = vmul.f32 %v3390, %v3392
        %v3394 = vadd.f32 %v3390, %v3393
        %vm3395 = vweird.f32 %v2938
        %vm3396 = vweird.f32 %v3390
        %vm3397 = vmor %vm3395, %vm3396
        %v3398 = vsel %vm3397, %v3390, %v3394
        %v3399 = vand.u32 2147483647, %v2938
        %vm3400 = vcmp.eq.f32.partialorder %v3399, 8.507059e+37
        %v3401 = vand.u32 %v2938, 2147483648
        %v3402 = vor.u32 1.1754944e-38, %v3401
        %v3403 = vsel %vm3400, %v3402, %v3398
        %v3404 = vmul.f32 1.0, %v3403
        %v3405 = vrcp.pop %v2939
        %v3406 = vmul.f32 %v2939, %v3405
        %v3407 = vsub.f32 1.0, %v3406
        %v3408 = vmul.f32 %v3405, %v3407
        %v3409 = vadd.f32 %v3405, %v3408
        %vm3410 = vweird.f32 %v2939
        %vm3411 = vweird.f32 %v3405
        %vm3412 = vmor %vm3410, %vm3411
        %v3413 = vsel %vm3412, %v3405, %v3409
        %v3414 = vand.u32 2147483647, %v2939
        %vm3415 = vcmp.eq.f32.partialorder %v3414, 8.507059e+37
        %v3416 = vand.u32 %v2939, 2147483648
        %v3417 = vor.u32 1.1754944e-38, %v3416
        %v3418 = vsel %vm3415, %v3417, %v3413
        %v3419 = vmul.f32 1.0, %v3418
        %v3420 = vmul.f32 %v2140, %v2954
        %v3421 = vmul.f32 %v2141, %v2969
        %v3422 = vmul.f32 %v2142, %v2984
        %v3423 = vmul.f32 %v2143, %v2999
        %v3424 = vmul.f32 %v2144, %v3014
        %v3425 = vmul.f32 %v2145, %v3029
        %v3426 = vmul.f32 %v2146, %v3044
        %v3427 = vmul.f32 %v2147, %v3059
        %v3428 = vmul.f32 %v2148, %v3074
        %v3429 = vmul.f32 %v2149, %v3089
        %v3430 = vmul.f32 %v2150, %v3104
        %v3431 = vmul.f32 %v2151, %v3119
        %v3432 = vmul.f32 %v2152, %v3134
        %v3433 = vmul.f32 %v2153, %v3149
        %v3434 = vmul.f32 %v2154, %v3164
        %v3435 = vmul.f32 %v2155, %v3179
        %v3436 = vmul.f32 %v2156, %v3194
        %v3437 = vmul.f32 %v2157, %v3209
        %v3438 = vmul.f32 %v2158, %v3224
        %v3439 = vmul.f32 %v2159, %v3239
        %v3440 = vmul.f32 %v2160, %v3254
        %v3441 = vmul.f32 %v2161, %v3269
        %v3442 = vmul.f32 %v2162, %v3284
        %v3443 = vmul.f32 %v2163, %v3299
        %v3444 = vmul.f32 %v2164, %v3314
        %v3445 = vmul.f32 %v2165, %v3329
        %v3446 = vmul.f32 %v2166, %v3344
        %v3447 = vmul.f32 %v2167, %v3359
        %v3448 = vmul.f32 %v2168, %v3374
        %v3449 = vmul.f32 %v2169, %v3389
        %v3450 = vmul.f32 %v2170, %v3404
        %v3451 = vmul.f32 %v2171, %v3419
        %3452 = vrot.lane.b32.xlu0 %v3420, 112
        %v3453 = vpop.permute.xlu0 %3452
        %3454 = vrot.lane.b32.xlu0 %v3421, 112
        %v3455 = vpop.permute.xlu0 %3454
        %3456 = vrot.lane.b32.xlu0 %v3422, 112
        %v3457 = vpop.permute.xlu0 %3456
        %3458 = vrot.lane.b32.xlu0 %v3423, 112
        %v3459 = vpop.permute.xlu0 %3458
        %3460 = vrot.lane.b32.xlu0 %v3424, 112
        %v3461 = vpop.permute.xlu0 %3460
        %3462 = vrot.lane.b32.xlu0 %v3425, 112
        %v3463 = vpop.permute.xlu0 %3462
        %3464 = vrot.lane.b32.xlu0 %v3426, 112
        %v3465 = vpop.permute.xlu0 %3464
        %3466 = vrot.lane.b32.xlu0 %v3427, 112
        %v3467 = vpop.permute.xlu0 %3466
        %3468 = vrot.lane.b32.xlu0 %v3428, 112
        %v3469 = vpop.permute.xlu0 %3468
        %3470 = vrot.lane.b32.xlu0 %v3429, 112
        %v3471 = vpop.permute.xlu0 %3470
        %3472 = vrot.lane.b32.xlu0 %v3430, 112
        %v3473 = vpop.permute.xlu0 %3472
        %3474 = vrot.lane.b32.xlu0 %v3431, 112
        %v3475 = vpop.permute.xlu0 %3474
        %3476 = vrot.lane.b32.xlu0 %v3432, 112
        %v3477 = vpop.permute.xlu0 %3476
        %3478 = vrot.lane.b32.xlu0 %v3433, 112
        %v3479 = vpop.permute.xlu0 %3478
        %3480 = vrot.lane.b32.xlu0 %v3434, 112
        %v3481 = vpop.permute.xlu0 %3480
        %3482 = vrot.lane.b32.xlu0 %v3435, 112
        %v3483 = vpop.permute.xlu0 %3482
        %3484 = vrot.lane.b32.xlu0 %v3436, 112
        %v3485 = vpop.permute.xlu0 %3484
        %3486 = vrot.lane.b32.xlu0 %v3437, 112
        %v3487 = vpop.permute.xlu0 %3486
        %3488 = vrot.lane.b32.xlu0 %v3438, 112
        %v3489 = vpop.permute.xlu0 %3488
        %3490 = vrot.lane.b32.xlu0 %v3439, 112
        %v3491 = vpop.permute.xlu0 %3490
        %3492 = vrot.lane.b32.xlu0 %v3440, 112
        %v3493 = vpop.permute.xlu0 %3492
        %3494 = vrot.lane.b32.xlu0 %v3441, 112
        %v3495 = vpop.permute.xlu0 %3494
        %3496 = vrot.lane.b32.xlu0 %v3442, 112
        %v3497 = vpop.permute.xlu0 %3496
        %3498 = vrot.lane.b32.xlu0 %v3443, 112
        %v3499 = vpop.permute.xlu0 %3498
        %3500 = vrot.lane.b32.xlu0 %v3444, 112
        %v3501 = vpop.permute.xlu0 %3500
        %3502 = vrot.lane.b32.xlu0 %v3445, 112
        %v3503 = vpop.permute.xlu0 %3502
        %3504 = vrot.lane.b32.xlu0 %v3446, 112
        %v3505 = vpop.permute.xlu0 %3504
        %3506 = vrot.lane.b32.xlu0 %v3447, 112
        %v3507 = vpop.permute.xlu0 %3506
        %3508 = vrot.lane.b32.xlu0 %v3448, 112
        %v3509 = vpop.permute.xlu0 %3508
        %3510 = vrot.lane.b32.xlu0 %v3449, 112
        %v3511 = vpop.permute.xlu0 %3510
        %3512 = vrot.lane.b32.xlu0 %v3450, 112
        %v3513 = vpop.permute.xlu0 %3512
        %3514 = vrot.lane.b32.xlu0 %v3451, 112
        %v3515 = vpop.permute.xlu0 %3514
        %v3516 = vmul.f32 %v3420, %v3453
        %v3517 = vmul.f32 %v3421, %v3455
        %v3518 = vmul.f32 %v3422, %v3457
        %v3519 = vmul.f32 %v3423, %v3459
        %v3520 = vmul.f32 %v3424, %v3461
        %v3521 = vmul.f32 %v3425, %v3463
        %v3522 = vmul.f32 %v3426, %v3465
        %v3523 = vmul.f32 %v3427, %v3467
        %v3524 = vmul.f32 %v3428, %v3469
        %v3525 = vmul.f32 %v3429, %v3471
        %v3526 = vmul.f32 %v3430, %v3473
        %v3527 = vmul.f32 %v3431, %v3475
        %v3528 = vmul.f32 %v3432, %v3477
        %v3529 = vmul.f32 %v3433, %v3479
        %v3530 = vmul.f32 %v3434, %v3481
        %v3531 = vmul.f32 %v3435, %v3483
        %v3532 = vmul.f32 %v3436, %v3485
        %v3533 = vmul.f32 %v3437, %v3487
        %v3534 = vmul.f32 %v3438, %v3489
        %v3535 = vmul.f32 %v3439, %v3491
        %v3536 = vmul.f32 %v3440, %v3493
        %v3537 = vmul.f32 %v3441, %v3495
        %v3538 = vmul.f32 %v3442, %v3497
        %v3539 = vmul.f32 %v3443, %v3499
        %v3540 = vmul.f32 %v3444, %v3501
        %v3541 = vmul.f32 %v3445, %v3503
        %v3542 = vmul.f32 %v3446, %v3505
        %v3543 = vmul.f32 %v3447, %v3507
        %v3544 = vmul.f32 %v3448, %v3509
        %v3545 = vmul.f32 %v3449, %v3511
        %v3546 = vmul.f32 %v3450, %v3513
        %v3547 = vmul.f32 %v3451, %v3515
        %3548 = vadd.xlane.f32.xlu0 %v3516
        %v3549 = vpop.xlane.xlu0 %3548
        %3550 = vadd.xlane.f32.xlu0 %v3517
        %v3551 = vpop.xlane.xlu0 %3550
        %3552 = vadd.xlane.f32.xlu0 %v3518
        %v3553 = vpop.xlane.xlu0 %3552
        %3554 = vadd.xlane.f32.xlu0 %v3519
        %v3555 = vpop.xlane.xlu0 %3554
        %3556 = vadd.xlane.f32.xlu0 %v3520
        %v3557 = vpop.xlane.xlu0 %3556
        %3558 = vadd.xlane.f32.xlu0 %v3521
        %v3559 = vpop.xlane.xlu0 %3558
        %3560 = vadd.xlane.f32.xlu0 %v3522
        %v3561 = vpop.xlane.xlu0 %3560
        %3562 = vadd.xlane.f32.xlu0 %v3523
        %v3563 = vpop.xlane.xlu0 %3562
        %3564 = vadd.xlane.f32.xlu0 %v3524
        %v3565 = vpop.xlane.xlu0 %3564
        %3566 = vadd.xlane.f32.xlu0 %v3525
        %v3567 = vpop.xlane.xlu0 %3566
        %3568 = vadd.xlane.f32.xlu0 %v3526
        %v3569 = vpop.xlane.xlu0 %3568
        %3570 = vadd.xlane.f32.xlu0 %v3527
        %v3571 = vpop.xlane.xlu0 %3570
        %3572 = vadd.xlane.f32.xlu0 %v3528
        %v3573 = vpop.xlane.xlu0 %3572
        %3574 = vadd.xlane.f32.xlu0 %v3529
        %v3575 = vpop.xlane.xlu0 %3574
        %3576 = vadd.xlane.f32.xlu0 %v3530
        %v3577 = vpop.xlane.xlu0 %3576
        %3578 = vadd.xlane.f32.xlu0 %v3531
        %v3579 = vpop.xlane.xlu0 %3578
        %3580 = vadd.xlane.f32.xlu0 %v3532
        %v3581 = vpop.xlane.xlu0 %3580
        %3582 = vadd.xlane.f32.xlu0 %v3533
        %v3583 = vpop.xlane.xlu0 %3582
        %3584 = vadd.xlane.f32.xlu0 %v3534
        %v3585 = vpop.xlane.xlu0 %3584
        %3586 = vadd.xlane.f32.xlu0 %v3535
        %v3587 = vpop.xlane.xlu0 %3586
        %3588 = vadd.xlane.f32.xlu0 %v3536
        %v3589 = vpop.xlane.xlu0 %3588
        %3590 = vadd.xlane.f32.xlu0 %v3537
        %v3591 = vpop.xlane.xlu0 %3590
        %3592 = vadd.xlane.f32.xlu0 %v3538
        %v3593 = vpop.xlane.xlu0 %3592
        %3594 = vadd.xlane.f32.xlu0 %v3539
        %v3595 = vpop.xlane.xlu0 %3594
        %3596 = vadd.xlane.f32.xlu0 %v3540
        %v3597 = vpop.xlane.xlu0 %3596
        %3598 = vadd.xlane.f32.xlu0 %v3541
        %v3599 = vpop.xlane.xlu0 %3598
        %3600 = vadd.xlane.f32.xlu0 %v3542
        %v3601 = vpop.xlane.xlu0 %3600
        %3602 = vadd.xlane.f32.xlu0 %v3543
        %v3603 = vpop.xlane.xlu0 %3602
        %3604 = vadd.xlane.f32.xlu0 %v3544
        %v3605 = vpop.xlane.xlu0 %3604
        %3606 = vadd.xlane.f32.xlu0 %v3545
        %v3607 = vpop.xlane.xlu0 %3606
        %3608 = vadd.xlane.f32.xlu0 %v3546
        %v3609 = vpop.xlane.xlu0 %3608
        %3610 = vadd.xlane.f32.xlu0 %v3547
        %v3611 = vpop.xlane.xlu0 %3610
        %v3612 = vmul.f32 %v2012, %v3549
        %v3613 = vmul.f32 %v2013, %v3551
        %v3614 = vmul.f32 %v2014, %v3553
        %v3615 = vmul.f32 %v2015, %v3555
        %v3616 = vmul.f32 %v2016, %v3557
        %v3617 = vmul.f32 %v2017, %v3559
        %v3618 = vmul.f32 %v2018, %v3561
        %v3619 = vmul.f32 %v2019, %v3563
        %v3620 = vmul.f32 %v2020, %v3565
        %v3621 = vmul.f32 %v2021, %v3567
        %v3622 = vmul.f32 %v2022, %v3569
        %v3623 = vmul.f32 %v2023, %v3571
        %v3624 = vmul.f32 %v2024, %v3573
        %v3625 = vmul.f32 %v2025, %v3575
        %v3626 = vmul.f32 %v2026, %v3577
        %v3627 = vmul.f32 %v2027, %v3579
        %v3628 = vmul.f32 %v2028, %v3581
        %v3629 = vmul.f32 %v2029, %v3583
        %v3630 = vmul.f32 %v2030, %v3585
        %v3631 = vmul.f32 %v2031, %v3587
        %v3632 = vmul.f32 %v2032, %v3589
        %v3633 = vmul.f32 %v2033, %v3591
        %v3634 = vmul.f32 %v2034, %v3593
        %v3635 = vmul.f32 %v2035, %v3595
        %v3636 = vmul.f32 %v2036, %v3597
        %v3637 = vmul.f32 %v2037, %v3599
        %v3638 = vmul.f32 %v2038, %v3601
        %v3639 = vmul.f32 %v2039, %v3603
        %v3640 = vmul.f32 %v2040, %v3605
        %v3641 = vmul.f32 %v2041, %v3607
        %v3642 = vmul.f32 %v2042, %v3609
        %v3643 = vmul.f32 %v2043, %v3611
        %v3644 = vadd.f32 %v3612, %v305
        %v3645 = vadd.f32 %v3613, %v305
        %v3646 = vadd.f32 %v3614, %v305
        %v3647 = vadd.f32 %v3615, %v305
        %v3648 = vadd.f32 %v3616, %v305
        %v3649 = vadd.f32 %v3617, %v305
        %v3650 = vadd.f32 %v3618, %v305
        %v3651 = vadd.f32 %v3619, %v305
        %v3652 = vadd.f32 %v3620, %v305
        %v3653 = vadd.f32 %v3621, %v305
        %v3654 = vadd.f32 %v3622, %v305
        %v3655 = vadd.f32 %v3623, %v305
        %v3656 = vadd.f32 %v3624, %v305
        %v3657 = vadd.f32 %v3625, %v305
        %v3658 = vadd.f32 %v3626, %v305
        %v3659 = vadd.f32 %v3627, %v305
        %v3660 = vadd.f32 %v3628, %v305
        %v3661 = vadd.f32 %v3629, %v305
        %v3662 = vadd.f32 %v3630, %v305
        %v3663 = vadd.f32 %v3631, %v305
        %v3664 = vadd.f32 %v3632, %v305
        %v3665 = vadd.f32 %v3633, %v305
        %v3666 = vadd.f32 %v3634, %v305
        %v3667 = vadd.f32 %v3635, %v305
        %v3668 = vadd.f32 %v3636, %v305
        %v3669 = vadd.f32 %v3637, %v305
        %v3670 = vadd.f32 %v3638, %v305
        %v3671 = vadd.f32 %v3639, %v305
        %v3672 = vadd.f32 %v3640, %v305
        %v3673 = vadd.f32 %v3641, %v305
        %v3674 = vadd.f32 %v3642, %v305
        %v3675 = vadd.f32 %v3643, %v305
        %v3676 = vmul.f32 %v2780, %v3644
        %v3677 = vmul.f32 %v2781, %v3645
        %v3678 = vmul.f32 %v2782, %v3646
        %v3679 = vmul.f32 %v2783, %v3647
        %v3680 = vmul.f32 %v2784, %v3648
        %v3681 = vmul.f32 %v2785, %v3649
        %v3682 = vmul.f32 %v2786, %v3650
        %v3683 = vmul.f32 %v2787, %v3651
        %v3684 = vmul.f32 %v2788, %v3652
        %v3685 = vmul.f32 %v2789, %v3653
        %v3686 = vmul.f32 %v2790, %v3654
        %v3687 = vmul.f32 %v2791, %v3655
        %v3688 = vmul.f32 %v2792, %v3656
        %v3689 = vmul.f32 %v2793, %v3657
        %v3690 = vmul.f32 %v2794, %v3658
        %v3691 = vmul.f32 %v2795, %v3659
        %v3692 = vmul.f32 %v2796, %v3660
        %v3693 = vmul.f32 %v2797, %v3661
        %v3694 = vmul.f32 %v2798, %v3662
        %v3695 = vmul.f32 %v2799, %v3663
        %v3696 = vmul.f32 %v2800, %v3664
        %v3697 = vmul.f32 %v2801, %v3665
        %v3698 = vmul.f32 %v2802, %v3666
        %v3699 = vmul.f32 %v2803, %v3667
        %v3700 = vmul.f32 %v2804, %v3668
        %v3701 = vmul.f32 %v2805, %v3669
        %v3702 = vmul.f32 %v2806, %v3670
        %v3703 = vmul.f32 %v2807, %v3671
        %v3704 = vmul.f32 %v2808, %v3672
        %v3705 = vmul.f32 %v2809, %v3673
        %v3706 = vmul.f32 %v2810, %v3674
        %v3707 = vmul.f32 %v2811, %v3675
        %v3708 = vxor.u32 %v1090, 2147483648
        %v3709 = vxor.u32 %v1092, 2147483648
        %v3710 = vxor.u32 %v1095, 2147483648
        %v3711 = vxor.u32 %v1097, 2147483648
        %v3712 = vxor.u32 %v1100, 2147483648
        %v3713 = vxor.u32 %v1102, 2147483648
        %v3714 = vxor.u32 %v1105, 2147483648
        %v3715 = vxor.u32 %v1107, 2147483648
        %v3716 = vxor.u32 %v1110, 2147483648
        %v3717 = vxor.u32 %v1112, 2147483648
        %v3718 = vxor.u32 %v1115, 2147483648
        %v3719 = vxor.u32 %v1117, 2147483648
        %v3720 = vxor.u32 %v1120, 2147483648
        %v3721 = vxor.u32 %v1122, 2147483648
        %v3722 = vxor.u32 %v1125, 2147483648
        %v3723 = vxor.u32 %v1127, 2147483648
        %v3724 = vxor.u32 %v1130, 2147483648
        %v3725 = vxor.u32 %v1132, 2147483648
        %v3726 = vxor.u32 %v1135, 2147483648
        %v3727 = vxor.u32 %v1137, 2147483648
        %v3728 = vxor.u32 %v1140, 2147483648
        %v3729 = vxor.u32 %v1142, 2147483648
        %v3730 = vxor.u32 %v1145, 2147483648
        %v3731 = vxor.u32 %v1147, 2147483648
        %v3732 = vxor.u32 %v1150, 2147483648
        %v3733 = vxor.u32 %v1152, 2147483648
        %v3734 = vxor.u32 %v1155, 2147483648
        %v3735 = vxor.u32 %v1157, 2147483648
        %v3736 = vxor.u32 %v1160, 2147483648
        %v3737 = vxor.u32 %v1162, 2147483648
        %v3738 = vxor.u32 %v1165, 2147483648
        %v3739 = vxor.u32 %v1167, 2147483648
        %v3740 = vmul.f32 %v3708, 1.442695
        %v3741 = vpow.pop %v3740
        %v3742 = vmul.f32 %v3709, 1.442695
        %v3743 = vpow.pop %v3742
        %v3744 = vmul.f32 %v3710, 1.442695
        %v3745 = vpow.pop %v3744
        %v3746 = vmul.f32 %v3711, 1.442695
        %v3747 = vpow.pop %v3746
        %v3748 = vmul.f32 %v3712, 1.442695
        %v3749 = vpow.pop %v3748
        %v3750 = vmul.f32 %v3713, 1.442695
        %v3751 = vpow.pop %v3750
        %v3752 = vmul.f32 %v3714, 1.442695
        %v3753 = vpow.pop %v3752
        %v3754 = vmul.f32 %v3715, 1.442695
        %v3755 = vpow.pop %v3754
        %v3756 = vmul.f32 %v3716, 1.442695
        %v3757 = vpow.pop %v3756
        %v3758 = vmul.f32 %v3717, 1.442695
        %v3759 = vpow.pop %v3758
        %v3760 = vmul.f32 %v3718, 1.442695
        %v3761 = vpow.pop %v3760
        %v3762 = vmul.f32 %v3719, 1.442695
        %v3763 = vpow.pop %v3762
        %v3764 = vmul.f32 %v3720, 1.442695
        %v3765 = vpow.pop %v3764
        %v3766 = vmul.f32 %v3721, 1.442695
        %v3767 = vpow.pop %v3766
        %v3768 = vmul.f32 %v3722, 1.442695
        %v3769 = vpow.pop %v3768
        %v3770 = vmul.f32 %v3723, 1.442695
        %v3771 = vpow.pop %v3770
        %v3772 = vmul.f32 %v3724, 1.442695
        %v3773 = vpow.pop %v3772
        %v3774 = vmul.f32 %v3725, 1.442695
        %v3775 = vpow.pop %v3774
        %v3776 = vmul.f32 %v3726, 1.442695
        %v3777 = vpow.pop %v3776
        %v3778 = vmul.f32 %v3727, 1.442695
        %v3779 = vpow.pop %v3778
        %v3780 = vmul.f32 %v3728, 1.442695
        %v3781 = vpow.pop %v3780
        %v3782 = vmul.f32 %v3729, 1.442695
        %v3783 = vpow.pop %v3782
        %v3784 = vmul.f32 %v3730, 1.442695
        %v3785 = vpow.pop %v3784
        %v3786 = vmul.f32 %v3731, 1.442695
        %v3787 = vpow.pop %v3786
        %v3788 = vmul.f32 %v3732, 1.442695
        %v3789 = vpow.pop %v3788
        %v3790 = vmul.f32 %v3733, 1.442695
        %v3791 = vpow.pop %v3790
        %v3792 = vmul.f32 %v3734, 1.442695
        %v3793 = vpow.pop %v3792
        %v3794 = vmul.f32 %v3735, 1.442695
        %v3795 = vpow.pop %v3794
        %v3796 = vmul.f32 %v3736, 1.442695
        %v3797 = vpow.pop %v3796
        %v3798 = vmul.f32 %v3737, 1.442695
        %v3799 = vpow.pop %v3798
        %v3800 = vmul.f32 %v3738, 1.442695
        %v3801 = vpow.pop %v3800
        %v3802 = vmul.f32 %v3739, 1.442695
        %v3803 = vpow.pop %v3802
        %v3804 = vadd.f32 %v3741, 1.0
        %v3805 = vadd.f32 %v3743, 1.0
        %v3806 = vadd.f32 %v3745, 1.0
        %v3807 = vadd.f32 %v3747, 1.0
        %v3808 = vadd.f32 %v3749, 1.0
        %v3809 = vadd.f32 %v3751, 1.0
        %v3810 = vadd.f32 %v3753, 1.0
        %v3811 = vadd.f32 %v3755, 1.0
        %v3812 = vadd.f32 %v3757, 1.0
        %v3813 = vadd.f32 %v3759, 1.0
        %v3814 = vadd.f32 %v3761, 1.0
        %v3815 = vadd.f32 %v3763, 1.0
        %v3816 = vadd.f32 %v3765, 1.0
        %v3817 = vadd.f32 %v3767, 1.0
        %v3818 = vadd.f32 %v3769, 1.0
        %v3819 = vadd.f32 %v3771, 1.0
        %v3820 = vadd.f32 %v3773, 1.0
        %v3821 = vadd.f32 %v3775, 1.0
        %v3822 = vadd.f32 %v3777, 1.0
        %v3823 = vadd.f32 %v3779, 1.0
        %v3824 = vadd.f32 %v3781, 1.0
        %v3825 = vadd.f32 %v3783, 1.0
        %v3826 = vadd.f32 %v3785, 1.0
        %v3827 = vadd.f32 %v3787, 1.0
        %v3828 = vadd.f32 %v3789, 1.0
        %v3829 = vadd.f32 %v3791, 1.0
        %v3830 = vadd.f32 %v3793, 1.0
        %v3831 = vadd.f32 %v3795, 1.0
        %v3832 = vadd.f32 %v3797, 1.0
        %v3833 = vadd.f32 %v3799, 1.0
        %v3834 = vadd.f32 %v3801, 1.0
        %v3835 = vadd.f32 %v3803, 1.0
        %v3836 = vrcp.pop %v3804
        %v3837 = vmul.f32 %v3804, %v3836
        %v3838 = vsub.f32 1.0, %v3837
        %v3839 = vmul.f32 %v3836, %v3838
        %v3840 = vadd.f32 %v3836, %v3839
        %vm3841 = vweird.f32 %v3804
        %vm3842 = vweird.f32 %v3836
        %vm3843 = vmor %vm3841, %vm3842
        %v3844 = vsel %vm3843, %v3836, %v3840
        %v3845 = vand.u32 2147483647, %v3804
        %vm3846 = vcmp.eq.f32.partialorder %v3845, 8.507059e+37
        %v3847 = vand.u32 %v3804, 2147483648
        %v3848 = vor.u32 1.1754944e-38, %v3847
        %v3849 = vsel %vm3846, %v3848, %v3844
        %v3850 = vmul.f32 1.0, %v3849
        %v3851 = vrcp.pop %v3805
        %v3852 = vmul.f32 %v3805, %v3851
        %v3853 = vsub.f32 1.0, %v3852
        %v3854 = vmul.f32 %v3851, %v3853
        %v3855 = vadd.f32 %v3851, %v3854
        %vm3856 = vweird.f32 %v3805
        %vm3857 = vweird.f32 %v3851
        %vm3858 = vmor %vm3856, %vm3857
        %v3859 = vsel %vm3858, %v3851, %v3855
        %v3860 = vand.u32 2147483647, %v3805
        %vm3861 = vcmp.eq.f32.partialorder %v3860, 8.507059e+37
        %v3862 = vand.u32 %v3805, 2147483648
        %v3863 = vor.u32 1.1754944e-38, %v3862
        %v3864 = vsel %vm3861, %v3863, %v3859
        %v3865 = vmul.f32 1.0, %v3864
        %v3866 = vrcp.pop %v3806
        %v3867 = vmul.f32 %v3806, %v3866
        %v3868 = vsub.f32 1.0, %v3867
        %v3869 = vmul.f32 %v3866, %v3868
        %v3870 = vadd.f32 %v3866, %v3869
        %vm3871 = vweird.f32 %v3806
        %vm3872 = vweird.f32 %v3866
        %vm3873 = vmor %vm3871, %vm3872
        %v3874 = vsel %vm3873, %v3866, %v3870
        %v3875 = vand.u32 2147483647, %v3806
        %vm3876 = vcmp.eq.f32.partialorder %v3875, 8.507059e+37
        %v3877 = vand.u32 %v3806, 2147483648
        %v3878 = vor.u32 1.1754944e-38, %v3877
        %v3879 = vsel %vm3876, %v3878, %v3874
        %v3880 = vmul.f32 1.0, %v3879
        %v3881 = vrcp.pop %v3807
        %v3882 = vmul.f32 %v3807, %v3881
        %v3883 = vsub.f32 1.0, %v3882
        %v3884 = vmul.f32 %v3881, %v3883
        %v3885 = vadd.f32 %v3881, %v3884
        %vm3886 = vweird.f32 %v3807
        %vm3887 = vweird.f32 %v3881
        %vm3888 = vmor %vm3886, %vm3887
        %v3889 = vsel %vm3888, %v3881, %v3885
        %v3890 = vand.u32 2147483647, %v3807
        %vm3891 = vcmp.eq.f32.partialorder %v3890, 8.507059e+37
        %v3892 = vand.u32 %v3807, 2147483648
        %v3893 = vor.u32 1.1754944e-38, %v3892
        %v3894 = vsel %vm3891, %v3893, %v3889
        %v3895 = vmul.f32 1.0, %v3894
        %v3896 = vrcp.pop %v3808
        %v3897 = vmul.f32 %v3808, %v3896
        %v3898 = vsub.f32 1.0, %v3897
        %v3899 = vmul.f32 %v3896, %v3898
        %v3900 = vadd.f32 %v3896, %v3899
        %vm3901 = vweird.f32 %v3808
        %vm3902 = vweird.f32 %v3896
        %vm3903 = vmor %vm3901, %vm3902
        %v3904 = vsel %vm3903, %v3896, %v3900
        %v3905 = vand.u32 2147483647, %v3808
        %vm3906 = vcmp.eq.f32.partialorder %v3905, 8.507059e+37
        %v3907 = vand.u32 %v3808, 2147483648
        %v3908 = vor.u32 1.1754944e-38, %v3907
        %v3909 = vsel %vm3906, %v3908, %v3904
        %v3910 = vmul.f32 1.0, %v3909
        %v3911 = vrcp.pop %v3809
        %v3912 = vmul.f32 %v3809, %v3911
        %v3913 = vsub.f32 1.0, %v3912
        %v3914 = vmul.f32 %v3911, %v3913
        %v3915 = vadd.f32 %v3911, %v3914
        %vm3916 = vweird.f32 %v3809
        %vm3917 = vweird.f32 %v3911
        %vm3918 = vmor %vm3916, %vm3917
        %v3919 = vsel %vm3918, %v3911, %v3915
        %v3920 = vand.u32 2147483647, %v3809
        %vm3921 = vcmp.eq.f32.partialorder %v3920, 8.507059e+37
        %v3922 = vand.u32 %v3809, 2147483648
        %v3923 = vor.u32 1.1754944e-38, %v3922
        %v3924 = vsel %vm3921, %v3923, %v3919
        %v3925 = vmul.f32 1.0, %v3924
        %v3926 = vrcp.pop %v3810
        %v3927 = vmul.f32 %v3810, %v3926
        %v3928 = vsub.f32 1.0, %v3927
        %v3929 = vmul.f32 %v3926, %v3928
        %v3930 = vadd.f32 %v3926, %v3929
        %vm3931 = vweird.f32 %v3810
        %vm3932 = vweird.f32 %v3926
        %vm3933 = vmor %vm3931, %vm3932
        %v3934 = vsel %vm3933, %v3926, %v3930
        %v3935 = vand.u32 2147483647, %v3810
        %vm3936 = vcmp.eq.f32.partialorder %v3935, 8.507059e+37
        %v3937 = vand.u32 %v3810, 2147483648
        %v3938 = vor.u32 1.1754944e-38, %v3937
        %v3939 = vsel %vm3936, %v3938, %v3934
        %v3940 = vmul.f32 1.0, %v3939
        %v3941 = vrcp.pop %v3811
        %v3942 = vmul.f32 %v3811, %v3941
        %v3943 = vsub.f32 1.0, %v3942
        %v3944 = vmul.f32 %v3941, %v3943
        %v3945 = vadd.f32 %v3941, %v3944
        %vm3946 = vweird.f32 %v3811
        %vm3947 = vweird.f32 %v3941
        %vm3948 = vmor %vm3946, %vm3947
        %v3949 = vsel %vm3948, %v3941, %v3945
        %v3950 = vand.u32 2147483647, %v3811
        %vm3951 = vcmp.eq.f32.partialorder %v3950, 8.507059e+37
        %v3952 = vand.u32 %v3811, 2147483648
        %v3953 = vor.u32 1.1754944e-38, %v3952
        %v3954 = vsel %vm3951, %v3953, %v3949
        %v3955 = vmul.f32 1.0, %v3954
        %v3956 = vrcp.pop %v3812
        %v3957 = vmul.f32 %v3812, %v3956
        %v3958 = vsub.f32 1.0, %v3957
        %v3959 = vmul.f32 %v3956, %v3958
        %v3960 = vadd.f32 %v3956, %v3959
        %vm3961 = vweird.f32 %v3812
        %vm3962 = vweird.f32 %v3956
        %vm3963 = vmor %vm3961, %vm3962
        %v3964 = vsel %vm3963, %v3956, %v3960
        %v3965 = vand.u32 2147483647, %v3812
        %vm3966 = vcmp.eq.f32.partialorder %v3965, 8.507059e+37
        %v3967 = vand.u32 %v3812, 2147483648
        %v3968 = vor.u32 1.1754944e-38, %v3967
        %v3969 = vsel %vm3966, %v3968, %v3964
        %v3970 = vmul.f32 1.0, %v3969
        %v3971 = vrcp.pop %v3813
        %v3972 = vmul.f32 %v3813, %v3971
        %v3973 = vsub.f32 1.0, %v3972
        %v3974 = vmul.f32 %v3971, %v3973
        %v3975 = vadd.f32 %v3971, %v3974
        %vm3976 = vweird.f32 %v3813
        %vm3977 = vweird.f32 %v3971
        %vm3978 = vmor %vm3976, %vm3977
        %v3979 = vsel %vm3978, %v3971, %v3975
        %v3980 = vand.u32 2147483647, %v3813
        %vm3981 = vcmp.eq.f32.partialorder %v3980, 8.507059e+37
        %v3982 = vand.u32 %v3813, 2147483648
        %v3983 = vor.u32 1.1754944e-38, %v3982
        %v3984 = vsel %vm3981, %v3983, %v3979
        %v3985 = vmul.f32 1.0, %v3984
        %v3986 = vrcp.pop %v3814
        %v3987 = vmul.f32 %v3814, %v3986
        %v3988 = vsub.f32 1.0, %v3987
        %v3989 = vmul.f32 %v3986, %v3988
        %v3990 = vadd.f32 %v3986, %v3989
        %vm3991 = vweird.f32 %v3814
        %vm3992 = vweird.f32 %v3986
        %vm3993 = vmor %vm3991, %vm3992
        %v3994 = vsel %vm3993, %v3986, %v3990
        %v3995 = vand.u32 2147483647, %v3814
        %vm3996 = vcmp.eq.f32.partialorder %v3995, 8.507059e+37
        %v3997 = vand.u32 %v3814, 2147483648
        %v3998 = vor.u32 1.1754944e-38, %v3997
        %v3999 = vsel %vm3996, %v3998, %v3994
        %v4000 = vmul.f32 1.0, %v3999
        %v4001 = vrcp.pop %v3815
        %v4002 = vmul.f32 %v3815, %v4001
        %v4003 = vsub.f32 1.0, %v4002
        %v4004 = vmul.f32 %v4001, %v4003
        %v4005 = vadd.f32 %v4001, %v4004
        %vm4006 = vweird.f32 %v3815
        %vm4007 = vweird.f32 %v4001
        %vm4008 = vmor %vm4006, %vm4007
        %v4009 = vsel %vm4008, %v4001, %v4005
        %v4010 = vand.u32 2147483647, %v3815
        %vm4011 = vcmp.eq.f32.partialorder %v4010, 8.507059e+37
        %v4012 = vand.u32 %v3815, 2147483648
        %v4013 = vor.u32 1.1754944e-38, %v4012
        %v4014 = vsel %vm4011, %v4013, %v4009
        %v4015 = vmul.f32 1.0, %v4014
        %v4016 = vrcp.pop %v3816
        %v4017 = vmul.f32 %v3816, %v4016
        %v4018 = vsub.f32 1.0, %v4017
        %v4019 = vmul.f32 %v4016, %v4018
        %v4020 = vadd.f32 %v4016, %v4019
        %vm4021 = vweird.f32 %v3816
        %vm4022 = vweird.f32 %v4016
        %vm4023 = vmor %vm4021, %vm4022
        %v4024 = vsel %vm4023, %v4016, %v4020
        %v4025 = vand.u32 2147483647, %v3816
        %vm4026 = vcmp.eq.f32.partialorder %v4025, 8.507059e+37
        %v4027 = vand.u32 %v3816, 2147483648
        %v4028 = vor.u32 1.1754944e-38, %v4027
        %v4029 = vsel %vm4026, %v4028, %v4024
        %v4030 = vmul.f32 1.0, %v4029
        %v4031 = vrcp.pop %v3817
        %v4032 = vmul.f32 %v3817, %v4031
        %v4033 = vsub.f32 1.0, %v4032
        %v4034 = vmul.f32 %v4031, %v4033
        %v4035 = vadd.f32 %v4031, %v4034
        %vm4036 = vweird.f32 %v3817
        %vm4037 = vweird.f32 %v4031
        %vm4038 = vmor %vm4036, %vm4037
        %v4039 = vsel %vm4038, %v4031, %v4035
        %v4040 = vand.u32 2147483647, %v3817
        %vm4041 = vcmp.eq.f32.partialorder %v4040, 8.507059e+37
        %v4042 = vand.u32 %v3817, 2147483648
        %v4043 = vor.u32 1.1754944e-38, %v4042
        %v4044 = vsel %vm4041, %v4043, %v4039
        %v4045 = vmul.f32 1.0, %v4044
        %v4046 = vrcp.pop %v3818
        %v4047 = vmul.f32 %v3818, %v4046
        %v4048 = vsub.f32 1.0, %v4047
        %v4049 = vmul.f32 %v4046, %v4048
        %v4050 = vadd.f32 %v4046, %v4049
        %vm4051 = vweird.f32 %v3818
        %vm4052 = vweird.f32 %v4046
        %vm4053 = vmor %vm4051, %vm4052
        %v4054 = vsel %vm4053, %v4046, %v4050
        %v4055 = vand.u32 2147483647, %v3818
        %vm4056 = vcmp.eq.f32.partialorder %v4055, 8.507059e+37
        %v4057 = vand.u32 %v3818, 2147483648
        %v4058 = vor.u32 1.1754944e-38, %v4057
        %v4059 = vsel %vm4056, %v4058, %v4054
        %v4060 = vmul.f32 1.0, %v4059
        %v4061 = vrcp.pop %v3819
        %v4062 = vmul.f32 %v3819, %v4061
        %v4063 = vsub.f32 1.0, %v4062
        %v4064 = vmul.f32 %v4061, %v4063
        %v4065 = vadd.f32 %v4061, %v4064
        %vm4066 = vweird.f32 %v3819
        %vm4067 = vweird.f32 %v4061
        %vm4068 = vmor %vm4066, %vm4067
        %v4069 = vsel %vm4068, %v4061, %v4065
        %v4070 = vand.u32 2147483647, %v3819
        %vm4071 = vcmp.eq.f32.partialorder %v4070, 8.507059e+37
        %v4072 = vand.u32 %v3819, 2147483648
        %v4073 = vor.u32 1.1754944e-38, %v4072
        %v4074 = vsel %vm4071, %v4073, %v4069
        %v4075 = vmul.f32 1.0, %v4074
        %v4076 = vrcp.pop %v3820
        %v4077 = vmul.f32 %v3820, %v4076
        %v4078 = vsub.f32 1.0, %v4077
        %v4079 = vmul.f32 %v4076, %v4078
        %v4080 = vadd.f32 %v4076, %v4079
        %vm4081 = vweird.f32 %v3820
        %vm4082 = vweird.f32 %v4076
        %vm4083 = vmor %vm4081, %vm4082
        %v4084 = vsel %vm4083, %v4076, %v4080
        %v4085 = vand.u32 2147483647, %v3820
        %vm4086 = vcmp.eq.f32.partialorder %v4085, 8.507059e+37
        %v4087 = vand.u32 %v3820, 2147483648
        %v4088 = vor.u32 1.1754944e-38, %v4087
        %v4089 = vsel %vm4086, %v4088, %v4084
        %v4090 = vmul.f32 1.0, %v4089
        %v4091 = vrcp.pop %v3821
        %v4092 = vmul.f32 %v3821, %v4091
        %v4093 = vsub.f32 1.0, %v4092
        %v4094 = vmul.f32 %v4091, %v4093
        %v4095 = vadd.f32 %v4091, %v4094
        %vm4096 = vweird.f32 %v3821
        %vm4097 = vweird.f32 %v4091
        %vm4098 = vmor %vm4096, %vm4097
        %v4099 = vsel %vm4098, %v4091, %v4095
        %v4100 = vand.u32 2147483647, %v3821
        %vm4101 = vcmp.eq.f32.partialorder %v4100, 8.507059e+37
        %v4102 = vand.u32 %v3821, 2147483648
        %v4103 = vor.u32 1.1754944e-38, %v4102
        %v4104 = vsel %vm4101, %v4103, %v4099
        %v4105 = vmul.f32 1.0, %v4104
        %v4106 = vrcp.pop %v3822
        %v4107 = vmul.f32 %v3822, %v4106
        %v4108 = vsub.f32 1.0, %v4107
        %v4109 = vmul.f32 %v4106, %v4108
        %v4110 = vadd.f32 %v4106, %v4109
        %vm4111 = vweird.f32 %v3822
        %vm4112 = vweird.f32 %v4106
        %vm4113 = vmor %vm4111, %vm4112
        %v4114 = vsel %vm4113, %v4106, %v4110
        %v4115 = vand.u32 2147483647, %v3822
        %vm4116 = vcmp.eq.f32.partialorder %v4115, 8.507059e+37
        %v4117 = vand.u32 %v3822, 2147483648
        %v4118 = vor.u32 1.1754944e-38, %v4117
        %v4119 = vsel %vm4116, %v4118, %v4114
        %v4120 = vmul.f32 1.0, %v4119
        %v4121 = vrcp.pop %v3823
        %v4122 = vmul.f32 %v3823, %v4121
        %v4123 = vsub.f32 1.0, %v4122
        %v4124 = vmul.f32 %v4121, %v4123
        %v4125 = vadd.f32 %v4121, %v4124
        %vm4126 = vweird.f32 %v3823
        %vm4127 = vweird.f32 %v4121
        %vm4128 = vmor %vm4126, %vm4127
        %v4129 = vsel %vm4128, %v4121, %v4125
        %v4130 = vand.u32 2147483647, %v3823
        %vm4131 = vcmp.eq.f32.partialorder %v4130, 8.507059e+37
        %v4132 = vand.u32 %v3823, 2147483648
        %v4133 = vor.u32 1.1754944e-38, %v4132
        %v4134 = vsel %vm4131, %v4133, %v4129
        %v4135 = vmul.f32 1.0, %v4134
        %v4136 = vrcp.pop %v3824
        %v4137 = vmul.f32 %v3824, %v4136
        %v4138 = vsub.f32 1.0, %v4137
        %v4139 = vmul.f32 %v4136, %v4138
        %v4140 = vadd.f32 %v4136, %v4139
        %vm4141 = vweird.f32 %v3824
        %vm4142 = vweird.f32 %v4136
        %vm4143 = vmor %vm4141, %vm4142
        %v4144 = vsel %vm4143, %v4136, %v4140
        %v4145 = vand.u32 2147483647, %v3824
        %vm4146 = vcmp.eq.f32.partialorder %v4145, 8.507059e+37
        %v4147 = vand.u32 %v3824, 2147483648
        %v4148 = vor.u32 1.1754944e-38, %v4147
        %v4149 = vsel %vm4146, %v4148, %v4144
        %v4150 = vmul.f32 1.0, %v4149
        %v4151 = vrcp.pop %v3825
        %v4152 = vmul.f32 %v3825, %v4151
        %v4153 = vsub.f32 1.0, %v4152
        %v4154 = vmul.f32 %v4151, %v4153
        %v4155 = vadd.f32 %v4151, %v4154
        %vm4156 = vweird.f32 %v3825
        %vm4157 = vweird.f32 %v4151
        %vm4158 = vmor %vm4156, %vm4157
        %v4159 = vsel %vm4158, %v4151, %v4155
        %v4160 = vand.u32 2147483647, %v3825
        %vm4161 = vcmp.eq.f32.partialorder %v4160, 8.507059e+37
        %v4162 = vand.u32 %v3825, 2147483648
        %v4163 = vor.u32 1.1754944e-38, %v4162
        %v4164 = vsel %vm4161, %v4163, %v4159
        %v4165 = vmul.f32 1.0, %v4164
        %v4166 = vrcp.pop %v3826
        %v4167 = vmul.f32 %v3826, %v4166
        %v4168 = vsub.f32 1.0, %v4167
        %v4169 = vmul.f32 %v4166, %v4168
        %v4170 = vadd.f32 %v4166, %v4169
        %vm4171 = vweird.f32 %v3826
        %vm4172 = vweird.f32 %v4166
        %vm4173 = vmor %vm4171, %vm4172
        %v4174 = vsel %vm4173, %v4166, %v4170
        %v4175 = vand.u32 2147483647, %v3826
        %vm4176 = vcmp.eq.f32.partialorder %v4175, 8.507059e+37
        %v4177 = vand.u32 %v3826, 2147483648
        %v4178 = vor.u32 1.1754944e-38, %v4177
        %v4179 = vsel %vm4176, %v4178, %v4174
        %v4180 = vmul.f32 1.0, %v4179
        %v4181 = vrcp.pop %v3827
        %v4182 = vmul.f32 %v3827, %v4181
        %v4183 = vsub.f32 1.0, %v4182
        %v4184 = vmul.f32 %v4181, %v4183
        %v4185 = vadd.f32 %v4181, %v4184
        %vm4186 = vweird.f32 %v3827
        %vm4187 = vweird.f32 %v4181
        %vm4188 = vmor %vm4186, %vm4187
        %v4189 = vsel %vm4188, %v4181, %v4185
        %v4190 = vand.u32 2147483647, %v3827
        %vm4191 = vcmp.eq.f32.partialorder %v4190, 8.507059e+37
        %v4192 = vand.u32 %v3827, 2147483648
        %v4193 = vor.u32 1.1754944e-38, %v4192
        %v4194 = vsel %vm4191, %v4193, %v4189
        %v4195 = vmul.f32 1.0, %v4194
        %v4196 = vrcp.pop %v3828
        %v4197 = vmul.f32 %v3828, %v4196
        %v4198 = vsub.f32 1.0, %v4197
        %v4199 = vmul.f32 %v4196, %v4198
        %v4200 = vadd.f32 %v4196, %v4199
        %vm4201 = vweird.f32 %v3828
        %vm4202 = vweird.f32 %v4196
        %vm4203 = vmor %vm4201, %vm4202
        %v4204 = vsel %vm4203, %v4196, %v4200
        %v4205 = vand.u32 2147483647, %v3828
        %vm4206 = vcmp.eq.f32.partialorder %v4205, 8.507059e+37
        %v4207 = vand.u32 %v3828, 2147483648
        %v4208 = vor.u32 1.1754944e-38, %v4207
        %v4209 = vsel %vm4206, %v4208, %v4204
        %v4210 = vmul.f32 1.0, %v4209
        %v4211 = vrcp.pop %v3829
        %v4212 = vmul.f32 %v3829, %v4211
        %v4213 = vsub.f32 1.0, %v4212
        %v4214 = vmul.f32 %v4211, %v4213
        %v4215 = vadd.f32 %v4211, %v4214
        %vm4216 = vweird.f32 %v3829
        %vm4217 = vweird.f32 %v4211
        %vm4218 = vmor %vm4216, %vm4217
        %v4219 = vsel %vm4218, %v4211, %v4215
        %v4220 = vand.u32 2147483647, %v3829
        %vm4221 = vcmp.eq.f32.partialorder %v4220, 8.507059e+37
        %v4222 = vand.u32 %v3829, 2147483648
        %v4223 = vor.u32 1.1754944e-38, %v4222
        %v4224 = vsel %vm4221, %v4223, %v4219
        %v4225 = vmul.f32 1.0, %v4224
        %v4226 = vrcp.pop %v3830
        %v4227 = vmul.f32 %v3830, %v4226
        %v4228 = vsub.f32 1.0, %v4227
        %v4229 = vmul.f32 %v4226, %v4228
        %v4230 = vadd.f32 %v4226, %v4229
        %vm4231 = vweird.f32 %v3830
        %vm4232 = vweird.f32 %v4226
        %vm4233 = vmor %vm4231, %vm4232
        %v4234 = vsel %vm4233, %v4226, %v4230
        %v4235 = vand.u32 2147483647, %v3830
        %vm4236 = vcmp.eq.f32.partialorder %v4235, 8.507059e+37
        %v4237 = vand.u32 %v3830, 2147483648
        %v4238 = vor.u32 1.1754944e-38, %v4237
        %v4239 = vsel %vm4236, %v4238, %v4234
        %v4240 = vmul.f32 1.0, %v4239
        %v4241 = vrcp.pop %v3831
        %v4242 = vmul.f32 %v3831, %v4241
        %v4243 = vsub.f32 1.0, %v4242
        %v4244 = vmul.f32 %v4241, %v4243
        %v4245 = vadd.f32 %v4241, %v4244
        %vm4246 = vweird.f32 %v3831
        %vm4247 = vweird.f32 %v4241
        %vm4248 = vmor %vm4246, %vm4247
        %v4249 = vsel %vm4248, %v4241, %v4245
        %v4250 = vand.u32 2147483647, %v3831
        %vm4251 = vcmp.eq.f32.partialorder %v4250, 8.507059e+37
        %v4252 = vand.u32 %v3831, 2147483648
        %v4253 = vor.u32 1.1754944e-38, %v4252
        %v4254 = vsel %vm4251, %v4253, %v4249
        %v4255 = vmul.f32 1.0, %v4254
        %v4256 = vrcp.pop %v3832
        %v4257 = vmul.f32 %v3832, %v4256
        %v4258 = vsub.f32 1.0, %v4257
        %v4259 = vmul.f32 %v4256, %v4258
        %v4260 = vadd.f32 %v4256, %v4259
        %vm4261 = vweird.f32 %v3832
        %vm4262 = vweird.f32 %v4256
        %vm4263 = vmor %vm4261, %vm4262
        %v4264 = vsel %vm4263, %v4256, %v4260
        %v4265 = vand.u32 2147483647, %v3832
        %vm4266 = vcmp.eq.f32.partialorder %v4265, 8.507059e+37
        %v4267 = vand.u32 %v3832, 2147483648
        %v4268 = vor.u32 1.1754944e-38, %v4267
        %v4269 = vsel %vm4266, %v4268, %v4264
        %v4270 = vmul.f32 1.0, %v4269
        %v4271 = vrcp.pop %v3833
        %v4272 = vmul.f32 %v3833, %v4271
        %v4273 = vsub.f32 1.0, %v4272
        %v4274 = vmul.f32 %v4271, %v4273
        %v4275 = vadd.f32 %v4271, %v4274
        %vm4276 = vweird.f32 %v3833
        %vm4277 = vweird.f32 %v4271
        %vm4278 = vmor %vm4276, %vm4277
        %v4279 = vsel %vm4278, %v4271, %v4275
        %v4280 = vand.u32 2147483647, %v3833
        %vm4281 = vcmp.eq.f32.partialorder %v4280, 8.507059e+37
        %v4282 = vand.u32 %v3833, 2147483648
        %v4283 = vor.u32 1.1754944e-38, %v4282
        %v4284 = vsel %vm4281, %v4283, %v4279
        %v4285 = vmul.f32 1.0, %v4284
        %v4286 = vrcp.pop %v3834
        %v4287 = vmul.f32 %v3834, %v4286
        %v4288 = vsub.f32 1.0, %v4287
        %v4289 = vmul.f32 %v4286, %v4288
        %v4290 = vadd.f32 %v4286, %v4289
        %vm4291 = vweird.f32 %v3834
        %vm4292 = vweird.f32 %v4286
        %vm4293 = vmor %vm4291, %vm4292
        %v4294 = vsel %vm4293, %v4286, %v4290
        %v4295 = vand.u32 2147483647, %v3834
        %vm4296 = vcmp.eq.f32.partialorder %v4295, 8.507059e+37
        %v4297 = vand.u32 %v3834, 2147483648
        %v4298 = vor.u32 1.1754944e-38, %v4297
        %v4299 = vsel %vm4296, %v4298, %v4294
        %v4300 = vmul.f32 1.0, %v4299
        %v4301 = vrcp.pop %v3835
        %v4302 = vmul.f32 %v3835, %v4301
        %v4303 = vsub.f32 1.0, %v4302
        %v4304 = vmul.f32 %v4301, %v4303
        %v4305 = vadd.f32 %v4301, %v4304
        %vm4306 = vweird.f32 %v3835
        %vm4307 = vweird.f32 %v4301
        %vm4308 = vmor %vm4306, %vm4307
        %v4309 = vsel %vm4308, %v4301, %v4305
        %v4310 = vand.u32 2147483647, %v3835
        %vm4311 = vcmp.eq.f32.partialorder %v4310, 8.507059e+37
        %v4312 = vand.u32 %v3835, 2147483648
        %v4313 = vor.u32 1.1754944e-38, %v4312
        %v4314 = vsel %vm4311, %v4313, %v4309
        %v4315 = vmul.f32 1.0, %v4314
        %v4316 = vmul.f32 %v1090, %v3850
        %v4317 = vmul.f32 %v1092, %v3865
        %v4318 = vmul.f32 %v1095, %v3880
        %v4319 = vmul.f32 %v1097, %v3895
        %v4320 = vmul.f32 %v1100, %v3910
        %v4321 = vmul.f32 %v1102, %v3925
        %v4322 = vmul.f32 %v1105, %v3940
        %v4323 = vmul.f32 %v1107, %v3955
        %v4324 = vmul.f32 %v1110, %v3970
        %v4325 = vmul.f32 %v1112, %v3985
        %v4326 = vmul.f32 %v1115, %v4000
        %v4327 = vmul.f32 %v1117, %v4015
        %v4328 = vmul.f32 %v1120, %v4030
        %v4329 = vmul.f32 %v1122, %v4045
        %v4330 = vmul.f32 %v1125, %v4060
        %v4331 = vmul.f32 %v1127, %v4075
        %v4332 = vmul.f32 %v1130, %v4090
        %v4333 = vmul.f32 %v1132, %v4105
        %v4334 = vmul.f32 %v1135, %v4120
        %v4335 = vmul.f32 %v1137, %v4135
        %v4336 = vmul.f32 %v1140, %v4150
        %v4337 = vmul.f32 %v1142, %v4165
        %v4338 = vmul.f32 %v1145, %v4180
        %v4339 = vmul.f32 %v1147, %v4195
        %v4340 = vmul.f32 %v1150, %v4210
        %v4341 = vmul.f32 %v1152, %v4225
        %v4342 = vmul.f32 %v1155, %v4240
        %v4343 = vmul.f32 %v1157, %v4255
        %v4344 = vmul.f32 %v1160, %v4270
        %v4345 = vmul.f32 %v1162, %v4285
        %v4346 = vmul.f32 %v1165, %v4300
        %v4347 = vmul.f32 %v1167, %v4315
        %v4348 = vmul.f32 %v3676, %v4316
        %v4349 = vmul.f32 %v3677, %v4317
        %v4350 = vmul.f32 %v3678, %v4318
        %v4351 = vmul.f32 %v3679, %v4319
        %v4352 = vmul.f32 %v3680, %v4320
        %v4353 = vmul.f32 %v3681, %v4321
        %v4354 = vmul.f32 %v3682, %v4322
        %v4355 = vmul.f32 %v3683, %v4323
        %v4356 = vmul.f32 %v3684, %v4324
        %v4357 = vmul.f32 %v3685, %v4325
        %v4358 = vmul.f32 %v3686, %v4326
        %v4359 = vmul.f32 %v3687, %v4327
        %v4360 = vmul.f32 %v3688, %v4328
        %v4361 = vmul.f32 %v3689, %v4329
        %v4362 = vmul.f32 %v3690, %v4330
        %v4363 = vmul.f32 %v3691, %v4331
        %v4364 = vmul.f32 %v3692, %v4332
        %v4365 = vmul.f32 %v3693, %v4333
        %v4366 = vmul.f32 %v3694, %v4334
        %v4367 = vmul.f32 %v3695, %v4335
        %v4368 = vmul.f32 %v3696, %v4336
        %v4369 = vmul.f32 %v3697, %v4337
        %v4370 = vmul.f32 %v3698, %v4338
        %v4371 = vmul.f32 %v3699, %v4339
        %v4372 = vmul.f32 %v3700, %v4340
        %v4373 = vmul.f32 %v3701, %v4341
        %v4374 = vmul.f32 %v3702, %v4342
        %v4375 = vmul.f32 %v3703, %v4343
        %v4376 = vmul.f32 %v3704, %v4344
        %v4377 = vmul.f32 %v3705, %v4345
        %v4378 = vmul.f32 %v3706, %v4346
        %v4379 = vmul.f32 %v3707, %v4347
        %v4380 = vmul.f32 %v4348, %v4348
        %v4381 = vmul.f32 %v4349, %v4349
        %v4382 = vmul.f32 %v4350, %v4350
        %v4383 = vmul.f32 %v4351, %v4351
        %v4384 = vmul.f32 %v4352, %v4352
        %v4385 = vmul.f32 %v4353, %v4353
        %v4386 = vmul.f32 %v4354, %v4354
        %v4387 = vmul.f32 %v4355, %v4355
        %v4388 = vmul.f32 %v4356, %v4356
        %v4389 = vmul.f32 %v4357, %v4357
        %v4390 = vmul.f32 %v4358, %v4358
        %v4391 = vmul.f32 %v4359, %v4359
        %v4392 = vmul.f32 %v4360, %v4360
        %v4393 = vmul.f32 %v4361, %v4361
        %v4394 = vmul.f32 %v4362, %v4362
        %v4395 = vmul.f32 %v4363, %v4363
        %v4396 = vmul.f32 %v4364, %v4364
        %v4397 = vmul.f32 %v4365, %v4365
        %v4398 = vmul.f32 %v4366, %v4366
        %v4399 = vmul.f32 %v4367, %v4367
        %v4400 = vmul.f32 %v4368, %v4368
        %v4401 = vmul.f32 %v4369, %v4369
        %v4402 = vmul.f32 %v4370, %v4370
        %v4403 = vmul.f32 %v4371, %v4371
        %v4404 = vmul.f32 %v4372, %v4372
        %v4405 = vmul.f32 %v4373, %v4373
        %v4406 = vmul.f32 %v4374, %v4374
        %v4407 = vmul.f32 %v4375, %v4375
        %v4408 = vmul.f32 %v4376, %v4376
        %v4409 = vmul.f32 %v4377, %v4377
        %v4410 = vmul.f32 %v4378, %v4378
        %v4411 = vmul.f32 %v4379, %v4379
        %4412 = vadd.xlane.f32.xlu0 %v4380
        %v4413 = vpop.xlane.xlu0 %4412
        %4414 = vadd.xlane.f32.xlu0 %v4381
        %v4415 = vpop.xlane.xlu0 %4414
        %4416 = vadd.xlane.f32.xlu0 %v4382
        %v4417 = vpop.xlane.xlu0 %4416
        %4418 = vadd.xlane.f32.xlu0 %v4383
        %v4419 = vpop.xlane.xlu0 %4418
        %4420 = vadd.xlane.f32.xlu0 %v4384
        %v4421 = vpop.xlane.xlu0 %4420
        %4422 = vadd.xlane.f32.xlu0 %v4385
        %v4423 = vpop.xlane.xlu0 %4422
        %4424 = vadd.xlane.f32.xlu0 %v4386
        %v4425 = vpop.xlane.xlu0 %4424
        %4426 = vadd.xlane.f32.xlu0 %v4387
        %v4427 = vpop.xlane.xlu0 %4426
        %4428 = vadd.xlane.f32.xlu0 %v4388
        %v4429 = vpop.xlane.xlu0 %4428
        %4430 = vadd.xlane.f32.xlu0 %v4389
        %v4431 = vpop.xlane.xlu0 %4430
        %4432 = vadd.xlane.f32.xlu0 %v4390
        %v4433 = vpop.xlane.xlu0 %4432
        %4434 = vadd.xlane.f32.xlu0 %v4391
        %v4435 = vpop.xlane.xlu0 %4434
        %4436 = vadd.xlane.f32.xlu0 %v4392
        %v4437 = vpop.xlane.xlu0 %4436
        %4438 = vadd.xlane.f32.xlu0 %v4393
        %v4439 = vpop.xlane.xlu0 %4438
        %4440 = vadd.xlane.f32.xlu0 %v4394
        %v4441 = vpop.xlane.xlu0 %4440
        %4442 = vadd.xlane.f32.xlu0 %v4395
        %v4443 = vpop.xlane.xlu0 %4442
        %4444 = vadd.xlane.f32.xlu0 %v4396
        %v4445 = vpop.xlane.xlu0 %4444
        %4446 = vadd.xlane.f32.xlu0 %v4397
        %v4447 = vpop.xlane.xlu0 %4446
        %4448 = vadd.xlane.f32.xlu0 %v4398
        %v4449 = vpop.xlane.xlu0 %4448
        %4450 = vadd.xlane.f32.xlu0 %v4399
        %v4451 = vpop.xlane.xlu0 %4450
        %4452 = vadd.xlane.f32.xlu0 %v4400
        %v4453 = vpop.xlane.xlu0 %4452
        %4454 = vadd.xlane.f32.xlu0 %v4401
        %v4455 = vpop.xlane.xlu0 %4454
        %4456 = vadd.xlane.f32.xlu0 %v4402
        %v4457 = vpop.xlane.xlu0 %4456
        %4458 = vadd.xlane.f32.xlu0 %v4403
        %v4459 = vpop.xlane.xlu0 %4458
        %4460 = vadd.xlane.f32.xlu0 %v4404
        %v4461 = vpop.xlane.xlu0 %4460
        %4462 = vadd.xlane.f32.xlu0 %v4405
        %v4463 = vpop.xlane.xlu0 %4462
        %4464 = vadd.xlane.f32.xlu0 %v4406
        %v4465 = vpop.xlane.xlu0 %4464
        %4466 = vadd.xlane.f32.xlu0 %v4407
        %v4467 = vpop.xlane.xlu0 %4466
        %4468 = vadd.xlane.f32.xlu0 %v4408
        %v4469 = vpop.xlane.xlu0 %4468
        %4470 = vadd.xlane.f32.xlu0 %v4409
        %v4471 = vpop.xlane.xlu0 %4470
        %4472 = vadd.xlane.f32.xlu0 %v4410
        %v4473 = vpop.xlane.xlu0 %4472
        %4474 = vadd.xlane.f32.xlu0 %v4411
        %v4475 = vpop.xlane.xlu0 %4474
        %v4476 = vrcp.pop 128.0
        %v4477 = vmul.f32 128.0, %v4476
        %v4478 = vsub.f32 1.0, %v4477
        %v4479 = vmul.f32 %v4476, %v4478
        %v4480 = vadd.f32 %v4476, %v4479
        %vm4481 = vweird.f32 %v4476
        %v4482 = vsel %vm4481, %v4476, %v4480
        %v4483 = vmul.f32 %v4413, %v4482
        %v4484 = vmul.f32 %v4415, %v4482
        %v4485 = vmul.f32 %v4417, %v4482
        %v4486 = vmul.f32 %v4419, %v4482
        %v4487 = vmul.f32 %v4421, %v4482
        %v4488 = vmul.f32 %v4423, %v4482
        %v4489 = vmul.f32 %v4425, %v4482
        %v4490 = vmul.f32 %v4427, %v4482
        %v4491 = vmul.f32 %v4429, %v4482
        %v4492 = vmul.f32 %v4431, %v4482
        %v4493 = vmul.f32 %v4433, %v4482
        %v4494 = vmul.f32 %v4435, %v4482
        %v4495 = vmul.f32 %v4437, %v4482
        %v4496 = vmul.f32 %v4439, %v4482
        %v4497 = vmul.f32 %v4441, %v4482
        %v4498 = vmul.f32 %v4443, %v4482
        %v4499 = vmul.f32 %v4445, %v4482
        %v4500 = vmul.f32 %v4447, %v4482
        %v4501 = vmul.f32 %v4449, %v4482
        %v4502 = vmul.f32 %v4451, %v4482
        %v4503 = vmul.f32 %v4453, %v4482
        %v4504 = vmul.f32 %v4455, %v4482
        %v4505 = vmul.f32 %v4457, %v4482
        %v4506 = vmul.f32 %v4459, %v4482
        %v4507 = vmul.f32 %v4461, %v4482
        %v4508 = vmul.f32 %v4463, %v4482
        %v4509 = vmul.f32 %v4465, %v4482
        %v4510 = vmul.f32 %v4467, %v4482
        %v4511 = vmul.f32 %v4469, %v4482
        %v4512 = vmul.f32 %v4471, %v4482
        %v4513 = vmul.f32 %v4473, %v4482
        %v4514 = vmul.f32 %v4475, %v4482
        %v4515 = vadd.f32 %v4483, 1e-05
        %v4516 = vadd.f32 %v4484, 1e-05
        %v4517 = vadd.f32 %v4485, 1e-05
        %v4518 = vadd.f32 %v4486, 1e-05
        %v4519 = vadd.f32 %v4487, 1e-05
        %v4520 = vadd.f32 %v4488, 1e-05
        %v4521 = vadd.f32 %v4489, 1e-05
        %v4522 = vadd.f32 %v4490, 1e-05
        %v4523 = vadd.f32 %v4491, 1e-05
        %v4524 = vadd.f32 %v4492, 1e-05
        %v4525 = vadd.f32 %v4493, 1e-05
        %v4526 = vadd.f32 %v4494, 1e-05
        %v4527 = vadd.f32 %v4495, 1e-05
        %v4528 = vadd.f32 %v4496, 1e-05
        %v4529 = vadd.f32 %v4497, 1e-05
        %v4530 = vadd.f32 %v4498, 1e-05
        %v4531 = vadd.f32 %v4499, 1e-05
        %v4532 = vadd.f32 %v4500, 1e-05
        %v4533 = vadd.f32 %v4501, 1e-05
        %v4534 = vadd.f32 %v4502, 1e-05
        %v4535 = vadd.f32 %v4503, 1e-05
        %v4536 = vadd.f32 %v4504, 1e-05
        %v4537 = vadd.f32 %v4505, 1e-05
        %v4538 = vadd.f32 %v4506, 1e-05
        %v4539 = vadd.f32 %v4507, 1e-05
        %v4540 = vadd.f32 %v4508, 1e-05
        %v4541 = vadd.f32 %v4509, 1e-05
        %v4542 = vadd.f32 %v4510, 1e-05
        %v4543 = vadd.f32 %v4511, 1e-05
        %v4544 = vadd.f32 %v4512, 1e-05
        %v4545 = vadd.f32 %v4513, 1e-05
        %v4546 = vadd.f32 %v4514, 1e-05
        %v4547 = vrsqrt.pop %v4515
        %v4548 = vmul.f32 %v4547, %v4515
        %v4549 = vmul.f32 %v4548, %v4547
        %v4550 = vmul.f32 0.5, %v4549
        %v4551 = vsub.f32 1.5, %v4550
        %v4552 = vmul.f32 %v4547, %v4551
        %vm4553 = vweird.f32 %v4515
        %vm4554 = vweird.f32 %v4547
        %vm4555 = vmor %vm4553, %vm4554
        %v4556 = vsel %vm4555, %v4547, %v4552
        %v4557 = vrsqrt.pop %v4516
        %v4558 = vmul.f32 %v4557, %v4516
        %v4559 = vmul.f32 %v4558, %v4557
        %v4560 = vmul.f32 0.5, %v4559
        %v4561 = vsub.f32 1.5, %v4560
        %v4562 = vmul.f32 %v4557, %v4561
        %vm4563 = vweird.f32 %v4516
        %vm4564 = vweird.f32 %v4557
        %vm4565 = vmor %vm4563, %vm4564
        %v4566 = vsel %vm4565, %v4557, %v4562
        %v4567 = vrsqrt.pop %v4517
        %v4568 = vmul.f32 %v4567, %v4517
        %v4569 = vmul.f32 %v4568, %v4567
        %v4570 = vmul.f32 0.5, %v4569
        %v4571 = vsub.f32 1.5, %v4570
        %v4572 = vmul.f32 %v4567, %v4571
        %vm4573 = vweird.f32 %v4517
        %vm4574 = vweird.f32 %v4567
        %vm4575 = vmor %vm4573, %vm4574
        %v4576 = vsel %vm4575, %v4567, %v4572
        %v4577 = vrsqrt.pop %v4518
        %v4578 = vmul.f32 %v4577, %v4518
        %v4579 = vmul.f32 %v4578, %v4577
        %v4580 = vmul.f32 0.5, %v4579
        %v4581 = vsub.f32 1.5, %v4580
        %v4582 = vmul.f32 %v4577, %v4581
        %vm4583 = vweird.f32 %v4518
        %vm4584 = vweird.f32 %v4577
        %vm4585 = vmor %vm4583, %vm4584
        %v4586 = vsel %vm4585, %v4577, %v4582
        %v4587 = vrsqrt.pop %v4519
        %v4588 = vmul.f32 %v4587, %v4519
        %v4589 = vmul.f32 %v4588, %v4587
        %v4590 = vmul.f32 0.5, %v4589
        %v4591 = vsub.f32 1.5, %v4590
        %v4592 = vmul.f32 %v4587, %v4591
        %vm4593 = vweird.f32 %v4519
        %vm4594 = vweird.f32 %v4587
        %vm4595 = vmor %vm4593, %vm4594
        %v4596 = vsel %vm4595, %v4587, %v4592
        %v4597 = vrsqrt.pop %v4520
        %v4598 = vmul.f32 %v4597, %v4520
        %v4599 = vmul.f32 %v4598, %v4597
        %v4600 = vmul.f32 0.5, %v4599
        %v4601 = vsub.f32 1.5, %v4600
        %v4602 = vmul.f32 %v4597, %v4601
        %vm4603 = vweird.f32 %v4520
        %vm4604 = vweird.f32 %v4597
        %vm4605 = vmor %vm4603, %vm4604
        %v4606 = vsel %vm4605, %v4597, %v4602
        %v4607 = vrsqrt.pop %v4521
        %v4608 = vmul.f32 %v4607, %v4521
        %v4609 = vmul.f32 %v4608, %v4607
        %v4610 = vmul.f32 0.5, %v4609
        %v4611 = vsub.f32 1.5, %v4610
        %v4612 = vmul.f32 %v4607, %v4611
        %vm4613 = vweird.f32 %v4521
        %vm4614 = vweird.f32 %v4607
        %vm4615 = vmor %vm4613, %vm4614
        %v4616 = vsel %vm4615, %v4607, %v4612
        %v4617 = vrsqrt.pop %v4522
        %v4618 = vmul.f32 %v4617, %v4522
        %v4619 = vmul.f32 %v4618, %v4617
        %v4620 = vmul.f32 0.5, %v4619
        %v4621 = vsub.f32 1.5, %v4620
        %v4622 = vmul.f32 %v4617, %v4621
        %vm4623 = vweird.f32 %v4522
        %vm4624 = vweird.f32 %v4617
        %vm4625 = vmor %vm4623, %vm4624
        %v4626 = vsel %vm4625, %v4617, %v4622
        %v4627 = vrsqrt.pop %v4523
        %v4628 = vmul.f32 %v4627, %v4523
        %v4629 = vmul.f32 %v4628, %v4627
        %v4630 = vmul.f32 0.5, %v4629
        %v4631 = vsub.f32 1.5, %v4630
        %v4632 = vmul.f32 %v4627, %v4631
        %vm4633 = vweird.f32 %v4523
        %vm4634 = vweird.f32 %v4627
        %vm4635 = vmor %vm4633, %vm4634
        %v4636 = vsel %vm4635, %v4627, %v4632
        %v4637 = vrsqrt.pop %v4524
        %v4638 = vmul.f32 %v4637, %v4524
        %v4639 = vmul.f32 %v4638, %v4637
        %v4640 = vmul.f32 0.5, %v4639
        %v4641 = vsub.f32 1.5, %v4640
        %v4642 = vmul.f32 %v4637, %v4641
        %vm4643 = vweird.f32 %v4524
        %vm4644 = vweird.f32 %v4637
        %vm4645 = vmor %vm4643, %vm4644
        %v4646 = vsel %vm4645, %v4637, %v4642
        %v4647 = vrsqrt.pop %v4525
        %v4648 = vmul.f32 %v4647, %v4525
        %v4649 = vmul.f32 %v4648, %v4647
        %v4650 = vmul.f32 0.5, %v4649
        %v4651 = vsub.f32 1.5, %v4650
        %v4652 = vmul.f32 %v4647, %v4651
        %vm4653 = vweird.f32 %v4525
        %vm4654 = vweird.f32 %v4647
        %vm4655 = vmor %vm4653, %vm4654
        %v4656 = vsel %vm4655, %v4647, %v4652
        %v4657 = vrsqrt.pop %v4526
        %v4658 = vmul.f32 %v4657, %v4526
        %v4659 = vmul.f32 %v4658, %v4657
        %v4660 = vmul.f32 0.5, %v4659
        %v4661 = vsub.f32 1.5, %v4660
        %v4662 = vmul.f32 %v4657, %v4661
        %vm4663 = vweird.f32 %v4526
        %vm4664 = vweird.f32 %v4657
        %vm4665 = vmor %vm4663, %vm4664
        %v4666 = vsel %vm4665, %v4657, %v4662
        %v4667 = vrsqrt.pop %v4527
        %v4668 = vmul.f32 %v4667, %v4527
        %v4669 = vmul.f32 %v4668, %v4667
        %v4670 = vmul.f32 0.5, %v4669
        %v4671 = vsub.f32 1.5, %v4670
        %v4672 = vmul.f32 %v4667, %v4671
        %vm4673 = vweird.f32 %v4527
        %vm4674 = vweird.f32 %v4667
        %vm4675 = vmor %vm4673, %vm4674
        %v4676 = vsel %vm4675, %v4667, %v4672
        %v4677 = vrsqrt.pop %v4528
        %v4678 = vmul.f32 %v4677, %v4528
        %v4679 = vmul.f32 %v4678, %v4677
        %v4680 = vmul.f32 0.5, %v4679
        %v4681 = vsub.f32 1.5, %v4680
        %v4682 = vmul.f32 %v4677, %v4681
        %vm4683 = vweird.f32 %v4528
        %vm4684 = vweird.f32 %v4677
        %vm4685 = vmor %vm4683, %vm4684
        %v4686 = vsel %vm4685, %v4677, %v4682
        %v4687 = vrsqrt.pop %v4529
        %v4688 = vmul.f32 %v4687, %v4529
        %v4689 = vmul.f32 %v4688, %v4687
        %v4690 = vmul.f32 0.5, %v4689
        %v4691 = vsub.f32 1.5, %v4690
        %v4692 = vmul.f32 %v4687, %v4691
        %vm4693 = vweird.f32 %v4529
        %vm4694 = vweird.f32 %v4687
        %vm4695 = vmor %vm4693, %vm4694
        %v4696 = vsel %vm4695, %v4687, %v4692
        %v4697 = vrsqrt.pop %v4530
        %v4698 = vmul.f32 %v4697, %v4530
        %v4699 = vmul.f32 %v4698, %v4697
        %v4700 = vmul.f32 0.5, %v4699
        %v4701 = vsub.f32 1.5, %v4700
        %v4702 = vmul.f32 %v4697, %v4701
        %vm4703 = vweird.f32 %v4530
        %vm4704 = vweird.f32 %v4697
        %vm4705 = vmor %vm4703, %vm4704
        %v4706 = vsel %vm4705, %v4697, %v4702
        %v4707 = vrsqrt.pop %v4531
        %v4708 = vmul.f32 %v4707, %v4531
        %v4709 = vmul.f32 %v4708, %v4707
        %v4710 = vmul.f32 0.5, %v4709
        %v4711 = vsub.f32 1.5, %v4710
        %v4712 = vmul.f32 %v4707, %v4711
        %vm4713 = vweird.f32 %v4531
        %vm4714 = vweird.f32 %v4707
        %vm4715 = vmor %vm4713, %vm4714
        %v4716 = vsel %vm4715, %v4707, %v4712
        %v4717 = vrsqrt.pop %v4532
        %v4718 = vmul.f32 %v4717, %v4532
        %v4719 = vmul.f32 %v4718, %v4717
        %v4720 = vmul.f32 0.5, %v4719
        %v4721 = vsub.f32 1.5, %v4720
        %v4722 = vmul.f32 %v4717, %v4721
        %vm4723 = vweird.f32 %v4532
        %vm4724 = vweird.f32 %v4717
        %vm4725 = vmor %vm4723, %vm4724
        %v4726 = vsel %vm4725, %v4717, %v4722
        %v4727 = vrsqrt.pop %v4533
        %v4728 = vmul.f32 %v4727, %v4533
        %v4729 = vmul.f32 %v4728, %v4727
        %v4730 = vmul.f32 0.5, %v4729
        %v4731 = vsub.f32 1.5, %v4730
        %v4732 = vmul.f32 %v4727, %v4731
        %vm4733 = vweird.f32 %v4533
        %vm4734 = vweird.f32 %v4727
        %vm4735 = vmor %vm4733, %vm4734
        %v4736 = vsel %vm4735, %v4727, %v4732
        %v4737 = vrsqrt.pop %v4534
        %v4738 = vmul.f32 %v4737, %v4534
        %v4739 = vmul.f32 %v4738, %v4737
        %v4740 = vmul.f32 0.5, %v4739
        %v4741 = vsub.f32 1.5, %v4740
        %v4742 = vmul.f32 %v4737, %v4741
        %vm4743 = vweird.f32 %v4534
        %vm4744 = vweird.f32 %v4737
        %vm4745 = vmor %vm4743, %vm4744
        %v4746 = vsel %vm4745, %v4737, %v4742
        %v4747 = vrsqrt.pop %v4535
        %v4748 = vmul.f32 %v4747, %v4535
        %v4749 = vmul.f32 %v4748, %v4747
        %v4750 = vmul.f32 0.5, %v4749
        %v4751 = vsub.f32 1.5, %v4750
        %v4752 = vmul.f32 %v4747, %v4751
        %vm4753 = vweird.f32 %v4535
        %vm4754 = vweird.f32 %v4747
        %vm4755 = vmor %vm4753, %vm4754
        %v4756 = vsel %vm4755, %v4747, %v4752
        %v4757 = vrsqrt.pop %v4536
        %v4758 = vmul.f32 %v4757, %v4536
        %v4759 = vmul.f32 %v4758, %v4757
        %v4760 = vmul.f32 0.5, %v4759
        %v4761 = vsub.f32 1.5, %v4760
        %v4762 = vmul.f32 %v4757, %v4761
        %vm4763 = vweird.f32 %v4536
        %vm4764 = vweird.f32 %v4757
        %vm4765 = vmor %vm4763, %vm4764
        %v4766 = vsel %vm4765, %v4757, %v4762
        %v4767 = vrsqrt.pop %v4537
        %v4768 = vmul.f32 %v4767, %v4537
        %v4769 = vmul.f32 %v4768, %v4767
        %v4770 = vmul.f32 0.5, %v4769
        %v4771 = vsub.f32 1.5, %v4770
        %v4772 = vmul.f32 %v4767, %v4771
        %vm4773 = vweird.f32 %v4537
        %vm4774 = vweird.f32 %v4767
        %vm4775 = vmor %vm4773, %vm4774
        %v4776 = vsel %vm4775, %v4767, %v4772
        %v4777 = vrsqrt.pop %v4538
        %v4778 = vmul.f32 %v4777, %v4538
        %v4779 = vmul.f32 %v4778, %v4777
        %v4780 = vmul.f32 0.5, %v4779
        %v4781 = vsub.f32 1.5, %v4780
        %v4782 = vmul.f32 %v4777, %v4781
        %vm4783 = vweird.f32 %v4538
        %vm4784 = vweird.f32 %v4777
        %vm4785 = vmor %vm4783, %vm4784
        %v4786 = vsel %vm4785, %v4777, %v4782
        %v4787 = vrsqrt.pop %v4539
        %v4788 = vmul.f32 %v4787, %v4539
        %v4789 = vmul.f32 %v4788, %v4787
        %v4790 = vmul.f32 0.5, %v4789
        %v4791 = vsub.f32 1.5, %v4790
        %v4792 = vmul.f32 %v4787, %v4791
        %vm4793 = vweird.f32 %v4539
        %vm4794 = vweird.f32 %v4787
        %vm4795 = vmor %vm4793, %vm4794
        %v4796 = vsel %vm4795, %v4787, %v4792
        %v4797 = vrsqrt.pop %v4540
        %v4798 = vmul.f32 %v4797, %v4540
        %v4799 = vmul.f32 %v4798, %v4797
        %v4800 = vmul.f32 0.5, %v4799
        %v4801 = vsub.f32 1.5, %v4800
        %v4802 = vmul.f32 %v4797, %v4801
        %vm4803 = vweird.f32 %v4540
        %vm4804 = vweird.f32 %v4797
        %vm4805 = vmor %vm4803, %vm4804
        %v4806 = vsel %vm4805, %v4797, %v4802
        %v4807 = vrsqrt.pop %v4541
        %v4808 = vmul.f32 %v4807, %v4541
        %v4809 = vmul.f32 %v4808, %v4807
        %v4810 = vmul.f32 0.5, %v4809
        %v4811 = vsub.f32 1.5, %v4810
        %v4812 = vmul.f32 %v4807, %v4811
        %vm4813 = vweird.f32 %v4541
        %vm4814 = vweird.f32 %v4807
        %vm4815 = vmor %vm4813, %vm4814
        %v4816 = vsel %vm4815, %v4807, %v4812
        %v4817 = vrsqrt.pop %v4542
        %v4818 = vmul.f32 %v4817, %v4542
        %v4819 = vmul.f32 %v4818, %v4817
        %v4820 = vmul.f32 0.5, %v4819
        %v4821 = vsub.f32 1.5, %v4820
        %v4822 = vmul.f32 %v4817, %v4821
        %vm4823 = vweird.f32 %v4542
        %vm4824 = vweird.f32 %v4817
        %vm4825 = vmor %vm4823, %vm4824
        %v4826 = vsel %vm4825, %v4817, %v4822
        %v4827 = vrsqrt.pop %v4543
        %v4828 = vmul.f32 %v4827, %v4543
        %v4829 = vmul.f32 %v4828, %v4827
        %v4830 = vmul.f32 0.5, %v4829
        %v4831 = vsub.f32 1.5, %v4830
        %v4832 = vmul.f32 %v4827, %v4831
        %vm4833 = vweird.f32 %v4543
        %vm4834 = vweird.f32 %v4827
        %vm4835 = vmor %vm4833, %vm4834
        %v4836 = vsel %vm4835, %v4827, %v4832
        %v4837 = vrsqrt.pop %v4544
        %v4838 = vmul.f32 %v4837, %v4544
        %v4839 = vmul.f32 %v4838, %v4837
        %v4840 = vmul.f32 0.5, %v4839
        %v4841 = vsub.f32 1.5, %v4840
        %v4842 = vmul.f32 %v4837, %v4841
        %vm4843 = vweird.f32 %v4544
        %vm4844 = vweird.f32 %v4837
        %vm4845 = vmor %vm4843, %vm4844
        %v4846 = vsel %vm4845, %v4837, %v4842
        %v4847 = vrsqrt.pop %v4545
        %v4848 = vmul.f32 %v4847, %v4545
        %v4849 = vmul.f32 %v4848, %v4847
        %v4850 = vmul.f32 0.5, %v4849
        %v4851 = vsub.f32 1.5, %v4850
        %v4852 = vmul.f32 %v4847, %v4851
        %vm4853 = vweird.f32 %v4545
        %vm4854 = vweird.f32 %v4847
        %vm4855 = vmor %vm4853, %vm4854
        %v4856 = vsel %vm4855, %v4847, %v4852
        %v4857 = vrsqrt.pop %v4546
        %v4858 = vmul.f32 %v4857, %v4546
        %v4859 = vmul.f32 %v4858, %v4857
        %v4860 = vmul.f32 0.5, %v4859
        %v4861 = vsub.f32 1.5, %v4860
        %v4862 = vmul.f32 %v4857, %v4861
        %vm4863 = vweird.f32 %v4546
        %vm4864 = vweird.f32 %v4857
        %vm4865 = vmor %vm4863, %vm4864
        %v4866 = vsel %vm4865, %v4857, %v4862
        %v4867 = vmul.f32 %v4348, %v4556
        %v4868 = vmul.f32 %v4349, %v4566
        %v4869 = vmul.f32 %v4350, %v4576
        %v4870 = vmul.f32 %v4351, %v4586
        %v4871 = vmul.f32 %v4352, %v4596
        %v4872 = vmul.f32 %v4353, %v4606
        %v4873 = vmul.f32 %v4354, %v4616
        %v4874 = vmul.f32 %v4355, %v4626
        %v4875 = vmul.f32 %v4356, %v4636
        %v4876 = vmul.f32 %v4357, %v4646
        %v4877 = vmul.f32 %v4358, %v4656
        %v4878 = vmul.f32 %v4359, %v4666
        %v4879 = vmul.f32 %v4360, %v4676
        %v4880 = vmul.f32 %v4361, %v4686
        %v4881 = vmul.f32 %v4362, %v4696
        %v4882 = vmul.f32 %v4363, %v4706
        %v4883 = vmul.f32 %v4364, %v4716
        %v4884 = vmul.f32 %v4365, %v4726
        %v4885 = vmul.f32 %v4366, %v4736
        %v4886 = vmul.f32 %v4367, %v4746
        %v4887 = vmul.f32 %v4368, %v4756
        %v4888 = vmul.f32 %v4369, %v4766
        %v4889 = vmul.f32 %v4370, %v4776
        %v4890 = vmul.f32 %v4371, %v4786
        %v4891 = vmul.f32 %v4372, %v4796
        %v4892 = vmul.f32 %v4373, %v4806
        %v4893 = vmul.f32 %v4374, %v4816
        %v4894 = vmul.f32 %v4375, %v4826
        %v4895 = vmul.f32 %v4376, %v4836
        %v4896 = vmul.f32 %v4377, %v4846
        %v4897 = vmul.f32 %v4378, %v4856
        %v4898 = vmul.f32 %v4379, %v4866
        %v4899 = vmul.f32 %v4867, %v306
        %v4900 = vmul.f32 %v4868, %v306
        %v4901 = vmul.f32 %v4869, %v306
        %v4902 = vmul.f32 %v4870, %v306
        %v4903 = vmul.f32 %v4871, %v306
        %v4904 = vmul.f32 %v4872, %v306
        %v4905 = vmul.f32 %v4873, %v306
        %v4906 = vmul.f32 %v4874, %v306
        %v4907 = vmul.f32 %v4875, %v306
        %v4908 = vmul.f32 %v4876, %v306
        %v4909 = vmul.f32 %v4877, %v306
        %v4910 = vmul.f32 %v4878, %v306
        %v4911 = vmul.f32 %v4879, %v306
        %v4912 = vmul.f32 %v4880, %v306
        %v4913 = vmul.f32 %v4881, %v306
        %v4914 = vmul.f32 %v4882, %v306
        %v4915 = vmul.f32 %v4883, %v306
        %v4916 = vmul.f32 %v4884, %v306
        %v4917 = vmul.f32 %v4885, %v306
        %v4918 = vmul.f32 %v4886, %v306
        %v4919 = vmul.f32 %v4887, %v306
        %v4920 = vmul.f32 %v4888, %v306
        %v4921 = vmul.f32 %v4889, %v306
        %v4922 = vmul.f32 %v4890, %v306
        %v4923 = vmul.f32 %v4891, %v306
        %v4924 = vmul.f32 %v4892, %v306
        %v4925 = vmul.f32 %v4893, %v306
        %v4926 = vmul.f32 %v4894, %v306
        %v4927 = vmul.f32 %v4895, %v306
        %v4928 = vmul.f32 %v4896, %v306
        %v4929 = vmul.f32 %v4897, %v306
        %v4930 = vmul.f32 %v4898, %v306
        %v4931 = vpack.c.bf16 %v4900, %v4899
        %v4932 = vpack.c.bf16 %v4902, %v4901
        %v4933 = vpack.c.bf16 %v4904, %v4903
        %v4934 = vpack.c.bf16 %v4906, %v4905
        %v4935 = vpack.c.bf16 %v4908, %v4907
        %v4936 = vpack.c.bf16 %v4910, %v4909
        %v4937 = vpack.c.bf16 %v4912, %v4911
        %v4938 = vpack.c.bf16 %v4914, %v4913
        %v4939 = vpack.c.bf16 %v4916, %v4915
        %v4940 = vpack.c.bf16 %v4918, %v4917
        %v4941 = vpack.c.bf16 %v4920, %v4919
        %v4942 = vpack.c.bf16 %v4922, %v4921
        %v4943 = vpack.c.bf16 %v4924, %v4923
        %v4944 = vpack.c.bf16 %v4926, %v4925
        %v4945 = vpack.c.bf16 %v4928, %v4927
        %v4946 = vpack.c.bf16 %v4930, %v4929
        %v4963 = vunpack.c.l.b16 %v376
        %v4964 = vunpack.c.l.b16 %v377
        %v4965 = vunpack.c.l.b16 %v378
        %v4966 = vunpack.c.l.b16 %v379
        %v4967 = vunpack.c.l.b16 %v380
        %v4968 = vunpack.c.l.b16 %v381
        %v4969 = vunpack.c.l.b16 %v382
        %v4970 = vunpack.c.l.b16 %v383
        %v4971 = vunpack.c.l.b16 %v384
        %v4972 = vunpack.c.l.b16 %v385
        %v4973 = vunpack.c.l.b16 %v386
        %v4974 = vunpack.c.l.b16 %v387
        %v4975 = vunpack.c.l.b16 %v388
        %v4976 = vunpack.c.l.b16 %v389
        %v4977 = vunpack.c.l.b16 %v390
        %v4978 = vunpack.c.l.b16 %v391
        %v4979 = vpack.c.b16 %v4964, %v4963
        %v4980 = vpack.c.b16 %v4966, %v4965
        %v4981 = vpack.c.b16 %v4968, %v4967
        %v4982 = vpack.c.b16 %v4970, %v4969
        %v4983 = vpack.c.b16 %v4972, %v4971
        %v4984 = vpack.c.b16 %v4974, %v4973
        %v4985 = vpack.c.b16 %v4976, %v4975
        %v4986 = vpack.c.b16 %v4978, %v4977
        %4995 = vmatpush.bf16.msra.mxu0 %v4986
        %4996 = vmatpush.bf16.msra.mxu0 %v4985
        %4997 = vmatpush.bf16.msra.mxu0 %v4984
        %4998 = vmatpush.bf16.msra.mxu0 %v4983
        %4999 = vmatpush.bf16.msra.mxu0 %v4982
        %5000 = vmatpush.bf16.msra.mxu0 %v4981
        %5001 = vmatpush.bf16.msra.mxu0 %v4980
        %5002 = vmatpush.bf16.msra.mxu0 %v4979
        %5003 = vmatmul.bf16.gmra.mxu0 %v4931
        %v5004 = vpop.f32.mrf.mxu0
        %v5005 = vadd.f32 0.0, %v5004
        %v5006 = vpop.f32.mrf.mxu0
        %v5007 = vadd.f32 0.0, %v5006
        %5008 = vmatmul.bf16.gmra.mxu0 %v4932
        %v5009 = vpop.f32.mrf.mxu0
        %v5010 = vadd.f32 0.0, %v5009
        %v5011 = vpop.f32.mrf.mxu0
        %v5012 = vadd.f32 0.0, %v5011
        %5013 = vmatmul.bf16.gmra.mxu0 %v4933
        %v5014 = vpop.f32.mrf.mxu0
        %v5015 = vadd.f32 0.0, %v5014
        %v5016 = vpop.f32.mrf.mxu0
        %v5017 = vadd.f32 0.0, %v5016
        %5018 = vmatmul.bf16.gmra.mxu0 %v4934
        %v5019 = vpop.f32.mrf.mxu0
        %v5020 = vadd.f32 0.0, %v5019
        %v5021 = vpop.f32.mrf.mxu0
        %v5022 = vadd.f32 0.0, %v5021
        %5023 = vmatmul.bf16.gmra.mxu0 %v4935
        %v5024 = vpop.f32.mrf.mxu0
        %v5025 = vadd.f32 0.0, %v5024
        %v5026 = vpop.f32.mrf.mxu0
        %v5027 = vadd.f32 0.0, %v5026
        %5028 = vmatmul.bf16.gmra.mxu0 %v4936
        %v5029 = vpop.f32.mrf.mxu0
        %v5030 = vadd.f32 0.0, %v5029
        %v5031 = vpop.f32.mrf.mxu0
        %v5032 = vadd.f32 0.0, %v5031
        %5033 = vmatmul.bf16.gmra.mxu0 %v4937
        %v5034 = vpop.f32.mrf.mxu0
        %v5035 = vadd.f32 0.0, %v5034
        %v5036 = vpop.f32.mrf.mxu0
        %v5037 = vadd.f32 0.0, %v5036
        %5038 = vmatmul.bf16.gmra.mxu0 %v4938
        %v5039 = vpop.f32.mrf.mxu0
        %v5040 = vadd.f32 0.0, %v5039
        %v5041 = vpop.f32.mrf.mxu0
        %v5042 = vadd.f32 0.0, %v5041
        %5043 = vmatmul.bf16.gmra.mxu0 %v4939
        %v5044 = vpop.f32.mrf.mxu0
        %v5045 = vadd.f32 0.0, %v5044
        %v5046 = vpop.f32.mrf.mxu0
        %v5047 = vadd.f32 0.0, %v5046
        %5048 = vmatmul.bf16.gmra.mxu0 %v4940
        %v5049 = vpop.f32.mrf.mxu0
        %v5050 = vadd.f32 0.0, %v5049
        %v5051 = vpop.f32.mrf.mxu0
        %v5052 = vadd.f32 0.0, %v5051
        %5053 = vmatmul.bf16.gmra.mxu0 %v4941
        %v5054 = vpop.f32.mrf.mxu0
        %v5055 = vadd.f32 0.0, %v5054
        %v5056 = vpop.f32.mrf.mxu0
        %v5057 = vadd.f32 0.0, %v5056
        %5058 = vmatmul.bf16.gmra.mxu0 %v4942
        %v5059 = vpop.f32.mrf.mxu0
        %v5060 = vadd.f32 0.0, %v5059
        %v5061 = vpop.f32.mrf.mxu0
        %v5062 = vadd.f32 0.0, %v5061
        %5063 = vmatmul.bf16.gmra.mxu0 %v4943
        %v5064 = vpop.f32.mrf.mxu0
        %v5065 = vadd.f32 0.0, %v5064
        %v5066 = vpop.f32.mrf.mxu0
        %v5067 = vadd.f32 0.0, %v5066
        %5068 = vmatmul.bf16.gmra.mxu0 %v4944
        %v5069 = vpop.f32.mrf.mxu0
        %v5070 = vadd.f32 0.0, %v5069
        %v5071 = vpop.f32.mrf.mxu0
        %v5072 = vadd.f32 0.0, %v5071
        %5073 = vmatmul.bf16.gmra.mxu0 %v4945
        %v5074 = vpop.f32.mrf.mxu0
        %v5075 = vadd.f32 0.0, %v5074
        %v5076 = vpop.f32.mrf.mxu0
        %v5077 = vadd.f32 0.0, %v5076
        %5078 = vmatmul.bf16.gmra.mxu0 %v4946
        %v5079 = vpop.f32.mrf.mxu0
        %v5080 = vadd.f32 0.0, %v5079
        %v5081 = vpop.f32.mrf.mxu0
        %v5082 = vadd.f32 0.0, %v5081
        %5083 = vdwg.mxu0
        %v5084 = vadd.f32 %v268, %v5005
        %v5085 = vadd.f32 %v269, %v5007
        %v5086 = vadd.f32 %v270, %v5010
        %v5087 = vadd.f32 %v271, %v5012
        %v5088 = vadd.f32 %v272, %v5015
        %v5089 = vadd.f32 %v273, %v5017
        %v5090 = vadd.f32 %v274, %v5020
        %v5091 = vadd.f32 %v275, %v5022
        %v5092 = vadd.f32 %v276, %v5025
        %v5093 = vadd.f32 %v277, %v5027
        %v5094 = vadd.f32 %v278, %v5030
        %v5095 = vadd.f32 %v279, %v5032
        %v5096 = vadd.f32 %v280, %v5035
        %v5097 = vadd.f32 %v281, %v5037
        %v5098 = vadd.f32 %v282, %v5040
        %v5099 = vadd.f32 %v283, %v5042
        %v5100 = vadd.f32 %v284, %v5045
        %v5101 = vadd.f32 %v285, %v5047
        %v5102 = vadd.f32 %v286, %v5050
        %v5103 = vadd.f32 %v287, %v5052
        %v5104 = vadd.f32 %v288, %v5055
        %v5105 = vadd.f32 %v289, %v5057
        %v5106 = vadd.f32 %v290, %v5060
        %v5107 = vadd.f32 %v291, %v5062
        %v5108 = vadd.f32 %v292, %v5065
        %v5109 = vadd.f32 %v293, %v5067
        %v5110 = vadd.f32 %v294, %v5070
        %v5111 = vadd.f32 %v295, %v5072
        %v5112 = vadd.f32 %v296, %v5075
        %v5113 = vadd.f32 %v297, %v5077
        %v5114 = vadd.f32 %v298, %v5080
        %v5115 = vadd.f32 %v299, %v5082
        %v5116 = vmul.f32 %v5084, %v5084
        %v5117 = vmul.f32 %v5085, %v5085
        %v5118 = vmul.f32 %v5086, %v5086
        %v5119 = vmul.f32 %v5087, %v5087
        %v5120 = vmul.f32 %v5088, %v5088
        %v5121 = vmul.f32 %v5089, %v5089
        %v5122 = vmul.f32 %v5090, %v5090
        %v5123 = vmul.f32 %v5091, %v5091
        %v5124 = vmul.f32 %v5092, %v5092
        %v5125 = vmul.f32 %v5093, %v5093
        %v5126 = vmul.f32 %v5094, %v5094
        %v5127 = vmul.f32 %v5095, %v5095
        %v5128 = vmul.f32 %v5096, %v5096
        %v5129 = vmul.f32 %v5097, %v5097
        %v5130 = vmul.f32 %v5098, %v5098
        %v5131 = vmul.f32 %v5099, %v5099
        %v5132 = vmul.f32 %v5100, %v5100
        %v5133 = vmul.f32 %v5101, %v5101
        %v5134 = vmul.f32 %v5102, %v5102
        %v5135 = vmul.f32 %v5103, %v5103
        %v5136 = vmul.f32 %v5104, %v5104
        %v5137 = vmul.f32 %v5105, %v5105
        %v5138 = vmul.f32 %v5106, %v5106
        %v5139 = vmul.f32 %v5107, %v5107
        %v5140 = vmul.f32 %v5108, %v5108
        %v5141 = vmul.f32 %v5109, %v5109
        %v5142 = vmul.f32 %v5110, %v5110
        %v5143 = vmul.f32 %v5111, %v5111
        %v5144 = vmul.f32 %v5112, %v5112
        %v5145 = vmul.f32 %v5113, %v5113
        %v5146 = vmul.f32 %v5114, %v5114
        %v5147 = vmul.f32 %v5115, %v5115
        %5148 = vadd.xlane.f32.xlu0 %v5116
        %v5149 = vpop.xlane.xlu0 %5148
        %5150 = vadd.xlane.f32.xlu0 %v5117
        %v5151 = vpop.xlane.xlu0 %5150
        %5152 = vadd.xlane.f32.xlu0 %v5118
        %v5153 = vpop.xlane.xlu0 %5152
        %5154 = vadd.xlane.f32.xlu0 %v5119
        %v5155 = vpop.xlane.xlu0 %5154
        %5156 = vadd.xlane.f32.xlu0 %v5120
        %v5157 = vpop.xlane.xlu0 %5156
        %5158 = vadd.xlane.f32.xlu0 %v5121
        %v5159 = vpop.xlane.xlu0 %5158
        %5160 = vadd.xlane.f32.xlu0 %v5122
        %v5161 = vpop.xlane.xlu0 %5160
        %5162 = vadd.xlane.f32.xlu0 %v5123
        %v5163 = vpop.xlane.xlu0 %5162
        %5164 = vadd.xlane.f32.xlu0 %v5124
        %v5165 = vpop.xlane.xlu0 %5164
        %5166 = vadd.xlane.f32.xlu0 %v5125
        %v5167 = vpop.xlane.xlu0 %5166
        %5168 = vadd.xlane.f32.xlu0 %v5126
        %v5169 = vpop.xlane.xlu0 %5168
        %5170 = vadd.xlane.f32.xlu0 %v5127
        %v5171 = vpop.xlane.xlu0 %5170
        %5172 = vadd.xlane.f32.xlu0 %v5128
        %v5173 = vpop.xlane.xlu0 %5172
        %5174 = vadd.xlane.f32.xlu0 %v5129
        %v5175 = vpop.xlane.xlu0 %5174
        %5176 = vadd.xlane.f32.xlu0 %v5130
        %v5177 = vpop.xlane.xlu0 %5176
        %5178 = vadd.xlane.f32.xlu0 %v5131
        %v5179 = vpop.xlane.xlu0 %5178
        %5180 = vadd.xlane.f32.xlu0 %v5132
        %v5181 = vpop.xlane.xlu0 %5180
        %5182 = vadd.xlane.f32.xlu0 %v5133
        %v5183 = vpop.xlane.xlu0 %5182
        %5184 = vadd.xlane.f32.xlu0 %v5134
        %v5185 = vpop.xlane.xlu0 %5184
        %5186 = vadd.xlane.f32.xlu0 %v5135
        %v5187 = vpop.xlane.xlu0 %5186
        %5188 = vadd.xlane.f32.xlu0 %v5136
        %v5189 = vpop.xlane.xlu0 %5188
        %5190 = vadd.xlane.f32.xlu0 %v5137
        %v5191 = vpop.xlane.xlu0 %5190
        %5192 = vadd.xlane.f32.xlu0 %v5138
        %v5193 = vpop.xlane.xlu0 %5192
        %5194 = vadd.xlane.f32.xlu0 %v5139
        %v5195 = vpop.xlane.xlu0 %5194
        %5196 = vadd.xlane.f32.xlu0 %v5140
        %v5197 = vpop.xlane.xlu0 %5196
        %5198 = vadd.xlane.f32.xlu0 %v5141
        %v5199 = vpop.xlane.xlu0 %5198
        %5200 = vadd.xlane.f32.xlu0 %v5142
        %v5201 = vpop.xlane.xlu0 %5200
        %5202 = vadd.xlane.f32.xlu0 %v5143
        %v5203 = vpop.xlane.xlu0 %5202
        %5204 = vadd.xlane.f32.xlu0 %v5144
        %v5205 = vpop.xlane.xlu0 %5204
        %5206 = vadd.xlane.f32.xlu0 %v5145
        %v5207 = vpop.xlane.xlu0 %5206
        %5208 = vadd.xlane.f32.xlu0 %v5146
        %v5209 = vpop.xlane.xlu0 %5208
        %5210 = vadd.xlane.f32.xlu0 %v5147
        %v5211 = vpop.xlane.xlu0 %5210
        %v5212 = vmul.f32 %v309, %v5084
        %v5213 = vmul.f32 %v309, %v5085
        %v5214 = vmul.f32 %v309, %v5086
        %v5215 = vmul.f32 %v309, %v5087
        %v5216 = vmul.f32 %v309, %v5088
        %v5217 = vmul.f32 %v309, %v5089
        %v5218 = vmul.f32 %v309, %v5090
        %v5219 = vmul.f32 %v309, %v5091
        %v5220 = vmul.f32 %v309, %v5092
        %v5221 = vmul.f32 %v309, %v5093
        %v5222 = vmul.f32 %v309, %v5094
        %v5223 = vmul.f32 %v309, %v5095
        %v5224 = vmul.f32 %v309, %v5096
        %v5225 = vmul.f32 %v309, %v5097
        %v5226 = vmul.f32 %v309, %v5098
        %v5227 = vmul.f32 %v309, %v5099
        %v5228 = vmul.f32 %v309, %v5100
        %v5229 = vmul.f32 %v309, %v5101
        %v5230 = vmul.f32 %v309, %v5102
        %v5231 = vmul.f32 %v309, %v5103
        %v5232 = vmul.f32 %v309, %v5104
        %v5233 = vmul.f32 %v309, %v5105
        %v5234 = vmul.f32 %v309, %v5106
        %v5235 = vmul.f32 %v309, %v5107
        %v5236 = vmul.f32 %v309, %v5108
        %v5237 = vmul.f32 %v309, %v5109
        %v5238 = vmul.f32 %v309, %v5110
        %v5239 = vmul.f32 %v309, %v5111
        %v5240 = vmul.f32 %v309, %v5112
        %v5241 = vmul.f32 %v309, %v5113
        %v5242 = vmul.f32 %v309, %v5114
        %v5243 = vmul.f32 %v309, %v5115
        %v5244 = vadd.f32 %v5149, 1e-06
        %v5245 = vadd.f32 %v5151, 1e-06
        %v5246 = vadd.f32 %v5153, 1e-06
        %v5247 = vadd.f32 %v5155, 1e-06
        %v5248 = vadd.f32 %v5157, 1e-06
        %v5249 = vadd.f32 %v5159, 1e-06
        %v5250 = vadd.f32 %v5161, 1e-06
        %v5251 = vadd.f32 %v5163, 1e-06
        %v5252 = vadd.f32 %v5165, 1e-06
        %v5253 = vadd.f32 %v5167, 1e-06
        %v5254 = vadd.f32 %v5169, 1e-06
        %v5255 = vadd.f32 %v5171, 1e-06
        %v5256 = vadd.f32 %v5173, 1e-06
        %v5257 = vadd.f32 %v5175, 1e-06
        %v5258 = vadd.f32 %v5177, 1e-06
        %v5259 = vadd.f32 %v5179, 1e-06
        %v5260 = vadd.f32 %v5181, 1e-06
        %v5261 = vadd.f32 %v5183, 1e-06
        %v5262 = vadd.f32 %v5185, 1e-06
        %v5263 = vadd.f32 %v5187, 1e-06
        %v5264 = vadd.f32 %v5189, 1e-06
        %v5265 = vadd.f32 %v5191, 1e-06
        %v5266 = vadd.f32 %v5193, 1e-06
        %v5267 = vadd.f32 %v5195, 1e-06
        %v5268 = vadd.f32 %v5197, 1e-06
        %v5269 = vadd.f32 %v5199, 1e-06
        %v5270 = vadd.f32 %v5201, 1e-06
        %v5271 = vadd.f32 %v5203, 1e-06
        %v5272 = vadd.f32 %v5205, 1e-06
        %v5273 = vadd.f32 %v5207, 1e-06
        %v5274 = vadd.f32 %v5209, 1e-06
        %v5275 = vadd.f32 %v5211, 1e-06
        %v5276 = vrsqrt.pop %v5244
        %v5277 = vmul.f32 %v5276, %v5244
        %v5278 = vmul.f32 %v5277, %v5276
        %v5279 = vmul.f32 0.5, %v5278
        %v5280 = vsub.f32 1.5, %v5279
        %v5281 = vmul.f32 %v5276, %v5280
        %vm5282 = vweird.f32 %v5244
        %vm5283 = vweird.f32 %v5276
        %vm5284 = vmor %vm5282, %vm5283
        %v5285 = vsel %vm5284, %v5276, %v5281
        %v5286 = vrsqrt.pop %v5245
        %v5287 = vmul.f32 %v5286, %v5245
        %v5288 = vmul.f32 %v5287, %v5286
        %v5289 = vmul.f32 0.5, %v5288
        %v5290 = vsub.f32 1.5, %v5289
        %v5291 = vmul.f32 %v5286, %v5290
        %vm5292 = vweird.f32 %v5245
        %vm5293 = vweird.f32 %v5286
        %vm5294 = vmor %vm5292, %vm5293
        %v5295 = vsel %vm5294, %v5286, %v5291
        %v5296 = vrsqrt.pop %v5246
        %v5297 = vmul.f32 %v5296, %v5246
        %v5298 = vmul.f32 %v5297, %v5296
        %v5299 = vmul.f32 0.5, %v5298
        %v5300 = vsub.f32 1.5, %v5299
        %v5301 = vmul.f32 %v5296, %v5300
        %vm5302 = vweird.f32 %v5246
        %vm5303 = vweird.f32 %v5296
        %vm5304 = vmor %vm5302, %vm5303
        %v5305 = vsel %vm5304, %v5296, %v5301
        %v5306 = vrsqrt.pop %v5247
        %v5307 = vmul.f32 %v5306, %v5247
        %v5308 = vmul.f32 %v5307, %v5306
        %v5309 = vmul.f32 0.5, %v5308
        %v5310 = vsub.f32 1.5, %v5309
        %v5311 = vmul.f32 %v5306, %v5310
        %vm5312 = vweird.f32 %v5247
        %vm5313 = vweird.f32 %v5306
        %vm5314 = vmor %vm5312, %vm5313
        %v5315 = vsel %vm5314, %v5306, %v5311
        %v5316 = vrsqrt.pop %v5248
        %v5317 = vmul.f32 %v5316, %v5248
        %v5318 = vmul.f32 %v5317, %v5316
        %v5319 = vmul.f32 0.5, %v5318
        %v5320 = vsub.f32 1.5, %v5319
        %v5321 = vmul.f32 %v5316, %v5320
        %vm5322 = vweird.f32 %v5248
        %vm5323 = vweird.f32 %v5316
        %vm5324 = vmor %vm5322, %vm5323
        %v5325 = vsel %vm5324, %v5316, %v5321
        %v5326 = vrsqrt.pop %v5249
        %v5327 = vmul.f32 %v5326, %v5249
        %v5328 = vmul.f32 %v5327, %v5326
        %v5329 = vmul.f32 0.5, %v5328
        %v5330 = vsub.f32 1.5, %v5329
        %v5331 = vmul.f32 %v5326, %v5330
        %vm5332 = vweird.f32 %v5249
        %vm5333 = vweird.f32 %v5326
        %vm5334 = vmor %vm5332, %vm5333
        %v5335 = vsel %vm5334, %v5326, %v5331
        %v5336 = vrsqrt.pop %v5250
        %v5337 = vmul.f32 %v5336, %v5250
        %v5338 = vmul.f32 %v5337, %v5336
        %v5339 = vmul.f32 0.5, %v5338
        %v5340 = vsub.f32 1.5, %v5339
        %v5341 = vmul.f32 %v5336, %v5340
        %vm5342 = vweird.f32 %v5250
        %vm5343 = vweird.f32 %v5336
        %vm5344 = vmor %vm5342, %vm5343
        %v5345 = vsel %vm5344, %v5336, %v5341
        %v5346 = vrsqrt.pop %v5251
        %v5347 = vmul.f32 %v5346, %v5251
        %v5348 = vmul.f32 %v5347, %v5346
        %v5349 = vmul.f32 0.5, %v5348
        %v5350 = vsub.f32 1.5, %v5349
        %v5351 = vmul.f32 %v5346, %v5350
        %vm5352 = vweird.f32 %v5251
        %vm5353 = vweird.f32 %v5346
        %vm5354 = vmor %vm5352, %vm5353
        %v5355 = vsel %vm5354, %v5346, %v5351
        %v5356 = vrsqrt.pop %v5252
        %v5357 = vmul.f32 %v5356, %v5252
        %v5358 = vmul.f32 %v5357, %v5356
        %v5359 = vmul.f32 0.5, %v5358
        %v5360 = vsub.f32 1.5, %v5359
        %v5361 = vmul.f32 %v5356, %v5360
        %vm5362 = vweird.f32 %v5252
        %vm5363 = vweird.f32 %v5356
        %vm5364 = vmor %vm5362, %vm5363
        %v5365 = vsel %vm5364, %v5356, %v5361
        %v5366 = vrsqrt.pop %v5253
        %v5367 = vmul.f32 %v5366, %v5253
        %v5368 = vmul.f32 %v5367, %v5366
        %v5369 = vmul.f32 0.5, %v5368
        %v5370 = vsub.f32 1.5, %v5369
        %v5371 = vmul.f32 %v5366, %v5370
        %vm5372 = vweird.f32 %v5253
        %vm5373 = vweird.f32 %v5366
        %vm5374 = vmor %vm5372, %vm5373
        %v5375 = vsel %vm5374, %v5366, %v5371
        %v5376 = vrsqrt.pop %v5254
        %v5377 = vmul.f32 %v5376, %v5254
        %v5378 = vmul.f32 %v5377, %v5376
        %v5379 = vmul.f32 0.5, %v5378
        %v5380 = vsub.f32 1.5, %v5379
        %v5381 = vmul.f32 %v5376, %v5380
        %vm5382 = vweird.f32 %v5254
        %vm5383 = vweird.f32 %v5376
        %vm5384 = vmor %vm5382, %vm5383
        %v5385 = vsel %vm5384, %v5376, %v5381
        %v5386 = vrsqrt.pop %v5255
        %v5387 = vmul.f32 %v5386, %v5255
        %v5388 = vmul.f32 %v5387, %v5386
        %v5389 = vmul.f32 0.5, %v5388
        %v5390 = vsub.f32 1.5, %v5389
        %v5391 = vmul.f32 %v5386, %v5390
        %vm5392 = vweird.f32 %v5255
        %vm5393 = vweird.f32 %v5386
        %vm5394 = vmor %vm5392, %vm5393
        %v5395 = vsel %vm5394, %v5386, %v5391
        %v5396 = vrsqrt.pop %v5256
        %v5397 = vmul.f32 %v5396, %v5256
        %v5398 = vmul.f32 %v5397, %v5396
        %v5399 = vmul.f32 0.5, %v5398
        %v5400 = vsub.f32 1.5, %v5399
        %v5401 = vmul.f32 %v5396, %v5400
        %vm5402 = vweird.f32 %v5256
        %vm5403 = vweird.f32 %v5396
        %vm5404 = vmor %vm5402, %vm5403
        %v5405 = vsel %vm5404, %v5396, %v5401
        %v5406 = vrsqrt.pop %v5257
        %v5407 = vmul.f32 %v5406, %v5257
        %v5408 = vmul.f32 %v5407, %v5406
        %v5409 = vmul.f32 0.5, %v5408
        %v5410 = vsub.f32 1.5, %v5409
        %v5411 = vmul.f32 %v5406, %v5410
        %vm5412 = vweird.f32 %v5257
        %vm5413 = vweird.f32 %v5406
        %vm5414 = vmor %vm5412, %vm5413
        %v5415 = vsel %vm5414, %v5406, %v5411
        %v5416 = vrsqrt.pop %v5258
        %v5417 = vmul.f32 %v5416, %v5258
        %v5418 = vmul.f32 %v5417, %v5416
        %v5419 = vmul.f32 0.5, %v5418
        %v5420 = vsub.f32 1.5, %v5419
        %v5421 = vmul.f32 %v5416, %v5420
        %vm5422 = vweird.f32 %v5258
        %vm5423 = vweird.f32 %v5416
        %vm5424 = vmor %vm5422, %vm5423
        %v5425 = vsel %vm5424, %v5416, %v5421
        %v5426 = vrsqrt.pop %v5259
        %v5427 = vmul.f32 %v5426, %v5259
        %v5428 = vmul.f32 %v5427, %v5426
        %v5429 = vmul.f32 0.5, %v5428
        %v5430 = vsub.f32 1.5, %v5429
        %v5431 = vmul.f32 %v5426, %v5430
        %vm5432 = vweird.f32 %v5259
        %vm5433 = vweird.f32 %v5426
        %vm5434 = vmor %vm5432, %vm5433
        %v5435 = vsel %vm5434, %v5426, %v5431
        %v5436 = vrsqrt.pop %v5260
        %v5437 = vmul.f32 %v5436, %v5260
        %v5438 = vmul.f32 %v5437, %v5436
        %v5439 = vmul.f32 0.5, %v5438
        %v5440 = vsub.f32 1.5, %v5439
        %v5441 = vmul.f32 %v5436, %v5440
        %vm5442 = vweird.f32 %v5260
        %vm5443 = vweird.f32 %v5436
        %vm5444 = vmor %vm5442, %vm5443
        %v5445 = vsel %vm5444, %v5436, %v5441
        %v5446 = vrsqrt.pop %v5261
        %v5447 = vmul.f32 %v5446, %v5261
        %v5448 = vmul.f32 %v5447, %v5446
        %v5449 = vmul.f32 0.5, %v5448
        %v5450 = vsub.f32 1.5, %v5449
        %v5451 = vmul.f32 %v5446, %v5450
        %vm5452 = vweird.f32 %v5261
        %vm5453 = vweird.f32 %v5446
        %vm5454 = vmor %vm5452, %vm5453
        %v5455 = vsel %vm5454, %v5446, %v5451
        %v5456 = vrsqrt.pop %v5262
        %v5457 = vmul.f32 %v5456, %v5262
        %v5458 = vmul.f32 %v5457, %v5456
        %v5459 = vmul.f32 0.5, %v5458
        %v5460 = vsub.f32 1.5, %v5459
        %v5461 = vmul.f32 %v5456, %v5460
        %vm5462 = vweird.f32 %v5262
        %vm5463 = vweird.f32 %v5456
        %vm5464 = vmor %vm5462, %vm5463
        %v5465 = vsel %vm5464, %v5456, %v5461
        %v5466 = vrsqrt.pop %v5263
        %v5467 = vmul.f32 %v5466, %v5263
        %v5468 = vmul.f32 %v5467, %v5466
        %v5469 = vmul.f32 0.5, %v5468
        %v5470 = vsub.f32 1.5, %v5469
        %v5471 = vmul.f32 %v5466, %v5470
        %vm5472 = vweird.f32 %v5263
        %vm5473 = vweird.f32 %v5466
        %vm5474 = vmor %vm5472, %vm5473
        %v5475 = vsel %vm5474, %v5466, %v5471
        %v5476 = vrsqrt.pop %v5264
        %v5477 = vmul.f32 %v5476, %v5264
        %v5478 = vmul.f32 %v5477, %v5476
        %v5479 = vmul.f32 0.5, %v5478
        %v5480 = vsub.f32 1.5, %v5479
        %v5481 = vmul.f32 %v5476, %v5480
        %vm5482 = vweird.f32 %v5264
        %vm5483 = vweird.f32 %v5476
        %vm5484 = vmor %vm5482, %vm5483
        %v5485 = vsel %vm5484, %v5476, %v5481
        %v5486 = vrsqrt.pop %v5265
        %v5487 = vmul.f32 %v5486, %v5265
        %v5488 = vmul.f32 %v5487, %v5486
        %v5489 = vmul.f32 0.5, %v5488
        %v5490 = vsub.f32 1.5, %v5489
        %v5491 = vmul.f32 %v5486, %v5490
        %vm5492 = vweird.f32 %v5265
        %vm5493 = vweird.f32 %v5486
        %vm5494 = vmor %vm5492, %vm5493
        %v5495 = vsel %vm5494, %v5486, %v5491
        %v5496 = vrsqrt.pop %v5266
        %v5497 = vmul.f32 %v5496, %v5266
        %v5498 = vmul.f32 %v5497, %v5496
        %v5499 = vmul.f32 0.5, %v5498
        %v5500 = vsub.f32 1.5, %v5499
        %v5501 = vmul.f32 %v5496, %v5500
        %vm5502 = vweird.f32 %v5266
        %vm5503 = vweird.f32 %v5496
        %vm5504 = vmor %vm5502, %vm5503
        %v5505 = vsel %vm5504, %v5496, %v5501
        %v5506 = vrsqrt.pop %v5267
        %v5507 = vmul.f32 %v5506, %v5267
        %v5508 = vmul.f32 %v5507, %v5506
        %v5509 = vmul.f32 0.5, %v5508
        %v5510 = vsub.f32 1.5, %v5509
        %v5511 = vmul.f32 %v5506, %v5510
        %vm5512 = vweird.f32 %v5267
        %vm5513 = vweird.f32 %v5506
        %vm5514 = vmor %vm5512, %vm5513
        %v5515 = vsel %vm5514, %v5506, %v5511
        %v5516 = vrsqrt.pop %v5268
        %v5517 = vmul.f32 %v5516, %v5268
        %v5518 = vmul.f32 %v5517, %v5516
        %v5519 = vmul.f32 0.5, %v5518
        %v5520 = vsub.f32 1.5, %v5519
        %v5521 = vmul.f32 %v5516, %v5520
        %vm5522 = vweird.f32 %v5268
        %vm5523 = vweird.f32 %v5516
        %vm5524 = vmor %vm5522, %vm5523
        %v5525 = vsel %vm5524, %v5516, %v5521
        %v5526 = vrsqrt.pop %v5269
        %v5527 = vmul.f32 %v5526, %v5269
        %v5528 = vmul.f32 %v5527, %v5526
        %v5529 = vmul.f32 0.5, %v5528
        %v5530 = vsub.f32 1.5, %v5529
        %v5531 = vmul.f32 %v5526, %v5530
        %vm5532 = vweird.f32 %v5269
        %vm5533 = vweird.f32 %v5526
        %vm5534 = vmor %vm5532, %vm5533
        %v5535 = vsel %vm5534, %v5526, %v5531
        %v5536 = vrsqrt.pop %v5270
        %v5537 = vmul.f32 %v5536, %v5270
        %v5538 = vmul.f32 %v5537, %v5536
        %v5539 = vmul.f32 0.5, %v5538
        %v5540 = vsub.f32 1.5, %v5539
        %v5541 = vmul.f32 %v5536, %v5540
        %vm5542 = vweird.f32 %v5270
        %vm5543 = vweird.f32 %v5536
        %vm5544 = vmor %vm5542, %vm5543
        %v5545 = vsel %vm5544, %v5536, %v5541
        %v5546 = vrsqrt.pop %v5271
        %v5547 = vmul.f32 %v5546, %v5271
        %v5548 = vmul.f32 %v5547, %v5546
        %v5549 = vmul.f32 0.5, %v5548
        %v5550 = vsub.f32 1.5, %v5549
        %v5551 = vmul.f32 %v5546, %v5550
        %vm5552 = vweird.f32 %v5271
        %vm5553 = vweird.f32 %v5546
        %vm5554 = vmor %vm5552, %vm5553
        %v5555 = vsel %vm5554, %v5546, %v5551
        %v5556 = vrsqrt.pop %v5272
        %v5557 = vmul.f32 %v5556, %v5272
        %v5558 = vmul.f32 %v5557, %v5556
        %v5559 = vmul.f32 0.5, %v5558
        %v5560 = vsub.f32 1.5, %v5559
        %v5561 = vmul.f32 %v5556, %v5560
        %vm5562 = vweird.f32 %v5272
        %vm5563 = vweird.f32 %v5556
        %vm5564 = vmor %vm5562, %vm5563
        %v5565 = vsel %vm5564, %v5556, %v5561
        %v5566 = vrsqrt.pop %v5273
        %v5567 = vmul.f32 %v5566, %v5273
        %v5568 = vmul.f32 %v5567, %v5566
        %v5569 = vmul.f32 0.5, %v5568
        %v5570 = vsub.f32 1.5, %v5569
        %v5571 = vmul.f32 %v5566, %v5570
        %vm5572 = vweird.f32 %v5273
        %vm5573 = vweird.f32 %v5566
        %vm5574 = vmor %vm5572, %vm5573
        %v5575 = vsel %vm5574, %v5566, %v5571
        %v5576 = vrsqrt.pop %v5274
        %v5577 = vmul.f32 %v5576, %v5274
        %v5578 = vmul.f32 %v5577, %v5576
        %v5579 = vmul.f32 0.5, %v5578
        %v5580 = vsub.f32 1.5, %v5579
        %v5581 = vmul.f32 %v5576, %v5580
        %vm5582 = vweird.f32 %v5274
        %vm5583 = vweird.f32 %v5576
        %vm5584 = vmor %vm5582, %vm5583
        %v5585 = vsel %vm5584, %v5576, %v5581
        %v5586 = vrsqrt.pop %v5275
        %v5587 = vmul.f32 %v5586, %v5275
        %v5588 = vmul.f32 %v5587, %v5586
        %v5589 = vmul.f32 0.5, %v5588
        %v5590 = vsub.f32 1.5, %v5589
        %v5591 = vmul.f32 %v5586, %v5590
        %vm5592 = vweird.f32 %v5275
        %vm5593 = vweird.f32 %v5586
        %vm5594 = vmor %vm5592, %vm5593
        %v5595 = vsel %vm5594, %v5586, %v5591
        %v5596 = vmul.f32 %v5212, %v5285
        %v5597 = vmul.f32 %v5213, %v5295
        %v5598 = vmul.f32 %v5214, %v5305
        %v5599 = vmul.f32 %v5215, %v5315
        %v5600 = vmul.f32 %v5216, %v5325
        %v5601 = vmul.f32 %v5217, %v5335
        %v5602 = vmul.f32 %v5218, %v5345
        %v5603 = vmul.f32 %v5219, %v5355
        %v5604 = vmul.f32 %v5220, %v5365
        %v5605 = vmul.f32 %v5221, %v5375
        %v5606 = vmul.f32 %v5222, %v5385
        %v5607 = vmul.f32 %v5223, %v5395
        %v5608 = vmul.f32 %v5224, %v5405
        %v5609 = vmul.f32 %v5225, %v5415
        %v5610 = vmul.f32 %v5226, %v5425
        %v5611 = vmul.f32 %v5227, %v5435
        %v5612 = vmul.f32 %v5228, %v5445
        %v5613 = vmul.f32 %v5229, %v5455
        %v5614 = vmul.f32 %v5230, %v5465
        %v5615 = vmul.f32 %v5231, %v5475
        %v5616 = vmul.f32 %v5232, %v5485
        %v5617 = vmul.f32 %v5233, %v5495
        %v5618 = vmul.f32 %v5234, %v5505
        %v5619 = vmul.f32 %v5235, %v5515
        %v5620 = vmul.f32 %v5236, %v5525
        %v5621 = vmul.f32 %v5237, %v5535
        %v5622 = vmul.f32 %v5238, %v5545
        %v5623 = vmul.f32 %v5239, %v5555
        %v5624 = vmul.f32 %v5240, %v5565
        %v5625 = vmul.f32 %v5241, %v5575
        %v5626 = vmul.f32 %v5242, %v5585
        %v5627 = vmul.f32 %v5243, %v5595
        %v5628 = vpack.c.bf16 %v5597, %v5596
        %v5629 = vpack.c.bf16 %v5599, %v5598
        %v5630 = vpack.c.bf16 %v5601, %v5600
        %v5631 = vpack.c.bf16 %v5603, %v5602
        %v5632 = vpack.c.bf16 %v5605, %v5604
        %v5633 = vpack.c.bf16 %v5607, %v5606
        %v5634 = vpack.c.bf16 %v5609, %v5608
        %v5635 = vpack.c.bf16 %v5611, %v5610
        %v5636 = vpack.c.bf16 %v5613, %v5612
        %v5637 = vpack.c.bf16 %v5615, %v5614
        %v5638 = vpack.c.bf16 %v5617, %v5616
        %v5639 = vpack.c.bf16 %v5619, %v5618
        %v5640 = vpack.c.bf16 %v5621, %v5620
        %v5641 = vpack.c.bf16 %v5623, %v5622
        %v5642 = vpack.c.bf16 %v5625, %v5624
        %v5643 = vpack.c.bf16 %v5627, %v5626
        %v5645 = vperm.slane %v311, 0
        %v5646 = vperm.slane %v311, 1
        %v5665 = vunpack.c.l.b16 %v344
        %v5666 = vunpack.c.h.b16 %v344
        %v5667 = vunpack.c.l.b16 %v345
        %v5668 = vunpack.c.h.b16 %v345
        %v5669 = vunpack.c.l.b16 %v346
        %v5670 = vunpack.c.h.b16 %v346
        %v5671 = vunpack.c.l.b16 %v347
        %v5672 = vunpack.c.h.b16 %v347
        %v5673 = vunpack.c.l.b16 %v348
        %v5674 = vunpack.c.h.b16 %v348
        %v5675 = vunpack.c.l.b16 %v349
        %v5676 = vunpack.c.h.b16 %v349
        %v5677 = vunpack.c.l.b16 %v350
        %v5678 = vunpack.c.h.b16 %v350
        %v5679 = vunpack.c.l.b16 %v351
        %v5680 = vunpack.c.h.b16 %v351
        %v5681 = vunpack.c.l.b16 %v352
        %v5682 = vunpack.c.h.b16 %v352
        %v5683 = vunpack.c.l.b16 %v353
        %v5684 = vunpack.c.h.b16 %v353
        %v5685 = vunpack.c.l.b16 %v354
        %v5686 = vunpack.c.h.b16 %v354
        %v5687 = vunpack.c.l.b16 %v355
        %v5688 = vunpack.c.h.b16 %v355
        %v5689 = vunpack.c.l.b16 %v356
        %v5690 = vunpack.c.h.b16 %v356
        %v5691 = vunpack.c.l.b16 %v357
        %v5692 = vunpack.c.h.b16 %v357
        %v5693 = vunpack.c.l.b16 %v358
        %v5694 = vunpack.c.h.b16 %v358
        %v5695 = vunpack.c.l.b16 %v359
        %v5696 = vunpack.c.h.b16 %v359
        %v5697 = vpack.c.b16 %v5667, %v5665
        %v5698 = vpack.c.b16 %v5668, %v5666
        %v5699 = vpack.c.b16 %v5671, %v5669
        %v5700 = vpack.c.b16 %v5672, %v5670
        %v5701 = vpack.c.b16 %v5675, %v5673
        %v5702 = vpack.c.b16 %v5676, %v5674
        %v5703 = vpack.c.b16 %v5679, %v5677
        %v5704 = vpack.c.b16 %v5680, %v5678
        %v5705 = vpack.c.b16 %v5683, %v5681
        %v5706 = vpack.c.b16 %v5684, %v5682
        %v5707 = vpack.c.b16 %v5687, %v5685
        %v5708 = vpack.c.b16 %v5688, %v5686
        %v5709 = vpack.c.b16 %v5691, %v5689
        %v5710 = vpack.c.b16 %v5692, %v5690
        %v5711 = vpack.c.b16 %v5695, %v5693
        %v5712 = vpack.c.b16 %v5696, %v5694
        %5729 = vmatpush.bf16.msra.mxu0 %v5711
        %5730 = vmatpush.bf16.msra.mxu0 %v5709
        %5731 = vmatpush.bf16.msra.mxu0 %v5707
        %5732 = vmatpush.bf16.msra.mxu0 %v5705
        %5733 = vmatpush.bf16.msra.mxu0 %v5703
        %5734 = vmatpush.bf16.msra.mxu0 %v5701
        %5735 = vmatpush.bf16.msra.mxu0 %v5699
        %5736 = vmatpush.bf16.msra.mxu0 %v5697
        %5737 = vmatmul.bf16.gmra.mxu0 %v5628
        %v5738 = vpop.f32.mrf.mxu0
        %v5739 = vadd.f32 %v5645, %v5738
        %v5740 = vpop.f32.mrf.mxu0
        %v5741 = vadd.f32 %v5645, %v5740
        %5742 = vmatmul.bf16.gmra.mxu0 %v5629
        %v5743 = vpop.f32.mrf.mxu0
        %v5744 = vadd.f32 %v5645, %v5743
        %v5745 = vpop.f32.mrf.mxu0
        %v5746 = vadd.f32 %v5645, %v5745
        %5747 = vmatmul.bf16.gmra.mxu0 %v5630
        %v5748 = vpop.f32.mrf.mxu0
        %v5749 = vadd.f32 %v5645, %v5748
        %v5750 = vpop.f32.mrf.mxu0
        %v5751 = vadd.f32 %v5645, %v5750
        %5752 = vmatmul.bf16.gmra.mxu0 %v5631
        %v5753 = vpop.f32.mrf.mxu0
        %v5754 = vadd.f32 %v5645, %v5753
        %v5755 = vpop.f32.mrf.mxu0
        %v5756 = vadd.f32 %v5645, %v5755
        %5757 = vmatmul.bf16.gmra.mxu0 %v5632
        %v5758 = vpop.f32.mrf.mxu0
        %v5759 = vadd.f32 %v5645, %v5758
        %v5760 = vpop.f32.mrf.mxu0
        %v5761 = vadd.f32 %v5645, %v5760
        %5762 = vmatmul.bf16.gmra.mxu0 %v5633
        %v5763 = vpop.f32.mrf.mxu0
        %v5764 = vadd.f32 %v5645, %v5763
        %v5765 = vpop.f32.mrf.mxu0
        %v5766 = vadd.f32 %v5645, %v5765
        %5767 = vmatmul.bf16.gmra.mxu0 %v5634
        %v5768 = vpop.f32.mrf.mxu0
        %v5769 = vadd.f32 %v5645, %v5768
        %v5770 = vpop.f32.mrf.mxu0
        %v5771 = vadd.f32 %v5645, %v5770
        %5772 = vmatmul.bf16.gmra.mxu0 %v5635
        %v5773 = vpop.f32.mrf.mxu0
        %v5774 = vadd.f32 %v5645, %v5773
        %v5775 = vpop.f32.mrf.mxu0
        %v5776 = vadd.f32 %v5645, %v5775
        %5777 = vmatmul.bf16.gmra.mxu0 %v5636
        %v5778 = vpop.f32.mrf.mxu0
        %v5779 = vadd.f32 %v5645, %v5778
        %v5780 = vpop.f32.mrf.mxu0
        %v5781 = vadd.f32 %v5645, %v5780
        %5782 = vmatmul.bf16.gmra.mxu0 %v5637
        %v5783 = vpop.f32.mrf.mxu0
        %v5784 = vadd.f32 %v5645, %v5783
        %v5785 = vpop.f32.mrf.mxu0
        %v5786 = vadd.f32 %v5645, %v5785
        %5787 = vmatmul.bf16.gmra.mxu0 %v5638
        %v5788 = vpop.f32.mrf.mxu0
        %v5789 = vadd.f32 %v5645, %v5788
        %v5790 = vpop.f32.mrf.mxu0
        %v5791 = vadd.f32 %v5645, %v5790
        %5792 = vmatmul.bf16.gmra.mxu0 %v5639
        %v5793 = vpop.f32.mrf.mxu0
        %v5794 = vadd.f32 %v5645, %v5793
        %v5795 = vpop.f32.mrf.mxu0
        %v5796 = vadd.f32 %v5645, %v5795
        %5797 = vmatmul.bf16.gmra.mxu0 %v5640
        %v5798 = vpop.f32.mrf.mxu0
        %v5799 = vadd.f32 %v5645, %v5798
        %v5800 = vpop.f32.mrf.mxu0
        %v5801 = vadd.f32 %v5645, %v5800
        %5802 = vmatmul.bf16.gmra.mxu0 %v5641
        %v5803 = vpop.f32.mrf.mxu0
        %v5804 = vadd.f32 %v5645, %v5803
        %v5805 = vpop.f32.mrf.mxu0
        %v5806 = vadd.f32 %v5645, %v5805
        %5807 = vmatmul.bf16.gmra.mxu0 %v5642
        %v5808 = vpop.f32.mrf.mxu0
        %v5809 = vadd.f32 %v5645, %v5808
        %v5810 = vpop.f32.mrf.mxu0
        %v5811 = vadd.f32 %v5645, %v5810
        %5812 = vmatmul.bf16.gmra.mxu0 %v5643
        %v5813 = vpop.f32.mrf.mxu0
        %v5814 = vadd.f32 %v5645, %v5813
        %v5815 = vpop.f32.mrf.mxu0
        %v5816 = vadd.f32 %v5645, %v5815
        %5817 = vdwg.mxu0
        %5818 = vmatpush.bf16.msra.mxu0 %v5712
        %5819 = vmatpush.bf16.msra.mxu0 %v5710
        %5820 = vmatpush.bf16.msra.mxu0 %v5708
        %5821 = vmatpush.bf16.msra.mxu0 %v5706
        %5822 = vmatpush.bf16.msra.mxu0 %v5704
        %5823 = vmatpush.bf16.msra.mxu0 %v5702
        %5824 = vmatpush.bf16.msra.mxu0 %v5700
        %5825 = vmatpush.bf16.msra.mxu0 %v5698
        %5826 = vmatmul.bf16.gmra.mxu0 %v5628
        %v5827 = vpop.f32.mrf.mxu0
        %v5828 = vadd.f32 %v5646, %v5827
        %v5829 = vpop.f32.mrf.mxu0
        %v5830 = vadd.f32 %v5646, %v5829
        %5831 = vmatmul.bf16.gmra.mxu0 %v5629
        %v5832 = vpop.f32.mrf.mxu0
        %v5833 = vadd.f32 %v5646, %v5832
        %v5834 = vpop.f32.mrf.mxu0
        %v5835 = vadd.f32 %v5646, %v5834
        %5836 = vmatmul.bf16.gmra.mxu0 %v5630
        %v5837 = vpop.f32.mrf.mxu0
        %v5838 = vadd.f32 %v5646, %v5837
        %v5839 = vpop.f32.mrf.mxu0
        %v5840 = vadd.f32 %v5646, %v5839
        %5841 = vmatmul.bf16.gmra.mxu0 %v5631
        %v5842 = vpop.f32.mrf.mxu0
        %v5843 = vadd.f32 %v5646, %v5842
        %v5844 = vpop.f32.mrf.mxu0
        %v5845 = vadd.f32 %v5646, %v5844
        %5846 = vmatmul.bf16.gmra.mxu0 %v5632
        %v5847 = vpop.f32.mrf.mxu0
        %v5848 = vadd.f32 %v5646, %v5847
        %v5849 = vpop.f32.mrf.mxu0
        %v5850 = vadd.f32 %v5646, %v5849
        %5851 = vmatmul.bf16.gmra.mxu0 %v5633
        %v5852 = vpop.f32.mrf.mxu0
        %v5853 = vadd.f32 %v5646, %v5852
        %v5854 = vpop.f32.mrf.mxu0
        %v5855 = vadd.f32 %v5646, %v5854
        %5856 = vmatmul.bf16.gmra.mxu0 %v5634
        %v5857 = vpop.f32.mrf.mxu0
        %v5858 = vadd.f32 %v5646, %v5857
        %v5859 = vpop.f32.mrf.mxu0
        %v5860 = vadd.f32 %v5646, %v5859
        %5861 = vmatmul.bf16.gmra.mxu0 %v5635
        %v5862 = vpop.f32.mrf.mxu0
        %v5863 = vadd.f32 %v5646, %v5862
        %v5864 = vpop.f32.mrf.mxu0
        %v5865 = vadd.f32 %v5646, %v5864
        %5866 = vmatmul.bf16.gmra.mxu0 %v5636
        %v5867 = vpop.f32.mrf.mxu0
        %v5868 = vadd.f32 %v5646, %v5867
        %v5869 = vpop.f32.mrf.mxu0
        %v5870 = vadd.f32 %v5646, %v5869
        %5871 = vmatmul.bf16.gmra.mxu0 %v5637
        %v5872 = vpop.f32.mrf.mxu0
        %v5873 = vadd.f32 %v5646, %v5872
        %v5874 = vpop.f32.mrf.mxu0
        %v5875 = vadd.f32 %v5646, %v5874
        %5876 = vmatmul.bf16.gmra.mxu0 %v5638
        %v5877 = vpop.f32.mrf.mxu0
        %v5878 = vadd.f32 %v5646, %v5877
        %v5879 = vpop.f32.mrf.mxu0
        %v5880 = vadd.f32 %v5646, %v5879
        %5881 = vmatmul.bf16.gmra.mxu0 %v5639
        %v5882 = vpop.f32.mrf.mxu0
        %v5883 = vadd.f32 %v5646, %v5882
        %v5884 = vpop.f32.mrf.mxu0
        %v5885 = vadd.f32 %v5646, %v5884
        %5886 = vmatmul.bf16.gmra.mxu0 %v5640
        %v5887 = vpop.f32.mrf.mxu0
        %v5888 = vadd.f32 %v5646, %v5887
        %v5889 = vpop.f32.mrf.mxu0
        %v5890 = vadd.f32 %v5646, %v5889
        %5891 = vmatmul.bf16.gmra.mxu0 %v5641
        %v5892 = vpop.f32.mrf.mxu0
        %v5893 = vadd.f32 %v5646, %v5892
        %v5894 = vpop.f32.mrf.mxu0
        %v5895 = vadd.f32 %v5646, %v5894
        %5896 = vmatmul.bf16.gmra.mxu0 %v5642
        %v5897 = vpop.f32.mrf.mxu0
        %v5898 = vadd.f32 %v5646, %v5897
        %v5899 = vpop.f32.mrf.mxu0
        %v5900 = vadd.f32 %v5646, %v5899
        %5901 = vmatmul.bf16.gmra.mxu0 %v5643
        %v5902 = vpop.f32.mrf.mxu0
        %v5903 = vadd.f32 %v5646, %v5902
        %v5904 = vpop.f32.mrf.mxu0
        %v5905 = vadd.f32 %v5646, %v5904
        %5906 = vdwg.mxu0
        %v5907 = vmul.f32 %v5739, %v5739
        %v5908 = vmul.f32 %v5828, %v5828
        %v5909 = vmul.f32 %v5741, %v5741
        %v5910 = vmul.f32 %v5830, %v5830
        %v5911 = vmul.f32 %v5744, %v5744
        %v5912 = vmul.f32 %v5833, %v5833
        %v5913 = vmul.f32 %v5746, %v5746
        %v5914 = vmul.f32 %v5835, %v5835
        %v5915 = vmul.f32 %v5749, %v5749
        %v5916 = vmul.f32 %v5838, %v5838
        %v5917 = vmul.f32 %v5751, %v5751
        %v5918 = vmul.f32 %v5840, %v5840
        %v5919 = vmul.f32 %v5754, %v5754
        %v5920 = vmul.f32 %v5843, %v5843
        %v5921 = vmul.f32 %v5756, %v5756
        %v5922 = vmul.f32 %v5845, %v5845
        %v5923 = vmul.f32 %v5759, %v5759
        %v5924 = vmul.f32 %v5848, %v5848
        %v5925 = vmul.f32 %v5761, %v5761
        %v5926 = vmul.f32 %v5850, %v5850
        %v5927 = vmul.f32 %v5764, %v5764
        %v5928 = vmul.f32 %v5853, %v5853
        %v5929 = vmul.f32 %v5766, %v5766
        %v5930 = vmul.f32 %v5855, %v5855
        %v5931 = vmul.f32 %v5769, %v5769
        %v5932 = vmul.f32 %v5858, %v5858
        %v5933 = vmul.f32 %v5771, %v5771
        %v5934 = vmul.f32 %v5860, %v5860
        %v5935 = vmul.f32 %v5774, %v5774
        %v5936 = vmul.f32 %v5863, %v5863
        %v5937 = vmul.f32 %v5776, %v5776
        %v5938 = vmul.f32 %v5865, %v5865
        %v5939 = vmul.f32 %v5779, %v5779
        %v5940 = vmul.f32 %v5868, %v5868
        %v5941 = vmul.f32 %v5781, %v5781
        %v5942 = vmul.f32 %v5870, %v5870
        %v5943 = vmul.f32 %v5784, %v5784
        %v5944 = vmul.f32 %v5873, %v5873
        %v5945 = vmul.f32 %v5786, %v5786
        %v5946 = vmul.f32 %v5875, %v5875
        %v5947 = vmul.f32 %v5789, %v5789
        %v5948 = vmul.f32 %v5878, %v5878
        %v5949 = vmul.f32 %v5791, %v5791
        %v5950 = vmul.f32 %v5880, %v5880
        %v5951 = vmul.f32 %v5794, %v5794
        %v5952 = vmul.f32 %v5883, %v5883
        %v5953 = vmul.f32 %v5796, %v5796
        %v5954 = vmul.f32 %v5885, %v5885
        %v5955 = vmul.f32 %v5799, %v5799
        %v5956 = vmul.f32 %v5888, %v5888
        %v5957 = vmul.f32 %v5801, %v5801
        %v5958 = vmul.f32 %v5890, %v5890
        %v5959 = vmul.f32 %v5804, %v5804
        %v5960 = vmul.f32 %v5893, %v5893
        %v5961 = vmul.f32 %v5806, %v5806
        %v5962 = vmul.f32 %v5895, %v5895
        %v5963 = vmul.f32 %v5809, %v5809
        %v5964 = vmul.f32 %v5898, %v5898
        %v5965 = vmul.f32 %v5811, %v5811
        %v5966 = vmul.f32 %v5900, %v5900
        %v5967 = vmul.f32 %v5814, %v5814
        %v5968 = vmul.f32 %v5903, %v5903
        %v5969 = vmul.f32 %v5816, %v5816
        %v5970 = vmul.f32 %v5905, %v5905
        %v5971 = vmul.f32 %v5739, %v5907
        %v5972 = vmul.f32 %v5828, %v5908
        %v5973 = vmul.f32 %v5741, %v5909
        %v5974 = vmul.f32 %v5830, %v5910
        %v5975 = vmul.f32 %v5744, %v5911
        %v5976 = vmul.f32 %v5833, %v5912
        %v5977 = vmul.f32 %v5746, %v5913
        %v5978 = vmul.f32 %v5835, %v5914
        %v5979 = vmul.f32 %v5749, %v5915
        %v5980 = vmul.f32 %v5838, %v5916
        %v5981 = vmul.f32 %v5751, %v5917
        %v5982 = vmul.f32 %v5840, %v5918
        %v5983 = vmul.f32 %v5754, %v5919
        %v5984 = vmul.f32 %v5843, %v5920
        %v5985 = vmul.f32 %v5756, %v5921
        %v5986 = vmul.f32 %v5845, %v5922
        %v5987 = vmul.f32 %v5759, %v5923
        %v5988 = vmul.f32 %v5848, %v5924
        %v5989 = vmul.f32 %v5761, %v5925
        %v5990 = vmul.f32 %v5850, %v5926
        %v5991 = vmul.f32 %v5764, %v5927
        %v5992 = vmul.f32 %v5853, %v5928
        %v5993 = vmul.f32 %v5766, %v5929
        %v5994 = vmul.f32 %v5855, %v5930
        %v5995 = vmul.f32 %v5769, %v5931
        %v5996 = vmul.f32 %v5858, %v5932
        %v5997 = vmul.f32 %v5771, %v5933
        %v5998 = vmul.f32 %v5860, %v5934
        %v5999 = vmul.f32 %v5774, %v5935
        %v6000 = vmul.f32 %v5863, %v5936
        %v6001 = vmul.f32 %v5776, %v5937
        %v6002 = vmul.f32 %v5865, %v5938
        %v6003 = vmul.f32 %v5779, %v5939
        %v6004 = vmul.f32 %v5868, %v5940
        %v6005 = vmul.f32 %v5781, %v5941
        %v6006 = vmul.f32 %v5870, %v5942
        %v6007 = vmul.f32 %v5784, %v5943
        %v6008 = vmul.f32 %v5873, %v5944
        %v6009 = vmul.f32 %v5786, %v5945
        %v6010 = vmul.f32 %v5875, %v5946
        %v6011 = vmul.f32 %v5789, %v5947
        %v6012 = vmul.f32 %v5878, %v5948
        %v6013 = vmul.f32 %v5791, %v5949
        %v6014 = vmul.f32 %v5880, %v5950
        %v6015 = vmul.f32 %v5794, %v5951
        %v6016 = vmul.f32 %v5883, %v5952
        %v6017 = vmul.f32 %v5796, %v5953
        %v6018 = vmul.f32 %v5885, %v5954
        %v6019 = vmul.f32 %v5799, %v5955
        %v6020 = vmul.f32 %v5888, %v5956
        %v6021 = vmul.f32 %v5801, %v5957
        %v6022 = vmul.f32 %v5890, %v5958
        %v6023 = vmul.f32 %v5804, %v5959
        %v6024 = vmul.f32 %v5893, %v5960
        %v6025 = vmul.f32 %v5806, %v5961
        %v6026 = vmul.f32 %v5895, %v5962
        %v6027 = vmul.f32 %v5809, %v5963
        %v6028 = vmul.f32 %v5898, %v5964
        %v6029 = vmul.f32 %v5811, %v5965
        %v6030 = vmul.f32 %v5900, %v5966
        %v6031 = vmul.f32 %v5814, %v5967
        %v6032 = vmul.f32 %v5903, %v5968
        %v6033 = vmul.f32 %v5816, %v5969
        %v6034 = vmul.f32 %v5905, %v5970
        %v6035 = vmul.f32 %v5971, 0.044715
        %v6036 = vmul.f32 %v5972, 0.044715
        %v6037 = vmul.f32 %v5973, 0.044715
        %v6038 = vmul.f32 %v5974, 0.044715
        %v6039 = vmul.f32 %v5975, 0.044715
        %v6040 = vmul.f32 %v5976, 0.044715
        %v6041 = vmul.f32 %v5977, 0.044715
        %v6042 = vmul.f32 %v5978, 0.044715
        %v6043 = vmul.f32 %v5979, 0.044715
        %v6044 = vmul.f32 %v5980, 0.044715
        %v6045 = vmul.f32 %v5981, 0.044715
        %v6046 = vmul.f32 %v5982, 0.044715
        %v6047 = vmul.f32 %v5983, 0.044715
        %v6048 = vmul.f32 %v5984, 0.044715
        %v6049 = vmul.f32 %v5985, 0.044715
        %v6050 = vmul.f32 %v5986, 0.044715
        %v6051 = vmul.f32 %v5987, 0.044715
        %v6052 = vmul.f32 %v5988, 0.044715
        %v6053 = vmul.f32 %v5989, 0.044715
        %v6054 = vmul.f32 %v5990, 0.044715
        %v6055 = vmul.f32 %v5991, 0.044715
        %v6056 = vmul.f32 %v5992, 0.044715
        %v6057 = vmul.f32 %v5993, 0.044715
        %v6058 = vmul.f32 %v5994, 0.044715
        %v6059 = vmul.f32 %v5995, 0.044715
        %v6060 = vmul.f32 %v5996, 0.044715
        %v6061 = vmul.f32 %v5997, 0.044715
        %v6062 = vmul.f32 %v5998, 0.044715
        %v6063 = vmul.f32 %v5999, 0.044715
        %v6064 = vmul.f32 %v6000, 0.044715
        %v6065 = vmul.f32 %v6001, 0.044715
        %v6066 = vmul.f32 %v6002, 0.044715
        %v6067 = vmul.f32 %v6003, 0.044715
        %v6068 = vmul.f32 %v6004, 0.044715
        %v6069 = vmul.f32 %v6005, 0.044715
        %v6070 = vmul.f32 %v6006, 0.044715
        %v6071 = vmul.f32 %v6007, 0.044715
        %v6072 = vmul.f32 %v6008, 0.044715
        %v6073 = vmul.f32 %v6009, 0.044715
        %v6074 = vmul.f32 %v6010, 0.044715
        %v6075 = vmul.f32 %v6011, 0.044715
        %v6076 = vmul.f32 %v6012, 0.044715
        %v6077 = vmul.f32 %v6013, 0.044715
        %v6078 = vmul.f32 %v6014, 0.044715
        %v6079 = vmul.f32 %v6015, 0.044715
        %v6080 = vmul.f32 %v6016, 0.044715
        %v6081 = vmul.f32 %v6017, 0.044715
        %v6082 = vmul.f32 %v6018, 0.044715
        %v6083 = vmul.f32 %v6019, 0.044715
        %v6084 = vmul.f32 %v6020, 0.044715
        %v6085 = vmul.f32 %v6021, 0.044715
        %v6086 = vmul.f32 %v6022, 0.044715
        %v6087 = vmul.f32 %v6023, 0.044715
        %v6088 = vmul.f32 %v6024, 0.044715
        %v6089 = vmul.f32 %v6025, 0.044715
        %v6090 = vmul.f32 %v6026, 0.044715
        %v6091 = vmul.f32 %v6027, 0.044715
        %v6092 = vmul.f32 %v6028, 0.044715
        %v6093 = vmul.f32 %v6029, 0.044715
        %v6094 = vmul.f32 %v6030, 0.044715
        %v6095 = vmul.f32 %v6031, 0.044715
        %v6096 = vmul.f32 %v6032, 0.044715
        %v6097 = vmul.f32 %v6033, 0.044715
        %v6098 = vmul.f32 %v6034, 0.044715
        %v6099 = vadd.f32 %v5739, %v6035
        %v6100 = vadd.f32 %v5828, %v6036
        %v6101 = vadd.f32 %v5741, %v6037
        %v6102 = vadd.f32 %v5830, %v6038
        %v6103 = vadd.f32 %v5744, %v6039
        %v6104 = vadd.f32 %v5833, %v6040
        %v6105 = vadd.f32 %v5746, %v6041
        %v6106 = vadd.f32 %v5835, %v6042
        %v6107 = vadd.f32 %v5749, %v6043
        %v6108 = vadd.f32 %v5838, %v6044
        %v6109 = vadd.f32 %v5751, %v6045
        %v6110 = vadd.f32 %v5840, %v6046
        %v6111 = vadd.f32 %v5754, %v6047
        %v6112 = vadd.f32 %v5843, %v6048
        %v6113 = vadd.f32 %v5756, %v6049
        %v6114 = vadd.f32 %v5845, %v6050
        %v6115 = vadd.f32 %v5759, %v6051
        %v6116 = vadd.f32 %v5848, %v6052
        %v6117 = vadd.f32 %v5761, %v6053
        %v6118 = vadd.f32 %v5850, %v6054
        %v6119 = vadd.f32 %v5764, %v6055
        %v6120 = vadd.f32 %v5853, %v6056
        %v6121 = vadd.f32 %v5766, %v6057
        %v6122 = vadd.f32 %v5855, %v6058
        %v6123 = vadd.f32 %v5769, %v6059
        %v6124 = vadd.f32 %v5858, %v6060
        %v6125 = vadd.f32 %v5771, %v6061
        %v6126 = vadd.f32 %v5860, %v6062
        %v6127 = vadd.f32 %v5774, %v6063
        %v6128 = vadd.f32 %v5863, %v6064
        %v6129 = vadd.f32 %v5776, %v6065
        %v6130 = vadd.f32 %v5865, %v6066
        %v6131 = vadd.f32 %v5779, %v6067
        %v6132 = vadd.f32 %v5868, %v6068
        %v6133 = vadd.f32 %v5781, %v6069
        %v6134 = vadd.f32 %v5870, %v6070
        %v6135 = vadd.f32 %v5784, %v6071
        %v6136 = vadd.f32 %v5873, %v6072
        %v6137 = vadd.f32 %v5786, %v6073
        %v6138 = vadd.f32 %v5875, %v6074
        %v6139 = vadd.f32 %v5789, %v6075
        %v6140 = vadd.f32 %v5878, %v6076
        %v6141 = vadd.f32 %v5791, %v6077
        %v6142 = vadd.f32 %v5880, %v6078
        %v6143 = vadd.f32 %v5794, %v6079
        %v6144 = vadd.f32 %v5883, %v6080
        %v6145 = vadd.f32 %v5796, %v6081
        %v6146 = vadd.f32 %v5885, %v6082
        %v6147 = vadd.f32 %v5799, %v6083
        %v6148 = vadd.f32 %v5888, %v6084
        %v6149 = vadd.f32 %v5801, %v6085
        %v6150 = vadd.f32 %v5890, %v6086
        %v6151 = vadd.f32 %v5804, %v6087
        %v6152 = vadd.f32 %v5893, %v6088
        %v6153 = vadd.f32 %v5806, %v6089
        %v6154 = vadd.f32 %v5895, %v6090
        %v6155 = vadd.f32 %v5809, %v6091
        %v6156 = vadd.f32 %v5898, %v6092
        %v6157 = vadd.f32 %v5811, %v6093
        %v6158 = vadd.f32 %v5900, %v6094
        %v6159 = vadd.f32 %v5814, %v6095
        %v6160 = vadd.f32 %v5903, %v6096
        %v6161 = vadd.f32 %v5816, %v6097
        %v6162 = vadd.f32 %v5905, %v6098
        %v6163 = vmul.f32 %v6099, 0.7978846
        %v6164 = vmul.f32 %v6100, 0.7978846
        %v6165 = vmul.f32 %v6101, 0.7978846
        %v6166 = vmul.f32 %v6102, 0.7978846
        %v6167 = vmul.f32 %v6103, 0.7978846
        %v6168 = vmul.f32 %v6104, 0.7978846
        %v6169 = vmul.f32 %v6105, 0.7978846
        %v6170 = vmul.f32 %v6106, 0.7978846
        %v6171 = vmul.f32 %v6107, 0.7978846
        %v6172 = vmul.f32 %v6108, 0.7978846
        %v6173 = vmul.f32 %v6109, 0.7978846
        %v6174 = vmul.f32 %v6110, 0.7978846
        %v6175 = vmul.f32 %v6111, 0.7978846
        %v6176 = vmul.f32 %v6112, 0.7978846
        %v6177 = vmul.f32 %v6113, 0.7978846
        %v6178 = vmul.f32 %v6114, 0.7978846
        %v6179 = vmul.f32 %v6115, 0.7978846
        %v6180 = vmul.f32 %v6116, 0.7978846
        %v6181 = vmul.f32 %v6117, 0.7978846
        %v6182 = vmul.f32 %v6118, 0.7978846
        %v6183 = vmul.f32 %v6119, 0.7978846
        %v6184 = vmul.f32 %v6120, 0.7978846
        %v6185 = vmul.f32 %v6121, 0.7978846
        %v6186 = vmul.f32 %v6122, 0.7978846
        %v6187 = vmul.f32 %v6123, 0.7978846
        %v6188 = vmul.f32 %v6124, 0.7978846
        %v6189 = vmul.f32 %v6125, 0.7978846
        %v6190 = vmul.f32 %v6126, 0.7978846
        %v6191 = vmul.f32 %v6127, 0.7978846
        %v6192 = vmul.f32 %v6128, 0.7978846
        %v6193 = vmul.f32 %v6129, 0.7978846
        %v6194 = vmul.f32 %v6130, 0.7978846
        %v6195 = vmul.f32 %v6131, 0.7978846
        %v6196 = vmul.f32 %v6132, 0.7978846
        %v6197 = vmul.f32 %v6133, 0.7978846
        %v6198 = vmul.f32 %v6134, 0.7978846
        %v6199 = vmul.f32 %v6135, 0.7978846
        %v6200 = vmul.f32 %v6136, 0.7978846
        %v6201 = vmul.f32 %v6137, 0.7978846
        %v6202 = vmul.f32 %v6138, 0.7978846
        %v6203 = vmul.f32 %v6139, 0.7978846
        %v6204 = vmul.f32 %v6140, 0.7978846
        %v6205 = vmul.f32 %v6141, 0.7978846
        %v6206 = vmul.f32 %v6142, 0.7978846
        %v6207 = vmul.f32 %v6143, 0.7978846
        %v6208 = vmul.f32 %v6144, 0.7978846
        %v6209 = vmul.f32 %v6145, 0.7978846
        %v6210 = vmul.f32 %v6146, 0.7978846
        %v6211 = vmul.f32 %v6147, 0.7978846
        %v6212 = vmul.f32 %v6148, 0.7978846
        %v6213 = vmul.f32 %v6149, 0.7978846
        %v6214 = vmul.f32 %v6150, 0.7978846
        %v6215 = vmul.f32 %v6151, 0.7978846
        %v6216 = vmul.f32 %v6152, 0.7978846
        %v6217 = vmul.f32 %v6153, 0.7978846
        %v6218 = vmul.f32 %v6154, 0.7978846
        %v6219 = vmul.f32 %v6155, 0.7978846
        %v6220 = vmul.f32 %v6156, 0.7978846
        %v6221 = vmul.f32 %v6157, 0.7978846
        %v6222 = vmul.f32 %v6158, 0.7978846
        %v6223 = vmul.f32 %v6159, 0.7978846
        %v6224 = vmul.f32 %v6160, 0.7978846
        %v6225 = vmul.f32 %v6161, 0.7978846
        %v6226 = vmul.f32 %v6162, 0.7978846
        %v6227 = vtanh.pop %v6163
        %v6228 = vtanh.pop %v6164
        %v6229 = vtanh.pop %v6165
        %v6230 = vtanh.pop %v6166
        %v6231 = vtanh.pop %v6167
        %v6232 = vtanh.pop %v6168
        %v6233 = vtanh.pop %v6169
        %v6234 = vtanh.pop %v6170
        %v6235 = vtanh.pop %v6171
        %v6236 = vtanh.pop %v6172
        %v6237 = vtanh.pop %v6173
        %v6238 = vtanh.pop %v6174
        %v6239 = vtanh.pop %v6175
        %v6240 = vtanh.pop %v6176
        %v6241 = vtanh.pop %v6177
        %v6242 = vtanh.pop %v6178
        %v6243 = vtanh.pop %v6179
        %v6244 = vtanh.pop %v6180
        %v6245 = vtanh.pop %v6181
        %v6246 = vtanh.pop %v6182
        %v6247 = vtanh.pop %v6183
        %v6248 = vtanh.pop %v6184
        %v6249 = vtanh.pop %v6185
        %v6250 = vtanh.pop %v6186
        %v6251 = vtanh.pop %v6187
        %v6252 = vtanh.pop %v6188
        %v6253 = vtanh.pop %v6189
        %v6254 = vtanh.pop %v6190
        %v6255 = vtanh.pop %v6191
        %v6256 = vtanh.pop %v6192
        %v6257 = vtanh.pop %v6193
        %v6258 = vtanh.pop %v6194
        %v6259 = vtanh.pop %v6195
        %v6260 = vtanh.pop %v6196
        %v6261 = vtanh.pop %v6197
        %v6262 = vtanh.pop %v6198
        %v6263 = vtanh.pop %v6199
        %v6264 = vtanh.pop %v6200
        %v6265 = vtanh.pop %v6201
        %v6266 = vtanh.pop %v6202
        %v6267 = vtanh.pop %v6203
        %v6268 = vtanh.pop %v6204
        %v6269 = vtanh.pop %v6205
        %v6270 = vtanh.pop %v6206
        %v6271 = vtanh.pop %v6207
        %v6272 = vtanh.pop %v6208
        %v6273 = vtanh.pop %v6209
        %v6274 = vtanh.pop %v6210
        %v6275 = vtanh.pop %v6211
        %v6276 = vtanh.pop %v6212
        %v6277 = vtanh.pop %v6213
        %v6278 = vtanh.pop %v6214
        %v6279 = vtanh.pop %v6215
        %v6280 = vtanh.pop %v6216
        %v6281 = vtanh.pop %v6217
        %v6282 = vtanh.pop %v6218
        %v6283 = vtanh.pop %v6219
        %v6284 = vtanh.pop %v6220
        %v6285 = vtanh.pop %v6221
        %v6286 = vtanh.pop %v6222
        %v6287 = vtanh.pop %v6223
        %v6288 = vtanh.pop %v6224
        %v6289 = vtanh.pop %v6225
        %v6290 = vtanh.pop %v6226
        %v6291 = vadd.f32 %v6227, 1.0
        %v6292 = vadd.f32 %v6228, 1.0
        %v6293 = vadd.f32 %v6229, 1.0
        %v6294 = vadd.f32 %v6230, 1.0
        %v6295 = vadd.f32 %v6231, 1.0
        %v6296 = vadd.f32 %v6232, 1.0
        %v6297 = vadd.f32 %v6233, 1.0
        %v6298 = vadd.f32 %v6234, 1.0
        %v6299 = vadd.f32 %v6235, 1.0
        %v6300 = vadd.f32 %v6236, 1.0
        %v6301 = vadd.f32 %v6237, 1.0
        %v6302 = vadd.f32 %v6238, 1.0
        %v6303 = vadd.f32 %v6239, 1.0
        %v6304 = vadd.f32 %v6240, 1.0
        %v6305 = vadd.f32 %v6241, 1.0
        %v6306 = vadd.f32 %v6242, 1.0
        %v6307 = vadd.f32 %v6243, 1.0
        %v6308 = vadd.f32 %v6244, 1.0
        %v6309 = vadd.f32 %v6245, 1.0
        %v6310 = vadd.f32 %v6246, 1.0
        %v6311 = vadd.f32 %v6247, 1.0
        %v6312 = vadd.f32 %v6248, 1.0
        %v6313 = vadd.f32 %v6249, 1.0
        %v6314 = vadd.f32 %v6250, 1.0
        %v6315 = vadd.f32 %v6251, 1.0
        %v6316 = vadd.f32 %v6252, 1.0
        %v6317 = vadd.f32 %v6253, 1.0
        %v6318 = vadd.f32 %v6254, 1.0
        %v6319 = vadd.f32 %v6255, 1.0
        %v6320 = vadd.f32 %v6256, 1.0
        %v6321 = vadd.f32 %v6257, 1.0
        %v6322 = vadd.f32 %v6258, 1.0
        %v6323 = vadd.f32 %v6259, 1.0
        %v6324 = vadd.f32 %v6260, 1.0
        %v6325 = vadd.f32 %v6261, 1.0
        %v6326 = vadd.f32 %v6262, 1.0
        %v6327 = vadd.f32 %v6263, 1.0
        %v6328 = vadd.f32 %v6264, 1.0
        %v6329 = vadd.f32 %v6265, 1.0
        %v6330 = vadd.f32 %v6266, 1.0
        %v6331 = vadd.f32 %v6267, 1.0
        %v6332 = vadd.f32 %v6268, 1.0
        %v6333 = vadd.f32 %v6269, 1.0
        %v6334 = vadd.f32 %v6270, 1.0
        %v6335 = vadd.f32 %v6271, 1.0
        %v6336 = vadd.f32 %v6272, 1.0
        %v6337 = vadd.f32 %v6273, 1.0
        %v6338 = vadd.f32 %v6274, 1.0
        %v6339 = vadd.f32 %v6275, 1.0
        %v6340 = vadd.f32 %v6276, 1.0
        %v6341 = vadd.f32 %v6277, 1.0
        %v6342 = vadd.f32 %v6278, 1.0
        %v6343 = vadd.f32 %v6279, 1.0
        %v6344 = vadd.f32 %v6280, 1.0
        %v6345 = vadd.f32 %v6281, 1.0
        %v6346 = vadd.f32 %v6282, 1.0
        %v6347 = vadd.f32 %v6283, 1.0
        %v6348 = vadd.f32 %v6284, 1.0
        %v6349 = vadd.f32 %v6285, 1.0
        %v6350 = vadd.f32 %v6286, 1.0
        %v6351 = vadd.f32 %v6287, 1.0
        %v6352 = vadd.f32 %v6288, 1.0
        %v6353 = vadd.f32 %v6289, 1.0
        %v6354 = vadd.f32 %v6290, 1.0
        %v6355 = vmul.f32 %v6291, 0.5
        %v6356 = vmul.f32 %v6292, 0.5
        %v6357 = vmul.f32 %v6293, 0.5
        %v6358 = vmul.f32 %v6294, 0.5
        %v6359 = vmul.f32 %v6295, 0.5
        %v6360 = vmul.f32 %v6296, 0.5
        %v6361 = vmul.f32 %v6297, 0.5
        %v6362 = vmul.f32 %v6298, 0.5
        %v6363 = vmul.f32 %v6299, 0.5
        %v6364 = vmul.f32 %v6300, 0.5
        %v6365 = vmul.f32 %v6301, 0.5
        %v6366 = vmul.f32 %v6302, 0.5
        %v6367 = vmul.f32 %v6303, 0.5
        %v6368 = vmul.f32 %v6304, 0.5
        %v6369 = vmul.f32 %v6305, 0.5
        %v6370 = vmul.f32 %v6306, 0.5
        %v6371 = vmul.f32 %v6307, 0.5
        %v6372 = vmul.f32 %v6308, 0.5
        %v6373 = vmul.f32 %v6309, 0.5
        %v6374 = vmul.f32 %v6310, 0.5
        %v6375 = vmul.f32 %v6311, 0.5
        %v6376 = vmul.f32 %v6312, 0.5
        %v6377 = vmul.f32 %v6313, 0.5
        %v6378 = vmul.f32 %v6314, 0.5
        %v6379 = vmul.f32 %v6315, 0.5
        %v6380 = vmul.f32 %v6316, 0.5
        %v6381 = vmul.f32 %v6317, 0.5
        %v6382 = vmul.f32 %v6318, 0.5
        %v6383 = vmul.f32 %v6319, 0.5
        %v6384 = vmul.f32 %v6320, 0.5
        %v6385 = vmul.f32 %v6321, 0.5
        %v6386 = vmul.f32 %v6322, 0.5
        %v6387 = vmul.f32 %v6323, 0.5
        %v6388 = vmul.f32 %v6324, 0.5
        %v6389 = vmul.f32 %v6325, 0.5
        %v6390 = vmul.f32 %v6326, 0.5
        %v6391 = vmul.f32 %v6327, 0.5
        %v6392 = vmul.f32 %v6328, 0.5
        %v6393 = vmul.f32 %v6329, 0.5
        %v6394 = vmul.f32 %v6330, 0.5
        %v6395 = vmul.f32 %v6331, 0.5
        %v6396 = vmul.f32 %v6332, 0.5
        %v6397 = vmul.f32 %v6333, 0.5
        %v6398 = vmul.f32 %v6334, 0.5
        %v6399 = vmul.f32 %v6335, 0.5
        %v6400 = vmul.f32 %v6336, 0.5
        %v6401 = vmul.f32 %v6337, 0.5
        %v6402 = vmul.f32 %v6338, 0.5
        %v6403 = vmul.f32 %v6339, 0.5
        %v6404 = vmul.f32 %v6340, 0.5
        %v6405 = vmul.f32 %v6341, 0.5
        %v6406 = vmul.f32 %v6342, 0.5
        %v6407 = vmul.f32 %v6343, 0.5
        %v6408 = vmul.f32 %v6344, 0.5
        %v6409 = vmul.f32 %v6345, 0.5
        %v6410 = vmul.f32 %v6346, 0.5
        %v6411 = vmul.f32 %v6347, 0.5
        %v6412 = vmul.f32 %v6348, 0.5
        %v6413 = vmul.f32 %v6349, 0.5
        %v6414 = vmul.f32 %v6350, 0.5
        %v6415 = vmul.f32 %v6351, 0.5
        %v6416 = vmul.f32 %v6352, 0.5
        %v6417 = vmul.f32 %v6353, 0.5
        %v6418 = vmul.f32 %v6354, 0.5
        %v6419 = vmul.f32 %v5739, %v6355
        %v6420 = vmul.f32 %v5828, %v6356
        %v6421 = vmul.f32 %v5741, %v6357
        %v6422 = vmul.f32 %v5830, %v6358
        %v6423 = vmul.f32 %v5744, %v6359
        %v6424 = vmul.f32 %v5833, %v6360
        %v6425 = vmul.f32 %v5746, %v6361
        %v6426 = vmul.f32 %v5835, %v6362
        %v6427 = vmul.f32 %v5749, %v6363
        %v6428 = vmul.f32 %v5838, %v6364
        %v6429 = vmul.f32 %v5751, %v6365
        %v6430 = vmul.f32 %v5840, %v6366
        %v6431 = vmul.f32 %v5754, %v6367
        %v6432 = vmul.f32 %v5843, %v6368
        %v6433 = vmul.f32 %v5756, %v6369
        %v6434 = vmul.f32 %v5845, %v6370
        %v6435 = vmul.f32 %v5759, %v6371
        %v6436 = vmul.f32 %v5848, %v6372
        %v6437 = vmul.f32 %v5761, %v6373
        %v6438 = vmul.f32 %v5850, %v6374
        %v6439 = vmul.f32 %v5764, %v6375
        %v6440 = vmul.f32 %v5853, %v6376
        %v6441 = vmul.f32 %v5766, %v6377
        %v6442 = vmul.f32 %v5855, %v6378
        %v6443 = vmul.f32 %v5769, %v6379
        %v6444 = vmul.f32 %v5858, %v6380
        %v6445 = vmul.f32 %v5771, %v6381
        %v6446 = vmul.f32 %v5860, %v6382
        %v6447 = vmul.f32 %v5774, %v6383
        %v6448 = vmul.f32 %v5863, %v6384
        %v6449 = vmul.f32 %v5776, %v6385
        %v6450 = vmul.f32 %v5865, %v6386
        %v6451 = vmul.f32 %v5779, %v6387
        %v6452 = vmul.f32 %v5868, %v6388
        %v6453 = vmul.f32 %v5781, %v6389
        %v6454 = vmul.f32 %v5870, %v6390
        %v6455 = vmul.f32 %v5784, %v6391
        %v6456 = vmul.f32 %v5873, %v6392
        %v6457 = vmul.f32 %v5786, %v6393
        %v6458 = vmul.f32 %v5875, %v6394
        %v6459 = vmul.f32 %v5789, %v6395
        %v6460 = vmul.f32 %v5878, %v6396
        %v6461 = vmul.f32 %v5791, %v6397
        %v6462 = vmul.f32 %v5880, %v6398
        %v6463 = vmul.f32 %v5794, %v6399
        %v6464 = vmul.f32 %v5883, %v6400
        %v6465 = vmul.f32 %v5796, %v6401
        %v6466 = vmul.f32 %v5885, %v6402
        %v6467 = vmul.f32 %v5799, %v6403
        %v6468 = vmul.f32 %v5888, %v6404
        %v6469 = vmul.f32 %v5801, %v6405
        %v6470 = vmul.f32 %v5890, %v6406
        %v6471 = vmul.f32 %v5804, %v6407
        %v6472 = vmul.f32 %v5893, %v6408
        %v6473 = vmul.f32 %v5806, %v6409
        %v6474 = vmul.f32 %v5895, %v6410
        %v6475 = vmul.f32 %v5809, %v6411
        %v6476 = vmul.f32 %v5898, %v6412
        %v6477 = vmul.f32 %v5811, %v6413
        %v6478 = vmul.f32 %v5900, %v6414
        %v6479 = vmul.f32 %v5814, %v6415
        %v6480 = vmul.f32 %v5903, %v6416
        %v6481 = vmul.f32 %v5816, %v6417
        %v6482 = vmul.f32 %v5905, %v6418
        %v6483 = vadd.f32 %v268, %v5084
        %v6484 = vadd.f32 %v269, %v5085
        %v6485 = vadd.f32 %v270, %v5086
        %v6486 = vadd.f32 %v271, %v5087
        %v6487 = vadd.f32 %v272, %v5088
        %v6488 = vadd.f32 %v273, %v5089
        %v6489 = vadd.f32 %v274, %v5090
        %v6490 = vadd.f32 %v275, %v5091
        %v6491 = vadd.f32 %v276, %v5092
        %v6492 = vadd.f32 %v277, %v5093
        %v6493 = vadd.f32 %v278, %v5094
        %v6494 = vadd.f32 %v279, %v5095
        %v6495 = vadd.f32 %v280, %v5096
        %v6496 = vadd.f32 %v281, %v5097
        %v6497 = vadd.f32 %v282, %v5098
        %v6498 = vadd.f32 %v283, %v5099
        %v6499 = vadd.f32 %v284, %v5100
        %v6500 = vadd.f32 %v285, %v5101
        %v6501 = vadd.f32 %v286, %v5102
        %v6502 = vadd.f32 %v287, %v5103
        %v6503 = vadd.f32 %v288, %v5104
        %v6504 = vadd.f32 %v289, %v5105
        %v6505 = vadd.f32 %v290, %v5106
        %v6506 = vadd.f32 %v291, %v5107
        %v6507 = vadd.f32 %v292, %v5108
        %v6508 = vadd.f32 %v293, %v5109
        %v6509 = vadd.f32 %v294, %v5110
        %v6510 = vadd.f32 %v295, %v5111
        %v6511 = vadd.f32 %v296, %v5112
        %v6512 = vadd.f32 %v297, %v5113
        %v6513 = vadd.f32 %v298, %v5114
        %v6514 = vadd.f32 %v299, %v5115
        %v6515 = vpack.c.bf16 %v6484, %v6483
        %v6516 = vpack.c.bf16 %v6486, %v6485
        %v6517 = vpack.c.bf16 %v6488, %v6487
        %v6518 = vpack.c.bf16 %v6490, %v6489
        %v6519 = vpack.c.bf16 %v6492, %v6491
        %v6520 = vpack.c.bf16 %v6494, %v6493
        %v6521 = vpack.c.bf16 %v6496, %v6495
        %v6522 = vpack.c.bf16 %v6498, %v6497
        %v6523 = vpack.c.bf16 %v6500, %v6499
        %v6524 = vpack.c.bf16 %v6502, %v6501
        %v6525 = vpack.c.bf16 %v6504, %v6503
        %v6526 = vpack.c.bf16 %v6506, %v6505
        %v6527 = vpack.c.bf16 %v6508, %v6507
        %v6528 = vpack.c.bf16 %v6510, %v6509
        %v6529 = vpack.c.bf16 %v6512, %v6511
        %v6530 = vpack.c.bf16 %v6514, %v6513
        %v6531 = vpack.c.bf16 %v6421, %v6419
        %v6532 = vpack.c.bf16 %v6422, %v6420
        %v6533 = vpack.c.bf16 %v6425, %v6423
        %v6534 = vpack.c.bf16 %v6426, %v6424
        %v6535 = vpack.c.bf16 %v6429, %v6427
        %v6536 = vpack.c.bf16 %v6430, %v6428
        %v6537 = vpack.c.bf16 %v6433, %v6431
        %v6538 = vpack.c.bf16 %v6434, %v6432
        %v6539 = vpack.c.bf16 %v6437, %v6435
        %v6540 = vpack.c.bf16 %v6438, %v6436
        %v6541 = vpack.c.bf16 %v6441, %v6439
        %v6542 = vpack.c.bf16 %v6442, %v6440
        %v6543 = vpack.c.bf16 %v6445, %v6443
        %v6544 = vpack.c.bf16 %v6446, %v6444
        %v6545 = vpack.c.bf16 %v6449, %v6447
        %v6546 = vpack.c.bf16 %v6450, %v6448
        %v6547 = vpack.c.bf16 %v6453, %v6451
        %v6548 = vpack.c.bf16 %v6454, %v6452
        %v6549 = vpack.c.bf16 %v6457, %v6455
        %v6550 = vpack.c.bf16 %v6458, %v6456
        %v6551 = vpack.c.bf16 %v6461, %v6459
        %v6552 = vpack.c.bf16 %v6462, %v6460
        %v6553 = vpack.c.bf16 %v6465, %v6463
        %v6554 = vpack.c.bf16 %v6466, %v6464
        %v6555 = vpack.c.bf16 %v6469, %v6467
        %v6556 = vpack.c.bf16 %v6470, %v6468
        %v6557 = vpack.c.bf16 %v6473, %v6471
        %v6558 = vpack.c.bf16 %v6474, %v6472
        %v6559 = vpack.c.bf16 %v6477, %v6475
        %v6560 = vpack.c.bf16 %v6478, %v6476
        %v6561 = vpack.c.bf16 %v6481, %v6479
        %v6562 = vpack.c.bf16 %v6482, %v6480
        %v6563 = vld [vmem:[#allocation8] sm:$0xf]
        %v6564 = vld [vmem:[#allocation8 + $0x4] sm:$0xf]
        %v6565 = vld [vmem:[#allocation8 + $0x8] sm:$0xf]
        %v6566 = vld [vmem:[#allocation8 + $0xc] sm:$0xf]
        %v6567 = vld [vmem:[#allocation8 + $0x10] sm:$0xf]
        %v6568 = vld [vmem:[#allocation8 + $0x14] sm:$0xf]
        %v6569 = vld [vmem:[#allocation8 + $0x18] sm:$0xf]
        %v6570 = vld [vmem:[#allocation8 + $0x1c] sm:$0xf]
        %v6571 = vld [vmem:[#allocation8 + $0x20] sm:$0xf]
        %v6572 = vld [vmem:[#allocation8 + $0x24] sm:$0xf]
        %v6573 = vld [vmem:[#allocation8 + $0x28] sm:$0xf]
        %v6574 = vld [vmem:[#allocation8 + $0x2c] sm:$0xf]
        %v6575 = vld [vmem:[#allocation8 + $0x30] sm:$0xf]
        %v6576 = vld [vmem:[#allocation8 + $0x34] sm:$0xf]
        %v6577 = vld [vmem:[#allocation8 + $0x38] sm:$0xf]
        %v6578 = vld [vmem:[#allocation8 + $0x3c] sm:$0xf]
        %v6579 = vld [vmem:[#allocation8 + $0x40] sm:$0xf]
        %v6580 = vld [vmem:[#allocation8 + $0x44] sm:$0xf]
        %v6581 = vld [vmem:[#allocation8 + $0x48] sm:$0xf]
        %v6582 = vld [vmem:[#allocation8 + $0x4c] sm:$0xf]
        %v6583 = vld [vmem:[#allocation8 + $0x50] sm:$0xf]
        %v6584 = vld [vmem:[#allocation8 + $0x54] sm:$0xf]
        %v6585 = vld [vmem:[#allocation8 + $0x58] sm:$0xf]
        %v6586 = vld [vmem:[#allocation8 + $0x5c] sm:$0xf]
        %v6587 = vld [vmem:[#allocation8 + $0x60] sm:$0xf]
        %v6588 = vld [vmem:[#allocation8 + $0x64] sm:$0xf]
        %v6589 = vld [vmem:[#allocation8 + $0x68] sm:$0xf]
        %v6590 = vld [vmem:[#allocation8 + $0x6c] sm:$0xf]
        %v6591 = vld [vmem:[#allocation8 + $0x70] sm:$0xf]
        %v6592 = vld [vmem:[#allocation8 + $0x74] sm:$0xf]
        %v6593 = vld [vmem:[#allocation8 + $0x78] sm:$0xf]
        %v6594 = vld [vmem:[#allocation8 + $0x7c] sm:$0xf]
        %v6627 = vunpack.c.l.b16 %v6563
        %v6628 = vunpack.c.l.b16 %v6564
        %v6629 = vunpack.c.l.b16 %v6565
        %v6630 = vunpack.c.l.b16 %v6566
        %v6631 = vunpack.c.l.b16 %v6567
        %v6632 = vunpack.c.l.b16 %v6568
        %v6633 = vunpack.c.l.b16 %v6569
        %v6634 = vunpack.c.l.b16 %v6570
        %v6635 = vunpack.c.l.b16 %v6571
        %v6636 = vunpack.c.l.b16 %v6572
        %v6637 = vunpack.c.l.b16 %v6573
        %v6638 = vunpack.c.l.b16 %v6574
        %v6639 = vunpack.c.l.b16 %v6575
        %v6640 = vunpack.c.l.b16 %v6576
        %v6641 = vunpack.c.l.b16 %v6577
        %v6642 = vunpack.c.l.b16 %v6578
        %v6643 = vunpack.c.l.b16 %v6579
        %v6644 = vunpack.c.l.b16 %v6580
        %v6645 = vunpack.c.l.b16 %v6581
        %v6646 = vunpack.c.l.b16 %v6582
        %v6647 = vunpack.c.l.b16 %v6583
        %v6648 = vunpack.c.l.b16 %v6584
        %v6649 = vunpack.c.l.b16 %v6585
        %v6650 = vunpack.c.l.b16 %v6586
        %v6651 = vunpack.c.l.b16 %v6587
        %v6652 = vunpack.c.l.b16 %v6588
        %v6653 = vunpack.c.l.b16 %v6589
        %v6654 = vunpack.c.l.b16 %v6590
        %v6655 = vunpack.c.l.b16 %v6591
        %v6656 = vunpack.c.l.b16 %v6592
        %v6657 = vunpack.c.l.b16 %v6593
        %v6658 = vunpack.c.l.b16 %v6594
        %v6659 = vpack.c.b16 %v6628, %v6627
        %v6660 = vpack.c.b16 %v6630, %v6629
        %v6661 = vpack.c.b16 %v6632, %v6631
        %v6662 = vpack.c.b16 %v6634, %v6633
        %v6663 = vpack.c.b16 %v6636, %v6635
        %v6664 = vpack.c.b16 %v6638, %v6637
        %v6665 = vpack.c.b16 %v6640, %v6639
        %v6666 = vpack.c.b16 %v6642, %v6641
        %v6667 = vpack.c.b16 %v6644, %v6643
        %v6668 = vpack.c.b16 %v6646, %v6645
        %v6669 = vpack.c.b16 %v6648, %v6647
        %v6670 = vpack.c.b16 %v6650, %v6649
        %v6671 = vpack.c.b16 %v6652, %v6651
        %v6672 = vpack.c.b16 %v6654, %v6653
        %v6673 = vpack.c.b16 %v6656, %v6655
        %v6674 = vpack.c.b16 %v6658, %v6657
        %6691 = vmatpush.bf16.msra.mxu0 %v6666
        %6692 = vmatpush.bf16.msra.mxu0 %v6665
        %6693 = vmatpush.bf16.msra.mxu0 %v6664
        %6694 = vmatpush.bf16.msra.mxu0 %v6663
        %6695 = vmatpush.bf16.msra.mxu0 %v6662
        %6696 = vmatpush.bf16.msra.mxu0 %v6661
        %6697 = vmatpush.bf16.msra.mxu0 %v6660
        %6698 = vmatpush.bf16.msra.mxu0 %v6659
        %6699 = vmatmul.bf16.gmra.mxu0 %v6531
        %v6700 = vpop.f32.mrf.mxu0
        %v6701 = vadd.f32 0.0, %v6700
        %v6702 = vpop.f32.mrf.mxu0
        %v6703 = vadd.f32 0.0, %v6702
        %6704 = vmatmul.bf16.gmra.mxu0 %v6533
        %v6705 = vpop.f32.mrf.mxu0
        %v6706 = vadd.f32 0.0, %v6705
        %v6707 = vpop.f32.mrf.mxu0
        %v6708 = vadd.f32 0.0, %v6707
        %6709 = vmatmul.bf16.gmra.mxu0 %v6535
        %v6710 = vpop.f32.mrf.mxu0
        %v6711 = vadd.f32 0.0, %v6710
        %v6712 = vpop.f32.mrf.mxu0
        %v6713 = vadd.f32 0.0, %v6712
        %6714 = vmatmul.bf16.gmra.mxu0 %v6537
        %v6715 = vpop.f32.mrf.mxu0
        %v6716 = vadd.f32 0.0, %v6715
        %v6717 = vpop.f32.mrf.mxu0
        %v6718 = vadd.f32 0.0, %v6717
        %6719 = vmatmul.bf16.gmra.mxu0 %v6539
        %v6720 = vpop.f32.mrf.mxu0
        %v6721 = vadd.f32 0.0, %v6720
        %v6722 = vpop.f32.mrf.mxu0
        %v6723 = vadd.f32 0.0, %v6722
        %6724 = vmatmul.bf16.gmra.mxu0 %v6541
        %v6725 = vpop.f32.mrf.mxu0
        %v6726 = vadd.f32 0.0, %v6725
        %v6727 = vpop.f32.mrf.mxu0
        %v6728 = vadd.f32 0.0, %v6727
        %6729 = vmatmul.bf16.gmra.mxu0 %v6543
        %v6730 = vpop.f32.mrf.mxu0
        %v6731 = vadd.f32 0.0, %v6730
        %v6732 = vpop.f32.mrf.mxu0
        %v6733 = vadd.f32 0.0, %v6732
        %6734 = vmatmul.bf16.gmra.mxu0 %v6545
        %v6735 = vpop.f32.mrf.mxu0
        %v6736 = vadd.f32 0.0, %v6735
        %v6737 = vpop.f32.mrf.mxu0
        %v6738 = vadd.f32 0.0, %v6737
        %6739 = vmatmul.bf16.gmra.mxu0 %v6547
        %v6740 = vpop.f32.mrf.mxu0
        %v6741 = vadd.f32 0.0, %v6740
        %v6742 = vpop.f32.mrf.mxu0
        %v6743 = vadd.f32 0.0, %v6742
        %6744 = vmatmul.bf16.gmra.mxu0 %v6549
        %v6745 = vpop.f32.mrf.mxu0
        %v6746 = vadd.f32 0.0, %v6745
        %v6747 = vpop.f32.mrf.mxu0
        %v6748 = vadd.f32 0.0, %v6747
        %6749 = vmatmul.bf16.gmra.mxu0 %v6551
        %v6750 = vpop.f32.mrf.mxu0
        %v6751 = vadd.f32 0.0, %v6750
        %v6752 = vpop.f32.mrf.mxu0
        %v6753 = vadd.f32 0.0, %v6752
        %6754 = vmatmul.bf16.gmra.mxu0 %v6553
        %v6755 = vpop.f32.mrf.mxu0
        %v6756 = vadd.f32 0.0, %v6755
        %v6757 = vpop.f32.mrf.mxu0
        %v6758 = vadd.f32 0.0, %v6757
        %6759 = vmatmul.bf16.gmra.mxu0 %v6555
        %v6760 = vpop.f32.mrf.mxu0
        %v6761 = vadd.f32 0.0, %v6760
        %v6762 = vpop.f32.mrf.mxu0
        %v6763 = vadd.f32 0.0, %v6762
        %6764 = vmatmul.bf16.gmra.mxu0 %v6557
        %v6765 = vpop.f32.mrf.mxu0
        %v6766 = vadd.f32 0.0, %v6765
        %v6767 = vpop.f32.mrf.mxu0
        %v6768 = vadd.f32 0.0, %v6767
        %6769 = vmatmul.bf16.gmra.mxu0 %v6559
        %v6770 = vpop.f32.mrf.mxu0
        %v6771 = vadd.f32 0.0, %v6770
        %v6772 = vpop.f32.mrf.mxu0
        %v6773 = vadd.f32 0.0, %v6772
        %6774 = vmatmul.bf16.gmra.mxu0 %v6561
        %v6775 = vpop.f32.mrf.mxu0
        %v6776 = vadd.f32 0.0, %v6775
        %v6777 = vpop.f32.mrf.mxu0
        %v6778 = vadd.f32 0.0, %v6777
        %6779 = vdwg.mxu0
        %6780 = vmatpush.bf16.msra.mxu0 %v6674
        %6781 = vmatpush.bf16.msra.mxu0 %v6673
        %6782 = vmatpush.bf16.msra.mxu0 %v6672
        %6783 = vmatpush.bf16.msra.mxu0 %v6671
        %6784 = vmatpush.bf16.msra.mxu0 %v6670
        %6785 = vmatpush.bf16.msra.mxu0 %v6669
        %6786 = vmatpush.bf16.msra.mxu0 %v6668
        %6787 = vmatpush.bf16.msra.mxu0 %v6667
        %6788 = vmatmul.bf16.gmra.mxu0 %v6532
        %v6789 = vpop.f32.mrf.mxu0
        %v6790 = vadd.f32 %v6701, %v6789
        %v6791 = vpop.f32.mrf.mxu0
        %v6792 = vadd.f32 %v6703, %v6791
        %6793 = vmatmul.bf16.gmra.mxu0 %v6534
        %v6794 = vpop.f32.mrf.mxu0
        %v6795 = vadd.f32 %v6706, %v6794
        %v6796 = vpop.f32.mrf.mxu0
        %v6797 = vadd.f32 %v6708, %v6796
        %6798 = vmatmul.bf16.gmra.mxu0 %v6536
        %v6799 = vpop.f32.mrf.mxu0
        %v6800 = vadd.f32 %v6711, %v6799
        %v6801 = vpop.f32.mrf.mxu0
        %v6802 = vadd.f32 %v6713, %v6801
        %6803 = vmatmul.bf16.gmra.mxu0 %v6538
        %v6804 = vpop.f32.mrf.mxu0
        %v6805 = vadd.f32 %v6716, %v6804
        %v6806 = vpop.f32.mrf.mxu0
        %v6807 = vadd.f32 %v6718, %v6806
        %6808 = vmatmul.bf16.gmra.mxu0 %v6540
        %v6809 = vpop.f32.mrf.mxu0
        %v6810 = vadd.f32 %v6721, %v6809
        %v6811 = vpop.f32.mrf.mxu0
        %v6812 = vadd.f32 %v6723, %v6811
        %6813 = vmatmul.bf16.gmra.mxu0 %v6542
        %v6814 = vpop.f32.mrf.mxu0
        %v6815 = vadd.f32 %v6726, %v6814
        %v6816 = vpop.f32.mrf.mxu0
        %v6817 = vadd.f32 %v6728, %v6816
        %6818 = vmatmul.bf16.gmra.mxu0 %v6544
        %v6819 = vpop.f32.mrf.mxu0
        %v6820 = vadd.f32 %v6731, %v6819
        %v6821 = vpop.f32.mrf.mxu0
        %v6822 = vadd.f32 %v6733, %v6821
        %6823 = vmatmul.bf16.gmra.mxu0 %v6546
        %v6824 = vpop.f32.mrf.mxu0
        %v6825 = vadd.f32 %v6736, %v6824
        %v6826 = vpop.f32.mrf.mxu0
        %v6827 = vadd.f32 %v6738, %v6826
        %6828 = vmatmul.bf16.gmra.mxu0 %v6548
        %v6829 = vpop.f32.mrf.mxu0
        %v6830 = vadd.f32 %v6741, %v6829
        %v6831 = vpop.f32.mrf.mxu0
        %v6832 = vadd.f32 %v6743, %v6831
        %6833 = vmatmul.bf16.gmra.mxu0 %v6550
        %v6834 = vpop.f32.mrf.mxu0
        %v6835 = vadd.f32 %v6746, %v6834
        %v6836 = vpop.f32.mrf.mxu0
        %v6837 = vadd.f32 %v6748, %v6836
        %6838 = vmatmul.bf16.gmra.mxu0 %v6552
        %v6839 = vpop.f32.mrf.mxu0
        %v6840 = vadd.f32 %v6751, %v6839
        %v6841 = vpop.f32.mrf.mxu0
        %v6842 = vadd.f32 %v6753, %v6841
        %6843 = vmatmul.bf16.gmra.mxu0 %v6554
        %v6844 = vpop.f32.mrf.mxu0
        %v6845 = vadd.f32 %v6756, %v6844
        %v6846 = vpop.f32.mrf.mxu0
        %v6847 = vadd.f32 %v6758, %v6846
        %6848 = vmatmul.bf16.gmra.mxu0 %v6556
        %v6849 = vpop.f32.mrf.mxu0
        %v6850 = vadd.f32 %v6761, %v6849
        %v6851 = vpop.f32.mrf.mxu0
        %v6852 = vadd.f32 %v6763, %v6851
        %6853 = vmatmul.bf16.gmra.mxu0 %v6558
        %v6854 = vpop.f32.mrf.mxu0
        %v6855 = vadd.f32 %v6766, %v6854
        %v6856 = vpop.f32.mrf.mxu0
        %v6857 = vadd.f32 %v6768, %v6856
        %6858 = vmatmul.bf16.gmra.mxu0 %v6560
        %v6859 = vpop.f32.mrf.mxu0
        %v6860 = vadd.f32 %v6771, %v6859
        %v6861 = vpop.f32.mrf.mxu0
        %v6862 = vadd.f32 %v6773, %v6861
        %6863 = vmatmul.bf16.gmra.mxu0 %v6562
        %v6864 = vpop.f32.mrf.mxu0
        %v6865 = vadd.f32 %v6776, %v6864
        %v6866 = vpop.f32.mrf.mxu0
        %v6867 = vadd.f32 %v6778, %v6866
        %6868 = vdwg.mxu0
        %v6885 = vunpack.c.l.b16 %v360
        %v6886 = vunpack.c.l.b16 %v361
        %v6887 = vunpack.c.l.b16 %v362
        %v6888 = vunpack.c.l.b16 %v363
        %v6889 = vunpack.c.l.b16 %v364
        %v6890 = vunpack.c.l.b16 %v365
        %v6891 = vunpack.c.l.b16 %v366
        %v6892 = vunpack.c.l.b16 %v367
        %v6893 = vunpack.c.l.b16 %v368
        %v6894 = vunpack.c.l.b16 %v369
        %v6895 = vunpack.c.l.b16 %v370
        %v6896 = vunpack.c.l.b16 %v371
        %v6897 = vunpack.c.l.b16 %v372
        %v6898 = vunpack.c.l.b16 %v373
        %v6899 = vunpack.c.l.b16 %v374
        %v6900 = vunpack.c.l.b16 %v375
        %v6901 = vpack.c.b16 %v6886, %v6885
        %v6902 = vpack.c.b16 %v6888, %v6887
        %v6903 = vpack.c.b16 %v6890, %v6889
        %v6904 = vpack.c.b16 %v6892, %v6891
        %v6905 = vpack.c.b16 %v6894, %v6893
        %v6906 = vpack.c.b16 %v6896, %v6895
        %v6907 = vpack.c.b16 %v6898, %v6897
        %v6908 = vpack.c.b16 %v6900, %v6899
        %6917 = vmatpush.bf16.msra.mxu0 %v6908
        %6918 = vmatpush.bf16.msra.mxu0 %v6907
        %6919 = vmatpush.bf16.msra.mxu0 %v6906
        %6920 = vmatpush.bf16.msra.mxu0 %v6905
        %6921 = vmatpush.bf16.msra.mxu0 %v6904
        %6922 = vmatpush.bf16.msra.mxu0 %v6903
        %6923 = vmatpush.bf16.msra.mxu0 %v6902
        %6924 = vmatpush.bf16.msra.mxu0 %v6901
        %6925 = vmatmul.bf16.gmra.mxu0 %v6515
        %v6926 = vpop.f32.mrf.mxu0
        %v6927 = vadd.f32 %v6790, %v6926
        %v6928 = vpop.f32.mrf.mxu0
        %v6929 = vadd.f32 %v6792, %v6928
        %6930 = vmatmul.bf16.gmra.mxu0 %v6516
        %v6931 = vpop.f32.mrf.mxu0
        %v6932 = vadd.f32 %v6795, %v6931
        %v6933 = vpop.f32.mrf.mxu0
        %v6934 = vadd.f32 %v6797, %v6933
        %6935 = vmatmul.bf16.gmra.mxu0 %v6517
        %v6936 = vpop.f32.mrf.mxu0
        %v6937 = vadd.f32 %v6800, %v6936
        %v6938 = vpop.f32.mrf.mxu0
        %v6939 = vadd.f32 %v6802, %v6938
        %6940 = vmatmul.bf16.gmra.mxu0 %v6518
        %v6941 = vpop.f32.mrf.mxu0
        %v6942 = vadd.f32 %v6805, %v6941
        %v6943 = vpop.f32.mrf.mxu0
        %v6944 = vadd.f32 %v6807, %v6943
        %6945 = vmatmul.bf16.gmra.mxu0 %v6519
        %v6946 = vpop.f32.mrf.mxu0
        %v6947 = vadd.f32 %v6810, %v6946
        %v6948 = vpop.f32.mrf.mxu0
        %v6949 = vadd.f32 %v6812, %v6948
        %6950 = vmatmul.bf16.gmra.mxu0 %v6520
        %v6951 = vpop.f32.mrf.mxu0
        %v6952 = vadd.f32 %v6815, %v6951
        %v6953 = vpop.f32.mrf.mxu0
        %v6954 = vadd.f32 %v6817, %v6953
        %6955 = vmatmul.bf16.gmra.mxu0 %v6521
        %v6956 = vpop.f32.mrf.mxu0
        %v6957 = vadd.f32 %v6820, %v6956
        %v6958 = vpop.f32.mrf.mxu0
        %v6959 = vadd.f32 %v6822, %v6958
        %6960 = vmatmul.bf16.gmra.mxu0 %v6522
        %v6961 = vpop.f32.mrf.mxu0
        %v6962 = vadd.f32 %v6825, %v6961
        %v6963 = vpop.f32.mrf.mxu0
        %v6964 = vadd.f32 %v6827, %v6963
        %6965 = vmatmul.bf16.gmra.mxu0 %v6523
        %v6966 = vpop.f32.mrf.mxu0
        %v6967 = vadd.f32 %v6830, %v6966
        %v6968 = vpop.f32.mrf.mxu0
        %v6969 = vadd.f32 %v6832, %v6968
        %6970 = vmatmul.bf16.gmra.mxu0 %v6524
        %v6971 = vpop.f32.mrf.mxu0
        %v6972 = vadd.f32 %v6835, %v6971
        %v6973 = vpop.f32.mrf.mxu0
        %v6974 = vadd.f32 %v6837, %v6973
        %6975 = vmatmul.bf16.gmra.mxu0 %v6525
        %v6976 = vpop.f32.mrf.mxu0
        %v6977 = vadd.f32 %v6840, %v6976
        %v6978 = vpop.f32.mrf.mxu0
        %v6979 = vadd.f32 %v6842, %v6978
        %6980 = vmatmul.bf16.gmra.mxu0 %v6526
        %v6981 = vpop.f32.mrf.mxu0
        %v6982 = vadd.f32 %v6845, %v6981
        %v6983 = vpop.f32.mrf.mxu0
        %v6984 = vadd.f32 %v6847, %v6983
        %6985 = vmatmul.bf16.gmra.mxu0 %v6527
        %v6986 = vpop.f32.mrf.mxu0
        %v6987 = vadd.f32 %v6850, %v6986
        %v6988 = vpop.f32.mrf.mxu0
        %v6989 = vadd.f32 %v6852, %v6988
        %6990 = vmatmul.bf16.gmra.mxu0 %v6528
        %v6991 = vpop.f32.mrf.mxu0
        %v6992 = vadd.f32 %v6855, %v6991
        %v6993 = vpop.f32.mrf.mxu0
        %v6994 = vadd.f32 %v6857, %v6993
        %6995 = vmatmul.bf16.gmra.mxu0 %v6529
        %v6996 = vpop.f32.mrf.mxu0
        %v6997 = vadd.f32 %v6860, %v6996
        %v6998 = vpop.f32.mrf.mxu0
        %v6999 = vadd.f32 %v6862, %v6998
        %7000 = vmatmul.bf16.gmra.mxu0 %v6530
        %v7001 = vpop.f32.mrf.mxu0
        %v7002 = vadd.f32 %v6865, %v7001
        %v7003 = vpop.f32.mrf.mxu0
        %v7004 = vadd.f32 %v6867, %v7003
        %7005 = vdwg.mxu0
        %v7006 = vadd.f32 %v6927, %v307
        %v7007 = vadd.f32 %v6929, %v307
        %v7008 = vadd.f32 %v6932, %v307
        %v7009 = vadd.f32 %v6934, %v307
        %v7010 = vadd.f32 %v6937, %v307
        %v7011 = vadd.f32 %v6939, %v307
        %v7012 = vadd.f32 %v6942, %v307
        %v7013 = vadd.f32 %v6944, %v307
        %v7014 = vadd.f32 %v6947, %v307
        %v7015 = vadd.f32 %v6949, %v307
        %v7016 = vadd.f32 %v6952, %v307
        %v7017 = vadd.f32 %v6954, %v307
        %v7018 = vadd.f32 %v6957, %v307
        %v7019 = vadd.f32 %v6959, %v307
        %v7020 = vadd.f32 %v6962, %v307
        %v7021 = vadd.f32 %v6964, %v307
        %v7022 = vadd.f32 %v6967, %v307
        %v7023 = vadd.f32 %v6969, %v307
        %v7024 = vadd.f32 %v6972, %v307
        %v7025 = vadd.f32 %v6974, %v307
        %v7026 = vadd.f32 %v6977, %v307
        %v7027 = vadd.f32 %v6979, %v307
        %v7028 = vadd.f32 %v6982, %v307
        %v7029 = vadd.f32 %v6984, %v307
        %v7030 = vadd.f32 %v6987, %v307
        %v7031 = vadd.f32 %v6989, %v307
        %v7032 = vadd.f32 %v6992, %v307
        %v7033 = vadd.f32 %v6994, %v307
        %v7034 = vadd.f32 %v6997, %v307
        %v7035 = vadd.f32 %v6999, %v307
        %v7036 = vadd.f32 %v7002, %v307
        %v7037 = vadd.f32 %v7004, %v307
        %7038 = vst [vmem:[%s265] sm:$0xff] %v7006
        %7039 = vst [vmem:[%s265 + $0x8] sm:$0xff] %v7007
        %7040 = vst [vmem:[%s265 + $0x10] sm:$0xff] %v7008
        %7041 = vst [vmem:[%s265 + $0x18] sm:$0xff] %v7009
        %7042 = vst [vmem:[%s265 + $0x20] sm:$0xff] %v7010
        %7043 = vst [vmem:[%s265 + $0x28] sm:$0xff] %v7011
        %7044 = vst [vmem:[%s265 + $0x30] sm:$0xff] %v7012
        %7045 = vst [vmem:[%s265 + $0x38] sm:$0xff] %v7013
        %7046 = vst [vmem:[%s265 + $0x40] sm:$0xff] %v7014
        %7047 = vst [vmem:[%s265 + $0x48] sm:$0xff] %v7015
        %7048 = vst [vmem:[%s265 + $0x50] sm:$0xff] %v7016
        %7049 = vst [vmem:[%s265 + $0x58] sm:$0xff] %v7017
        %7050 = vst [vmem:[%s265 + $0x60] sm:$0xff] %v7018
        %7051 = vst [vmem:[%s265 + $0x68] sm:$0xff] %v7019
        %7052 = vst [vmem:[%s265 + $0x70] sm:$0xff] %v7020
        %7053 = vst [vmem:[%s265 + $0x78] sm:$0xff] %v7021
        %7054 = vst [vmem:[%s265 + $0x80] sm:$0xff] %v7022
        %7055 = vst [vmem:[%s265 + $0x88] sm:$0xff] %v7023
        %7056 = vst [vmem:[%s265 + $0x90] sm:$0xff] %v7024
        %7057 = vst [vmem:[%s265 + $0x98] sm:$0xff] %v7025
        %7058 = vst [vmem:[%s265 + $0xa0] sm:$0xff] %v7026
        %7059 = vst [vmem:[%s265 + $0xa8] sm:$0xff] %v7027
        %7060 = vst [vmem:[%s265 + $0xb0] sm:$0xff] %v7028
        %7061 = vst [vmem:[%s265 + $0xb8] sm:$0xff] %v7029
        %7062 = vst [vmem:[%s265 + $0xc0] sm:$0xff] %v7030
        %7063 = vst [vmem:[%s265 + $0xc8] sm:$0xff] %v7031
        %7064 = vst [vmem:[%s265 + $0xd0] sm:$0xff] %v7032
        %7065 = vst [vmem:[%s265 + $0xd8] sm:$0xff] %v7033
        %7066 = vst [vmem:[%s265 + $0xe0] sm:$0xff] %v7034
        %7067 = vst [vmem:[%s265 + $0xe8] sm:$0xff] %v7035
        %7068 = vst [vmem:[%s265 + $0xf0] sm:$0xff] %v7036
        %7069 = vst [vmem:[%s265 + $0xf8] sm:$0xff] %v7037
        %s7070 = sand.u32 %s120, 1
        %s7071 = scalar_lea.sflag [#allocation4], %s7070
        %s7072 = sand.u32 %s120, 1
        %s7073 = smul.addr %s7072, 256
        %s7074 = scalar_lea.vmem [#allocation10], %s7073
        // Predicated region
        $region53: #{tpu_custom_call.1} parent=35 // pred_check
          %p7075 = pneg %p130
        $region54: #{tpu_custom_call.1} parent=35 // pred_check_branch
          %7077 = sbr.rel (%p7075) target = $region56
        $region55: #{tpu_custom_call.1} parent=35 // pred_region
          %s7078 = smul.u32 32, %s23
          %7080 = vsyncadd %s7071, 0
          %s7081 = smul.addr %s7078, 8
          %s7082 = scalar_lea.hbm %s4, %s7081
          %s7083 = sshll.u32 %s7074, 4
          %s7084 = int_to_ptr.vmem [resolvable:$true] %s7083
          %s7085 = sshll.u32 %s7082, 4
          %s7086 = int_to_ptr.hbm [resolvable:$true] %s7085
          %7091 = dma.vmem_to_hbm [thread:$0]  %s7084, 4096, %s7086, %s7071, 128, 128, 8
        $region56: #{tpu_custom_call.1} parent=35 // pred_fallthru
          _
      $region36: #{tpu_custom_call.1} parent=5 // pred_fallthru
        _
      %p7092 = scmp.le.s32.totalorder 2, %s18
      // Predicated region
      $region57: #{tpu_custom_call.1} parent=5 // pred_check
        %p7093 = pneg %p7092
      $region58: #{tpu_custom_call.1} parent=5 // pred_check_branch
        %7095 = sbr.rel (%p7093) target = $region60
      $region59: #{tpu_custom_call.1} parent=5 // pred_region
        %s7096 = ssub.s32 %s18, 2
        // Predicated region
        $region61: #{tpu_custom_call.1} parent=59 // pred_check
          %p7097 = pneg %p136
        $region62: #{tpu_custom_call.1} parent=59 // pred_check_branch
          %7099 = sbr.rel (%p7097) target = $region64
        $region63: #{tpu_custom_call.1} parent=59 // pred_region
          %s7100 = sand.u32 %s121, 1
          %s7101 = scalar_lea.sflag [#allocation4], %s7100
          %s7102 = sand.u32 %s121, 1
          %s7103 = smul.addr %s7102, 256
          %s7104 = scalar_lea.vmem [#allocation10], %s7103
          %7106 = dma.done %s7101, 4096
        $region64: #{tpu_custom_call.1} parent=59 // pred_fallthru
          _
      $region60: #{tpu_custom_call.1} parent=5 // pred_fallthru
        _
    $region6: #{tpu_custom_call.1} parent=1 // loop_footer
      %s22 = sadd.s32 1, %s18
    $region7: #{tpu_custom_call.1} parent=1 // loop_footer_branch
      %17 = sbr.rel target = $region3
    $region8: #{tpu_custom_call.1} parent=1 // loop_exit
      _
    %7107 = vsyncpa [#allocation3], 1
    %s7108 = scalar_lea.sflag [#allocation3], 1
    %7109 = vsyncpa %s7108, 1
    %7110 = vsyncpa [#allocation6], 1
    %7111 = vsyncpa [#allocation9], 1
    %7112 = vsyncpa [#allocation4], 1
    %s7113 = scalar_lea.sflag [#allocation4], 1
    %7114 = vsyncpa %s7113, 1

</llo_original>
